<compile_context>
chip_gen: v7x
topology: tpu7x:2x2x1
jax: 0.10.0
libtpu: 0.0.40
codegen_flags: <defaults>
</compile_context>

<pallas_src>
import jax
import jax.numpy as jnp
from jax.experimental import pallas as pl
from jax.experimental.pallas import tpu as pltpu

G, CG = 55, 8            # groups, channels per group (55 * 8 = 440)
C = G * CG               # 440 channels
H, W = 7, 7              # spatial
KH, KW = 3, 3            # kernel
PH, PW = H + 2, W + 2    # zero-padded spatial (9, 9)
PR = 88                  # x_exp rows: >= 63 + 20 + 1 = 84, rounded to multiple of 8
OR = 64                  # output rows computed: >= 61, rounded to multiple of 8


def relu_gconv_kernel(x_ref, w_ref, o_ref):
    # x_ref: (CG, PR, C)   ReLU'd, zero-padded, per-group ci-broadcast input slabs
    #                      x_ref[ci, yy*PW+xx, g*CG+co] = relu(x_pad)[g, ci, yy, xx]
    # w_ref: (KH*KW*CG, C) weight rows: w_ref[(kh*KW+kw)*CG+ci, g*CG+co]
    # o_ref: (OR, C)       output rows p = yy*PW + xx (valid where xx <= 6, p <= 60)
    acc = None
    for kh in range(KH):
        for kw in range(KW):
            off = kh * PW + kw                 # pure static row offset per tap
            base = (kh * KW + kw) * CG
            for ci in range(CG):
                xv = x_ref[ci, off:off + OR, :]             # (OR, C) static slice
                wv = w_ref[base + ci:base + ci + 1, :]      # (1, C) broadcast row
                term = xv * wv
                acc = term if acc is None else acc + term
    o_ref[...] = acc


def relu_grouped_conv(x_nchw, wt):
    """x_nchw: (1, 440, 7, 7) f32; wt: (440, 8, 3, 3) f32 (PyTorch grouped OIHW)."""
    # ---- lane-dense input slabs: ReLU + zero-pad + per-group ci broadcast ----
    xg = jnp.maximum(x_nchw.reshape(G, CG, H, W), 0.0)              # (55, 8, 7, 7)
    xp = jnp.pad(xg, ((0, 0), (0, 0), (1, 1), (1, 1)))              # (55, 8, 9, 9)
    xe = xp.transpose(1, 2, 3, 0).reshape(CG, PH * PW, G)           # (8, 81, 55)
    xe = jnp.broadcast_to(xe[:, :, :, None], (CG, PH * PW, G, CG))
    xe = xe.reshape(CG, PH * PW, C)                                 # (8, 81, 440)
    xe = jnp.pad(xe, ((0, 0), (0, PR - PH * PW), (0, 0)))           # (8, 88, 440)

    # ---- weight rows: w_row[(kh*KW+kw)*CG+ci, g*CG+co] = wt[g*CG+co, ci, kh, kw] ----
    wg = wt.reshape(G, CG, CG, KH, KW)                              # (g, co, ci, kh, kw)
    w_row = wg.transpose(3, 4, 2, 0, 1).reshape(KH * KW * CG, C)    # (72, 440)

    o_full = pl.pallas_call(
        relu_gconv_kernel,
        out_shape=jax.ShapeDtypeStruct((OR, C), jnp.float32),
        grid=(1,),
        in_specs=[
            pl.BlockSpec((CG, PR, C), lambda i: (0, 0, 0)),
            pl.BlockSpec((KH * KW * CG, C), lambda i: (0, 0)),
        ],
        out_specs=pl.BlockSpec((OR, C), lambda i: (0, 0)),
        compiler_params=pltpu.CompilerParams(dimension_semantics=("arbitrary",)),
    )(xe, w_row)

    # rows p = yy*PW + xx; keep yy, xx in 0..6 and go back to NCHW
    o = o_full[: H * PW].reshape(H, PW, C)[:, :W, :]                # (7, 7, 440)
    return o.transpose(2, 0, 1).reshape(1, C, H, W)


def reference(x_nchw, wt):
    """Pure-JAX reference: ReLU + grouped conv via lax.conv_general_dilated."""
    xr = jnp.maximum(x_nchw, 0.0)
    rhs = wt.transpose(2, 3, 1, 0)          # HWIO grouped: (3, 3, 8, 440)
    return jax.lax.conv_general_dilated(
        xr, rhs, window_strides=(1, 1), padding=((1, 1), (1, 1)),
        dimension_numbers=("NCHW", "HWIO", "NCHW"),
        feature_group_count=G)


if __name__ == "__main__":
    key = jax.random.PRNGKey(0)
    kx, kw = jax.random.split(key)
    # shapes implied by the module: x205 = (1, 440, 7, 7), weight = (440, 8, 3, 3)
    x = jax.random.normal(kx, (1, C, H, W), dtype=jnp.float32)
    wt = 0.1 * jax.random.normal(kw, (C, CG, KH, KW), dtype=jnp.float32)

    fn = jax.jit(relu_grouped_conv)
    out = fn(x, wt)
    jax.block_until_ready(out)

    exp = reference(x, wt)
    assert out.shape == (1, C, H, W)
    assert jnp.allclose(out, exp, atol=1e-3, rtol=1e-3), "mismatch vs reference"
    print("KERNEL_OK")
</pallas_src>

<mosaic_0001>
module attributes {stable_mosaic.version = 11 : i64} {
  func.func @relu_gconv_kernel(%arg0: i32, %arg1: memref<8x88x440xf32, #tpu.memory_space<vmem>>, %arg2: memref<72x440xf32, #tpu.memory_space<vmem>>, %arg3: memref<64x440xf32, #tpu.memory_space<vmem>>) attributes {dimension_semantics = [#tpu.dimension_semantics<arbitrary>], iteration_bounds = array<i64: 1>, scalar_prefetch = 0 : i64, scratch_operands = 0 : i64, tpu.core_type = #tpu.core_type<tc>, window_params = [{pipeline_mode = #tpu.pipeline_mode<synchronous>, transform_indices = @transform_0, window_bounds = array<i64: 8, 88, 440>}, {pipeline_mode = #tpu.pipeline_mode<synchronous>, transform_indices = @transform_1, window_bounds = array<i64: 72, 440>}, {pipeline_mode = #tpu.pipeline_mode<synchronous>, transform_indices = @transform_2, window_bounds = array<i64: 64, 440>}]} {
    %c0 = arith.constant 0 : index
    %c0_0 = arith.constant 0 : index
    %c0_1 = arith.constant 0 : index
    %0 = vector.load %arg1[%c0, %c0_0, %c0_1] : memref<8x88x440xf32, #tpu.memory_space<vmem>>, vector<1x64x440xf32>
    %1 = vector.shape_cast %0 : vector<1x64x440xf32> to vector<64x440xf32>
    %c0_2 = arith.constant 0 : index
    %c0_3 = arith.constant 0 : index
    %2 = vector.load %arg2[%c0_2, %c0_3] : memref<72x440xf32, #tpu.memory_space<vmem>>, vector<1x440xf32>
    %3 = vector.broadcast %2 : vector<1x440xf32> to vector<64x440xf32>
    %4 = arith.mulf %1, %3 : vector<64x440xf32>
    %c1 = arith.constant 1 : index
    %c0_4 = arith.constant 0 : index
    %c0_5 = arith.constant 0 : index
    %5 = vector.load %arg1[%c1, %c0_4, %c0_5] : memref<8x88x440xf32, #tpu.memory_space<vmem>>, vector<1x64x440xf32>
    %6 = vector.shape_cast %5 : vector<1x64x440xf32> to vector<64x440xf32>
    %c1_6 = arith.constant 1 : index
    %c0_7 = arith.constant 0 : index
    %7 = vector.load %arg2[%c1_6, %c0_7] : memref<72x440xf32, #tpu.memory_space<vmem>>, vector<1x440xf32>
    %8 = vector.broadcast %7 : vector<1x440xf32> to vector<64x440xf32>
    %9 = arith.mulf %6, %8 : vector<64x440xf32>
    %10 = arith.addf %4, %9 : vector<64x440xf32>
    %c2 = arith.constant 2 : index
    %c0_8 = arith.constant 0 : index
    %c0_9 = arith.constant 0 : index
    %11 = vector.load %arg1[%c2, %c0_8, %c0_9] : memref<8x88x440xf32, #tpu.memory_space<vmem>>, vector<1x64x440xf32>
    %12 = vector.shape_cast %11 : vector<1x64x440xf32> to vector<64x440xf32>
    %c2_10 = arith.constant 2 : index
    %c0_11 = arith.constant 0 : index
    %13 = vector.load %arg2[%c2_10, %c0_11] : memref<72x440xf32, #tpu.memory_space<vmem>>, vector<1x440xf32>
    %14 = vector.broadcast %13 : vector<1x440xf32> to vector<64x440xf32>
    %15 = arith.mulf %12, %14 : vector<64x440xf32>
    %16 = arith.addf %10, %15 : vector<64x440xf32>
    %c3 = arith.constant 3 : index
    %c0_12 = arith.constant 0 : index
    %c0_13 = arith.constant 0 : index
    %17 = vector.load %arg1[%c3, %c0_12, %c0_13] : memref<8x88x440xf32, #tpu.memory_space<vmem>>, vector<1x64x440xf32>
    %18 = vector.shape_cast %17 : vector<1x64x440xf32> to vector<64x440xf32>
    %c3_14 = arith.constant 3 : index
    %c0_15 = arith.constant 0 : index
    %19 = vector.load %arg2[%c3_14, %c0_15] : memref<72x440xf32, #tpu.memory_space<vmem>>, vector<1x440xf32>
    %20 = vector.broadcast %19 : vector<1x440xf32> to vector<64x440xf32>
    %21 = arith.mulf %18, %20 : vector<64x440xf32>
    %22 = arith.addf %16, %21 : vector<64x440xf32>
    %c4 = arith.constant 4 : index
    %c0_16 = arith.constant 0 : index
    %c0_17 = arith.constant 0 : index
    %23 = vector.load %arg1[%c4, %c0_16, %c0_17] : memref<8x88x440xf32, #tpu.memory_space<vmem>>, vector<1x64x440xf32>
    %24 = vector.shape_cast %23 : vector<1x64x440xf32> to vector<64x440xf32>
    %c4_18 = arith.constant 4 : index
    %c0_19 = arith.constant 0 : index
    %25 = vector.load %arg2[%c4_18, %c0_19] : memref<72x440xf32, #tpu.memory_space<vmem>>, vector<1x440xf32>
    %26 = vector.broadcast %25 : vector<1x440xf32> to vector<64x440xf32>
    %27 = arith.mulf %24, %26 : vector<64x440xf32>
    %28 = arith.addf %22, %27 : vector<64x440xf32>
    %c5 = arith.constant 5 : index
    %c0_20 = arith.constant 0 : index
    %c0_21 = arith.constant 0 : index
    %29 = vector.load %arg1[%c5, %c0_20, %c0_21] : memref<8x88x440xf32, #tpu.memory_space<vmem>>, vector<1x64x440xf32>
    %30 = vector.shape_cast %29 : vector<1x64x440xf32> to vector<64x440xf32>
    %c5_22 = arith.constant 5 : index
    %c0_23 = arith.constant 0 : index
    %31 = vector.load %arg2[%c5_22, %c0_23] : memref<72x440xf32, #tpu.memory_space<vmem>>, vector<1x440xf32>
    %32 = vector.broadcast %31 : vector<1x440xf32> to vector<64x440xf32>
    %33 = arith.mulf %30, %32 : vector<64x440xf32>
    %34 = arith.addf %28, %33 : vector<64x440xf32>
    %c6 = arith.constant 6 : index
    %c0_24 = arith.constant 0 : index
    %c0_25 = arith.constant 0 : index
    %35 = vector.load %arg1[%c6, %c0_24, %c0_25] : memref<8x88x440xf32, #tpu.memory_space<vmem>>, vector<1x64x440xf32>
    %36 = vector.shape_cast %35 : vector<1x64x440xf32> to vector<64x440xf32>
    %c6_26 = arith.constant 6 : index
    %c0_27 = arith.constant 0 : index
    %37 = vector.load %arg2[%c6_26, %c0_27] : memref<72x440xf32, #tpu.memory_space<vmem>>, vector<1x440xf32>
    %38 = vector.broadcast %37 : vector<1x440xf32> to vector<64x440xf32>
    %39 = arith.mulf %36, %38 : vector<64x440xf32>
    %40 = arith.addf %34, %39 : vector<64x440xf32>
    %c7 = arith.constant 7 : index
    %c0_28 = arith.constant 0 : index
    %c0_29 = arith.constant 0 : index
    %41 = vector.load %arg1[%c7, %c0_28, %c0_29] : memref<8x88x440xf32, #tpu.memory_space<vmem>>, vector<1x64x440xf32>
    %42 = vector.shape_cast %41 : vector<1x64x440xf32> to vector<64x440xf32>
    %c7_30 = arith.constant 7 : index
    %c0_31 = arith.constant 0 : index
    %43 = vector.load %arg2[%c7_30, %c0_31] : memref<72x440xf32, #tpu.memory_space<vmem>>, vector<1x440xf32>
    %44 = vector.broadcast %43 : vector<1x440xf32> to vector<64x440xf32>
    %45 = arith.mulf %42, %44 : vector<64x440xf32>
    %46 = arith.addf %40, %45 : vector<64x440xf32>
    %c0_32 = arith.constant 0 : index
    %c1_33 = arith.constant 1 : index
    %c0_34 = arith.constant 0 : index
    %47 = vector.load %arg1[%c0_32, %c1_33, %c0_34] : memref<8x88x440xf32, #tpu.memory_space<vmem>>, vector<1x64x440xf32>
    %48 = vector.shape_cast %47 : vector<1x64x440xf32> to vector<64x440xf32>
    %c8 = arith.constant 8 : index
    %c0_35 = arith.constant 0 : index
    %49 = vector.load %arg2[%c8, %c0_35] : memref<72x440xf32, #tpu.memory_space<vmem>>, vector<1x440xf32>
    %50 = vector.broadcast %49 : vector<1x440xf32> to vector<64x440xf32>
    %51 = arith.mulf %48, %50 : vector<64x440xf32>
    %52 = arith.addf %46, %51 : vector<64x440xf32>
    %c1_36 = arith.constant 1 : index
    %c1_37 = arith.constant 1 : index
    %c0_38 = arith.constant 0 : index
    %53 = vector.load %arg1[%c1_36, %c1_37, %c0_38] : memref<8x88x440xf32, #tpu.memory_space<vmem>>, vector<1x64x440xf32>
    %54 = vector.shape_cast %53 : vector<1x64x440xf32> to vector<64x440xf32>
    %c9 = arith.constant 9 : index
    %c0_39 = arith.constant 0 : index
    %55 = vector.load %arg2[%c9, %c0_39] : memref<72x440xf32, #tpu.memory_space<vmem>>, vector<1x440xf32>
    %56 = vector.broadcast %55 : vector<1x440xf32> to vector<64x440xf32>
    %57 = arith.mulf %54, %56 : vector<64x440xf32>
    %58 = arith.addf %52, %57 : vector<64x440xf32>
    %c2_40 = arith.constant 2 : index
    %c1_41 = arith.constant 1 : index
    %c0_42 = arith.constant 0 : index
    %59 = vector.load %arg1[%c2_40, %c1_41, %c0_42] : memref<8x88x440xf32, #tpu.memory_space<vmem>>, vector<1x64x440xf32>
    %60 = vector.shape_cast %59 : vector<1x64x440xf32> to vector<64x440xf32>
    %c10 = arith.constant 10 : index
    %c0_43 = arith.constant 0 : index
    %61 = vector.load %arg2[%c10, %c0_43] : memref<72x440xf32, #tpu.memory_space<vmem>>, vector<1x440xf32>
    %62 = vector.broadcast %61 : vector<1x440xf32> to vector<64x440xf32>
    %63 = arith.mulf %60, %62 : vector<64x440xf32>
    %64 = arith.addf %58, %63 : vector<64x440xf32>
    %c3_44 = arith.constant 3 : index
    %c1_45 = arith.constant 1 : index
    %c0_46 = arith.constant 0 : index
    %65 = vector.load %arg1[%c3_44, %c1_45, %c0_46] : memref<8x88x440xf32, #tpu.memory_space<vmem>>, vector<1x64x440xf32>
    %66 = vector.shape_cast %65 : vector<1x64x440xf32> to vector<64x440xf32>
    %c11 = arith.constant 11 : index
    %c0_47 = arith.constant 0 : index
    %67 = vector.load %arg2[%c11, %c0_47] : memref<72x440xf32, #tpu.memory_space<vmem>>, vector<1x440xf32>
    %68 = vector.broadcast %67 : vector<1x440xf32> to vector<64x440xf32>
    %69 = arith.mulf %66, %68 : vector<64x440xf32>
    %70 = arith.addf %64, %69 : vector<64x440xf32>
    %c4_48 = arith.constant 4 : index
    %c1_49 = arith.constant 1 : index
    %c0_50 = arith.constant 0 : index
    %71 = vector.load %arg1[%c4_48, %c1_49, %c0_50] : memref<8x88x440xf32, #tpu.memory_space<vmem>>, vector<1x64x440xf32>
    %72 = vector.shape_cast %71 : vector<1x64x440xf32> to vector<64x440xf32>
    %c12 = arith.constant 12 : index
    %c0_51 = arith.constant 0 : index
    %73 = vector.load %arg2[%c12, %c0_51] : memref<72x440xf32, #tpu.memory_space<vmem>>, vector<1x440xf32>
    %74 = vector.broadcast %73 : vector<1x440xf32> to vector<64x440xf32>
    %75 = arith.mulf %72, %74 : vector<64x440xf32>
    %76 = arith.addf %70, %75 : vector<64x440xf32>
    %c5_52 = arith.constant 5 : index
    %c1_53 = arith.constant 1 : index
    %c0_54 = arith.constant 0 : index
    %77 = vector.load %arg1[%c5_52, %c1_53, %c0_54] : memref<8x88x440xf32, #tpu.memory_space<vmem>>, vector<1x64x440xf32>
    %78 = vector.shape_cast %77 : vector<1x64x440xf32> to vector<64x440xf32>
    %c13 = arith.constant 13 : index
    %c0_55 = arith.constant 0 : index
    %79 = vector.load %arg2[%c13, %c0_55] : memref<72x440xf32, #tpu.memory_space<vmem>>, vector<1x440xf32>
    %80 = vector.broadcast %79 : vector<1x440xf32> to vector<64x440xf32>
    %81 = arith.mulf %78, %80 : vector<64x440xf32>
    %82 = arith.addf %76, %81 : vector<64x440xf32>
    %c6_56 = arith.constant 6 : index
    %c1_57 = arith.constant 1 : index
    %c0_58 = arith.constant 0 : index
    %83 = vector.load %arg1[%c6_56, %c1_57, %c0_58] : memref<8x88x440xf32, #tpu.memory_space<vmem>>, vector<1x64x440xf32>
    %84 = vector.shape_cast %83 : vector<1x64x440xf32> to vector<64x440xf32>
    %c14 = arith.constant 14 : index
    %c0_59 = arith.constant 0 : index
    %85 = vector.load %arg2[%c14, %c0_59] : memref<72x440xf32, #tpu.memory_space<vmem>>, vector<1x440xf32>
    %86 = vector.broadcast %85 : vector<1x440xf32> to vector<64x440xf32>
    %87 = arith.mulf %84, %86 : vector<64x440xf32>
    %88 = arith.addf %82, %87 : vector<64x440xf32>
    %c7_60 = arith.constant 7 : index
    %c1_61 = arith.constant 1 : index
    %c0_62 = arith.constant 0 : index
    %89 = vector.load %arg1[%c7_60, %c1_61, %c0_62] : memref<8x88x440xf32, #tpu.memory_space<vmem>>, vector<1x64x440xf32>
    %90 = vector.shape_cast %89 : vector<1x64x440xf32> to vector<64x440xf32>
    %c15 = arith.constant 15 : index
    %c0_63 = arith.constant 0 : index
    %91 = vector.load %arg2[%c15, %c0_63] : memref<72x440xf32, #tpu.memory_space<vmem>>, vector<1x440xf32>
    %92 = vector.broadcast %91 : vector<1x440xf32> to vector<64x440xf32>
    %93 = arith.mulf %90, %92 : vector<64x440xf32>
    %94 = arith.addf %88, %93 : vector<64x440xf32>
    %c0_64 = arith.constant 0 : index
    %c2_65 = arith.constant 2 : index
    %c0_66 = arith.constant 0 : index
    %95 = vector.load %arg1[%c0_64, %c2_65, %c0_66] : memref<8x88x440xf32, #tpu.memory_space<vmem>>, vector<1x64x440xf32>
    %96 = vector.shape_cast %95 : vector<1x64x440xf32> to vector<64x440xf32>
    %c16 = arith.constant 16 : index
    %c0_67 = arith.constant 0 : index
    %97 = vector.load %arg2[%c16, %c0_67] : memref<72x440xf32, #tpu.memory_space<vmem>>, vector<1x440xf32>
    %98 = vector.broadcast %97 : vector<1x440xf32> to vector<64x440xf32>
    %99 = arith.mulf %96, %98 : vector<64x440xf32>
    %100 = arith.addf %94, %99 : vector<64x440xf32>
    %c1_68 = arith.constant 1 : index
    %c2_69 = arith.constant 2 : index
    %c0_70 = arith.constant 0 : index
    %101 = vector.load %arg1[%c1_68, %c2_69, %c0_70] : memref<8x88x440xf32, #tpu.memory_space<vmem>>, vector<1x64x440xf32>
    %102 = vector.shape_cast %101 : vector<1x64x440xf32> to vector<64x440xf32>
    %c17 = arith.constant 17 : index
    %c0_71 = arith.constant 0 : index
    %103 = vector.load %arg2[%c17, %c0_71] : memref<72x440xf32, #tpu.memory_space<vmem>>, vector<1x440xf32>
    %104 = vector.broadcast %103 : vector<1x440xf32> to vector<64x440xf32>
    %105 = arith.mulf %102, %104 : vector<64x440xf32>
    %106 = arith.addf %100, %105 : vector<64x440xf32>
    %c2_72 = arith.constant 2 : index
    %c2_73 = arith.constant 2 : index
    %c0_74 = arith.constant 0 : index
    %107 = vector.load %arg1[%c2_72, %c2_73, %c0_74] : memref<8x88x440xf32, #tpu.memory_space<vmem>>, vector<1x64x440xf32>
    %108 = vector.shape_cast %107 : vector<1x64x440xf32> to vector<64x440xf32>
    %c18 = arith.constant 18 : index
    %c0_75 = arith.constant 0 : index
    %109 = vector.load %arg2[%c18, %c0_75] : memref<72x440xf32, #tpu.memory_space<vmem>>, vector<1x440xf32>
    %110 = vector.broadcast %109 : vector<1x440xf32> to vector<64x440xf32>
    %111 = arith.mulf %108, %110 : vector<64x440xf32>
    %112 = arith.addf %106, %111 : vector<64x440xf32>
    %c3_76 = arith.constant 3 : index
    %c2_77 = arith.constant 2 : index
    %c0_78 = arith.constant 0 : index
    %113 = vector.load %arg1[%c3_76, %c2_77, %c0_78] : memref<8x88x440xf32, #tpu.memory_space<vmem>>, vector<1x64x440xf32>
    %114 = vector.shape_cast %113 : vector<1x64x440xf32> to vector<64x440xf32>
    %c19 = arith.constant 19 : index
    %c0_79 = arith.constant 0 : index
    %115 = vector.load %arg2[%c19, %c0_79] : memref<72x440xf32, #tpu.memory_space<vmem>>, vector<1x440xf32>
    %116 = vector.broadcast %115 : vector<1x440xf32> to vector<64x440xf32>
    %117 = arith.mulf %114, %116 : vector<64x440xf32>
    %118 = arith.addf %112, %117 : vector<64x440xf32>
    %c4_80 = arith.constant 4 : index
    %c2_81 = arith.constant 2 : index
    %c0_82 = arith.constant 0 : index
    %119 = vector.load %arg1[%c4_80, %c2_81, %c0_82] : memref<8x88x440xf32, #tpu.memory_space<vmem>>, vector<1x64x440xf32>
    %120 = vector.shape_cast %119 : vector<1x64x440xf32> to vector<64x440xf32>
    %c20 = arith.constant 20 : index
    %c0_83 = arith.constant 0 : index
    %121 = vector.load %arg2[%c20, %c0_83] : memref<72x440xf32, #tpu.memory_space<vmem>>, vector<1x440xf32>
    %122 = vector.broadcast %121 : vector<1x440xf32> to vector<64x440xf32>
    %123 = arith.mulf %120, %122 : vector<64x440xf32>
    %124 = arith.addf %118, %123 : vector<64x440xf32>
    %c5_84 = arith.constant 5 : index
    %c2_85 = arith.constant 2 : index
    %c0_86 = arith.constant 0 : index
    %125 = vector.load %arg1[%c5_84, %c2_85, %c0_86] : memref<8x88x440xf32, #tpu.memory_space<vmem>>, vector<1x64x440xf32>
    %126 = vector.shape_cast %125 : vector<1x64x440xf32> to vector<64x440xf32>
    %c21 = arith.constant 21 : index
    %c0_87 = arith.constant 0 : index
    %127 = vector.load %arg2[%c21, %c0_87] : memref<72x440xf32, #tpu.memory_space<vmem>>, vector<1x440xf32>
    %128 = vector.broadcast %127 : vector<1x440xf32> to vector<64x440xf32>
    %129 = arith.mulf %126, %128 : vector<64x440xf32>
    %130 = arith.addf %124, %129 : vector<64x440xf32>
    %c6_88 = arith.constant 6 : index
    %c2_89 = arith.constant 2 : index
    %c0_90 = arith.constant 0 : index
    %131 = vector.load %arg1[%c6_88, %c2_89, %c0_90] : memref<8x88x440xf32, #tpu.memory_space<vmem>>, vector<1x64x440xf32>
    %132 = vector.shape_cast %131 : vector<1x64x440xf32> to vector<64x440xf32>
    %c22 = arith.constant 22 : index
    %c0_91 = arith.constant 0 : index
    %133 = vector.load %arg2[%c22, %c0_91] : memref<72x440xf32, #tpu.memory_space<vmem>>, vector<1x440xf32>
    %134 = vector.broadcast %133 : vector<1x440xf32> to vector<64x440xf32>
    %135 = arith.mulf %132, %134 : vector<64x440xf32>
    %136 = arith.addf %130, %135 : vector<64x440xf32>
    %c7_92 = arith.constant 7 : index
    %c2_93 = arith.constant 2 : index
    %c0_94 = arith.constant 0 : index
    %137 = vector.load %arg1[%c7_92, %c2_93, %c0_94] : memref<8x88x440xf32, #tpu.memory_space<vmem>>, vector<1x64x440xf32>
    %138 = vector.shape_cast %137 : vector<1x64x440xf32> to vector<64x440xf32>
    %c23 = arith.constant 23 : index
    %c0_95 = arith.constant 0 : index
    %139 = vector.load %arg2[%c23, %c0_95] : memref<72x440xf32, #tpu.memory_space<vmem>>, vector<1x440xf32>
    %140 = vector.broadcast %139 : vector<1x440xf32> to vector<64x440xf32>
    %141 = arith.mulf %138, %140 : vector<64x440xf32>
    %142 = arith.addf %136, %141 : vector<64x440xf32>
    %c0_96 = arith.constant 0 : index
    %c9_97 = arith.constant 9 : index
    %c0_98 = arith.constant 0 : index
    %143 = vector.load %arg1[%c0_96, %c9_97, %c0_98] : memref<8x88x440xf32, #tpu.memory_space<vmem>>, vector<1x64x440xf32>
    %144 = vector.shape_cast %143 : vector<1x64x440xf32> to vector<64x440xf32>
    %c24 = arith.constant 24 : index
    %c0_99 = arith.constant 0 : index
    %145 = vector.load %arg2[%c24, %c0_99] : memref<72x440xf32, #tpu.memory_space<vmem>>, vector<1x440xf32>
    %146 = vector.broadcast %145 : vector<1x440xf32> to vector<64x440xf32>
    %147 = arith.mulf %144, %146 : vector<64x440xf32>
    %148 = arith.addf %142, %147 : vector<64x440xf32>
    %c1_100 = arith.constant 1 : index
    %c9_101 = arith.constant 9 : index
    %c0_102 = arith.constant 0 : index
    %149 = vector.load %arg1[%c1_100, %c9_101, %c0_102] : memref<8x88x440xf32, #tpu.memory_space<vmem>>, vector<1x64x440xf32>
    %150 = vector.shape_cast %149 : vector<1x64x440xf32> to vector<64x440xf32>
    %c25 = arith.constant 25 : index
    %c0_103 = arith.constant 0 : index
    %151 = vector.load %arg2[%c25, %c0_103] : memref<72x440xf32, #tpu.memory_space<vmem>>, vector<1x440xf32>
    %152 = vector.broadcast %151 : vector<1x440xf32> to vector<64x440xf32>
    %153 = arith.mulf %150, %152 : vector<64x440xf32>
    %154 = arith.addf %148, %153 : vector<64x440xf32>
    %c2_104 = arith.constant 2 : index
    %c9_105 = arith.constant 9 : index
    %c0_106 = arith.constant 0 : index
    %155 = vector.load %arg1[%c2_104, %c9_105, %c0_106] : memref<8x88x440xf32, #tpu.memory_space<vmem>>, vector<1x64x440xf32>
    %156 = vector.shape_cast %155 : vector<1x64x440xf32> to vector<64x440xf32>
    %c26 = arith.constant 26 : index
    %c0_107 = arith.constant 0 : index
    %157 = vector.load %arg2[%c26, %c0_107] : memref<72x440xf32, #tpu.memory_space<vmem>>, vector<1x440xf32>
    %158 = vector.broadcast %157 : vector<1x440xf32> to vector<64x440xf32>
    %159 = arith.mulf %156, %158 : vector<64x440xf32>
    %160 = arith.addf %154, %159 : vector<64x440xf32>
    %c3_108 = arith.constant 3 : index
    %c9_109 = arith.constant 9 : index
    %c0_110 = arith.constant 0 : index
    %161 = vector.load %arg1[%c3_108, %c9_109, %c0_110] : memref<8x88x440xf32, #tpu.memory_space<vmem>>, vector<1x64x440xf32>
    %162 = vector.shape_cast %161 : vector<1x64x440xf32> to vector<64x440xf32>
    %c27 = arith.constant 27 : index
    %c0_111 = arith.constant 0 : index
    %163 = vector.load %arg2[%c27, %c0_111] : memref<72x440xf32, #tpu.memory_space<vmem>>, vector<1x440xf32>
    %164 = vector.broadcast %163 : vector<1x440xf32> to vector<64x440xf32>
    %165 = arith.mulf %162, %164 : vector<64x440xf32>
    %166 = arith.addf %160, %165 : vector<64x440xf32>
    %c4_112 = arith.constant 4 : index
    %c9_113 = arith.constant 9 : index
    %c0_114 = arith.constant 0 : index
    %167 = vector.load %arg1[%c4_112, %c9_113, %c0_114] : memref<8x88x440xf32, #tpu.memory_space<vmem>>, vector<1x64x440xf32>
    %168 = vector.shape_cast %167 : vector<1x64x440xf32> to vector<64x440xf32>
    %c28 = arith.constant 28 : index
    %c0_115 = arith.constant 0 : index
    %169 = vector.load %arg2[%c28, %c0_115] : memref<72x440xf32, #tpu.memory_space<vmem>>, vector<1x440xf32>
    %170 = vector.broadcast %169 : vector<1x440xf32> to vector<64x440xf32>
    %171 = arith.mulf %168, %170 : vector<64x440xf32>
    %172 = arith.addf %166, %171 : vector<64x440xf32>
    %c5_116 = arith.constant 5 : index
    %c9_117 = arith.constant 9 : index
    %c0_118 = arith.constant 0 : index
    %173 = vector.load %arg1[%c5_116, %c9_117, %c0_118] : memref<8x88x440xf32, #tpu.memory_space<vmem>>, vector<1x64x440xf32>
    %174 = vector.shape_cast %173 : vector<1x64x440xf32> to vector<64x440xf32>
    %c29 = arith.constant 29 : index
    %c0_119 = arith.constant 0 : index
    %175 = vector.load %arg2[%c29, %c0_119] : memref<72x440xf32, #tpu.memory_space<vmem>>, vector<1x440xf32>
    %176 = vector.broadcast %175 : vector<1x440xf32> to vector<64x440xf32>
    %177 = arith.mulf %174, %176 : vector<64x440xf32>
    %178 = arith.addf %172, %177 : vector<64x440xf32>
    %c6_120 = arith.constant 6 : index
    %c9_121 = arith.constant 9 : index
    %c0_122 = arith.constant 0 : index
    %179 = vector.load %arg1[%c6_120, %c9_121, %c0_122] : memref<8x88x440xf32, #tpu.memory_space<vmem>>, vector<1x64x440xf32>
    %180 = vector.shape_cast %179 : vector<1x64x440xf32> to vector<64x440xf32>
    %c30 = arith.constant 30 : index
    %c0_123 = arith.constant 0 : index
    %181 = vector.load %arg2[%c30, %c0_123] : memref<72x440xf32, #tpu.memory_space<vmem>>, vector<1x440xf32>
    %182 = vector.broadcast %181 : vector<1x440xf32> to vector<64x440xf32>
    %183 = arith.mulf %180, %182 : vector<64x440xf32>
    %184 = arith.addf %178, %183 : vector<64x440xf32>
    %c7_124 = arith.constant 7 : index
    %c9_125 = arith.constant 9 : index
    %c0_126 = arith.constant 0 : index
    %185 = vector.load %arg1[%c7_124, %c9_125, %c0_126] : memref<8x88x440xf32, #tpu.memory_space<vmem>>, vector<1x64x440xf32>
    %186 = vector.shape_cast %185 : vector<1x64x440xf32> to vector<64x440xf32>
    %c31 = arith.constant 31 : index
    %c0_127 = arith.constant 0 : index
    %187 = vector.load %arg2[%c31, %c0_127] : memref<72x440xf32, #tpu.memory_space<vmem>>, vector<1x440xf32>
    %188 = vector.broadcast %187 : vector<1x440xf32> to vector<64x440xf32>
    %189 = arith.mulf %186, %188 : vector<64x440xf32>
    %190 = arith.addf %184, %189 : vector<64x440xf32>
    %c0_128 = arith.constant 0 : index
    %c10_129 = arith.constant 10 : index
    %c0_130 = arith.constant 0 : index
    %191 = vector.load %arg1[%c0_128, %c10_129, %c0_130] : memref<8x88x440xf32, #tpu.memory_space<vmem>>, vector<1x64x440xf32>
    %192 = vector.shape_cast %191 : vector<1x64x440xf32> to vector<64x440xf32>
    %c32 = arith.constant 32 : index
    %c0_131 = arith.constant 0 : index
    %193 = vector.load %arg2[%c32, %c0_131] : memref<72x440xf32, #tpu.memory_space<vmem>>, vector<1x440xf32>
    %194 = vector.broadcast %193 : vector<1x440xf32> to vector<64x440xf32>
    %195 = arith.mulf %192, %194 : vector<64x440xf32>
    %196 = arith.addf %190, %195 : vector<64x440xf32>
    %c1_132 = arith.constant 1 : index
    %c10_133 = arith.constant 10 : index
    %c0_134 = arith.constant 0 : index
    %197 = vector.load %arg1[%c1_132, %c10_133, %c0_134] : memref<8x88x440xf32, #tpu.memory_space<vmem>>, vector<1x64x440xf32>
    %198 = vector.shape_cast %197 : vector<1x64x440xf32> to vector<64x440xf32>
    %c33 = arith.constant 33 : index
    %c0_135 = arith.constant 0 : index
    %199 = vector.load %arg2[%c33, %c0_135] : memref<72x440xf32, #tpu.memory_space<vmem>>, vector<1x440xf32>
    %200 = vector.broadcast %199 : vector<1x440xf32> to vector<64x440xf32>
    %201 = arith.mulf %198, %200 : vector<64x440xf32>
    %202 = arith.addf %196, %201 : vector<64x440xf32>
    %c2_136 = arith.constant 2 : index
    %c10_137 = arith.constant 10 : index
    %c0_138 = arith.constant 0 : index
    %203 = vector.load %arg1[%c2_136, %c10_137, %c0_138] : memref<8x88x440xf32, #tpu.memory_space<vmem>>, vector<1x64x440xf32>
    %204 = vector.shape_cast %203 : vector<1x64x440xf32> to vector<64x440xf32>
    %c34 = arith.constant 34 : index
    %c0_139 = arith.constant 0 : index
    %205 = vector.load %arg2[%c34, %c0_139] : memref<72x440xf32, #tpu.memory_space<vmem>>, vector<1x440xf32>
    %206 = vector.broadcast %205 : vector<1x440xf32> to vector<64x440xf32>
    %207 = arith.mulf %204, %206 : vector<64x440xf32>
    %208 = arith.addf %202, %207 : vector<64x440xf32>
    %c3_140 = arith.constant 3 : index
    %c10_141 = arith.constant 10 : index
    %c0_142 = arith.constant 0 : index
    %209 = vector.load %arg1[%c3_140, %c10_141, %c0_142] : memref<8x88x440xf32, #tpu.memory_space<vmem>>, vector<1x64x440xf32>
    %210 = vector.shape_cast %209 : vector<1x64x440xf32> to vector<64x440xf32>
    %c35 = arith.constant 35 : index
    %c0_143 = arith.constant 0 : index
    %211 = vector.load %arg2[%c35, %c0_143] : memref<72x440xf32, #tpu.memory_space<vmem>>, vector<1x440xf32>
    %212 = vector.broadcast %211 : vector<1x440xf32> to vector<64x440xf32>
    %213 = arith.mulf %210, %212 : vector<64x440xf32>
    %214 = arith.addf %208, %213 : vector<64x440xf32>
    %c4_144 = arith.constant 4 : index
    %c10_145 = arith.constant 10 : index
    %c0_146 = arith.constant 0 : index
    %215 = vector.load %arg1[%c4_144, %c10_145, %c0_146] : memref<8x88x440xf32, #tpu.memory_space<vmem>>, vector<1x64x440xf32>
    %216 = vector.shape_cast %215 : vector<1x64x440xf32> to vector<64x440xf32>
    %c36 = arith.constant 36 : index
    %c0_147 = arith.constant 0 : index
    %217 = vector.load %arg2[%c36, %c0_147] : memref<72x440xf32, #tpu.memory_space<vmem>>, vector<1x440xf32>
    %218 = vector.broadcast %217 : vector<1x440xf32> to vector<64x440xf32>
    %219 = arith.mulf %216, %218 : vector<64x440xf32>
    %220 = arith.addf %214, %219 : vector<64x440xf32>
    %c5_148 = arith.constant 5 : index
    %c10_149 = arith.constant 10 : index
    %c0_150 = arith.constant 0 : index
    %221 = vector.load %arg1[%c5_148, %c10_149, %c0_150] : memref<8x88x440xf32, #tpu.memory_space<vmem>>, vector<1x64x440xf32>
    %222 = vector.shape_cast %221 : vector<1x64x440xf32> to vector<64x440xf32>
    %c37 = arith.constant 37 : index
    %c0_151 = arith.constant 0 : index
    %223 = vector.load %arg2[%c37, %c0_151] : memref<72x440xf32, #tpu.memory_space<vmem>>, vector<1x440xf32>
    %224 = vector.broadcast %223 : vector<1x440xf32> to vector<64x440xf32>
    %225 = arith.mulf %222, %224 : vector<64x440xf32>
    %226 = arith.addf %220, %225 : vector<64x440xf32>
    %c6_152 = arith.constant 6 : index
    %c10_153 = arith.constant 10 : index
    %c0_154 = arith.constant 0 : index
    %227 = vector.load %arg1[%c6_152, %c10_153, %c0_154] : memref<8x88x440xf32, #tpu.memory_space<vmem>>, vector<1x64x440xf32>
    %228 = vector.shape_cast %227 : vector<1x64x440xf32> to vector<64x440xf32>
    %c38 = arith.constant 38 : index
    %c0_155 = arith.constant 0 : index
    %229 = vector.load %arg2[%c38, %c0_155] : memref<72x440xf32, #tpu.memory_space<vmem>>, vector<1x440xf32>
    %230 = vector.broadcast %229 : vector<1x440xf32> to vector<64x440xf32>
    %231 = arith.mulf %228, %230 : vector<64x440xf32>
    %232 = arith.addf %226, %231 : vector<64x440xf32>
    %c7_156 = arith.constant 7 : index
    %c10_157 = arith.constant 10 : index
    %c0_158 = arith.constant 0 : index
    %233 = vector.load %arg1[%c7_156, %c10_157, %c0_158] : memref<8x88x440xf32, #tpu.memory_space<vmem>>, vector<1x64x440xf32>
    %234 = vector.shape_cast %233 : vector<1x64x440xf32> to vector<64x440xf32>
    %c39 = arith.constant 39 : index
    %c0_159 = arith.constant 0 : index
    %235 = vector.load %arg2[%c39, %c0_159] : memref<72x440xf32, #tpu.memory_space<vmem>>, vector<1x440xf32>
    %236 = vector.broadcast %235 : vector<1x440xf32> to vector<64x440xf32>
    %237 = arith.mulf %234, %236 : vector<64x440xf32>
    %238 = arith.addf %232, %237 : vector<64x440xf32>
    %c0_160 = arith.constant 0 : index
    %c11_161 = arith.constant 11 : index
    %c0_162 = arith.constant 0 : index
    %239 = vector.load %arg1[%c0_160, %c11_161, %c0_162] : memref<8x88x440xf32, #tpu.memory_space<vmem>>, vector<1x64x440xf32>
    %240 = vector.shape_cast %239 : vector<1x64x440xf32> to vector<64x440xf32>
    %c40 = arith.constant 40 : index
    %c0_163 = arith.constant 0 : index
    %241 = vector.load %arg2[%c40, %c0_163] : memref<72x440xf32, #tpu.memory_space<vmem>>, vector<1x440xf32>
    %242 = vector.broadcast %241 : vector<1x440xf32> to vector<64x440xf32>
    %243 = arith.mulf %240, %242 : vector<64x440xf32>
    %244 = arith.addf %238, %243 : vector<64x440xf32>
    %c1_164 = arith.constant 1 : index
    %c11_165 = arith.constant 11 : index
    %c0_166 = arith.constant 0 : index
    %245 = vector.load %arg1[%c1_164, %c11_165, %c0_166] : memref<8x88x440xf32, #tpu.memory_space<vmem>>, vector<1x64x440xf32>
    %246 = vector.shape_cast %245 : vector<1x64x440xf32> to vector<64x440xf32>
    %c41 = arith.constant 41 : index
    %c0_167 = arith.constant 0 : index
    %247 = vector.load %arg2[%c41, %c0_167] : memref<72x440xf32, #tpu.memory_space<vmem>>, vector<1x440xf32>
    %248 = vector.broadcast %247 : vector<1x440xf32> to vector<64x440xf32>
    %249 = arith.mulf %246, %248 : vector<64x440xf32>
    %250 = arith.addf %244, %249 : vector<64x440xf32>
    %c2_168 = arith.constant 2 : index
    %c11_169 = arith.constant 11 : index
    %c0_170 = arith.constant 0 : index
    %251 = vector.load %arg1[%c2_168, %c11_169, %c0_170] : memref<8x88x440xf32, #tpu.memory_space<vmem>>, vector<1x64x440xf32>
    %252 = vector.shape_cast %251 : vector<1x64x440xf32> to vector<64x440xf32>
    %c42 = arith.constant 42 : index
    %c0_171 = arith.constant 0 : index
    %253 = vector.load %arg2[%c42, %c0_171] : memref<72x440xf32, #tpu.memory_space<vmem>>, vector<1x440xf32>
    %254 = vector.broadcast %253 : vector<1x440xf32> to vector<64x440xf32>
    %255 = arith.mulf %252, %254 : vector<64x440xf32>
    %256 = arith.addf %250, %255 : vector<64x440xf32>
    %c3_172 = arith.constant 3 : index
    %c11_173 = arith.constant 11 : index
    %c0_174 = arith.constant 0 : index
    %257 = vector.load %arg1[%c3_172, %c11_173, %c0_174] : memref<8x88x440xf32, #tpu.memory_space<vmem>>, vector<1x64x440xf32>
    %258 = vector.shape_cast %257 : vector<1x64x440xf32> to vector<64x440xf32>
    %c43 = arith.constant 43 : index
    %c0_175 = arith.constant 0 : index
    %259 = vector.load %arg2[%c43, %c0_175] : memref<72x440xf32, #tpu.memory_space<vmem>>, vector<1x440xf32>
    %260 = vector.broadcast %259 : vector<1x440xf32> to vector<64x440xf32>
    %261 = arith.mulf %258, %260 : vector<64x440xf32>
    %262 = arith.addf %256, %261 : vector<64x440xf32>
    %c4_176 = arith.constant 4 : index
    %c11_177 = arith.constant 11 : index
    %c0_178 = arith.constant 0 : index
    %263 = vector.load %arg1[%c4_176, %c11_177, %c0_178] : memref<8x88x440xf32, #tpu.memory_space<vmem>>, vector<1x64x440xf32>
    %264 = vector.shape_cast %263 : vector<1x64x440xf32> to vector<64x440xf32>
    %c44 = arith.constant 44 : index
    %c0_179 = arith.constant 0 : index
    %265 = vector.load %arg2[%c44, %c0_179] : memref<72x440xf32, #tpu.memory_space<vmem>>, vector<1x440xf32>
    %266 = vector.broadcast %265 : vector<1x440xf32> to vector<64x440xf32>
    %267 = arith.mulf %264, %266 : vector<64x440xf32>
    %268 = arith.addf %262, %267 : vector<64x440xf32>
    %c5_180 = arith.constant 5 : index
    %c11_181 = arith.constant 11 : index
    %c0_182 = arith.constant 0 : index
    %269 = vector.load %arg1[%c5_180, %c11_181, %c0_182] : memref<8x88x440xf32, #tpu.memory_space<vmem>>, vector<1x64x440xf32>
    %270 = vector.shape_cast %269 : vector<1x64x440xf32> to vector<64x440xf32>
    %c45 = arith.constant 45 : index
    %c0_183 = arith.constant 0 : index
    %271 = vector.load %arg2[%c45, %c0_183] : memref<72x440xf32, #tpu.memory_space<vmem>>, vector<1x440xf32>
    %272 = vector.broadcast %271 : vector<1x440xf32> to vector<64x440xf32>
    %273 = arith.mulf %270, %272 : vector<64x440xf32>
    %274 = arith.addf %268, %273 : vector<64x440xf32>
    %c6_184 = arith.constant 6 : index
    %c11_185 = arith.constant 11 : index
    %c0_186 = arith.constant 0 : index
    %275 = vector.load %arg1[%c6_184, %c11_185, %c0_186] : memref<8x88x440xf32, #tpu.memory_space<vmem>>, vector<1x64x440xf32>
    %276 = vector.shape_cast %275 : vector<1x64x440xf32> to vector<64x440xf32>
    %c46 = arith.constant 46 : index
    %c0_187 = arith.constant 0 : index
    %277 = vector.load %arg2[%c46, %c0_187] : memref<72x440xf32, #tpu.memory_space<vmem>>, vector<1x440xf32>
    %278 = vector.broadcast %277 : vector<1x440xf32> to vector<64x440xf32>
    %279 = arith.mulf %276, %278 : vector<64x440xf32>
    %280 = arith.addf %274, %279 : vector<64x440xf32>
    %c7_188 = arith.constant 7 : index
    %c11_189 = arith.constant 11 : index
    %c0_190 = arith.constant 0 : index
    %281 = vector.load %arg1[%c7_188, %c11_189, %c0_190] : memref<8x88x440xf32, #tpu.memory_space<vmem>>, vector<1x64x440xf32>
    %282 = vector.shape_cast %281 : vector<1x64x440xf32> to vector<64x440xf32>
    %c47 = arith.constant 47 : index
    %c0_191 = arith.constant 0 : index
    %283 = vector.load %arg2[%c47, %c0_191] : memref<72x440xf32, #tpu.memory_space<vmem>>, vector<1x440xf32>
    %284 = vector.broadcast %283 : vector<1x440xf32> to vector<64x440xf32>
    %285 = arith.mulf %282, %284 : vector<64x440xf32>
    %286 = arith.addf %280, %285 : vector<64x440xf32>
    %c0_192 = arith.constant 0 : index
    %c18_193 = arith.constant 18 : index
    %c0_194 = arith.constant 0 : index
    %287 = vector.load %arg1[%c0_192, %c18_193, %c0_194] : memref<8x88x440xf32, #tpu.memory_space<vmem>>, vector<1x64x440xf32>
    %288 = vector.shape_cast %287 : vector<1x64x440xf32> to vector<64x440xf32>
    %c48 = arith.constant 48 : index
    %c0_195 = arith.constant 0 : index
    %289 = vector.load %arg2[%c48, %c0_195] : memref<72x440xf32, #tpu.memory_space<vmem>>, vector<1x440xf32>
    %290 = vector.broadcast %289 : vector<1x440xf32> to vector<64x440xf32>
    %291 = arith.mulf %288, %290 : vector<64x440xf32>
    %292 = arith.addf %286, %291 : vector<64x440xf32>
    %c1_196 = arith.constant 1 : index
    %c18_197 = arith.constant 18 : index
    %c0_198 = arith.constant 0 : index
    %293 = vector.load %arg1[%c1_196, %c18_197, %c0_198] : memref<8x88x440xf32, #tpu.memory_space<vmem>>, vector<1x64x440xf32>
    %294 = vector.shape_cast %293 : vector<1x64x440xf32> to vector<64x440xf32>
    %c49 = arith.constant 49 : index
    %c0_199 = arith.constant 0 : index
    %295 = vector.load %arg2[%c49, %c0_199] : memref<72x440xf32, #tpu.memory_space<vmem>>, vector<1x440xf32>
    %296 = vector.broadcast %295 : vector<1x440xf32> to vector<64x440xf32>
    %297 = arith.mulf %294, %296 : vector<64x440xf32>
    %298 = arith.addf %292, %297 : vector<64x440xf32>
    %c2_200 = arith.constant 2 : index
    %c18_201 = arith.constant 18 : index
    %c0_202 = arith.constant 0 : index
    %299 = vector.load %arg1[%c2_200, %c18_201, %c0_202] : memref<8x88x440xf32, #tpu.memory_space<vmem>>, vector<1x64x440xf32>
    %300 = vector.shape_cast %299 : vector<1x64x440xf32> to vector<64x440xf32>
    %c50 = arith.constant 50 : index
    %c0_203 = arith.constant 0 : index
    %301 = vector.load %arg2[%c50, %c0_203] : memref<72x440xf32, #tpu.memory_space<vmem>>, vector<1x440xf32>
    %302 = vector.broadcast %301 : vector<1x440xf32> to vector<64x440xf32>
    %303 = arith.mulf %300, %302 : vector<64x440xf32>
    %304 = arith.addf %298, %303 : vector<64x440xf32>
    %c3_204 = arith.constant 3 : index
    %c18_205 = arith.constant 18 : index
    %c0_206 = arith.constant 0 : index
    %305 = vector.load %arg1[%c3_204, %c18_205, %c0_206] : memref<8x88x440xf32, #tpu.memory_space<vmem>>, vector<1x64x440xf32>
    %306 = vector.shape_cast %305 : vector<1x64x440xf32> to vector<64x440xf32>
    %c51 = arith.constant 51 : index
    %c0_207 = arith.constant 0 : index
    %307 = vector.load %arg2[%c51, %c0_207] : memref<72x440xf32, #tpu.memory_space<vmem>>, vector<1x440xf32>
    %308 = vector.broadcast %307 : vector<1x440xf32> to vector<64x440xf32>
    %309 = arith.mulf %306, %308 : vector<64x440xf32>
    %310 = arith.addf %304, %309 : vector<64x440xf32>
    %c4_208 = arith.constant 4 : index
    %c18_209 = arith.constant 18 : index
    %c0_210 = arith.constant 0 : index
    %311 = vector.load %arg1[%c4_208, %c18_209, %c0_210] : memref<8x88x440xf32, #tpu.memory_space<vmem>>, vector<1x64x440xf32>
    %312 = vector.shape_cast %311 : vector<1x64x440xf32> to vector<64x440xf32>
    %c52 = arith.constant 52 : index
    %c0_211 = arith.constant 0 : index
    %313 = vector.load %arg2[%c52, %c0_211] : memref<72x440xf32, #tpu.memory_space<vmem>>, vector<1x440xf32>
    %314 = vector.broadcast %313 : vector<1x440xf32> to vector<64x440xf32>
    %315 = arith.mulf %312, %314 : vector<64x440xf32>
    %316 = arith.addf %310, %315 : vector<64x440xf32>
    %c5_212 = arith.constant 5 : index
    %c18_213 = arith.constant 18 : index
    %c0_214 = arith.constant 0 : index
    %317 = vector.load %arg1[%c5_212, %c18_213, %c0_214] : memref<8x88x440xf32, #tpu.memory_space<vmem>>, vector<1x64x440xf32>
    %318 = vector.shape_cast %317 : vector<1x64x440xf32> to vector<64x440xf32>
    %c53 = arith.constant 53 : index
    %c0_215 = arith.constant 0 : index
    %319 = vector.load %arg2[%c53, %c0_215] : memref<72x440xf32, #tpu.memory_space<vmem>>, vector<1x440xf32>
    %320 = vector.broadcast %319 : vector<1x440xf32> to vector<64x440xf32>
    %321 = arith.mulf %318, %320 : vector<64x440xf32>
    %322 = arith.addf %316, %321 : vector<64x440xf32>
    %c6_216 = arith.constant 6 : index
    %c18_217 = arith.constant 18 : index
    %c0_218 = arith.constant 0 : index
    %323 = vector.load %arg1[%c6_216, %c18_217, %c0_218] : memref<8x88x440xf32, #tpu.memory_space<vmem>>, vector<1x64x440xf32>
    %324 = vector.shape_cast %323 : vector<1x64x440xf32> to vector<64x440xf32>
    %c54 = arith.constant 54 : index
    %c0_219 = arith.constant 0 : index
    %325 = vector.load %arg2[%c54, %c0_219] : memref<72x440xf32, #tpu.memory_space<vmem>>, vector<1x440xf32>
    %326 = vector.broadcast %325 : vector<1x440xf32> to vector<64x440xf32>
    %327 = arith.mulf %324, %326 : vector<64x440xf32>
    %328 = arith.addf %322, %327 : vector<64x440xf32>
    %c7_220 = arith.constant 7 : index
    %c18_221 = arith.constant 18 : index
    %c0_222 = arith.constant 0 : index
    %329 = vector.load %arg1[%c7_220, %c18_221, %c0_222] : memref<8x88x440xf32, #tpu.memory_space<vmem>>, vector<1x64x440xf32>
    %330 = vector.shape_cast %329 : vector<1x64x440xf32> to vector<64x440xf32>
    %c55 = arith.constant 55 : index
    %c0_223 = arith.constant 0 : index
    %331 = vector.load %arg2[%c55, %c0_223] : memref<72x440xf32, #tpu.memory_space<vmem>>, vector<1x440xf32>
    %332 = vector.broadcast %331 : vector<1x440xf32> to vector<64x440xf32>
    %333 = arith.mulf %330, %332 : vector<64x440xf32>
    %334 = arith.addf %328, %333 : vector<64x440xf32>
    %c0_224 = arith.constant 0 : index
    %c19_225 = arith.constant 19 : index
    %c0_226 = arith.constant 0 : index
    %335 = vector.load %arg1[%c0_224, %c19_225, %c0_226] : memref<8x88x440xf32, #tpu.memory_space<vmem>>, vector<1x64x440xf32>
    %336 = vector.shape_cast %335 : vector<1x64x440xf32> to vector<64x440xf32>
    %c56 = arith.constant 56 : index
    %c0_227 = arith.constant 0 : index
    %337 = vector.load %arg2[%c56, %c0_227] : memref<72x440xf32, #tpu.memory_space<vmem>>, vector<1x440xf32>
    %338 = vector.broadcast %337 : vector<1x440xf32> to vector<64x440xf32>
    %339 = arith.mulf %336, %338 : vector<64x440xf32>
    %340 = arith.addf %334, %339 : vector<64x440xf32>
    %c1_228 = arith.constant 1 : index
    %c19_229 = arith.constant 19 : index
    %c0_230 = arith.constant 0 : index
    %341 = vector.load %arg1[%c1_228, %c19_229, %c0_230] : memref<8x88x440xf32, #tpu.memory_space<vmem>>, vector<1x64x440xf32>
    %342 = vector.shape_cast %341 : vector<1x64x440xf32> to vector<64x440xf32>
    %c57 = arith.constant 57 : index
    %c0_231 = arith.constant 0 : index
    %343 = vector.load %arg2[%c57, %c0_231] : memref<72x440xf32, #tpu.memory_space<vmem>>, vector<1x440xf32>
    %344 = vector.broadcast %343 : vector<1x440xf32> to vector<64x440xf32>
    %345 = arith.mulf %342, %344 : vector<64x440xf32>
    %346 = arith.addf %340, %345 : vector<64x440xf32>
    %c2_232 = arith.constant 2 : index
    %c19_233 = arith.constant 19 : index
    %c0_234 = arith.constant 0 : index
    %347 = vector.load %arg1[%c2_232, %c19_233, %c0_234] : memref<8x88x440xf32, #tpu.memory_space<vmem>>, vector<1x64x440xf32>
    %348 = vector.shape_cast %347 : vector<1x64x440xf32> to vector<64x440xf32>
    %c58 = arith.constant 58 : index
    %c0_235 = arith.constant 0 : index
    %349 = vector.load %arg2[%c58, %c0_235] : memref<72x440xf32, #tpu.memory_space<vmem>>, vector<1x440xf32>
    %350 = vector.broadcast %349 : vector<1x440xf32> to vector<64x440xf32>
    %351 = arith.mulf %348, %350 : vector<64x440xf32>
    %352 = arith.addf %346, %351 : vector<64x440xf32>
    %c3_236 = arith.constant 3 : index
    %c19_237 = arith.constant 19 : index
    %c0_238 = arith.constant 0 : index
    %353 = vector.load %arg1[%c3_236, %c19_237, %c0_238] : memref<8x88x440xf32, #tpu.memory_space<vmem>>, vector<1x64x440xf32>
    %354 = vector.shape_cast %353 : vector<1x64x440xf32> to vector<64x440xf32>
    %c59 = arith.constant 59 : index
    %c0_239 = arith.constant 0 : index
    %355 = vector.load %arg2[%c59, %c0_239] : memref<72x440xf32, #tpu.memory_space<vmem>>, vector<1x440xf32>
    %356 = vector.broadcast %355 : vector<1x440xf32> to vector<64x440xf32>
    %357 = arith.mulf %354, %356 : vector<64x440xf32>
    %358 = arith.addf %352, %357 : vector<64x440xf32>
    %c4_240 = arith.constant 4 : index
    %c19_241 = arith.constant 19 : index
    %c0_242 = arith.constant 0 : index
    %359 = vector.load %arg1[%c4_240, %c19_241, %c0_242] : memref<8x88x440xf32, #tpu.memory_space<vmem>>, vector<1x64x440xf32>
    %360 = vector.shape_cast %359 : vector<1x64x440xf32> to vector<64x440xf32>
    %c60 = arith.constant 60 : index
    %c0_243 = arith.constant 0 : index
    %361 = vector.load %arg2[%c60, %c0_243] : memref<72x440xf32, #tpu.memory_space<vmem>>, vector<1x440xf32>
    %362 = vector.broadcast %361 : vector<1x440xf32> to vector<64x440xf32>
    %363 = arith.mulf %360, %362 : vector<64x440xf32>
    %364 = arith.addf %358, %363 : vector<64x440xf32>
    %c5_244 = arith.constant 5 : index
    %c19_245 = arith.constant 19 : index
    %c0_246 = arith.constant 0 : index
    %365 = vector.load %arg1[%c5_244, %c19_245, %c0_246] : memref<8x88x440xf32, #tpu.memory_space<vmem>>, vector<1x64x440xf32>
    %366 = vector.shape_cast %365 : vector<1x64x440xf32> to vector<64x440xf32>
    %c61 = arith.constant 61 : index
    %c0_247 = arith.constant 0 : index
    %367 = vector.load %arg2[%c61, %c0_247] : memref<72x440xf32, #tpu.memory_space<vmem>>, vector<1x440xf32>
    %368 = vector.broadcast %367 : vector<1x440xf32> to vector<64x440xf32>
    %369 = arith.mulf %366, %368 : vector<64x440xf32>
    %370 = arith.addf %364, %369 : vector<64x440xf32>
    %c6_248 = arith.constant 6 : index
    %c19_249 = arith.constant 19 : index
    %c0_250 = arith.constant 0 : index
    %371 = vector.load %arg1[%c6_248, %c19_249, %c0_250] : memref<8x88x440xf32, #tpu.memory_space<vmem>>, vector<1x64x440xf32>
    %372 = vector.shape_cast %371 : vector<1x64x440xf32> to vector<64x440xf32>
    %c62 = arith.constant 62 : index
    %c0_251 = arith.constant 0 : index
    %373 = vector.load %arg2[%c62, %c0_251] : memref<72x440xf32, #tpu.memory_space<vmem>>, vector<1x440xf32>
    %374 = vector.broadcast %373 : vector<1x440xf32> to vector<64x440xf32>
    %375 = arith.mulf %372, %374 : vector<64x440xf32>
    %376 = arith.addf %370, %375 : vector<64x440xf32>
    %c7_252 = arith.constant 7 : index
    %c19_253 = arith.constant 19 : index
    %c0_254 = arith.constant 0 : index
    %377 = vector.load %arg1[%c7_252, %c19_253, %c0_254] : memref<8x88x440xf32, #tpu.memory_space<vmem>>, vector<1x64x440xf32>
    %378 = vector.shape_cast %377 : vector<1x64x440xf32> to vector<64x440xf32>
    %c63 = arith.constant 63 : index
    %c0_255 = arith.constant 0 : index
    %379 = vector.load %arg2[%c63, %c0_255] : memref<72x440xf32, #tpu.memory_space<vmem>>, vector<1x440xf32>
    %380 = vector.broadcast %379 : vector<1x440xf32> to vector<64x440xf32>
    %381 = arith.mulf %378, %380 : vector<64x440xf32>
    %382 = arith.addf %376, %381 : vector<64x440xf32>
    %c0_256 = arith.constant 0 : index
    %c20_257 = arith.constant 20 : index
    %c0_258 = arith.constant 0 : index
    %383 = vector.load %arg1[%c0_256, %c20_257, %c0_258] : memref<8x88x440xf32, #tpu.memory_space<vmem>>, vector<1x64x440xf32>
    %384 = vector.shape_cast %383 : vector<1x64x440xf32> to vector<64x440xf32>
    %c64 = arith.constant 64 : index
    %c0_259 = arith.constant 0 : index
    %385 = vector.load %arg2[%c64, %c0_259] : memref<72x440xf32, #tpu.memory_space<vmem>>, vector<1x440xf32>
    %386 = vector.broadcast %385 : vector<1x440xf32> to vector<64x440xf32>
    %387 = arith.mulf %384, %386 : vector<64x440xf32>
    %388 = arith.addf %382, %387 : vector<64x440xf32>
    %c1_260 = arith.constant 1 : index
    %c20_261 = arith.constant 20 : index
    %c0_262 = arith.constant 0 : index
    %389 = vector.load %arg1[%c1_260, %c20_261, %c0_262] : memref<8x88x440xf32, #tpu.memory_space<vmem>>, vector<1x64x440xf32>
    %390 = vector.shape_cast %389 : vector<1x64x440xf32> to vector<64x440xf32>
    %c65 = arith.constant 65 : index
    %c0_263 = arith.constant 0 : index
    %391 = vector.load %arg2[%c65, %c0_263] : memref<72x440xf32, #tpu.memory_space<vmem>>, vector<1x440xf32>
    %392 = vector.broadcast %391 : vector<1x440xf32> to vector<64x440xf32>
    %393 = arith.mulf %390, %392 : vector<64x440xf32>
    %394 = arith.addf %388, %393 : vector<64x440xf32>
    %c2_264 = arith.constant 2 : index
    %c20_265 = arith.constant 20 : index
    %c0_266 = arith.constant 0 : index
    %395 = vector.load %arg1[%c2_264, %c20_265, %c0_266] : memref<8x88x440xf32, #tpu.memory_space<vmem>>, vector<1x64x440xf32>
    %396 = vector.shape_cast %395 : vector<1x64x440xf32> to vector<64x440xf32>
    %c66 = arith.constant 66 : index
    %c0_267 = arith.constant 0 : index
    %397 = vector.load %arg2[%c66, %c0_267] : memref<72x440xf32, #tpu.memory_space<vmem>>, vector<1x440xf32>
    %398 = vector.broadcast %397 : vector<1x440xf32> to vector<64x440xf32>
    %399 = arith.mulf %396, %398 : vector<64x440xf32>
    %400 = arith.addf %394, %399 : vector<64x440xf32>
    %c3_268 = arith.constant 3 : index
    %c20_269 = arith.constant 20 : index
    %c0_270 = arith.constant 0 : index
    %401 = vector.load %arg1[%c3_268, %c20_269, %c0_270] : memref<8x88x440xf32, #tpu.memory_space<vmem>>, vector<1x64x440xf32>
    %402 = vector.shape_cast %401 : vector<1x64x440xf32> to vector<64x440xf32>
    %c67 = arith.constant 67 : index
    %c0_271 = arith.constant 0 : index
    %403 = vector.load %arg2[%c67, %c0_271] : memref<72x440xf32, #tpu.memory_space<vmem>>, vector<1x440xf32>
    %404 = vector.broadcast %403 : vector<1x440xf32> to vector<64x440xf32>
    %405 = arith.mulf %402, %404 : vector<64x440xf32>
    %406 = arith.addf %400, %405 : vector<64x440xf32>
    %c4_272 = arith.constant 4 : index
    %c20_273 = arith.constant 20 : index
    %c0_274 = arith.constant 0 : index
    %407 = vector.load %arg1[%c4_272, %c20_273, %c0_274] : memref<8x88x440xf32, #tpu.memory_space<vmem>>, vector<1x64x440xf32>
    %408 = vector.shape_cast %407 : vector<1x64x440xf32> to vector<64x440xf32>
    %c68 = arith.constant 68 : index
    %c0_275 = arith.constant 0 : index
    %409 = vector.load %arg2[%c68, %c0_275] : memref<72x440xf32, #tpu.memory_space<vmem>>, vector<1x440xf32>
    %410 = vector.broadcast %409 : vector<1x440xf32> to vector<64x440xf32>
    %411 = arith.mulf %408, %410 : vector<64x440xf32>
    %412 = arith.addf %406, %411 : vector<64x440xf32>
    %c5_276 = arith.constant 5 : index
    %c20_277 = arith.constant 20 : index
    %c0_278 = arith.constant 0 : index
    %413 = vector.load %arg1[%c5_276, %c20_277, %c0_278] : memref<8x88x440xf32, #tpu.memory_space<vmem>>, vector<1x64x440xf32>
    %414 = vector.shape_cast %413 : vector<1x64x440xf32> to vector<64x440xf32>
    %c69 = arith.constant 69 : index
    %c0_279 = arith.constant 0 : index
    %415 = vector.load %arg2[%c69, %c0_279] : memref<72x440xf32, #tpu.memory_space<vmem>>, vector<1x440xf32>
    %416 = vector.broadcast %415 : vector<1x440xf32> to vector<64x440xf32>
    %417 = arith.mulf %414, %416 : vector<64x440xf32>
    %418 = arith.addf %412, %417 : vector<64x440xf32>
    %c6_280 = arith.constant 6 : index
    %c20_281 = arith.constant 20 : index
    %c0_282 = arith.constant 0 : index
    %419 = vector.load %arg1[%c6_280, %c20_281, %c0_282] : memref<8x88x440xf32, #tpu.memory_space<vmem>>, vector<1x64x440xf32>
    %420 = vector.shape_cast %419 : vector<1x64x440xf32> to vector<64x440xf32>
    %c70 = arith.constant 70 : index
    %c0_283 = arith.constant 0 : index
    %421 = vector.load %arg2[%c70, %c0_283] : memref<72x440xf32, #tpu.memory_space<vmem>>, vector<1x440xf32>
    %422 = vector.broadcast %421 : vector<1x440xf32> to vector<64x440xf32>
    %423 = arith.mulf %420, %422 : vector<64x440xf32>
    %424 = arith.addf %418, %423 : vector<64x440xf32>
    %c7_284 = arith.constant 7 : index
    %c20_285 = arith.constant 20 : index
    %c0_286 = arith.constant 0 : index
    %425 = vector.load %arg1[%c7_284, %c20_285, %c0_286] : memref<8x88x440xf32, #tpu.memory_space<vmem>>, vector<1x64x440xf32>
    %426 = vector.shape_cast %425 : vector<1x64x440xf32> to vector<64x440xf32>
    %c71 = arith.constant 71 : index
    %c0_287 = arith.constant 0 : index
    %427 = vector.load %arg2[%c71, %c0_287] : memref<72x440xf32, #tpu.memory_space<vmem>>, vector<1x440xf32>
    %428 = vector.broadcast %427 : vector<1x440xf32> to vector<64x440xf32>
    %429 = arith.mulf %426, %428 : vector<64x440xf32>
    %430 = arith.addf %424, %429 : vector<64x440xf32>
    %c0_288 = arith.constant 0 : index
    %c0_289 = arith.constant 0 : index
    %431 = vector.load %arg3[%c0_288, %c0_289] : memref<64x440xf32, #tpu.memory_space<vmem>>, vector<64x440xf32>
    tpu.vector_store %arg3[%c0_288, %c0_289], %430 {strides = array<i32>} : memref<64x440xf32, #tpu.memory_space<vmem>>, vector<64x440xf32>,
    return
  }
  func.func @transform_0(%arg0: i32) -> (i32, i32, i32) {
    %c0_i32 = arith.constant 0 : i32
    %c0_i32_0 = arith.constant 0 : i32
    %c0_i32_1 = arith.constant 0 : i32
    %c0_i32_2 = arith.constant 0 : i32
    return %c0_i32, %c0_i32_0, %c0_i32_1 : i32, i32, i32
  }
  func.func @transform_1(%arg0: i32) -> (i32, i32) {
    %c0_i32 = arith.constant 0 : i32
    %c0_i32_0 = arith.constant 0 : i32
    %c0_i32_1 = arith.constant 0 : i32
    return %c0_i32, %c0_i32_0 : i32, i32
  }
  func.func @transform_2(%arg0: i32) -> (i32, i32) {
    %c0_i32 = arith.constant 0 : i32
    %c0_i32_0 = arith.constant 0 : i32
    %c0_i32_1 = arith.constant 0 : i32
    return %c0_i32, %c0_i32_0 : i32, i32
  }
}

</mosaic_0001>

<llo_original>
// kernel: relu_grouped_conv.1
$region0: #{relu_grouped_conv.1}
  #allocation0 [shape = 'u32[]', space=smem, size = 0x4, offset = 0x4, fixed_abs, tag = 'smem constant byte address 0x4 - core index']
  #allocation1 [shape = 'u32[144,128]{1,0:T(1,128)}', space=vmem, size = 0x12000, scoped, tag = 'internal scratch']
  %s0 = inlined_call_operand.vmem [shape: f32[8,88,440], index: 0, kind: input, shape index: {}]
  %s1 = inlined_call_operand.vmem [shape: f32[72,440], index: 1, kind: input, shape index: {}]
  %s2 = inlined_call_operand.vmem [shape: f32[64,440], index: 2, kind: output, shape index: {}]
  %s3 = sld [smem:[#allocation0]]
  $region18: #{relu_grouped_conv.1} parent=0
    _
  %s5 = ssub.s32 1, %s3
  %s6 = scalar_select 0, %s5, %s3
  // Predicated region
  $region2: #{relu_grouped_conv.1} parent=0 // pred_check
    _
  $region3: #{relu_grouped_conv.1} parent=0 // pred_check_branch
    %8 = sbr.rel (0) target = $region5
  $region4: #{relu_grouped_conv.1} parent=0 // pred_region
    _
  $region5: #{relu_grouped_conv.1} parent=0 // pred_fallthru
    _
  // Predicated region
  $region6: #{relu_grouped_conv.1} parent=0 // pred_check
    _
  $region7: #{relu_grouped_conv.1} parent=0 // pred_check_branch
    %10 = sbr.rel (0) target = $region9
  $region8: #{relu_grouped_conv.1} parent=0 // pred_region
    _
  $region9: #{relu_grouped_conv.1} parent=0 // pred_fallthru
    _
  %v11 = vld [vmem:[%s0] sm:$0xff]
  %v12 = vld [vmem:[%s0 + $0x8] sm:$0xff]
  %v13 = vld [vmem:[%s0 + $0x10] sm:$0xff]
  %v14 = vld [vmem:[%s0 + $0x18] sm:$0xff]
  %v15 = vld [vmem:[%s0 + $0x20] sm:$0xff]
  %v16 = vld [vmem:[%s0 + $0x28] sm:$0xff]
  %v17 = vld [vmem:[%s0 + $0x30] sm:$0xff]
  %v18 = vld [vmem:[%s0 + $0x38] sm:$0xff]
  %v19 = vld [vmem:[%s0 + $0x40] sm:$0xff]
  %v20 = vld [vmem:[%s0 + $0x48] sm:$0xff]
  %v21 = vld [vmem:[%s0 + $0x50] sm:$0xff]
  %v22 = vld [vmem:[%s0 + $0x58] sm:$0xff]
  %v23 = vld [vmem:[%s0 + $0x60] sm:$0xff]
  %v24 = vld [vmem:[%s0 + $0x68] sm:$0xff]
  %v25 = vld [vmem:[%s0 + $0x70] sm:$0xff]
  %v26 = vld [vmem:[%s0 + $0x78] sm:$0xff]
  %v27 = vld [vmem:[%s0 + $0x80] sm:$0xff]
  %v28 = vld [vmem:[%s0 + $0x88] sm:$0xff]
  %v29 = vld [vmem:[%s0 + $0x90] sm:$0xff]
  %v30 = vld [vmem:[%s0 + $0x98] sm:$0xff]
  %v31 = vld [vmem:[%s0 + $0xa0] sm:$0xff]
  %v32 = vld [vmem:[%s0 + $0xa8] sm:$0xff]
  %v33 = vld [vmem:[%s0 + $0xb0] sm:$0xff]
  %v34 = vld [vmem:[%s0 + $0xb8] sm:$0xff]
  %v35 = vld [vmem:[%s0 + $0xc0] sm:$0xff]
  %v36 = vld [vmem:[%s0 + $0xc8] sm:$0xff]
  %v37 = vld [vmem:[%s0 + $0xd0] sm:$0xff]
  %v38 = vld [vmem:[%s0 + $0xd8] sm:$0xff]
  %v39 = vld [vmem:[%s0 + $0xe0] sm:$0xff]
  %v40 = vld [vmem:[%s0 + $0xe8] sm:$0xff]
  %v41 = vld [vmem:[%s0 + $0xf0] sm:$0xff]
  %v42 = vld [vmem:[%s0 + $0xf8] sm:$0xff]
  %v43 = vld [vmem:[%s1] ss:$8 sm:$0xf]
  %v45 = vlaneseq
  %v46 = vshrl.u32 %v45, 7
  %v47 = vsub.s32 0, %v46
  %v48 = vrot.slane %v43, %v47
  %v49 = vlaneseq
  %v50 = vshrl.u32 %v49, 7
  %v51 = vsub.s32 1, %v50
  %v52 = vrot.slane %v43, %v51
  %v53 = vlaneseq
  %v54 = vshrl.u32 %v53, 7
  %v55 = vsub.s32 2, %v54
  %v56 = vrot.slane %v43, %v55
  %v57 = vlaneseq
  %v58 = vshrl.u32 %v57, 7
  %v59 = vsub.s32 3, %v58
  %v60 = vrot.slane %v43, %v59
  %v65 = vmul.f32 %v11, %v48
  %v66 = vmul.f32 %v12, %v52
  %v67 = vmul.f32 %v13, %v56
  %v68 = vmul.f32 %v14, %v60
  %v69 = vmul.f32 %v15, %v48
  %v70 = vmul.f32 %v16, %v52
  %v71 = vmul.f32 %v17, %v56
  %v72 = vmul.f32 %v18, %v60
  %v73 = vmul.f32 %v19, %v48
  %v74 = vmul.f32 %v20, %v52
  %v75 = vmul.f32 %v21, %v56
  %v76 = vmul.f32 %v22, %v60
  %v77 = vmul.f32 %v23, %v48
  %v78 = vmul.f32 %v24, %v52
  %v79 = vmul.f32 %v25, %v56
  %v80 = vmul.f32 %v26, %v60
  %v81 = vmul.f32 %v27, %v48
  %v82 = vmul.f32 %v28, %v52
  %v83 = vmul.f32 %v29, %v56
  %v84 = vmul.f32 %v30, %v60
  %v85 = vmul.f32 %v31, %v48
  %v86 = vmul.f32 %v32, %v52
  %v87 = vmul.f32 %v33, %v56
  %v88 = vmul.f32 %v34, %v60
  %v89 = vmul.f32 %v35, %v48
  %v90 = vmul.f32 %v36, %v52
  %v91 = vmul.f32 %v37, %v56
  %v92 = vmul.f32 %v38, %v60
  %v93 = vmul.f32 %v39, %v48
  %v94 = vmul.f32 %v40, %v52
  %v95 = vmul.f32 %v41, %v56
  %v96 = vmul.f32 %v42, %v60
  %s97 = scalar_lea.vmem %s0, 352
  %v98 = vld [vmem:[%s97] sm:$0xff]
  %v99 = vld [vmem:[%s97 + $0x8] sm:$0xff]
  %v100 = vld [vmem:[%s97 + $0x10] sm:$0xff]
  %v101 = vld [vmem:[%s97 + $0x18] sm:$0xff]
  %v102 = vld [vmem:[%s97 + $0x20] sm:$0xff]
  %v103 = vld [vmem:[%s97 + $0x28] sm:$0xff]
  %v104 = vld [vmem:[%s97 + $0x30] sm:$0xff]
  %v105 = vld [vmem:[%s97 + $0x38] sm:$0xff]
  %v106 = vld [vmem:[%s97 + $0x40] sm:$0xff]
  %v107 = vld [vmem:[%s97 + $0x48] sm:$0xff]
  %v108 = vld [vmem:[%s97 + $0x50] sm:$0xff]
  %v109 = vld [vmem:[%s97 + $0x58] sm:$0xff]
  %v110 = vld [vmem:[%s97 + $0x60] sm:$0xff]
  %v111 = vld [vmem:[%s97 + $0x68] sm:$0xff]
  %v112 = vld [vmem:[%s97 + $0x70] sm:$0xff]
  %v113 = vld [vmem:[%s97 + $0x78] sm:$0xff]
  %v114 = vld [vmem:[%s97 + $0x80] sm:$0xff]
  %v115 = vld [vmem:[%s97 + $0x88] sm:$0xff]
  %v116 = vld [vmem:[%s97 + $0x90] sm:$0xff]
  %v117 = vld [vmem:[%s97 + $0x98] sm:$0xff]
  %v118 = vld [vmem:[%s97 + $0xa0] sm:$0xff]
  %v119 = vld [vmem:[%s97 + $0xa8] sm:$0xff]
  %v120 = vld [vmem:[%s97 + $0xb0] sm:$0xff]
  %v121 = vld [vmem:[%s97 + $0xb8] sm:$0xff]
  %v122 = vld [vmem:[%s97 + $0xc0] sm:$0xff]
  %v123 = vld [vmem:[%s97 + $0xc8] sm:$0xff]
  %v124 = vld [vmem:[%s97 + $0xd0] sm:$0xff]
  %v125 = vld [vmem:[%s97 + $0xd8] sm:$0xff]
  %v126 = vld [vmem:[%s97 + $0xe0] sm:$0xff]
  %v127 = vld [vmem:[%s97 + $0xe8] sm:$0xff]
  %v128 = vld [vmem:[%s97 + $0xf0] sm:$0xff]
  %v129 = vld [vmem:[%s97 + $0xf8] sm:$0xff]
  %s130 = scalar_lea.vmem %s1, 1
  %v131 = vld [vmem:[%s130] ss:$8 sm:$0xf]
  %v133 = vlaneseq
  %v134 = vshrl.u32 %v133, 7
  %v135 = vsub.s32 0, %v134
  %v136 = vrot.slane %v131, %v135
  %v137 = vlaneseq
  %v138 = vshrl.u32 %v137, 7
  %v139 = vsub.s32 1, %v138
  %v140 = vrot.slane %v131, %v139
  %v141 = vlaneseq
  %v142 = vshrl.u32 %v141, 7
  %v143 = vsub.s32 2, %v142
  %v144 = vrot.slane %v131, %v143
  %v145 = vlaneseq
  %v146 = vshrl.u32 %v145, 7
  %v147 = vsub.s32 3, %v146
  %v148 = vrot.slane %v131, %v147
  %v153 = vmul.f32 %v98, %v136
  %v154 = vmul.f32 %v99, %v140
  %v155 = vmul.f32 %v100, %v144
  %v156 = vmul.f32 %v101, %v148
  %v157 = vmul.f32 %v102, %v136
  %v158 = vmul.f32 %v103, %v140
  %v159 = vmul.f32 %v104, %v144
  %v160 = vmul.f32 %v105, %v148
  %v161 = vmul.f32 %v106, %v136
  %v162 = vmul.f32 %v107, %v140
  %v163 = vmul.f32 %v108, %v144
  %v164 = vmul.f32 %v109, %v148
  %v165 = vmul.f32 %v110, %v136
  %v166 = vmul.f32 %v111, %v140
  %v167 = vmul.f32 %v112, %v144
  %v168 = vmul.f32 %v113, %v148
  %v169 = vmul.f32 %v114, %v136
  %v170 = vmul.f32 %v115, %v140
  %v171 = vmul.f32 %v116, %v144
  %v172 = vmul.f32 %v117, %v148
  %v173 = vmul.f32 %v118, %v136
  %v174 = vmul.f32 %v119, %v140
  %v175 = vmul.f32 %v120, %v144
  %v176 = vmul.f32 %v121, %v148
  %v177 = vmul.f32 %v122, %v136
  %v178 = vmul.f32 %v123, %v140
  %v179 = vmul.f32 %v124, %v144
  %v180 = vmul.f32 %v125, %v148
  %v181 = vmul.f32 %v126, %v136
  %v182 = vmul.f32 %v127, %v140
  %v183 = vmul.f32 %v128, %v144
  %v184 = vmul.f32 %v129, %v148
  %v185 = vadd.f32 %v65, %v153
  %v186 = vadd.f32 %v66, %v154
  %v187 = vadd.f32 %v67, %v155
  %v188 = vadd.f32 %v68, %v156
  %v189 = vadd.f32 %v69, %v157
  %v190 = vadd.f32 %v70, %v158
  %v191 = vadd.f32 %v71, %v159
  %v192 = vadd.f32 %v72, %v160
  %v193 = vadd.f32 %v73, %v161
  %v194 = vadd.f32 %v74, %v162
  %v195 = vadd.f32 %v75, %v163
  %v196 = vadd.f32 %v76, %v164
  %v197 = vadd.f32 %v77, %v165
  %v198 = vadd.f32 %v78, %v166
  %v199 = vadd.f32 %v79, %v167
  %v200 = vadd.f32 %v80, %v168
  %v201 = vadd.f32 %v81, %v169
  %v202 = vadd.f32 %v82, %v170
  %v203 = vadd.f32 %v83, %v171
  %v204 = vadd.f32 %v84, %v172
  %v205 = vadd.f32 %v85, %v173
  %v206 = vadd.f32 %v86, %v174
  %v207 = vadd.f32 %v87, %v175
  %v208 = vadd.f32 %v88, %v176
  %v209 = vadd.f32 %v89, %v177
  %v210 = vadd.f32 %v90, %v178
  %v211 = vadd.f32 %v91, %v179
  %v212 = vadd.f32 %v92, %v180
  %v213 = vadd.f32 %v93, %v181
  %v214 = vadd.f32 %v94, %v182
  %v215 = vadd.f32 %v95, %v183
  %v216 = vadd.f32 %v96, %v184
  %s217 = scalar_lea.vmem %s0, 704
  %v218 = vld [vmem:[%s217] sm:$0xff]
  %v219 = vld [vmem:[%s217 + $0x8] sm:$0xff]
  %v220 = vld [vmem:[%s217 + $0x10] sm:$0xff]
  %v221 = vld [vmem:[%s217 + $0x18] sm:$0xff]
  %v222 = vld [vmem:[%s217 + $0x20] sm:$0xff]
  %v223 = vld [vmem:[%s217 + $0x28] sm:$0xff]
  %v224 = vld [vmem:[%s217 + $0x30] sm:$0xff]
  %v225 = vld [vmem:[%s217 + $0x38] sm:$0xff]
  %v226 = vld [vmem:[%s217 + $0x40] sm:$0xff]
  %v227 = vld [vmem:[%s217 + $0x48] sm:$0xff]
  %v228 = vld [vmem:[%s217 + $0x50] sm:$0xff]
  %v229 = vld [vmem:[%s217 + $0x58] sm:$0xff]
  %v230 = vld [vmem:[%s217 + $0x60] sm:$0xff]
  %v231 = vld [vmem:[%s217 + $0x68] sm:$0xff]
  %v232 = vld [vmem:[%s217 + $0x70] sm:$0xff]
  %v233 = vld [vmem:[%s217 + $0x78] sm:$0xff]
  %v234 = vld [vmem:[%s217 + $0x80] sm:$0xff]
  %v235 = vld [vmem:[%s217 + $0x88] sm:$0xff]
  %v236 = vld [vmem:[%s217 + $0x90] sm:$0xff]
  %v237 = vld [vmem:[%s217 + $0x98] sm:$0xff]
  %v238 = vld [vmem:[%s217 + $0xa0] sm:$0xff]
  %v239 = vld [vmem:[%s217 + $0xa8] sm:$0xff]
  %v240 = vld [vmem:[%s217 + $0xb0] sm:$0xff]
  %v241 = vld [vmem:[%s217 + $0xb8] sm:$0xff]
  %v242 = vld [vmem:[%s217 + $0xc0] sm:$0xff]
  %v243 = vld [vmem:[%s217 + $0xc8] sm:$0xff]
  %v244 = vld [vmem:[%s217 + $0xd0] sm:$0xff]
  %v245 = vld [vmem:[%s217 + $0xd8] sm:$0xff]
  %v246 = vld [vmem:[%s217 + $0xe0] sm:$0xff]
  %v247 = vld [vmem:[%s217 + $0xe8] sm:$0xff]
  %v248 = vld [vmem:[%s217 + $0xf0] sm:$0xff]
  %v249 = vld [vmem:[%s217 + $0xf8] sm:$0xff]
  %s250 = scalar_lea.vmem %s1, 2
  %v251 = vld [vmem:[%s250] ss:$8 sm:$0xf]
  %v253 = vlaneseq
  %v254 = vshrl.u32 %v253, 7
  %v255 = vsub.s32 0, %v254
  %v256 = vrot.slane %v251, %v255
  %v257 = vlaneseq
  %v258 = vshrl.u32 %v257, 7
  %v259 = vsub.s32 1, %v258
  %v260 = vrot.slane %v251, %v259
  %v261 = vlaneseq
  %v262 = vshrl.u32 %v261, 7
  %v263 = vsub.s32 2, %v262
  %v264 = vrot.slane %v251, %v263
  %v265 = vlaneseq
  %v266 = vshrl.u32 %v265, 7
  %v267 = vsub.s32 3, %v266
  %v268 = vrot.slane %v251, %v267
  %v273 = vmul.f32 %v218, %v256
  %v274 = vmul.f32 %v219, %v260
  %v275 = vmul.f32 %v220, %v264
  %v276 = vmul.f32 %v221, %v268
  %v277 = vmul.f32 %v222, %v256
  %v278 = vmul.f32 %v223, %v260
  %v279 = vmul.f32 %v224, %v264
  %v280 = vmul.f32 %v225, %v268
  %v281 = vmul.f32 %v226, %v256
  %v282 = vmul.f32 %v227, %v260
  %v283 = vmul.f32 %v228, %v264
  %v284 = vmul.f32 %v229, %v268
  %v285 = vmul.f32 %v230, %v256
  %v286 = vmul.f32 %v231, %v260
  %v287 = vmul.f32 %v232, %v264
  %v288 = vmul.f32 %v233, %v268
  %v289 = vmul.f32 %v234, %v256
  %v290 = vmul.f32 %v235, %v260
  %v291 = vmul.f32 %v236, %v264
  %v292 = vmul.f32 %v237, %v268
  %v293 = vmul.f32 %v238, %v256
  %v294 = vmul.f32 %v239, %v260
  %v295 = vmul.f32 %v240, %v264
  %v296 = vmul.f32 %v241, %v268
  %v297 = vmul.f32 %v242, %v256
  %v298 = vmul.f32 %v243, %v260
  %v299 = vmul.f32 %v244, %v264
  %v300 = vmul.f32 %v245, %v268
  %v301 = vmul.f32 %v246, %v256
  %v302 = vmul.f32 %v247, %v260
  %v303 = vmul.f32 %v248, %v264
  %v304 = vmul.f32 %v249, %v268
  %v305 = vadd.f32 %v185, %v273
  %v306 = vadd.f32 %v186, %v274
  %v307 = vadd.f32 %v187, %v275
  %v308 = vadd.f32 %v188, %v276
  %v309 = vadd.f32 %v189, %v277
  %v310 = vadd.f32 %v190, %v278
  %v311 = vadd.f32 %v191, %v279
  %v312 = vadd.f32 %v192, %v280
  %v313 = vadd.f32 %v193, %v281
  %v314 = vadd.f32 %v194, %v282
  %v315 = vadd.f32 %v195, %v283
  %v316 = vadd.f32 %v196, %v284
  %v317 = vadd.f32 %v197, %v285
  %v318 = vadd.f32 %v198, %v286
  %v319 = vadd.f32 %v199, %v287
  %v320 = vadd.f32 %v200, %v288
  %v321 = vadd.f32 %v201, %v289
  %v322 = vadd.f32 %v202, %v290
  %v323 = vadd.f32 %v203, %v291
  %v324 = vadd.f32 %v204, %v292
  %v325 = vadd.f32 %v205, %v293
  %v326 = vadd.f32 %v206, %v294
  %v327 = vadd.f32 %v207, %v295
  %v328 = vadd.f32 %v208, %v296
  %v329 = vadd.f32 %v209, %v297
  %v330 = vadd.f32 %v210, %v298
  %v331 = vadd.f32 %v211, %v299
  %v332 = vadd.f32 %v212, %v300
  %v333 = vadd.f32 %v213, %v301
  %v334 = vadd.f32 %v214, %v302
  %v335 = vadd.f32 %v215, %v303
  %v336 = vadd.f32 %v216, %v304
  %s337 = scalar_lea.vmem %s0, 1056
  %v338 = vld [vmem:[%s337] sm:$0xff]
  %v339 = vld [vmem:[%s337 + $0x8] sm:$0xff]
  %v340 = vld [vmem:[%s337 + $0x10] sm:$0xff]
  %v341 = vld [vmem:[%s337 + $0x18] sm:$0xff]
  %v342 = vld [vmem:[%s337 + $0x20] sm:$0xff]
  %v343 = vld [vmem:[%s337 + $0x28] sm:$0xff]
  %v344 = vld [vmem:[%s337 + $0x30] sm:$0xff]
  %v345 = vld [vmem:[%s337 + $0x38] sm:$0xff]
  %v346 = vld [vmem:[%s337 + $0x40] sm:$0xff]
  %v347 = vld [vmem:[%s337 + $0x48] sm:$0xff]
  %v348 = vld [vmem:[%s337 + $0x50] sm:$0xff]
  %v349 = vld [vmem:[%s337 + $0x58] sm:$0xff]
  %v350 = vld [vmem:[%s337 + $0x60] sm:$0xff]
  %v351 = vld [vmem:[%s337 + $0x68] sm:$0xff]
  %v352 = vld [vmem:[%s337 + $0x70] sm:$0xff]
  %v353 = vld [vmem:[%s337 + $0x78] sm:$0xff]
  %v354 = vld [vmem:[%s337 + $0x80] sm:$0xff]
  %v355 = vld [vmem:[%s337 + $0x88] sm:$0xff]
  %v356 = vld [vmem:[%s337 + $0x90] sm:$0xff]
  %v357 = vld [vmem:[%s337 + $0x98] sm:$0xff]
  %v358 = vld [vmem:[%s337 + $0xa0] sm:$0xff]
  %v359 = vld [vmem:[%s337 + $0xa8] sm:$0xff]
  %v360 = vld [vmem:[%s337 + $0xb0] sm:$0xff]
  %v361 = vld [vmem:[%s337 + $0xb8] sm:$0xff]
  %v362 = vld [vmem:[%s337 + $0xc0] sm:$0xff]
  %v363 = vld [vmem:[%s337 + $0xc8] sm:$0xff]
  %v364 = vld [vmem:[%s337 + $0xd0] sm:$0xff]
  %v365 = vld [vmem:[%s337 + $0xd8] sm:$0xff]
  %v366 = vld [vmem:[%s337 + $0xe0] sm:$0xff]
  %v367 = vld [vmem:[%s337 + $0xe8] sm:$0xff]
  %v368 = vld [vmem:[%s337 + $0xf0] sm:$0xff]
  %v369 = vld [vmem:[%s337 + $0xf8] sm:$0xff]
  %s370 = scalar_lea.vmem %s1, 3
  %v371 = vld [vmem:[%s370] ss:$8 sm:$0xf]
  %v373 = vlaneseq
  %v374 = vshrl.u32 %v373, 7
  %v375 = vsub.s32 0, %v374
  %v376 = vrot.slane %v371, %v375
  %v377 = vlaneseq
  %v378 = vshrl.u32 %v377, 7
  %v379 = vsub.s32 1, %v378
  %v380 = vrot.slane %v371, %v379
  %v381 = vlaneseq
  %v382 = vshrl.u32 %v381, 7
  %v383 = vsub.s32 2, %v382
  %v384 = vrot.slane %v371, %v383
  %v385 = vlaneseq
  %v386 = vshrl.u32 %v385, 7
  %v387 = vsub.s32 3, %v386
  %v388 = vrot.slane %v371, %v387
  %v393 = vmul.f32 %v338, %v376
  %v394 = vmul.f32 %v339, %v380
  %v395 = vmul.f32 %v340, %v384
  %v396 = vmul.f32 %v341, %v388
  %v397 = vmul.f32 %v342, %v376
  %v398 = vmul.f32 %v343, %v380
  %v399 = vmul.f32 %v344, %v384
  %v400 = vmul.f32 %v345, %v388
  %v401 = vmul.f32 %v346, %v376
  %v402 = vmul.f32 %v347, %v380
  %v403 = vmul.f32 %v348, %v384
  %v404 = vmul.f32 %v349, %v388
  %v405 = vmul.f32 %v350, %v376
  %v406 = vmul.f32 %v351, %v380
  %v407 = vmul.f32 %v352, %v384
  %v408 = vmul.f32 %v353, %v388
  %v409 = vmul.f32 %v354, %v376
  %v410 = vmul.f32 %v355, %v380
  %v411 = vmul.f32 %v356, %v384
  %v412 = vmul.f32 %v357, %v388
  %v413 = vmul.f32 %v358, %v376
  %v414 = vmul.f32 %v359, %v380
  %v415 = vmul.f32 %v360, %v384
  %v416 = vmul.f32 %v361, %v388
  %v417 = vmul.f32 %v362, %v376
  %v418 = vmul.f32 %v363, %v380
  %v419 = vmul.f32 %v364, %v384
  %v420 = vmul.f32 %v365, %v388
  %v421 = vmul.f32 %v366, %v376
  %v422 = vmul.f32 %v367, %v380
  %v423 = vmul.f32 %v368, %v384
  %v424 = vmul.f32 %v369, %v388
  %v425 = vadd.f32 %v305, %v393
  %v426 = vadd.f32 %v306, %v394
  %v427 = vadd.f32 %v307, %v395
  %v428 = vadd.f32 %v308, %v396
  %v429 = vadd.f32 %v309, %v397
  %v430 = vadd.f32 %v310, %v398
  %v431 = vadd.f32 %v311, %v399
  %v432 = vadd.f32 %v312, %v400
  %v433 = vadd.f32 %v313, %v401
  %v434 = vadd.f32 %v314, %v402
  %v435 = vadd.f32 %v315, %v403
  %v436 = vadd.f32 %v316, %v404
  %v437 = vadd.f32 %v317, %v405
  %v438 = vadd.f32 %v318, %v406
  %v439 = vadd.f32 %v319, %v407
  %v440 = vadd.f32 %v320, %v408
  %v441 = vadd.f32 %v321, %v409
  %v442 = vadd.f32 %v322, %v410
  %v443 = vadd.f32 %v323, %v411
  %v444 = vadd.f32 %v324, %v412
  %v445 = vadd.f32 %v325, %v413
  %v446 = vadd.f32 %v326, %v414
  %v447 = vadd.f32 %v327, %v415
  %v448 = vadd.f32 %v328, %v416
  %v449 = vadd.f32 %v329, %v417
  %v450 = vadd.f32 %v330, %v418
  %v451 = vadd.f32 %v331, %v419
  %v452 = vadd.f32 %v332, %v420
  %v453 = vadd.f32 %v333, %v421
  %v454 = vadd.f32 %v334, %v422
  %v455 = vadd.f32 %v335, %v423
  %v456 = vadd.f32 %v336, %v424
  %s457 = scalar_lea.vmem %s0, 1408
  %v458 = vld [vmem:[%s457] sm:$0xff]
  %v459 = vld [vmem:[%s457 + $0x8] sm:$0xff]
  %v460 = vld [vmem:[%s457 + $0x10] sm:$0xff]
  %v461 = vld [vmem:[%s457 + $0x18] sm:$0xff]
  %v462 = vld [vmem:[%s457 + $0x20] sm:$0xff]
  %v463 = vld [vmem:[%s457 + $0x28] sm:$0xff]
  %v464 = vld [vmem:[%s457 + $0x30] sm:$0xff]
  %v465 = vld [vmem:[%s457 + $0x38] sm:$0xff]
  %v466 = vld [vmem:[%s457 + $0x40] sm:$0xff]
  %v467 = vld [vmem:[%s457 + $0x48] sm:$0xff]
  %v468 = vld [vmem:[%s457 + $0x50] sm:$0xff]
  %v469 = vld [vmem:[%s457 + $0x58] sm:$0xff]
  %v470 = vld [vmem:[%s457 + $0x60] sm:$0xff]
  %v471 = vld [vmem:[%s457 + $0x68] sm:$0xff]
  %v472 = vld [vmem:[%s457 + $0x70] sm:$0xff]
  %v473 = vld [vmem:[%s457 + $0x78] sm:$0xff]
  %v474 = vld [vmem:[%s457 + $0x80] sm:$0xff]
  %v475 = vld [vmem:[%s457 + $0x88] sm:$0xff]
  %v476 = vld [vmem:[%s457 + $0x90] sm:$0xff]
  %v477 = vld [vmem:[%s457 + $0x98] sm:$0xff]
  %v478 = vld [vmem:[%s457 + $0xa0] sm:$0xff]
  %v479 = vld [vmem:[%s457 + $0xa8] sm:$0xff]
  %v480 = vld [vmem:[%s457 + $0xb0] sm:$0xff]
  %v481 = vld [vmem:[%s457 + $0xb8] sm:$0xff]
  %v482 = vld [vmem:[%s457 + $0xc0] sm:$0xff]
  %v483 = vld [vmem:[%s457 + $0xc8] sm:$0xff]
  %v484 = vld [vmem:[%s457 + $0xd0] sm:$0xff]
  %v485 = vld [vmem:[%s457 + $0xd8] sm:$0xff]
  %v486 = vld [vmem:[%s457 + $0xe0] sm:$0xff]
  %v487 = vld [vmem:[%s457 + $0xe8] sm:$0xff]
  %v488 = vld [vmem:[%s457 + $0xf0] sm:$0xff]
  %v489 = vld [vmem:[%s457 + $0xf8] sm:$0xff]
  %s490 = scalar_lea.vmem %s1, 4
  %v491 = vld [vmem:[%s490] ss:$8 sm:$0xf]
  %v493 = vlaneseq
  %v494 = vshrl.u32 %v493, 7
  %v495 = vsub.s32 0, %v494
  %v496 = vrot.slane %v491, %v495
  %v497 = vlaneseq
  %v498 = vshrl.u32 %v497, 7
  %v499 = vsub.s32 1, %v498
  %v500 = vrot.slane %v491, %v499
  %v501 = vlaneseq
  %v502 = vshrl.u32 %v501, 7
  %v503 = vsub.s32 2, %v502
  %v504 = vrot.slane %v491, %v503
  %v505 = vlaneseq
  %v506 = vshrl.u32 %v505, 7
  %v507 = vsub.s32 3, %v506
  %v508 = vrot.slane %v491, %v507
  %v513 = vmul.f32 %v458, %v496
  %v514 = vmul.f32 %v459, %v500
  %v515 = vmul.f32 %v460, %v504
  %v516 = vmul.f32 %v461, %v508
  %v517 = vmul.f32 %v462, %v496
  %v518 = vmul.f32 %v463, %v500
  %v519 = vmul.f32 %v464, %v504
  %v520 = vmul.f32 %v465, %v508
  %v521 = vmul.f32 %v466, %v496
  %v522 = vmul.f32 %v467, %v500
  %v523 = vmul.f32 %v468, %v504
  %v524 = vmul.f32 %v469, %v508
  %v525 = vmul.f32 %v470, %v496
  %v526 = vmul.f32 %v471, %v500
  %v527 = vmul.f32 %v472, %v504
  %v528 = vmul.f32 %v473, %v508
  %v529 = vmul.f32 %v474, %v496
  %v530 = vmul.f32 %v475, %v500
  %v531 = vmul.f32 %v476, %v504
  %v532 = vmul.f32 %v477, %v508
  %v533 = vmul.f32 %v478, %v496
  %v534 = vmul.f32 %v479, %v500
  %v535 = vmul.f32 %v480, %v504
  %v536 = vmul.f32 %v481, %v508
  %v537 = vmul.f32 %v482, %v496
  %v538 = vmul.f32 %v483, %v500
  %v539 = vmul.f32 %v484, %v504
  %v540 = vmul.f32 %v485, %v508
  %v541 = vmul.f32 %v486, %v496
  %v542 = vmul.f32 %v487, %v500
  %v543 = vmul.f32 %v488, %v504
  %v544 = vmul.f32 %v489, %v508
  %v545 = vadd.f32 %v425, %v513
  %v546 = vadd.f32 %v426, %v514
  %v547 = vadd.f32 %v427, %v515
  %v548 = vadd.f32 %v428, %v516
  %v549 = vadd.f32 %v429, %v517
  %v550 = vadd.f32 %v430, %v518
  %v551 = vadd.f32 %v431, %v519
  %v552 = vadd.f32 %v432, %v520
  %v553 = vadd.f32 %v433, %v521
  %v554 = vadd.f32 %v434, %v522
  %v555 = vadd.f32 %v435, %v523
  %v556 = vadd.f32 %v436, %v524
  %v557 = vadd.f32 %v437, %v525
  %v558 = vadd.f32 %v438, %v526
  %v559 = vadd.f32 %v439, %v527
  %v560 = vadd.f32 %v440, %v528
  %v561 = vadd.f32 %v441, %v529
  %v562 = vadd.f32 %v442, %v530
  %v563 = vadd.f32 %v443, %v531
  %v564 = vadd.f32 %v444, %v532
  %v565 = vadd.f32 %v445, %v533
  %v566 = vadd.f32 %v446, %v534
  %v567 = vadd.f32 %v447, %v535
  %v568 = vadd.f32 %v448, %v536
  %v569 = vadd.f32 %v449, %v537
  %v570 = vadd.f32 %v450, %v538
  %v571 = vadd.f32 %v451, %v539
  %v572 = vadd.f32 %v452, %v540
  %v573 = vadd.f32 %v453, %v541
  %v574 = vadd.f32 %v454, %v542
  %v575 = vadd.f32 %v455, %v543
  %v576 = vadd.f32 %v456, %v544
  %s577 = scalar_lea.vmem %s0, 1760
  %v578 = vld [vmem:[%s577] sm:$0xff]
  %v579 = vld [vmem:[%s577 + $0x8] sm:$0xff]
  %v580 = vld [vmem:[%s577 + $0x10] sm:$0xff]
  %v581 = vld [vmem:[%s577 + $0x18] sm:$0xff]
  %v582 = vld [vmem:[%s577 + $0x20] sm:$0xff]
  %v583 = vld [vmem:[%s577 + $0x28] sm:$0xff]
  %v584 = vld [vmem:[%s577 + $0x30] sm:$0xff]
  %v585 = vld [vmem:[%s577 + $0x38] sm:$0xff]
  %v586 = vld [vmem:[%s577 + $0x40] sm:$0xff]
  %v587 = vld [vmem:[%s577 + $0x48] sm:$0xff]
  %v588 = vld [vmem:[%s577 + $0x50] sm:$0xff]
  %v589 = vld [vmem:[%s577 + $0x58] sm:$0xff]
  %v590 = vld [vmem:[%s577 + $0x60] sm:$0xff]
  %v591 = vld [vmem:[%s577 + $0x68] sm:$0xff]
  %v592 = vld [vmem:[%s577 + $0x70] sm:$0xff]
  %v593 = vld [vmem:[%s577 + $0x78] sm:$0xff]
  %v594 = vld [vmem:[%s577 + $0x80] sm:$0xff]
  %v595 = vld [vmem:[%s577 + $0x88] sm:$0xff]
  %v596 = vld [vmem:[%s577 + $0x90] sm:$0xff]
  %v597 = vld [vmem:[%s577 + $0x98] sm:$0xff]
  %v598 = vld [vmem:[%s577 + $0xa0] sm:$0xff]
  %v599 = vld [vmem:[%s577 + $0xa8] sm:$0xff]
  %v600 = vld [vmem:[%s577 + $0xb0] sm:$0xff]
  %v601 = vld [vmem:[%s577 + $0xb8] sm:$0xff]
  %v602 = vld [vmem:[%s577 + $0xc0] sm:$0xff]
  %v603 = vld [vmem:[%s577 + $0xc8] sm:$0xff]
  %v604 = vld [vmem:[%s577 + $0xd0] sm:$0xff]
  %v605 = vld [vmem:[%s577 + $0xd8] sm:$0xff]
  %v606 = vld [vmem:[%s577 + $0xe0] sm:$0xff]
  %v607 = vld [vmem:[%s577 + $0xe8] sm:$0xff]
  %v608 = vld [vmem:[%s577 + $0xf0] sm:$0xff]
  %v609 = vld [vmem:[%s577 + $0xf8] sm:$0xff]
  %s610 = scalar_lea.vmem %s1, 5
  %v611 = vld [vmem:[%s610] ss:$8 sm:$0xf]
  %v613 = vlaneseq
  %v614 = vshrl.u32 %v613, 7
  %v615 = vsub.s32 0, %v614
  %v616 = vrot.slane %v611, %v615
  %v617 = vlaneseq
  %v618 = vshrl.u32 %v617, 7
  %v619 = vsub.s32 1, %v618
  %v620 = vrot.slane %v611, %v619
  %v621 = vlaneseq
  %v622 = vshrl.u32 %v621, 7
  %v623 = vsub.s32 2, %v622
  %v624 = vrot.slane %v611, %v623
  %v625 = vlaneseq
  %v626 = vshrl.u32 %v625, 7
  %v627 = vsub.s32 3, %v626
  %v628 = vrot.slane %v611, %v627
  %v633 = vmul.f32 %v578, %v616
  %v634 = vmul.f32 %v579, %v620
  %v635 = vmul.f32 %v580, %v624
  %v636 = vmul.f32 %v581, %v628
  %v637 = vmul.f32 %v582, %v616
  %v638 = vmul.f32 %v583, %v620
  %v639 = vmul.f32 %v584, %v624
  %v640 = vmul.f32 %v585, %v628
  %v641 = vmul.f32 %v586, %v616
  %v642 = vmul.f32 %v587, %v620
  %v643 = vmul.f32 %v588, %v624
  %v644 = vmul.f32 %v589, %v628
  %v645 = vmul.f32 %v590, %v616
  %v646 = vmul.f32 %v591, %v620
  %v647 = vmul.f32 %v592, %v624
  %v648 = vmul.f32 %v593, %v628
  %v649 = vmul.f32 %v594, %v616
  %v650 = vmul.f32 %v595, %v620
  %v651 = vmul.f32 %v596, %v624
  %v652 = vmul.f32 %v597, %v628
  %v653 = vmul.f32 %v598, %v616
  %v654 = vmul.f32 %v599, %v620
  %v655 = vmul.f32 %v600, %v624
  %v656 = vmul.f32 %v601, %v628
  %v657 = vmul.f32 %v602, %v616
  %v658 = vmul.f32 %v603, %v620
  %v659 = vmul.f32 %v604, %v624
  %v660 = vmul.f32 %v605, %v628
  %v661 = vmul.f32 %v606, %v616
  %v662 = vmul.f32 %v607, %v620
  %v663 = vmul.f32 %v608, %v624
  %v664 = vmul.f32 %v609, %v628
  %v665 = vadd.f32 %v545, %v633
  %v666 = vadd.f32 %v546, %v634
  %v667 = vadd.f32 %v547, %v635
  %v668 = vadd.f32 %v548, %v636
  %v669 = vadd.f32 %v549, %v637
  %v670 = vadd.f32 %v550, %v638
  %v671 = vadd.f32 %v551, %v639
  %v672 = vadd.f32 %v552, %v640
  %v673 = vadd.f32 %v553, %v641
  %v674 = vadd.f32 %v554, %v642
  %v675 = vadd.f32 %v555, %v643
  %v676 = vadd.f32 %v556, %v644
  %v677 = vadd.f32 %v557, %v645
  %v678 = vadd.f32 %v558, %v646
  %v679 = vadd.f32 %v559, %v647
  %v680 = vadd.f32 %v560, %v648
  %v681 = vadd.f32 %v561, %v649
  %v682 = vadd.f32 %v562, %v650
  %v683 = vadd.f32 %v563, %v651
  %v684 = vadd.f32 %v564, %v652
  %v685 = vadd.f32 %v565, %v653
  %v686 = vadd.f32 %v566, %v654
  %v687 = vadd.f32 %v567, %v655
  %v688 = vadd.f32 %v568, %v656
  %v689 = vadd.f32 %v569, %v657
  %v690 = vadd.f32 %v570, %v658
  %v691 = vadd.f32 %v571, %v659
  %v692 = vadd.f32 %v572, %v660
  %v693 = vadd.f32 %v573, %v661
  %v694 = vadd.f32 %v574, %v662
  %v695 = vadd.f32 %v575, %v663
  %v696 = vadd.f32 %v576, %v664
  %s697 = scalar_lea.vmem %s0, 2112
  %v698 = vld [vmem:[%s697] sm:$0xff]
  %v699 = vld [vmem:[%s697 + $0x8] sm:$0xff]
  %v700 = vld [vmem:[%s697 + $0x10] sm:$0xff]
  %v701 = vld [vmem:[%s697 + $0x18] sm:$0xff]
  %v702 = vld [vmem:[%s697 + $0x20] sm:$0xff]
  %v703 = vld [vmem:[%s697 + $0x28] sm:$0xff]
  %v704 = vld [vmem:[%s697 + $0x30] sm:$0xff]
  %v705 = vld [vmem:[%s697 + $0x38] sm:$0xff]
  %v706 = vld [vmem:[%s697 + $0x40] sm:$0xff]
  %v707 = vld [vmem:[%s697 + $0x48] sm:$0xff]
  %v708 = vld [vmem:[%s697 + $0x50] sm:$0xff]
  %v709 = vld [vmem:[%s697 + $0x58] sm:$0xff]
  %v710 = vld [vmem:[%s697 + $0x60] sm:$0xff]
  %v711 = vld [vmem:[%s697 + $0x68] sm:$0xff]
  %v712 = vld [vmem:[%s697 + $0x70] sm:$0xff]
  %v713 = vld [vmem:[%s697 + $0x78] sm:$0xff]
  %v714 = vld [vmem:[%s697 + $0x80] sm:$0xff]
  %v715 = vld [vmem:[%s697 + $0x88] sm:$0xff]
  %v716 = vld [vmem:[%s697 + $0x90] sm:$0xff]
  %v717 = vld [vmem:[%s697 + $0x98] sm:$0xff]
  %v718 = vld [vmem:[%s697 + $0xa0] sm:$0xff]
  %v719 = vld [vmem:[%s697 + $0xa8] sm:$0xff]
  %v720 = vld [vmem:[%s697 + $0xb0] sm:$0xff]
  %v721 = vld [vmem:[%s697 + $0xb8] sm:$0xff]
  %v722 = vld [vmem:[%s697 + $0xc0] sm:$0xff]
  %v723 = vld [vmem:[%s697 + $0xc8] sm:$0xff]
  %v724 = vld [vmem:[%s697 + $0xd0] sm:$0xff]
  %v725 = vld [vmem:[%s697 + $0xd8] sm:$0xff]
  %v726 = vld [vmem:[%s697 + $0xe0] sm:$0xff]
  %v727 = vld [vmem:[%s697 + $0xe8] sm:$0xff]
  %v728 = vld [vmem:[%s697 + $0xf0] sm:$0xff]
  %v729 = vld [vmem:[%s697 + $0xf8] sm:$0xff]
  %s730 = scalar_lea.vmem %s1, 6
  %v731 = vld [vmem:[%s730] ss:$8 sm:$0xf]
  %v733 = vlaneseq
  %v734 = vshrl.u32 %v733, 7
  %v735 = vsub.s32 0, %v734
  %v736 = vrot.slane %v731, %v735
  %v737 = vlaneseq
  %v738 = vshrl.u32 %v737, 7
  %v739 = vsub.s32 1, %v738
  %v740 = vrot.slane %v731, %v739
  %v741 = vlaneseq
  %v742 = vshrl.u32 %v741, 7
  %v743 = vsub.s32 2, %v742
  %v744 = vrot.slane %v731, %v743
  %v745 = vlaneseq
  %v746 = vshrl.u32 %v745, 7
  %v747 = vsub.s32 3, %v746
  %v748 = vrot.slane %v731, %v747
  %v753 = vmul.f32 %v698, %v736
  %v754 = vmul.f32 %v699, %v740
  %v755 = vmul.f32 %v700, %v744
  %v756 = vmul.f32 %v701, %v748
  %v757 = vmul.f32 %v702, %v736
  %v758 = vmul.f32 %v703, %v740
  %v759 = vmul.f32 %v704, %v744
  %v760 = vmul.f32 %v705, %v748
  %v761 = vmul.f32 %v706, %v736
  %v762 = vmul.f32 %v707, %v740
  %v763 = vmul.f32 %v708, %v744
  %v764 = vmul.f32 %v709, %v748
  %v765 = vmul.f32 %v710, %v736
  %v766 = vmul.f32 %v711, %v740
  %v767 = vmul.f32 %v712, %v744
  %v768 = vmul.f32 %v713, %v748
  %v769 = vmul.f32 %v714, %v736
  %v770 = vmul.f32 %v715, %v740
  %v771 = vmul.f32 %v716, %v744
  %v772 = vmul.f32 %v717, %v748
  %v773 = vmul.f32 %v718, %v736
  %v774 = vmul.f32 %v719, %v740
  %v775 = vmul.f32 %v720, %v744
  %v776 = vmul.f32 %v721, %v748
  %v777 = vmul.f32 %v722, %v736
  %v778 = vmul.f32 %v723, %v740
  %v779 = vmul.f32 %v724, %v744
  %v780 = vmul.f32 %v725, %v748
  %v781 = vmul.f32 %v726, %v736
  %v782 = vmul.f32 %v727, %v740
  %v783 = vmul.f32 %v728, %v744
  %v784 = vmul.f32 %v729, %v748
  %v785 = vadd.f32 %v665, %v753
  %v786 = vadd.f32 %v666, %v754
  %v787 = vadd.f32 %v667, %v755
  %v788 = vadd.f32 %v668, %v756
  %v789 = vadd.f32 %v669, %v757
  %v790 = vadd.f32 %v670, %v758
  %v791 = vadd.f32 %v671, %v759
  %v792 = vadd.f32 %v672, %v760
  %v793 = vadd.f32 %v673, %v761
  %v794 = vadd.f32 %v674, %v762
  %v795 = vadd.f32 %v675, %v763
  %v796 = vadd.f32 %v676, %v764
  %v797 = vadd.f32 %v677, %v765
  %v798 = vadd.f32 %v678, %v766
  %v799 = vadd.f32 %v679, %v767
  %v800 = vadd.f32 %v680, %v768
  %v801 = vadd.f32 %v681, %v769
  %v802 = vadd.f32 %v682, %v770
  %v803 = vadd.f32 %v683, %v771
  %v804 = vadd.f32 %v684, %v772
  %v805 = vadd.f32 %v685, %v773
  %v806 = vadd.f32 %v686, %v774
  %v807 = vadd.f32 %v687, %v775
  %v808 = vadd.f32 %v688, %v776
  %v809 = vadd.f32 %v689, %v777
  %v810 = vadd.f32 %v690, %v778
  %v811 = vadd.f32 %v691, %v779
  %v812 = vadd.f32 %v692, %v780
  %v813 = vadd.f32 %v693, %v781
  %v814 = vadd.f32 %v694, %v782
  %v815 = vadd.f32 %v695, %v783
  %v816 = vadd.f32 %v696, %v784
  %s817 = scalar_lea.vmem %s0, 2464
  %v818 = vld [vmem:[%s817] sm:$0xff]
  %v819 = vld [vmem:[%s817 + $0x8] sm:$0xff]
  %v820 = vld [vmem:[%s817 + $0x10] sm:$0xff]
  %v821 = vld [vmem:[%s817 + $0x18] sm:$0xff]
  %v822 = vld [vmem:[%s817 + $0x20] sm:$0xff]
  %v823 = vld [vmem:[%s817 + $0x28] sm:$0xff]
  %v824 = vld [vmem:[%s817 + $0x30] sm:$0xff]
  %v825 = vld [vmem:[%s817 + $0x38] sm:$0xff]
  %v826 = vld [vmem:[%s817 + $0x40] sm:$0xff]
  %v827 = vld [vmem:[%s817 + $0x48] sm:$0xff]
  %v828 = vld [vmem:[%s817 + $0x50] sm:$0xff]
  %v829 = vld [vmem:[%s817 + $0x58] sm:$0xff]
  %v830 = vld [vmem:[%s817 + $0x60] sm:$0xff]
  %v831 = vld [vmem:[%s817 + $0x68] sm:$0xff]
  %v832 = vld [vmem:[%s817 + $0x70] sm:$0xff]
  %v833 = vld [vmem:[%s817 + $0x78] sm:$0xff]
  %v834 = vld [vmem:[%s817 + $0x80] sm:$0xff]
  %v835 = vld [vmem:[%s817 + $0x88] sm:$0xff]
  %v836 = vld [vmem:[%s817 + $0x90] sm:$0xff]
  %v837 = vld [vmem:[%s817 + $0x98] sm:$0xff]
  %v838 = vld [vmem:[%s817 + $0xa0] sm:$0xff]
  %v839 = vld [vmem:[%s817 + $0xa8] sm:$0xff]
  %v840 = vld [vmem:[%s817 + $0xb0] sm:$0xff]
  %v841 = vld [vmem:[%s817 + $0xb8] sm:$0xff]
  %v842 = vld [vmem:[%s817 + $0xc0] sm:$0xff]
  %v843 = vld [vmem:[%s817 + $0xc8] sm:$0xff]
  %v844 = vld [vmem:[%s817 + $0xd0] sm:$0xff]
  %v845 = vld [vmem:[%s817 + $0xd8] sm:$0xff]
  %v846 = vld [vmem:[%s817 + $0xe0] sm:$0xff]
  %v847 = vld [vmem:[%s817 + $0xe8] sm:$0xff]
  %v848 = vld [vmem:[%s817 + $0xf0] sm:$0xff]
  %v849 = vld [vmem:[%s817 + $0xf8] sm:$0xff]
  %s850 = scalar_lea.vmem %s1, 7
  %v851 = vld [vmem:[%s850] ss:$8 sm:$0xf]
  %v853 = vlaneseq
  %v854 = vshrl.u32 %v853, 7
  %v855 = vsub.s32 0, %v854
  %v856 = vrot.slane %v851, %v855
  %v857 = vlaneseq
  %v858 = vshrl.u32 %v857, 7
  %v859 = vsub.s32 1, %v858
  %v860 = vrot.slane %v851, %v859
  %v861 = vlaneseq
  %v862 = vshrl.u32 %v861, 7
  %v863 = vsub.s32 2, %v862
  %v864 = vrot.slane %v851, %v863
  %v865 = vlaneseq
  %v866 = vshrl.u32 %v865, 7
  %v867 = vsub.s32 3, %v866
  %v868 = vrot.slane %v851, %v867
  %v873 = vmul.f32 %v818, %v856
  %v874 = vmul.f32 %v819, %v860
  %v875 = vmul.f32 %v820, %v864
  %v876 = vmul.f32 %v821, %v868
  %v877 = vmul.f32 %v822, %v856
  %v878 = vmul.f32 %v823, %v860
  %v879 = vmul.f32 %v824, %v864
  %v880 = vmul.f32 %v825, %v868
  %v881 = vmul.f32 %v826, %v856
  %v882 = vmul.f32 %v827, %v860
  %v883 = vmul.f32 %v828, %v864
  %v884 = vmul.f32 %v829, %v868
  %v885 = vmul.f32 %v830, %v856
  %v886 = vmul.f32 %v831, %v860
  %v887 = vmul.f32 %v832, %v864
  %v888 = vmul.f32 %v833, %v868
  %v889 = vmul.f32 %v834, %v856
  %v890 = vmul.f32 %v835, %v860
  %v891 = vmul.f32 %v836, %v864
  %v892 = vmul.f32 %v837, %v868
  %v893 = vmul.f32 %v838, %v856
  %v894 = vmul.f32 %v839, %v860
  %v895 = vmul.f32 %v840, %v864
  %v896 = vmul.f32 %v841, %v868
  %v897 = vmul.f32 %v842, %v856
  %v898 = vmul.f32 %v843, %v860
  %v899 = vmul.f32 %v844, %v864
  %v900 = vmul.f32 %v845, %v868
  %v901 = vmul.f32 %v846, %v856
  %v902 = vmul.f32 %v847, %v860
  %v903 = vmul.f32 %v848, %v864
  %v904 = vmul.f32 %v849, %v868
  %v905 = vadd.f32 %v785, %v873
  %v906 = vadd.f32 %v786, %v874
  %v907 = vadd.f32 %v787, %v875
  %v908 = vadd.f32 %v788, %v876
  %v909 = vadd.f32 %v789, %v877
  %v910 = vadd.f32 %v790, %v878
  %v911 = vadd.f32 %v791, %v879
  %v912 = vadd.f32 %v792, %v880
  %v913 = vadd.f32 %v793, %v881
  %v914 = vadd.f32 %v794, %v882
  %v915 = vadd.f32 %v795, %v883
  %v916 = vadd.f32 %v796, %v884
  %v917 = vadd.f32 %v797, %v885
  %v918 = vadd.f32 %v798, %v886
  %v919 = vadd.f32 %v799, %v887
  %v920 = vadd.f32 %v800, %v888
  %v921 = vadd.f32 %v801, %v889
  %v922 = vadd.f32 %v802, %v890
  %v923 = vadd.f32 %v803, %v891
  %v924 = vadd.f32 %v804, %v892
  %v925 = vadd.f32 %v805, %v893
  %v926 = vadd.f32 %v806, %v894
  %v927 = vadd.f32 %v807, %v895
  %v928 = vadd.f32 %v808, %v896
  %v929 = vadd.f32 %v809, %v897
  %v930 = vadd.f32 %v810, %v898
  %v931 = vadd.f32 %v811, %v899
  %v932 = vadd.f32 %v812, %v900
  %v933 = vadd.f32 %v813, %v901
  %v934 = vadd.f32 %v814, %v902
  %v935 = vadd.f32 %v815, %v903
  %v936 = vadd.f32 %v816, %v904
  %v937 = vld [vmem:[%s0] sm:$0xfe]
  %v938 = vld [vmem:[%s0 + $0x8] sm:$0xfe]
  %v939 = vld [vmem:[%s0 + $0x10] sm:$0xfe]
  %v940 = vld [vmem:[%s0 + $0x18] sm:$0xfe]
  %v941 = vld [vmem:[%s0 + $0x100] sm:$0x1]
  %v942 = vld [vmem:[%s0 + $0x108] sm:$0x1]
  %v943 = vld [vmem:[%s0 + $0x110] sm:$0x1]
  %v944 = vld [vmem:[%s0 + $0x118] sm:$0x1]
  %s945 = scalar_lea.vmem %s1, 32
  %v946 = vld [vmem:[%s945] ss:$8 sm:$0xf]
  %v948 = vlaneseq
  %v949 = vshrl.u32 %v948, 7
  %v950 = vsub.s32 0, %v949
  %v951 = vrot.slane %v946, %v950
  %v952 = vlaneseq
  %v953 = vshrl.u32 %v952, 7
  %v954 = vsub.s32 1, %v953
  %v955 = vrot.slane %v946, %v954
  %v956 = vlaneseq
  %v957 = vshrl.u32 %v956, 7
  %v958 = vsub.s32 2, %v957
  %v959 = vrot.slane %v946, %v958
  %v960 = vlaneseq
  %v961 = vshrl.u32 %v960, 7
  %v962 = vsub.s32 3, %v961
  %v963 = vrot.slane %v946, %v962
  %v968 = vmul.f32 %v937, %v951
  %v969 = vmul.f32 %v938, %v955
  %v970 = vmul.f32 %v939, %v959
  %v971 = vmul.f32 %v940, %v963
  %v972 = vmul.f32 %v15, %v951
  %v973 = vmul.f32 %v16, %v955
  %v974 = vmul.f32 %v17, %v959
  %v975 = vmul.f32 %v18, %v963
  %v976 = vmul.f32 %v19, %v951
  %v977 = vmul.f32 %v20, %v955
  %v978 = vmul.f32 %v21, %v959
  %v979 = vmul.f32 %v22, %v963
  %v980 = vmul.f32 %v23, %v951
  %v981 = vmul.f32 %v24, %v955
  %v982 = vmul.f32 %v25, %v959
  %v983 = vmul.f32 %v26, %v963
  %v984 = vmul.f32 %v27, %v951
  %v985 = vmul.f32 %v28, %v955
  %v986 = vmul.f32 %v29, %v959
  %v987 = vmul.f32 %v30, %v963
  %v988 = vmul.f32 %v31, %v951
  %v989 = vmul.f32 %v32, %v955
  %v990 = vmul.f32 %v33, %v959
  %v991 = vmul.f32 %v34, %v963
  %v992 = vmul.f32 %v35, %v951
  %v993 = vmul.f32 %v36, %v955
  %v994 = vmul.f32 %v37, %v959
  %v995 = vmul.f32 %v38, %v963
  %v996 = vmul.f32 %v39, %v951
  %v997 = vmul.f32 %v40, %v955
  %v998 = vmul.f32 %v41, %v959
  %v999 = vmul.f32 %v42, %v963
  %v1000 = vmul.f32 %v941, %v951
  %v1001 = vmul.f32 %v942, %v955
  %v1002 = vmul.f32 %v943, %v959
  %v1003 = vmul.f32 %v944, %v963
  %vm1040 = vcmask 1046528
  %v1041 = vrot.slane %v968, 1
  %v1042 = vrot.slane %v972, 1
  %v1043 = vsel %vm1040, %v1041, %v1042
  %v1044 = vrot.slane %v969, 1
  %v1045 = vrot.slane %v973, 1
  %v1046 = vsel %vm1040, %v1044, %v1045
  %v1047 = vrot.slane %v970, 1
  %v1048 = vrot.slane %v974, 1
  %v1049 = vsel %vm1040, %v1047, %v1048
  %v1050 = vrot.slane %v971, 1
  %v1051 = vrot.slane %v975, 1
  %v1052 = vsel %vm1040, %v1050, %v1051
  %v1053 = vrot.slane %v976, 1
  %v1054 = vsel %vm1040, %v1042, %v1053
  %v1055 = vrot.slane %v977, 1
  %v1056 = vsel %vm1040, %v1045, %v1055
  %v1057 = vrot.slane %v978, 1
  %v1058 = vsel %vm1040, %v1048, %v1057
  %v1059 = vrot.slane %v979, 1
  %v1060 = vsel %vm1040, %v1051, %v1059
  %v1061 = vrot.slane %v980, 1
  %v1062 = vsel %vm1040, %v1053, %v1061
  %v1063 = vrot.slane %v981, 1
  %v1064 = vsel %vm1040, %v1055, %v1063
  %v1065 = vrot.slane %v982, 1
  %v1066 = vsel %vm1040, %v1057, %v1065
  %v1067 = vrot.slane %v983, 1
  %v1068 = vsel %vm1040, %v1059, %v1067
  %v1069 = vrot.slane %v984, 1
  %v1070 = vsel %vm1040, %v1061, %v1069
  %v1071 = vrot.slane %v985, 1
  %v1072 = vsel %vm1040, %v1063, %v1071
  %v1073 = vrot.slane %v986, 1
  %v1074 = vsel %vm1040, %v1065, %v1073
  %v1075 = vrot.slane %v987, 1
  %v1076 = vsel %vm1040, %v1067, %v1075
  %v1077 = vrot.slane %v988, 1
  %v1078 = vsel %vm1040, %v1069, %v1077
  %v1079 = vrot.slane %v989, 1
  %v1080 = vsel %vm1040, %v1071, %v1079
  %v1081 = vrot.slane %v990, 1
  %v1082 = vsel %vm1040, %v1073, %v1081
  %v1083 = vrot.slane %v991, 1
  %v1084 = vsel %vm1040, %v1075, %v1083
  %v1085 = vrot.slane %v992, 1
  %v1086 = vsel %vm1040, %v1077, %v1085
  %v1087 = vrot.slane %v993, 1
  %v1088 = vsel %vm1040, %v1079, %v1087
  %v1089 = vrot.slane %v994, 1
  %v1090 = vsel %vm1040, %v1081, %v1089
  %v1091 = vrot.slane %v995, 1
  %v1092 = vsel %vm1040, %v1083, %v1091
  %v1093 = vrot.slane %v996, 1
  %v1094 = vsel %vm1040, %v1085, %v1093
  %v1095 = vrot.slane %v997, 1
  %v1096 = vsel %vm1040, %v1087, %v1095
  %v1097 = vrot.slane %v998, 1
  %v1098 = vsel %vm1040, %v1089, %v1097
  %v1099 = vrot.slane %v999, 1
  %v1100 = vsel %vm1040, %v1091, %v1099
  %v1101 = vrot.slane %v1000, 1
  %v1102 = vsel %vm1040, %v1093, %v1101
  %v1103 = vrot.slane %v1001, 1
  %v1104 = vsel %vm1040, %v1095, %v1103
  %v1105 = vrot.slane %v1002, 1
  %v1106 = vsel %vm1040, %v1097, %v1105
  %v1107 = vrot.slane %v1003, 1
  %v1108 = vsel %vm1040, %v1099, %v1107
  %v1141 = vadd.f32 %v905, %v1043
  %v1142 = vadd.f32 %v906, %v1046
  %v1143 = vadd.f32 %v907, %v1049
  %v1144 = vadd.f32 %v908, %v1052
  %v1145 = vadd.f32 %v909, %v1054
  %v1146 = vadd.f32 %v910, %v1056
  %v1147 = vadd.f32 %v911, %v1058
  %v1148 = vadd.f32 %v912, %v1060
  %v1149 = vadd.f32 %v913, %v1062
  %v1150 = vadd.f32 %v914, %v1064
  %v1151 = vadd.f32 %v915, %v1066
  %v1152 = vadd.f32 %v916, %v1068
  %v1153 = vadd.f32 %v917, %v1070
  %v1154 = vadd.f32 %v918, %v1072
  %v1155 = vadd.f32 %v919, %v1074
  %v1156 = vadd.f32 %v920, %v1076
  %v1157 = vadd.f32 %v921, %v1078
  %v1158 = vadd.f32 %v922, %v1080
  %v1159 = vadd.f32 %v923, %v1082
  %v1160 = vadd.f32 %v924, %v1084
  %v1161 = vadd.f32 %v925, %v1086
  %v1162 = vadd.f32 %v926, %v1088
  %v1163 = vadd.f32 %v927, %v1090
  %v1164 = vadd.f32 %v928, %v1092
  %v1165 = vadd.f32 %v929, %v1094
  %v1166 = vadd.f32 %v930, %v1096
  %v1167 = vadd.f32 %v931, %v1098
  %v1168 = vadd.f32 %v932, %v1100
  %v1169 = vadd.f32 %v933, %v1102
  %v1170 = vadd.f32 %v934, %v1104
  %v1171 = vadd.f32 %v935, %v1106
  %v1172 = vadd.f32 %v936, %v1108
  %v1173 = vld [vmem:[%s97] sm:$0xfe]
  %v1174 = vld [vmem:[%s97 + $0x8] sm:$0xfe]
  %v1175 = vld [vmem:[%s97 + $0x10] sm:$0xfe]
  %v1176 = vld [vmem:[%s97 + $0x18] sm:$0xfe]
  %v1177 = vld [vmem:[%s97 + $0x100] sm:$0x1]
  %v1178 = vld [vmem:[%s97 + $0x108] sm:$0x1]
  %v1179 = vld [vmem:[%s97 + $0x110] sm:$0x1]
  %v1180 = vld [vmem:[%s97 + $0x118] sm:$0x1]
  %s1181 = scalar_lea.vmem %s1, 33
  %v1182 = vld [vmem:[%s1181] ss:$8 sm:$0xf]
  %v1184 = vlaneseq
  %v1185 = vshrl.u32 %v1184, 7
  %v1186 = vsub.s32 0, %v1185
  %v1187 = vrot.slane %v1182, %v1186
  %v1188 = vlaneseq
  %v1189 = vshrl.u32 %v1188, 7
  %v1190 = vsub.s32 1, %v1189
  %v1191 = vrot.slane %v1182, %v1190
  %v1192 = vlaneseq
  %v1193 = vshrl.u32 %v1192, 7
  %v1194 = vsub.s32 2, %v1193
  %v1195 = vrot.slane %v1182, %v1194
  %v1196 = vlaneseq
  %v1197 = vshrl.u32 %v1196, 7
  %v1198 = vsub.s32 3, %v1197
  %v1199 = vrot.slane %v1182, %v1198
  %v1204 = vmul.f32 %v1173, %v1187
  %v1205 = vmul.f32 %v1174, %v1191
  %v1206 = vmul.f32 %v1175, %v1195
  %v1207 = vmul.f32 %v1176, %v1199
  %v1208 = vmul.f32 %v102, %v1187
  %v1209 = vmul.f32 %v103, %v1191
  %v1210 = vmul.f32 %v104, %v1195
  %v1211 = vmul.f32 %v105, %v1199
  %v1212 = vmul.f32 %v106, %v1187
  %v1213 = vmul.f32 %v107, %v1191
  %v1214 = vmul.f32 %v108, %v1195
  %v1215 = vmul.f32 %v109, %v1199
  %v1216 = vmul.f32 %v110, %v1187
  %v1217 = vmul.f32 %v111, %v1191
  %v1218 = vmul.f32 %v112, %v1195
  %v1219 = vmul.f32 %v113, %v1199
  %v1220 = vmul.f32 %v114, %v1187
  %v1221 = vmul.f32 %v115, %v1191
  %v1222 = vmul.f32 %v116, %v1195
  %v1223 = vmul.f32 %v117, %v1199
  %v1224 = vmul.f32 %v118, %v1187
  %v1225 = vmul.f32 %v119, %v1191
  %v1226 = vmul.f32 %v120, %v1195
  %v1227 = vmul.f32 %v121, %v1199
  %v1228 = vmul.f32 %v122, %v1187
  %v1229 = vmul.f32 %v123, %v1191
  %v1230 = vmul.f32 %v124, %v1195
  %v1231 = vmul.f32 %v125, %v1199
  %v1232 = vmul.f32 %v126, %v1187
  %v1233 = vmul.f32 %v127, %v1191
  %v1234 = vmul.f32 %v128, %v1195
  %v1235 = vmul.f32 %v129, %v1199
  %v1236 = vmul.f32 %v1177, %v1187
  %v1237 = vmul.f32 %v1178, %v1191
  %v1238 = vmul.f32 %v1179, %v1195
  %v1239 = vmul.f32 %v1180, %v1199
  %v1276 = vrot.slane %v1204, 1
  %v1277 = vrot.slane %v1208, 1
  %v1278 = vsel %vm1040, %v1276, %v1277
  %v1279 = vrot.slane %v1205, 1
  %v1280 = vrot.slane %v1209, 1
  %v1281 = vsel %vm1040, %v1279, %v1280
  %v1282 = vrot.slane %v1206, 1
  %v1283 = vrot.slane %v1210, 1
  %v1284 = vsel %vm1040, %v1282, %v1283
  %v1285 = vrot.slane %v1207, 1
  %v1286 = vrot.slane %v1211, 1
  %v1287 = vsel %vm1040, %v1285, %v1286
  %v1288 = vrot.slane %v1212, 1
  %v1289 = vsel %vm1040, %v1277, %v1288
  %v1290 = vrot.slane %v1213, 1
  %v1291 = vsel %vm1040, %v1280, %v1290
  %v1292 = vrot.slane %v1214, 1
  %v1293 = vsel %vm1040, %v1283, %v1292
  %v1294 = vrot.slane %v1215, 1
  %v1295 = vsel %vm1040, %v1286, %v1294
  %v1296 = vrot.slane %v1216, 1
  %v1297 = vsel %vm1040, %v1288, %v1296
  %v1298 = vrot.slane %v1217, 1
  %v1299 = vsel %vm1040, %v1290, %v1298
  %v1300 = vrot.slane %v1218, 1
  %v1301 = vsel %vm1040, %v1292, %v1300
  %v1302 = vrot.slane %v1219, 1
  %v1303 = vsel %vm1040, %v1294, %v1302
  %v1304 = vrot.slane %v1220, 1
  %v1305 = vsel %vm1040, %v1296, %v1304
  %v1306 = vrot.slane %v1221, 1
  %v1307 = vsel %vm1040, %v1298, %v1306
  %v1308 = vrot.slane %v1222, 1
  %v1309 = vsel %vm1040, %v1300, %v1308
  %v1310 = vrot.slane %v1223, 1
  %v1311 = vsel %vm1040, %v1302, %v1310
  %v1312 = vrot.slane %v1224, 1
  %v1313 = vsel %vm1040, %v1304, %v1312
  %v1314 = vrot.slane %v1225, 1
  %v1315 = vsel %vm1040, %v1306, %v1314
  %v1316 = vrot.slane %v1226, 1
  %v1317 = vsel %vm1040, %v1308, %v1316
  %v1318 = vrot.slane %v1227, 1
  %v1319 = vsel %vm1040, %v1310, %v1318
  %v1320 = vrot.slane %v1228, 1
  %v1321 = vsel %vm1040, %v1312, %v1320
  %v1322 = vrot.slane %v1229, 1
  %v1323 = vsel %vm1040, %v1314, %v1322
  %v1324 = vrot.slane %v1230, 1
  %v1325 = vsel %vm1040, %v1316, %v1324
  %v1326 = vrot.slane %v1231, 1
  %v1327 = vsel %vm1040, %v1318, %v1326
  %v1328 = vrot.slane %v1232, 1
  %v1329 = vsel %vm1040, %v1320, %v1328
  %v1330 = vrot.slane %v1233, 1
  %v1331 = vsel %vm1040, %v1322, %v1330
  %v1332 = vrot.slane %v1234, 1
  %v1333 = vsel %vm1040, %v1324, %v1332
  %v1334 = vrot.slane %v1235, 1
  %v1335 = vsel %vm1040, %v1326, %v1334
  %v1336 = vrot.slane %v1236, 1
  %v1337 = vsel %vm1040, %v1328, %v1336
  %v1338 = vrot.slane %v1237, 1
  %v1339 = vsel %vm1040, %v1330, %v1338
  %v1340 = vrot.slane %v1238, 1
  %v1341 = vsel %vm1040, %v1332, %v1340
  %v1342 = vrot.slane %v1239, 1
  %v1343 = vsel %vm1040, %v1334, %v1342
  %v1376 = vadd.f32 %v1141, %v1278
  %v1377 = vadd.f32 %v1142, %v1281
  %v1378 = vadd.f32 %v1143, %v1284
  %v1379 = vadd.f32 %v1144, %v1287
  %v1380 = vadd.f32 %v1145, %v1289
  %v1381 = vadd.f32 %v1146, %v1291
  %v1382 = vadd.f32 %v1147, %v1293
  %v1383 = vadd.f32 %v1148, %v1295
  %v1384 = vadd.f32 %v1149, %v1297
  %v1385 = vadd.f32 %v1150, %v1299
  %v1386 = vadd.f32 %v1151, %v1301
  %v1387 = vadd.f32 %v1152, %v1303
  %v1388 = vadd.f32 %v1153, %v1305
  %v1389 = vadd.f32 %v1154, %v1307
  %v1390 = vadd.f32 %v1155, %v1309
  %v1391 = vadd.f32 %v1156, %v1311
  %v1392 = vadd.f32 %v1157, %v1313
  %v1393 = vadd.f32 %v1158, %v1315
  %v1394 = vadd.f32 %v1159, %v1317
  %v1395 = vadd.f32 %v1160, %v1319
  %v1396 = vadd.f32 %v1161, %v1321
  %v1397 = vadd.f32 %v1162, %v1323
  %v1398 = vadd.f32 %v1163, %v1325
  %v1399 = vadd.f32 %v1164, %v1327
  %v1400 = vadd.f32 %v1165, %v1329
  %v1401 = vadd.f32 %v1166, %v1331
  %v1402 = vadd.f32 %v1167, %v1333
  %v1403 = vadd.f32 %v1168, %v1335
  %v1404 = vadd.f32 %v1169, %v1337
  %v1405 = vadd.f32 %v1170, %v1339
  %v1406 = vadd.f32 %v1171, %v1341
  %v1407 = vadd.f32 %v1172, %v1343
  %v1408 = vld [vmem:[%s217] sm:$0xfe]
  %v1409 = vld [vmem:[%s217 + $0x8] sm:$0xfe]
  %v1410 = vld [vmem:[%s217 + $0x10] sm:$0xfe]
  %v1411 = vld [vmem:[%s217 + $0x18] sm:$0xfe]
  %v1412 = vld [vmem:[%s217 + $0x100] sm:$0x1]
  %v1413 = vld [vmem:[%s217 + $0x108] sm:$0x1]
  %v1414 = vld [vmem:[%s217 + $0x110] sm:$0x1]
  %v1415 = vld [vmem:[%s217 + $0x118] sm:$0x1]
  %s1416 = scalar_lea.vmem %s1, 34
  %v1417 = vld [vmem:[%s1416] ss:$8 sm:$0xf]
  %v1419 = vlaneseq
  %v1420 = vshrl.u32 %v1419, 7
  %v1421 = vsub.s32 0, %v1420
  %v1422 = vrot.slane %v1417, %v1421
  %v1423 = vlaneseq
  %v1424 = vshrl.u32 %v1423, 7
  %v1425 = vsub.s32 1, %v1424
  %v1426 = vrot.slane %v1417, %v1425
  %v1427 = vlaneseq
  %v1428 = vshrl.u32 %v1427, 7
  %v1429 = vsub.s32 2, %v1428
  %v1430 = vrot.slane %v1417, %v1429
  %v1431 = vlaneseq
  %v1432 = vshrl.u32 %v1431, 7
  %v1433 = vsub.s32 3, %v1432
  %v1434 = vrot.slane %v1417, %v1433
  %v1439 = vmul.f32 %v1408, %v1422
  %v1440 = vmul.f32 %v1409, %v1426
  %v1441 = vmul.f32 %v1410, %v1430
  %v1442 = vmul.f32 %v1411, %v1434
  %v1443 = vmul.f32 %v222, %v1422
  %v1444 = vmul.f32 %v223, %v1426
  %v1445 = vmul.f32 %v224, %v1430
  %v1446 = vmul.f32 %v225, %v1434
  %v1447 = vmul.f32 %v226, %v1422
  %v1448 = vmul.f32 %v227, %v1426
  %v1449 = vmul.f32 %v228, %v1430
  %v1450 = vmul.f32 %v229, %v1434
  %v1451 = vmul.f32 %v230, %v1422
  %v1452 = vmul.f32 %v231, %v1426
  %v1453 = vmul.f32 %v232, %v1430
  %v1454 = vmul.f32 %v233, %v1434
  %v1455 = vmul.f32 %v234, %v1422
  %v1456 = vmul.f32 %v235, %v1426
  %v1457 = vmul.f32 %v236, %v1430
  %v1458 = vmul.f32 %v237, %v1434
  %v1459 = vmul.f32 %v238, %v1422
  %v1460 = vmul.f32 %v239, %v1426
  %v1461 = vmul.f32 %v240, %v1430
  %v1462 = vmul.f32 %v241, %v1434
  %v1463 = vmul.f32 %v242, %v1422
  %v1464 = vmul.f32 %v243, %v1426
  %v1465 = vmul.f32 %v244, %v1430
  %v1466 = vmul.f32 %v245, %v1434
  %v1467 = vmul.f32 %v246, %v1422
  %v1468 = vmul.f32 %v247, %v1426
  %v1469 = vmul.f32 %v248, %v1430
  %v1470 = vmul.f32 %v249, %v1434
  %v1471 = vmul.f32 %v1412, %v1422
  %v1472 = vmul.f32 %v1413, %v1426
  %v1473 = vmul.f32 %v1414, %v1430
  %v1474 = vmul.f32 %v1415, %v1434
  %v1511 = vrot.slane %v1439, 1
  %v1512 = vrot.slane %v1443, 1
  %v1513 = vsel %vm1040, %v1511, %v1512
  %v1514 = vrot.slane %v1440, 1
  %v1515 = vrot.slane %v1444, 1
  %v1516 = vsel %vm1040, %v1514, %v1515
  %v1517 = vrot.slane %v1441, 1
  %v1518 = vrot.slane %v1445, 1
  %v1519 = vsel %vm1040, %v1517, %v1518
  %v1520 = vrot.slane %v1442, 1
  %v1521 = vrot.slane %v1446, 1
  %v1522 = vsel %vm1040, %v1520, %v1521
  %v1523 = vrot.slane %v1447, 1
  %v1524 = vsel %vm1040, %v1512, %v1523
  %v1525 = vrot.slane %v1448, 1
  %v1526 = vsel %vm1040, %v1515, %v1525
  %v1527 = vrot.slane %v1449, 1
  %v1528 = vsel %vm1040, %v1518, %v1527
  %v1529 = vrot.slane %v1450, 1
  %v1530 = vsel %vm1040, %v1521, %v1529
  %v1531 = vrot.slane %v1451, 1
  %v1532 = vsel %vm1040, %v1523, %v1531
  %v1533 = vrot.slane %v1452, 1
  %v1534 = vsel %vm1040, %v1525, %v1533
  %v1535 = vrot.slane %v1453, 1
  %v1536 = vsel %vm1040, %v1527, %v1535
  %v1537 = vrot.slane %v1454, 1
  %v1538 = vsel %vm1040, %v1529, %v1537
  %v1539 = vrot.slane %v1455, 1
  %v1540 = vsel %vm1040, %v1531, %v1539
  %v1541 = vrot.slane %v1456, 1
  %v1542 = vsel %vm1040, %v1533, %v1541
  %v1543 = vrot.slane %v1457, 1
  %v1544 = vsel %vm1040, %v1535, %v1543
  %v1545 = vrot.slane %v1458, 1
  %v1546 = vsel %vm1040, %v1537, %v1545
  %v1547 = vrot.slane %v1459, 1
  %v1548 = vsel %vm1040, %v1539, %v1547
  %v1549 = vrot.slane %v1460, 1
  %v1550 = vsel %vm1040, %v1541, %v1549
  %v1551 = vrot.slane %v1461, 1
  %v1552 = vsel %vm1040, %v1543, %v1551
  %v1553 = vrot.slane %v1462, 1
  %v1554 = vsel %vm1040, %v1545, %v1553
  %v1555 = vrot.slane %v1463, 1
  %v1556 = vsel %vm1040, %v1547, %v1555
  %v1557 = vrot.slane %v1464, 1
  %v1558 = vsel %vm1040, %v1549, %v1557
  %v1559 = vrot.slane %v1465, 1
  %v1560 = vsel %vm1040, %v1551, %v1559
  %v1561 = vrot.slane %v1466, 1
  %v1562 = vsel %vm1040, %v1553, %v1561
  %v1563 = vrot.slane %v1467, 1
  %v1564 = vsel %vm1040, %v1555, %v1563
  %v1565 = vrot.slane %v1468, 1
  %v1566 = vsel %vm1040, %v1557, %v1565
  %v1567 = vrot.slane %v1469, 1
  %v1568 = vsel %vm1040, %v1559, %v1567
  %v1569 = vrot.slane %v1470, 1
  %v1570 = vsel %vm1040, %v1561, %v1569
  %v1571 = vrot.slane %v1471, 1
  %v1572 = vsel %vm1040, %v1563, %v1571
  %v1573 = vrot.slane %v1472, 1
  %v1574 = vsel %vm1040, %v1565, %v1573
  %v1575 = vrot.slane %v1473, 1
  %v1576 = vsel %vm1040, %v1567, %v1575
  %v1577 = vrot.slane %v1474, 1
  %v1578 = vsel %vm1040, %v1569, %v1577
  %v1611 = vadd.f32 %v1376, %v1513
  %v1612 = vadd.f32 %v1377, %v1516
  %v1613 = vadd.f32 %v1378, %v1519
  %v1614 = vadd.f32 %v1379, %v1522
  %v1615 = vadd.f32 %v1380, %v1524
  %v1616 = vadd.f32 %v1381, %v1526
  %v1617 = vadd.f32 %v1382, %v1528
  %v1618 = vadd.f32 %v1383, %v1530
  %v1619 = vadd.f32 %v1384, %v1532
  %v1620 = vadd.f32 %v1385, %v1534
  %v1621 = vadd.f32 %v1386, %v1536
  %v1622 = vadd.f32 %v1387, %v1538
  %v1623 = vadd.f32 %v1388, %v1540
  %v1624 = vadd.f32 %v1389, %v1542
  %v1625 = vadd.f32 %v1390, %v1544
  %v1626 = vadd.f32 %v1391, %v1546
  %v1627 = vadd.f32 %v1392, %v1548
  %v1628 = vadd.f32 %v1393, %v1550
  %v1629 = vadd.f32 %v1394, %v1552
  %v1630 = vadd.f32 %v1395, %v1554
  %v1631 = vadd.f32 %v1396, %v1556
  %v1632 = vadd.f32 %v1397, %v1558
  %v1633 = vadd.f32 %v1398, %v1560
  %v1634 = vadd.f32 %v1399, %v1562
  %v1635 = vadd.f32 %v1400, %v1564
  %v1636 = vadd.f32 %v1401, %v1566
  %v1637 = vadd.f32 %v1402, %v1568
  %v1638 = vadd.f32 %v1403, %v1570
  %v1639 = vadd.f32 %v1404, %v1572
  %v1640 = vadd.f32 %v1405, %v1574
  %v1641 = vadd.f32 %v1406, %v1576
  %v1642 = vadd.f32 %v1407, %v1578
  %v1643 = vld [vmem:[%s337] sm:$0xfe]
  %v1644 = vld [vmem:[%s337 + $0x8] sm:$0xfe]
  %v1645 = vld [vmem:[%s337 + $0x10] sm:$0xfe]
  %v1646 = vld [vmem:[%s337 + $0x18] sm:$0xfe]
  %v1647 = vld [vmem:[%s337 + $0x100] sm:$0x1]
  %v1648 = vld [vmem:[%s337 + $0x108] sm:$0x1]
  %v1649 = vld [vmem:[%s337 + $0x110] sm:$0x1]
  %v1650 = vld [vmem:[%s337 + $0x118] sm:$0x1]
  %s1651 = scalar_lea.vmem %s1, 35
  %v1652 = vld [vmem:[%s1651] ss:$8 sm:$0xf]
  %v1654 = vlaneseq
  %v1655 = vshrl.u32 %v1654, 7
  %v1656 = vsub.s32 0, %v1655
  %v1657 = vrot.slane %v1652, %v1656
  %v1658 = vlaneseq
  %v1659 = vshrl.u32 %v1658, 7
  %v1660 = vsub.s32 1, %v1659
  %v1661 = vrot.slane %v1652, %v1660
  %v1662 = vlaneseq
  %v1663 = vshrl.u32 %v1662, 7
  %v1664 = vsub.s32 2, %v1663
  %v1665 = vrot.slane %v1652, %v1664
  %v1666 = vlaneseq
  %v1667 = vshrl.u32 %v1666, 7
  %v1668 = vsub.s32 3, %v1667
  %v1669 = vrot.slane %v1652, %v1668
  %v1674 = vmul.f32 %v1643, %v1657
  %v1675 = vmul.f32 %v1644, %v1661
  %v1676 = vmul.f32 %v1645, %v1665
  %v1677 = vmul.f32 %v1646, %v1669
  %v1678 = vmul.f32 %v342, %v1657
  %v1679 = vmul.f32 %v343, %v1661
  %v1680 = vmul.f32 %v344, %v1665
  %v1681 = vmul.f32 %v345, %v1669
  %v1682 = vmul.f32 %v346, %v1657
  %v1683 = vmul.f32 %v347, %v1661
  %v1684 = vmul.f32 %v348, %v1665
  %v1685 = vmul.f32 %v349, %v1669
  %v1686 = vmul.f32 %v350, %v1657
  %v1687 = vmul.f32 %v351, %v1661
  %v1688 = vmul.f32 %v352, %v1665
  %v1689 = vmul.f32 %v353, %v1669
  %v1690 = vmul.f32 %v354, %v1657
  %v1691 = vmul.f32 %v355, %v1661
  %v1692 = vmul.f32 %v356, %v1665
  %v1693 = vmul.f32 %v357, %v1669
  %v1694 = vmul.f32 %v358, %v1657
  %v1695 = vmul.f32 %v359, %v1661
  %v1696 = vmul.f32 %v360, %v1665
  %v1697 = vmul.f32 %v361, %v1669
  %v1698 = vmul.f32 %v362, %v1657
  %v1699 = vmul.f32 %v363, %v1661
  %v1700 = vmul.f32 %v364, %v1665
  %v1701 = vmul.f32 %v365, %v1669
  %v1702 = vmul.f32 %v366, %v1657
  %v1703 = vmul.f32 %v367, %v1661
  %v1704 = vmul.f32 %v368, %v1665
  %v1705 = vmul.f32 %v369, %v1669
  %v1706 = vmul.f32 %v1647, %v1657
  %v1707 = vmul.f32 %v1648, %v1661
  %v1708 = vmul.f32 %v1649, %v1665
  %v1709 = vmul.f32 %v1650, %v1669
  %v1746 = vrot.slane %v1674, 1
  %v1747 = vrot.slane %v1678, 1
  %v1748 = vsel %vm1040, %v1746, %v1747
  %v1749 = vrot.slane %v1675, 1
  %v1750 = vrot.slane %v1679, 1
  %v1751 = vsel %vm1040, %v1749, %v1750
  %v1752 = vrot.slane %v1676, 1
  %v1753 = vrot.slane %v1680, 1
  %v1754 = vsel %vm1040, %v1752, %v1753
  %v1755 = vrot.slane %v1677, 1
  %v1756 = vrot.slane %v1681, 1
  %v1757 = vsel %vm1040, %v1755, %v1756
  %v1758 = vrot.slane %v1682, 1
  %v1759 = vsel %vm1040, %v1747, %v1758
  %v1760 = vrot.slane %v1683, 1
  %v1761 = vsel %vm1040, %v1750, %v1760
  %v1762 = vrot.slane %v1684, 1
  %v1763 = vsel %vm1040, %v1753, %v1762
  %v1764 = vrot.slane %v1685, 1
  %v1765 = vsel %vm1040, %v1756, %v1764
  %v1766 = vrot.slane %v1686, 1
  %v1767 = vsel %vm1040, %v1758, %v1766
  %v1768 = vrot.slane %v1687, 1
  %v1769 = vsel %vm1040, %v1760, %v1768
  %v1770 = vrot.slane %v1688, 1
  %v1771 = vsel %vm1040, %v1762, %v1770
  %v1772 = vrot.slane %v1689, 1
  %v1773 = vsel %vm1040, %v1764, %v1772
  %v1774 = vrot.slane %v1690, 1
  %v1775 = vsel %vm1040, %v1766, %v1774
  %v1776 = vrot.slane %v1691, 1
  %v1777 = vsel %vm1040, %v1768, %v1776
  %v1778 = vrot.slane %v1692, 1
  %v1779 = vsel %vm1040, %v1770, %v1778
  %v1780 = vrot.slane %v1693, 1
  %v1781 = vsel %vm1040, %v1772, %v1780
  %v1782 = vrot.slane %v1694, 1
  %v1783 = vsel %vm1040, %v1774, %v1782
  %v1784 = vrot.slane %v1695, 1
  %v1785 = vsel %vm1040, %v1776, %v1784
  %v1786 = vrot.slane %v1696, 1
  %v1787 = vsel %vm1040, %v1778, %v1786
  %v1788 = vrot.slane %v1697, 1
  %v1789 = vsel %vm1040, %v1780, %v1788
  %v1790 = vrot.slane %v1698, 1
  %v1791 = vsel %vm1040, %v1782, %v1790
  %v1792 = vrot.slane %v1699, 1
  %v1793 = vsel %vm1040, %v1784, %v1792
  %v1794 = vrot.slane %v1700, 1
  %v1795 = vsel %vm1040, %v1786, %v1794
  %v1796 = vrot.slane %v1701, 1
  %v1797 = vsel %vm1040, %v1788, %v1796
  %v1798 = vrot.slane %v1702, 1
  %v1799 = vsel %vm1040, %v1790, %v1798
  %v1800 = vrot.slane %v1703, 1
  %v1801 = vsel %vm1040, %v1792, %v1800
  %v1802 = vrot.slane %v1704, 1
  %v1803 = vsel %vm1040, %v1794, %v1802
  %v1804 = vrot.slane %v1705, 1
  %v1805 = vsel %vm1040, %v1796, %v1804
  %v1806 = vrot.slane %v1706, 1
  %v1807 = vsel %vm1040, %v1798, %v1806
  %v1808 = vrot.slane %v1707, 1
  %v1809 = vsel %vm1040, %v1800, %v1808
  %v1810 = vrot.slane %v1708, 1
  %v1811 = vsel %vm1040, %v1802, %v1810
  %v1812 = vrot.slane %v1709, 1
  %v1813 = vsel %vm1040, %v1804, %v1812
  %v1846 = vadd.f32 %v1611, %v1748
  %v1847 = vadd.f32 %v1612, %v1751
  %v1848 = vadd.f32 %v1613, %v1754
  %v1849 = vadd.f32 %v1614, %v1757
  %v1850 = vadd.f32 %v1615, %v1759
  %v1851 = vadd.f32 %v1616, %v1761
  %v1852 = vadd.f32 %v1617, %v1763
  %v1853 = vadd.f32 %v1618, %v1765
  %v1854 = vadd.f32 %v1619, %v1767
  %v1855 = vadd.f32 %v1620, %v1769
  %v1856 = vadd.f32 %v1621, %v1771
  %v1857 = vadd.f32 %v1622, %v1773
  %v1858 = vadd.f32 %v1623, %v1775
  %v1859 = vadd.f32 %v1624, %v1777
  %v1860 = vadd.f32 %v1625, %v1779
  %v1861 = vadd.f32 %v1626, %v1781
  %v1862 = vadd.f32 %v1627, %v1783
  %v1863 = vadd.f32 %v1628, %v1785
  %v1864 = vadd.f32 %v1629, %v1787
  %v1865 = vadd.f32 %v1630, %v1789
  %v1866 = vadd.f32 %v1631, %v1791
  %v1867 = vadd.f32 %v1632, %v1793
  %v1868 = vadd.f32 %v1633, %v1795
  %v1869 = vadd.f32 %v1634, %v1797
  %v1870 = vadd.f32 %v1635, %v1799
  %v1871 = vadd.f32 %v1636, %v1801
  %v1872 = vadd.f32 %v1637, %v1803
  %v1873 = vadd.f32 %v1638, %v1805
  %v1874 = vadd.f32 %v1639, %v1807
  %v1875 = vadd.f32 %v1640, %v1809
  %v1876 = vadd.f32 %v1641, %v1811
  %v1877 = vadd.f32 %v1642, %v1813
  %v1878 = vld [vmem:[%s457] sm:$0xfe]
  %v1879 = vld [vmem:[%s457 + $0x8] sm:$0xfe]
  %v1880 = vld [vmem:[%s457 + $0x10] sm:$0xfe]
  %v1881 = vld [vmem:[%s457 + $0x18] sm:$0xfe]
  %v1882 = vld [vmem:[%s457 + $0x100] sm:$0x1]
  %v1883 = vld [vmem:[%s457 + $0x108] sm:$0x1]
  %v1884 = vld [vmem:[%s457 + $0x110] sm:$0x1]
  %v1885 = vld [vmem:[%s457 + $0x118] sm:$0x1]
  %s1886 = scalar_lea.vmem %s1, 36
  %v1887 = vld [vmem:[%s1886] ss:$8 sm:$0xf]
  %v1889 = vlaneseq
  %v1890 = vshrl.u32 %v1889, 7
  %v1891 = vsub.s32 0, %v1890
  %v1892 = vrot.slane %v1887, %v1891
  %v1893 = vlaneseq
  %v1894 = vshrl.u32 %v1893, 7
  %v1895 = vsub.s32 1, %v1894
  %v1896 = vrot.slane %v1887, %v1895
  %v1897 = vlaneseq
  %v1898 = vshrl.u32 %v1897, 7
  %v1899 = vsub.s32 2, %v1898
  %v1900 = vrot.slane %v1887, %v1899
  %v1901 = vlaneseq
  %v1902 = vshrl.u32 %v1901, 7
  %v1903 = vsub.s32 3, %v1902
  %v1904 = vrot.slane %v1887, %v1903
  %v1909 = vmul.f32 %v1878, %v1892
  %v1910 = vmul.f32 %v1879, %v1896
  %v1911 = vmul.f32 %v1880, %v1900
  %v1912 = vmul.f32 %v1881, %v1904
  %v1913 = vmul.f32 %v462, %v1892
  %v1914 = vmul.f32 %v463, %v1896
  %v1915 = vmul.f32 %v464, %v1900
  %v1916 = vmul.f32 %v465, %v1904
  %v1917 = vmul.f32 %v466, %v1892
  %v1918 = vmul.f32 %v467, %v1896
  %v1919 = vmul.f32 %v468, %v1900
  %v1920 = vmul.f32 %v469, %v1904
  %v1921 = vmul.f32 %v470, %v1892
  %v1922 = vmul.f32 %v471, %v1896
  %v1923 = vmul.f32 %v472, %v1900
  %v1924 = vmul.f32 %v473, %v1904
  %v1925 = vmul.f32 %v474, %v1892
  %v1926 = vmul.f32 %v475, %v1896
  %v1927 = vmul.f32 %v476, %v1900
  %v1928 = vmul.f32 %v477, %v1904
  %v1929 = vmul.f32 %v478, %v1892
  %v1930 = vmul.f32 %v479, %v1896
  %v1931 = vmul.f32 %v480, %v1900
  %v1932 = vmul.f32 %v481, %v1904
  %v1933 = vmul.f32 %v482, %v1892
  %v1934 = vmul.f32 %v483, %v1896
  %v1935 = vmul.f32 %v484, %v1900
  %v1936 = vmul.f32 %v485, %v1904
  %v1937 = vmul.f32 %v486, %v1892
  %v1938 = vmul.f32 %v487, %v1896
  %v1939 = vmul.f32 %v488, %v1900
  %v1940 = vmul.f32 %v489, %v1904
  %v1941 = vmul.f32 %v1882, %v1892
  %v1942 = vmul.f32 %v1883, %v1896
  %v1943 = vmul.f32 %v1884, %v1900
  %v1944 = vmul.f32 %v1885, %v1904
  %v1981 = vrot.slane %v1909, 1
  %v1982 = vrot.slane %v1913, 1
  %v1983 = vsel %vm1040, %v1981, %v1982
  %v1984 = vrot.slane %v1910, 1
  %v1985 = vrot.slane %v1914, 1
  %v1986 = vsel %vm1040, %v1984, %v1985
  %v1987 = vrot.slane %v1911, 1
  %v1988 = vrot.slane %v1915, 1
  %v1989 = vsel %vm1040, %v1987, %v1988
  %v1990 = vrot.slane %v1912, 1
  %v1991 = vrot.slane %v1916, 1
  %v1992 = vsel %vm1040, %v1990, %v1991
  %v1993 = vrot.slane %v1917, 1
  %v1994 = vsel %vm1040, %v1982, %v1993
  %v1995 = vrot.slane %v1918, 1
  %v1996 = vsel %vm1040, %v1985, %v1995
  %v1997 = vrot.slane %v1919, 1
  %v1998 = vsel %vm1040, %v1988, %v1997
  %v1999 = vrot.slane %v1920, 1
  %v2000 = vsel %vm1040, %v1991, %v1999
  %v2001 = vrot.slane %v1921, 1
  %v2002 = vsel %vm1040, %v1993, %v2001
  %v2003 = vrot.slane %v1922, 1
  %v2004 = vsel %vm1040, %v1995, %v2003
  %v2005 = vrot.slane %v1923, 1
  %v2006 = vsel %vm1040, %v1997, %v2005
  %v2007 = vrot.slane %v1924, 1
  %v2008 = vsel %vm1040, %v1999, %v2007
  %v2009 = vrot.slane %v1925, 1
  %v2010 = vsel %vm1040, %v2001, %v2009
  %v2011 = vrot.slane %v1926, 1
  %v2012 = vsel %vm1040, %v2003, %v2011
  %v2013 = vrot.slane %v1927, 1
  %v2014 = vsel %vm1040, %v2005, %v2013
  %v2015 = vrot.slane %v1928, 1
  %v2016 = vsel %vm1040, %v2007, %v2015
  %v2017 = vrot.slane %v1929, 1
  %v2018 = vsel %vm1040, %v2009, %v2017
  %v2019 = vrot.slane %v1930, 1
  %v2020 = vsel %vm1040, %v2011, %v2019
  %v2021 = vrot.slane %v1931, 1
  %v2022 = vsel %vm1040, %v2013, %v2021
  %v2023 = vrot.slane %v1932, 1
  %v2024 = vsel %vm1040, %v2015, %v2023
  %v2025 = vrot.slane %v1933, 1
  %v2026 = vsel %vm1040, %v2017, %v2025
  %v2027 = vrot.slane %v1934, 1
  %v2028 = vsel %vm1040, %v2019, %v2027
  %v2029 = vrot.slane %v1935, 1
  %v2030 = vsel %vm1040, %v2021, %v2029
  %v2031 = vrot.slane %v1936, 1
  %v2032 = vsel %vm1040, %v2023, %v2031
  %v2033 = vrot.slane %v1937, 1
  %v2034 = vsel %vm1040, %v2025, %v2033
  %v2035 = vrot.slane %v1938, 1
  %v2036 = vsel %vm1040, %v2027, %v2035
  %v2037 = vrot.slane %v1939, 1
  %v2038 = vsel %vm1040, %v2029, %v2037
  %v2039 = vrot.slane %v1940, 1
  %v2040 = vsel %vm1040, %v2031, %v2039
  %v2041 = vrot.slane %v1941, 1
  %v2042 = vsel %vm1040, %v2033, %v2041
  %v2043 = vrot.slane %v1942, 1
  %v2044 = vsel %vm1040, %v2035, %v2043
  %v2045 = vrot.slane %v1943, 1
  %v2046 = vsel %vm1040, %v2037, %v2045
  %v2047 = vrot.slane %v1944, 1
  %v2048 = vsel %vm1040, %v2039, %v2047
  %v2081 = vadd.f32 %v1846, %v1983
  %v2082 = vadd.f32 %v1847, %v1986
  %v2083 = vadd.f32 %v1848, %v1989
  %v2084 = vadd.f32 %v1849, %v1992
  %v2085 = vadd.f32 %v1850, %v1994
  %v2086 = vadd.f32 %v1851, %v1996
  %v2087 = vadd.f32 %v1852, %v1998
  %v2088 = vadd.f32 %v1853, %v2000
  %v2089 = vadd.f32 %v1854, %v2002
  %v2090 = vadd.f32 %v1855, %v2004
  %v2091 = vadd.f32 %v1856, %v2006
  %v2092 = vadd.f32 %v1857, %v2008
  %v2093 = vadd.f32 %v1858, %v2010
  %v2094 = vadd.f32 %v1859, %v2012
  %v2095 = vadd.f32 %v1860, %v2014
  %v2096 = vadd.f32 %v1861, %v2016
  %v2097 = vadd.f32 %v1862, %v2018
  %v2098 = vadd.f32 %v1863, %v2020
  %v2099 = vadd.f32 %v1864, %v2022
  %v2100 = vadd.f32 %v1865, %v2024
  %v2101 = vadd.f32 %v1866, %v2026
  %v2102 = vadd.f32 %v1867, %v2028
  %v2103 = vadd.f32 %v1868, %v2030
  %v2104 = vadd.f32 %v1869, %v2032
  %v2105 = vadd.f32 %v1870, %v2034
  %v2106 = vadd.f32 %v1871, %v2036
  %v2107 = vadd.f32 %v1872, %v2038
  %v2108 = vadd.f32 %v1873, %v2040
  %v2109 = vadd.f32 %v1874, %v2042
  %v2110 = vadd.f32 %v1875, %v2044
  %v2111 = vadd.f32 %v1876, %v2046
  %v2112 = vadd.f32 %v1877, %v2048
  %v2113 = vld [vmem:[%s577] sm:$0xfe]
  %v2114 = vld [vmem:[%s577 + $0x8] sm:$0xfe]
  %v2115 = vld [vmem:[%s577 + $0x10] sm:$0xfe]
  %v2116 = vld [vmem:[%s577 + $0x18] sm:$0xfe]
  %v2117 = vld [vmem:[%s577 + $0x100] sm:$0x1]
  %v2118 = vld [vmem:[%s577 + $0x108] sm:$0x1]
  %v2119 = vld [vmem:[%s577 + $0x110] sm:$0x1]
  %v2120 = vld [vmem:[%s577 + $0x118] sm:$0x1]
  %s2121 = scalar_lea.vmem %s1, 37
  %v2122 = vld [vmem:[%s2121] ss:$8 sm:$0xf]
  %v2124 = vlaneseq
  %v2125 = vshrl.u32 %v2124, 7
  %v2126 = vsub.s32 0, %v2125
  %v2127 = vrot.slane %v2122, %v2126
  %v2128 = vlaneseq
  %v2129 = vshrl.u32 %v2128, 7
  %v2130 = vsub.s32 1, %v2129
  %v2131 = vrot.slane %v2122, %v2130
  %v2132 = vlaneseq
  %v2133 = vshrl.u32 %v2132, 7
  %v2134 = vsub.s32 2, %v2133
  %v2135 = vrot.slane %v2122, %v2134
  %v2136 = vlaneseq
  %v2137 = vshrl.u32 %v2136, 7
  %v2138 = vsub.s32 3, %v2137
  %v2139 = vrot.slane %v2122, %v2138
  %v2144 = vmul.f32 %v2113, %v2127
  %v2145 = vmul.f32 %v2114, %v2131
  %v2146 = vmul.f32 %v2115, %v2135
  %v2147 = vmul.f32 %v2116, %v2139
  %v2148 = vmul.f32 %v582, %v2127
  %v2149 = vmul.f32 %v583, %v2131
  %v2150 = vmul.f32 %v584, %v2135
  %v2151 = vmul.f32 %v585, %v2139
  %v2152 = vmul.f32 %v586, %v2127
  %v2153 = vmul.f32 %v587, %v2131
  %v2154 = vmul.f32 %v588, %v2135
  %v2155 = vmul.f32 %v589, %v2139
  %v2156 = vmul.f32 %v590, %v2127
  %v2157 = vmul.f32 %v591, %v2131
  %v2158 = vmul.f32 %v592, %v2135
  %v2159 = vmul.f32 %v593, %v2139
  %v2160 = vmul.f32 %v594, %v2127
  %v2161 = vmul.f32 %v595, %v2131
  %v2162 = vmul.f32 %v596, %v2135
  %v2163 = vmul.f32 %v597, %v2139
  %v2164 = vmul.f32 %v598, %v2127
  %v2165 = vmul.f32 %v599, %v2131
  %v2166 = vmul.f32 %v600, %v2135
  %v2167 = vmul.f32 %v601, %v2139
  %v2168 = vmul.f32 %v602, %v2127
  %v2169 = vmul.f32 %v603, %v2131
  %v2170 = vmul.f32 %v604, %v2135
  %v2171 = vmul.f32 %v605, %v2139
  %v2172 = vmul.f32 %v606, %v2127
  %v2173 = vmul.f32 %v607, %v2131
  %v2174 = vmul.f32 %v608, %v2135
  %v2175 = vmul.f32 %v609, %v2139
  %v2176 = vmul.f32 %v2117, %v2127
  %v2177 = vmul.f32 %v2118, %v2131
  %v2178 = vmul.f32 %v2119, %v2135
  %v2179 = vmul.f32 %v2120, %v2139
  %v2216 = vrot.slane %v2144, 1
  %v2217 = vrot.slane %v2148, 1
  %v2218 = vsel %vm1040, %v2216, %v2217
  %v2219 = vrot.slane %v2145, 1
  %v2220 = vrot.slane %v2149, 1
  %v2221 = vsel %vm1040, %v2219, %v2220
  %v2222 = vrot.slane %v2146, 1
  %v2223 = vrot.slane %v2150, 1
  %v2224 = vsel %vm1040, %v2222, %v2223
  %v2225 = vrot.slane %v2147, 1
  %v2226 = vrot.slane %v2151, 1
  %v2227 = vsel %vm1040, %v2225, %v2226
  %v2228 = vrot.slane %v2152, 1
  %v2229 = vsel %vm1040, %v2217, %v2228
  %v2230 = vrot.slane %v2153, 1
  %v2231 = vsel %vm1040, %v2220, %v2230
  %v2232 = vrot.slane %v2154, 1
  %v2233 = vsel %vm1040, %v2223, %v2232
  %v2234 = vrot.slane %v2155, 1
  %v2235 = vsel %vm1040, %v2226, %v2234
  %v2236 = vrot.slane %v2156, 1
  %v2237 = vsel %vm1040, %v2228, %v2236
  %v2238 = vrot.slane %v2157, 1
  %v2239 = vsel %vm1040, %v2230, %v2238
  %v2240 = vrot.slane %v2158, 1
  %v2241 = vsel %vm1040, %v2232, %v2240
  %v2242 = vrot.slane %v2159, 1
  %v2243 = vsel %vm1040, %v2234, %v2242
  %v2244 = vrot.slane %v2160, 1
  %v2245 = vsel %vm1040, %v2236, %v2244
  %v2246 = vrot.slane %v2161, 1
  %v2247 = vsel %vm1040, %v2238, %v2246
  %v2248 = vrot.slane %v2162, 1
  %v2249 = vsel %vm1040, %v2240, %v2248
  %v2250 = vrot.slane %v2163, 1
  %v2251 = vsel %vm1040, %v2242, %v2250
  %v2252 = vrot.slane %v2164, 1
  %v2253 = vsel %vm1040, %v2244, %v2252
  %v2254 = vrot.slane %v2165, 1
  %v2255 = vsel %vm1040, %v2246, %v2254
  %v2256 = vrot.slane %v2166, 1
  %v2257 = vsel %vm1040, %v2248, %v2256
  %v2258 = vrot.slane %v2167, 1
  %v2259 = vsel %vm1040, %v2250, %v2258
  %v2260 = vrot.slane %v2168, 1
  %v2261 = vsel %vm1040, %v2252, %v2260
  %v2262 = vrot.slane %v2169, 1
  %v2263 = vsel %vm1040, %v2254, %v2262
  %v2264 = vrot.slane %v2170, 1
  %v2265 = vsel %vm1040, %v2256, %v2264
  %v2266 = vrot.slane %v2171, 1
  %v2267 = vsel %vm1040, %v2258, %v2266
  %v2268 = vrot.slane %v2172, 1
  %v2269 = vsel %vm1040, %v2260, %v2268
  %v2270 = vrot.slane %v2173, 1
  %v2271 = vsel %vm1040, %v2262, %v2270
  %v2272 = vrot.slane %v2174, 1
  %v2273 = vsel %vm1040, %v2264, %v2272
  %v2274 = vrot.slane %v2175, 1
  %v2275 = vsel %vm1040, %v2266, %v2274
  %v2276 = vrot.slane %v2176, 1
  %v2277 = vsel %vm1040, %v2268, %v2276
  %v2278 = vrot.slane %v2177, 1
  %v2279 = vsel %vm1040, %v2270, %v2278
  %v2280 = vrot.slane %v2178, 1
  %v2281 = vsel %vm1040, %v2272, %v2280
  %v2282 = vrot.slane %v2179, 1
  %v2283 = vsel %vm1040, %v2274, %v2282
  %v2316 = vadd.f32 %v2081, %v2218
  %v2317 = vadd.f32 %v2082, %v2221
  %v2318 = vadd.f32 %v2083, %v2224
  %v2319 = vadd.f32 %v2084, %v2227
  %v2320 = vadd.f32 %v2085, %v2229
  %v2321 = vadd.f32 %v2086, %v2231
  %v2322 = vadd.f32 %v2087, %v2233
  %v2323 = vadd.f32 %v2088, %v2235
  %v2324 = vadd.f32 %v2089, %v2237
  %v2325 = vadd.f32 %v2090, %v2239
  %v2326 = vadd.f32 %v2091, %v2241
  %v2327 = vadd.f32 %v2092, %v2243
  %v2328 = vadd.f32 %v2093, %v2245
  %v2329 = vadd.f32 %v2094, %v2247
  %v2330 = vadd.f32 %v2095, %v2249
  %v2331 = vadd.f32 %v2096, %v2251
  %v2332 = vadd.f32 %v2097, %v2253
  %v2333 = vadd.f32 %v2098, %v2255
  %v2334 = vadd.f32 %v2099, %v2257
  %v2335 = vadd.f32 %v2100, %v2259
  %v2336 = vadd.f32 %v2101, %v2261
  %v2337 = vadd.f32 %v2102, %v2263
  %v2338 = vadd.f32 %v2103, %v2265
  %v2339 = vadd.f32 %v2104, %v2267
  %v2340 = vadd.f32 %v2105, %v2269
  %v2341 = vadd.f32 %v2106, %v2271
  %v2342 = vadd.f32 %v2107, %v2273
  %v2343 = vadd.f32 %v2108, %v2275
  %v2344 = vadd.f32 %v2109, %v2277
  %v2345 = vadd.f32 %v2110, %v2279
  %v2346 = vadd.f32 %v2111, %v2281
  %v2347 = vadd.f32 %v2112, %v2283
  %v2348 = vld [vmem:[%s697] sm:$0xfe]
  %v2349 = vld [vmem:[%s697 + $0x8] sm:$0xfe]
  %v2350 = vld [vmem:[%s697 + $0x10] sm:$0xfe]
  %v2351 = vld [vmem:[%s697 + $0x18] sm:$0xfe]
  %v2352 = vld [vmem:[%s697 + $0x100] sm:$0x1]
  %v2353 = vld [vmem:[%s697 + $0x108] sm:$0x1]
  %v2354 = vld [vmem:[%s697 + $0x110] sm:$0x1]
  %v2355 = vld [vmem:[%s697 + $0x118] sm:$0x1]
  %s2356 = scalar_lea.vmem %s1, 38
  %v2357 = vld [vmem:[%s2356] ss:$8 sm:$0xf]
  %v2359 = vlaneseq
  %v2360 = vshrl.u32 %v2359, 7
  %v2361 = vsub.s32 0, %v2360
  %v2362 = vrot.slane %v2357, %v2361
  %v2363 = vlaneseq
  %v2364 = vshrl.u32 %v2363, 7
  %v2365 = vsub.s32 1, %v2364
  %v2366 = vrot.slane %v2357, %v2365
  %v2367 = vlaneseq
  %v2368 = vshrl.u32 %v2367, 7
  %v2369 = vsub.s32 2, %v2368
  %v2370 = vrot.slane %v2357, %v2369
  %v2371 = vlaneseq
  %v2372 = vshrl.u32 %v2371, 7
  %v2373 = vsub.s32 3, %v2372
  %v2374 = vrot.slane %v2357, %v2373
  %v2379 = vmul.f32 %v2348, %v2362
  %v2380 = vmul.f32 %v2349, %v2366
  %v2381 = vmul.f32 %v2350, %v2370
  %v2382 = vmul.f32 %v2351, %v2374
  %v2383 = vmul.f32 %v702, %v2362
  %v2384 = vmul.f32 %v703, %v2366
  %v2385 = vmul.f32 %v704, %v2370
  %v2386 = vmul.f32 %v705, %v2374
  %v2387 = vmul.f32 %v706, %v2362
  %v2388 = vmul.f32 %v707, %v2366
  %v2389 = vmul.f32 %v708, %v2370
  %v2390 = vmul.f32 %v709, %v2374
  %v2391 = vmul.f32 %v710, %v2362
  %v2392 = vmul.f32 %v711, %v2366
  %v2393 = vmul.f32 %v712, %v2370
  %v2394 = vmul.f32 %v713, %v2374
  %v2395 = vmul.f32 %v714, %v2362
  %v2396 = vmul.f32 %v715, %v2366
  %v2397 = vmul.f32 %v716, %v2370
  %v2398 = vmul.f32 %v717, %v2374
  %v2399 = vmul.f32 %v718, %v2362
  %v2400 = vmul.f32 %v719, %v2366
  %v2401 = vmul.f32 %v720, %v2370
  %v2402 = vmul.f32 %v721, %v2374
  %v2403 = vmul.f32 %v722, %v2362
  %v2404 = vmul.f32 %v723, %v2366
  %v2405 = vmul.f32 %v724, %v2370
  %v2406 = vmul.f32 %v725, %v2374
  %v2407 = vmul.f32 %v726, %v2362
  %v2408 = vmul.f32 %v727, %v2366
  %v2409 = vmul.f32 %v728, %v2370
  %v2410 = vmul.f32 %v729, %v2374
  %v2411 = vmul.f32 %v2352, %v2362
  %v2412 = vmul.f32 %v2353, %v2366
  %v2413 = vmul.f32 %v2354, %v2370
  %v2414 = vmul.f32 %v2355, %v2374
  %v2451 = vrot.slane %v2379, 1
  %v2452 = vrot.slane %v2383, 1
  %v2453 = vsel %vm1040, %v2451, %v2452
  %v2454 = vrot.slane %v2380, 1
  %v2455 = vrot.slane %v2384, 1
  %v2456 = vsel %vm1040, %v2454, %v2455
  %v2457 = vrot.slane %v2381, 1
  %v2458 = vrot.slane %v2385, 1
  %v2459 = vsel %vm1040, %v2457, %v2458
  %v2460 = vrot.slane %v2382, 1
  %v2461 = vrot.slane %v2386, 1
  %v2462 = vsel %vm1040, %v2460, %v2461
  %v2463 = vrot.slane %v2387, 1
  %v2464 = vsel %vm1040, %v2452, %v2463
  %v2465 = vrot.slane %v2388, 1
  %v2466 = vsel %vm1040, %v2455, %v2465
  %v2467 = vrot.slane %v2389, 1
  %v2468 = vsel %vm1040, %v2458, %v2467
  %v2469 = vrot.slane %v2390, 1
  %v2470 = vsel %vm1040, %v2461, %v2469
  %v2471 = vrot.slane %v2391, 1
  %v2472 = vsel %vm1040, %v2463, %v2471
  %v2473 = vrot.slane %v2392, 1
  %v2474 = vsel %vm1040, %v2465, %v2473
  %v2475 = vrot.slane %v2393, 1
  %v2476 = vsel %vm1040, %v2467, %v2475
  %v2477 = vrot.slane %v2394, 1
  %v2478 = vsel %vm1040, %v2469, %v2477
  %v2479 = vrot.slane %v2395, 1
  %v2480 = vsel %vm1040, %v2471, %v2479
  %v2481 = vrot.slane %v2396, 1
  %v2482 = vsel %vm1040, %v2473, %v2481
  %v2483 = vrot.slane %v2397, 1
  %v2484 = vsel %vm1040, %v2475, %v2483
  %v2485 = vrot.slane %v2398, 1
  %v2486 = vsel %vm1040, %v2477, %v2485
  %v2487 = vrot.slane %v2399, 1
  %v2488 = vsel %vm1040, %v2479, %v2487
  %v2489 = vrot.slane %v2400, 1
  %v2490 = vsel %vm1040, %v2481, %v2489
  %v2491 = vrot.slane %v2401, 1
  %v2492 = vsel %vm1040, %v2483, %v2491
  %v2493 = vrot.slane %v2402, 1
  %v2494 = vsel %vm1040, %v2485, %v2493
  %v2495 = vrot.slane %v2403, 1
  %v2496 = vsel %vm1040, %v2487, %v2495
  %v2497 = vrot.slane %v2404, 1
  %v2498 = vsel %vm1040, %v2489, %v2497
  %v2499 = vrot.slane %v2405, 1
  %v2500 = vsel %vm1040, %v2491, %v2499
  %v2501 = vrot.slane %v2406, 1
  %v2502 = vsel %vm1040, %v2493, %v2501
  %v2503 = vrot.slane %v2407, 1
  %v2504 = vsel %vm1040, %v2495, %v2503
  %v2505 = vrot.slane %v2408, 1
  %v2506 = vsel %vm1040, %v2497, %v2505
  %v2507 = vrot.slane %v2409, 1
  %v2508 = vsel %vm1040, %v2499, %v2507
  %v2509 = vrot.slane %v2410, 1
  %v2510 = vsel %vm1040, %v2501, %v2509
  %v2511 = vrot.slane %v2411, 1
  %v2512 = vsel %vm1040, %v2503, %v2511
  %v2513 = vrot.slane %v2412, 1
  %v2514 = vsel %vm1040, %v2505, %v2513
  %v2515 = vrot.slane %v2413, 1
  %v2516 = vsel %vm1040, %v2507, %v2515
  %v2517 = vrot.slane %v2414, 1
  %v2518 = vsel %vm1040, %v2509, %v2517
  %v2551 = vadd.f32 %v2316, %v2453
  %v2552 = vadd.f32 %v2317, %v2456
  %v2553 = vadd.f32 %v2318, %v2459
  %v2554 = vadd.f32 %v2319, %v2462
  %v2555 = vadd.f32 %v2320, %v2464
  %v2556 = vadd.f32 %v2321, %v2466
  %v2557 = vadd.f32 %v2322, %v2468
  %v2558 = vadd.f32 %v2323, %v2470
  %v2559 = vadd.f32 %v2324, %v2472
  %v2560 = vadd.f32 %v2325, %v2474
  %v2561 = vadd.f32 %v2326, %v2476
  %v2562 = vadd.f32 %v2327, %v2478
  %v2563 = vadd.f32 %v2328, %v2480
  %v2564 = vadd.f32 %v2329, %v2482
  %v2565 = vadd.f32 %v2330, %v2484
  %v2566 = vadd.f32 %v2331, %v2486
  %v2567 = vadd.f32 %v2332, %v2488
  %v2568 = vadd.f32 %v2333, %v2490
  %v2569 = vadd.f32 %v2334, %v2492
  %v2570 = vadd.f32 %v2335, %v2494
  %v2571 = vadd.f32 %v2336, %v2496
  %v2572 = vadd.f32 %v2337, %v2498
  %v2573 = vadd.f32 %v2338, %v2500
  %v2574 = vadd.f32 %v2339, %v2502
  %v2575 = vadd.f32 %v2340, %v2504
  %v2576 = vadd.f32 %v2341, %v2506
  %v2577 = vadd.f32 %v2342, %v2508
  %v2578 = vadd.f32 %v2343, %v2510
  %v2579 = vadd.f32 %v2344, %v2512
  %v2580 = vadd.f32 %v2345, %v2514
  %v2581 = vadd.f32 %v2346, %v2516
  %v2582 = vadd.f32 %v2347, %v2518
  %v2583 = vld [vmem:[%s817] sm:$0xfe]
  %v2584 = vld [vmem:[%s817 + $0x8] sm:$0xfe]
  %v2585 = vld [vmem:[%s817 + $0x10] sm:$0xfe]
  %v2586 = vld [vmem:[%s817 + $0x18] sm:$0xfe]
  %v2587 = vld [vmem:[%s817 + $0x100] sm:$0x1]
  %v2588 = vld [vmem:[%s817 + $0x108] sm:$0x1]
  %v2589 = vld [vmem:[%s817 + $0x110] sm:$0x1]
  %v2590 = vld [vmem:[%s817 + $0x118] sm:$0x1]
  %s2591 = scalar_lea.vmem %s1, 39
  %v2592 = vld [vmem:[%s2591] ss:$8 sm:$0xf]
  %v2594 = vlaneseq
  %v2595 = vshrl.u32 %v2594, 7
  %v2596 = vsub.s32 0, %v2595
  %v2597 = vrot.slane %v2592, %v2596
  %v2598 = vlaneseq
  %v2599 = vshrl.u32 %v2598, 7
  %v2600 = vsub.s32 1, %v2599
  %v2601 = vrot.slane %v2592, %v2600
  %v2602 = vlaneseq
  %v2603 = vshrl.u32 %v2602, 7
  %v2604 = vsub.s32 2, %v2603
  %v2605 = vrot.slane %v2592, %v2604
  %v2606 = vlaneseq
  %v2607 = vshrl.u32 %v2606, 7
  %v2608 = vsub.s32 3, %v2607
  %v2609 = vrot.slane %v2592, %v2608
  %v2614 = vmul.f32 %v2583, %v2597
  %v2615 = vmul.f32 %v2584, %v2601
  %v2616 = vmul.f32 %v2585, %v2605
  %v2617 = vmul.f32 %v2586, %v2609
  %v2618 = vmul.f32 %v822, %v2597
  %v2619 = vmul.f32 %v823, %v2601
  %v2620 = vmul.f32 %v824, %v2605
  %v2621 = vmul.f32 %v825, %v2609
  %v2622 = vmul.f32 %v826, %v2597
  %v2623 = vmul.f32 %v827, %v2601
  %v2624 = vmul.f32 %v828, %v2605
  %v2625 = vmul.f32 %v829, %v2609
  %v2626 = vmul.f32 %v830, %v2597
  %v2627 = vmul.f32 %v831, %v2601
  %v2628 = vmul.f32 %v832, %v2605
  %v2629 = vmul.f32 %v833, %v2609
  %v2630 = vmul.f32 %v834, %v2597
  %v2631 = vmul.f32 %v835, %v2601
  %v2632 = vmul.f32 %v836, %v2605
  %v2633 = vmul.f32 %v837, %v2609
  %v2634 = vmul.f32 %v838, %v2597
  %v2635 = vmul.f32 %v839, %v2601
  %v2636 = vmul.f32 %v840, %v2605
  %v2637 = vmul.f32 %v841, %v2609
  %v2638 = vmul.f32 %v842, %v2597
  %v2639 = vmul.f32 %v843, %v2601
  %v2640 = vmul.f32 %v844, %v2605
  %v2641 = vmul.f32 %v845, %v2609
  %v2642 = vmul.f32 %v846, %v2597
  %v2643 = vmul.f32 %v847, %v2601
  %v2644 = vmul.f32 %v848, %v2605
  %v2645 = vmul.f32 %v849, %v2609
  %v2646 = vmul.f32 %v2587, %v2597
  %v2647 = vmul.f32 %v2588, %v2601
  %v2648 = vmul.f32 %v2589, %v2605
  %v2649 = vmul.f32 %v2590, %v2609
  %v2686 = vrot.slane %v2614, 1
  %v2687 = vrot.slane %v2618, 1
  %v2688 = vsel %vm1040, %v2686, %v2687
  %v2689 = vrot.slane %v2615, 1
  %v2690 = vrot.slane %v2619, 1
  %v2691 = vsel %vm1040, %v2689, %v2690
  %v2692 = vrot.slane %v2616, 1
  %v2693 = vrot.slane %v2620, 1
  %v2694 = vsel %vm1040, %v2692, %v2693
  %v2695 = vrot.slane %v2617, 1
  %v2696 = vrot.slane %v2621, 1
  %v2697 = vsel %vm1040, %v2695, %v2696
  %v2698 = vrot.slane %v2622, 1
  %v2699 = vsel %vm1040, %v2687, %v2698
  %v2700 = vrot.slane %v2623, 1
  %v2701 = vsel %vm1040, %v2690, %v2700
  %v2702 = vrot.slane %v2624, 1
  %v2703 = vsel %vm1040, %v2693, %v2702
  %v2704 = vrot.slane %v2625, 1
  %v2705 = vsel %vm1040, %v2696, %v2704
  %v2706 = vrot.slane %v2626, 1
  %v2707 = vsel %vm1040, %v2698, %v2706
  %v2708 = vrot.slane %v2627, 1
  %v2709 = vsel %vm1040, %v2700, %v2708
  %v2710 = vrot.slane %v2628, 1
  %v2711 = vsel %vm1040, %v2702, %v2710
  %v2712 = vrot.slane %v2629, 1
  %v2713 = vsel %vm1040, %v2704, %v2712
  %v2714 = vrot.slane %v2630, 1
  %v2715 = vsel %vm1040, %v2706, %v2714
  %v2716 = vrot.slane %v2631, 1
  %v2717 = vsel %vm1040, %v2708, %v2716
  %v2718 = vrot.slane %v2632, 1
  %v2719 = vsel %vm1040, %v2710, %v2718
  %v2720 = vrot.slane %v2633, 1
  %v2721 = vsel %vm1040, %v2712, %v2720
  %v2722 = vrot.slane %v2634, 1
  %v2723 = vsel %vm1040, %v2714, %v2722
  %v2724 = vrot.slane %v2635, 1
  %v2725 = vsel %vm1040, %v2716, %v2724
  %v2726 = vrot.slane %v2636, 1
  %v2727 = vsel %vm1040, %v2718, %v2726
  %v2728 = vrot.slane %v2637, 1
  %v2729 = vsel %vm1040, %v2720, %v2728
  %v2730 = vrot.slane %v2638, 1
  %v2731 = vsel %vm1040, %v2722, %v2730
  %v2732 = vrot.slane %v2639, 1
  %v2733 = vsel %vm1040, %v2724, %v2732
  %v2734 = vrot.slane %v2640, 1
  %v2735 = vsel %vm1040, %v2726, %v2734
  %v2736 = vrot.slane %v2641, 1
  %v2737 = vsel %vm1040, %v2728, %v2736
  %v2738 = vrot.slane %v2642, 1
  %v2739 = vsel %vm1040, %v2730, %v2738
  %v2740 = vrot.slane %v2643, 1
  %v2741 = vsel %vm1040, %v2732, %v2740
  %v2742 = vrot.slane %v2644, 1
  %v2743 = vsel %vm1040, %v2734, %v2742
  %v2744 = vrot.slane %v2645, 1
  %v2745 = vsel %vm1040, %v2736, %v2744
  %v2746 = vrot.slane %v2646, 1
  %v2747 = vsel %vm1040, %v2738, %v2746
  %v2748 = vrot.slane %v2647, 1
  %v2749 = vsel %vm1040, %v2740, %v2748
  %v2750 = vrot.slane %v2648, 1
  %v2751 = vsel %vm1040, %v2742, %v2750
  %v2752 = vrot.slane %v2649, 1
  %v2753 = vsel %vm1040, %v2744, %v2752
  %v2786 = vadd.f32 %v2551, %v2688
  %v2787 = vadd.f32 %v2552, %v2691
  %v2788 = vadd.f32 %v2553, %v2694
  %v2789 = vadd.f32 %v2554, %v2697
  %v2790 = vadd.f32 %v2555, %v2699
  %v2791 = vadd.f32 %v2556, %v2701
  %v2792 = vadd.f32 %v2557, %v2703
  %v2793 = vadd.f32 %v2558, %v2705
  %v2794 = vadd.f32 %v2559, %v2707
  %v2795 = vadd.f32 %v2560, %v2709
  %v2796 = vadd.f32 %v2561, %v2711
  %v2797 = vadd.f32 %v2562, %v2713
  %v2798 = vadd.f32 %v2563, %v2715
  %v2799 = vadd.f32 %v2564, %v2717
  %v2800 = vadd.f32 %v2565, %v2719
  %v2801 = vadd.f32 %v2566, %v2721
  %v2802 = vadd.f32 %v2567, %v2723
  %v2803 = vadd.f32 %v2568, %v2725
  %v2804 = vadd.f32 %v2569, %v2727
  %v2805 = vadd.f32 %v2570, %v2729
  %v2806 = vadd.f32 %v2571, %v2731
  %v2807 = vadd.f32 %v2572, %v2733
  %v2808 = vadd.f32 %v2573, %v2735
  %v2809 = vadd.f32 %v2574, %v2737
  %v2810 = vadd.f32 %v2575, %v2739
  %v2811 = vadd.f32 %v2576, %v2741
  %v2812 = vadd.f32 %v2577, %v2743
  %v2813 = vadd.f32 %v2578, %v2745
  %v2814 = vadd.f32 %v2579, %v2747
  %v2815 = vadd.f32 %v2580, %v2749
  %v2816 = vadd.f32 %v2581, %v2751
  %v2817 = vadd.f32 %v2582, %v2753
  %v2818 = vld [vmem:[%s0] sm:$0xfc]
  %v2819 = vld [vmem:[%s0 + $0x8] sm:$0xfc]
  %v2820 = vld [vmem:[%s0 + $0x10] sm:$0xfc]
  %v2821 = vld [vmem:[%s0 + $0x18] sm:$0xfc]
  %v2822 = vld [vmem:[%s0 + $0x100] sm:$0x3]
  %v2823 = vld [vmem:[%s0 + $0x108] sm:$0x3]
  %v2824 = vld [vmem:[%s0 + $0x110] sm:$0x3]
  %v2825 = vld [vmem:[%s0 + $0x118] sm:$0x3]
  %s2826 = scalar_lea.vmem %s1, 64
  %v2827 = vld [vmem:[%s2826] ss:$8 sm:$0xf]
  %v2829 = vlaneseq
  %v2830 = vshrl.u32 %v2829, 7
  %v2831 = vsub.s32 0, %v2830
  %v2832 = vrot.slane %v2827, %v2831
  %v2833 = vlaneseq
  %v2834 = vshrl.u32 %v2833, 7
  %v2835 = vsub.s32 1, %v2834
  %v2836 = vrot.slane %v2827, %v2835
  %v2837 = vlaneseq
  %v2838 = vshrl.u32 %v2837, 7
  %v2839 = vsub.s32 2, %v2838
  %v2840 = vrot.slane %v2827, %v2839
  %v2841 = vlaneseq
  %v2842 = vshrl.u32 %v2841, 7
  %v2843 = vsub.s32 3, %v2842
  %v2844 = vrot.slane %v2827, %v2843
  %v2849 = vmul.f32 %v2818, %v2832
  %v2850 = vmul.f32 %v2819, %v2836
  %v2851 = vmul.f32 %v2820, %v2840
  %v2852 = vmul.f32 %v2821, %v2844
  %v2853 = vmul.f32 %v15, %v2832
  %v2854 = vmul.f32 %v16, %v2836
  %v2855 = vmul.f32 %v17, %v2840
  %v2856 = vmul.f32 %v18, %v2844
  %v2857 = vmul.f32 %v19, %v2832
  %v2858 = vmul.f32 %v20, %v2836
  %v2859 = vmul.f32 %v21, %v2840
  %v2860 = vmul.f32 %v22, %v2844
  %v2861 = vmul.f32 %v23, %v2832
  %v2862 = vmul.f32 %v24, %v2836
  %v2863 = vmul.f32 %v25, %v2840
  %v2864 = vmul.f32 %v26, %v2844
  %v2865 = vmul.f32 %v27, %v2832
  %v2866 = vmul.f32 %v28, %v2836
  %v2867 = vmul.f32 %v29, %v2840
  %v2868 = vmul.f32 %v30, %v2844
  %v2869 = vmul.f32 %v31, %v2832
  %v2870 = vmul.f32 %v32, %v2836
  %v2871 = vmul.f32 %v33, %v2840
  %v2872 = vmul.f32 %v34, %v2844
  %v2873 = vmul.f32 %v35, %v2832
  %v2874 = vmul.f32 %v36, %v2836
  %v2875 = vmul.f32 %v37, %v2840
  %v2876 = vmul.f32 %v38, %v2844
  %v2877 = vmul.f32 %v39, %v2832
  %v2878 = vmul.f32 %v40, %v2836
  %v2879 = vmul.f32 %v41, %v2840
  %v2880 = vmul.f32 %v42, %v2844
  %v2881 = vmul.f32 %v2822, %v2832
  %v2882 = vmul.f32 %v2823, %v2836
  %v2883 = vmul.f32 %v2824, %v2840
  %v2884 = vmul.f32 %v2825, %v2844
  %vm2921 = vcmask 1045504
  %v2922 = vrot.slane %v2849, 2
  %v2923 = vrot.slane %v2853, 2
  %v2924 = vsel %vm2921, %v2922, %v2923
  %v2925 = vrot.slane %v2850, 2
  %v2926 = vrot.slane %v2854, 2
  %v2927 = vsel %vm2921, %v2925, %v2926
  %v2928 = vrot.slane %v2851, 2
  %v2929 = vrot.slane %v2855, 2
  %v2930 = vsel %vm2921, %v2928, %v2929
  %v2931 = vrot.slane %v2852, 2
  %v2932 = vrot.slane %v2856, 2
  %v2933 = vsel %vm2921, %v2931, %v2932
  %v2934 = vrot.slane %v2857, 2
  %v2935 = vsel %vm2921, %v2923, %v2934
  %v2936 = vrot.slane %v2858, 2
  %v2937 = vsel %vm2921, %v2926, %v2936
  %v2938 = vrot.slane %v2859, 2
  %v2939 = vsel %vm2921, %v2929, %v2938
  %v2940 = vrot.slane %v2860, 2
  %v2941 = vsel %vm2921, %v2932, %v2940
  %v2942 = vrot.slane %v2861, 2
  %v2943 = vsel %vm2921, %v2934, %v2942
  %v2944 = vrot.slane %v2862, 2
  %v2945 = vsel %vm2921, %v2936, %v2944
  %v2946 = vrot.slane %v2863, 2
  %v2947 = vsel %vm2921, %v2938, %v2946
  %v2948 = vrot.slane %v2864, 2
  %v2949 = vsel %vm2921, %v2940, %v2948
  %v2950 = vrot.slane %v2865, 2
  %v2951 = vsel %vm2921, %v2942, %v2950
  %v2952 = vrot.slane %v2866, 2
  %v2953 = vsel %vm2921, %v2944, %v2952
  %v2954 = vrot.slane %v2867, 2
  %v2955 = vsel %vm2921, %v2946, %v2954
  %v2956 = vrot.slane %v2868, 2
  %v2957 = vsel %vm2921, %v2948, %v2956
  %v2958 = vrot.slane %v2869, 2
  %v2959 = vsel %vm2921, %v2950, %v2958
  %v2960 = vrot.slane %v2870, 2
  %v2961 = vsel %vm2921, %v2952, %v2960
  %v2962 = vrot.slane %v2871, 2
  %v2963 = vsel %vm2921, %v2954, %v2962
  %v2964 = vrot.slane %v2872, 2
  %v2965 = vsel %vm2921, %v2956, %v2964
  %v2966 = vrot.slane %v2873, 2
  %v2967 = vsel %vm2921, %v2958, %v2966
  %v2968 = vrot.slane %v2874, 2
  %v2969 = vsel %vm2921, %v2960, %v2968
  %v2970 = vrot.slane %v2875, 2
  %v2971 = vsel %vm2921, %v2962, %v2970
  %v2972 = vrot.slane %v2876, 2
  %v2973 = vsel %vm2921, %v2964, %v2972
  %v2974 = vrot.slane %v2877, 2
  %v2975 = vsel %vm2921, %v2966, %v2974
  %v2976 = vrot.slane %v2878, 2
  %v2977 = vsel %vm2921, %v2968, %v2976
  %v2978 = vrot.slane %v2879, 2
  %v2979 = vsel %vm2921, %v2970, %v2978
  %v2980 = vrot.slane %v2880, 2
  %v2981 = vsel %vm2921, %v2972, %v2980
  %v2982 = vrot.slane %v2881, 2
  %v2983 = vsel %vm2921, %v2974, %v2982
  %v2984 = vrot.slane %v2882, 2
  %v2985 = vsel %vm2921, %v2976, %v2984
  %v2986 = vrot.slane %v2883, 2
  %v2987 = vsel %vm2921, %v2978, %v2986
  %v2988 = vrot.slane %v2884, 2
  %v2989 = vsel %vm2921, %v2980, %v2988
  %v3022 = vadd.f32 %v2786, %v2924
  %v3023 = vadd.f32 %v2787, %v2927
  %v3024 = vadd.f32 %v2788, %v2930
  %v3025 = vadd.f32 %v2789, %v2933
  %v3026 = vadd.f32 %v2790, %v2935
  %v3027 = vadd.f32 %v2791, %v2937
  %v3028 = vadd.f32 %v2792, %v2939
  %v3029 = vadd.f32 %v2793, %v2941
  %v3030 = vadd.f32 %v2794, %v2943
  %v3031 = vadd.f32 %v2795, %v2945
  %v3032 = vadd.f32 %v2796, %v2947
  %v3033 = vadd.f32 %v2797, %v2949
  %v3034 = vadd.f32 %v2798, %v2951
  %v3035 = vadd.f32 %v2799, %v2953
  %v3036 = vadd.f32 %v2800, %v2955
  %v3037 = vadd.f32 %v2801, %v2957
  %v3038 = vadd.f32 %v2802, %v2959
  %v3039 = vadd.f32 %v2803, %v2961
  %v3040 = vadd.f32 %v2804, %v2963
  %v3041 = vadd.f32 %v2805, %v2965
  %v3042 = vadd.f32 %v2806, %v2967
  %v3043 = vadd.f32 %v2807, %v2969
  %v3044 = vadd.f32 %v2808, %v2971
  %v3045 = vadd.f32 %v2809, %v2973
  %v3046 = vadd.f32 %v2810, %v2975
  %v3047 = vadd.f32 %v2811, %v2977
  %v3048 = vadd.f32 %v2812, %v2979
  %v3049 = vadd.f32 %v2813, %v2981
  %v3050 = vadd.f32 %v2814, %v2983
  %v3051 = vadd.f32 %v2815, %v2985
  %v3052 = vadd.f32 %v2816, %v2987
  %v3053 = vadd.f32 %v2817, %v2989
  %v3054 = vld [vmem:[%s97] sm:$0xfc]
  %v3055 = vld [vmem:[%s97 + $0x8] sm:$0xfc]
  %v3056 = vld [vmem:[%s97 + $0x10] sm:$0xfc]
  %v3057 = vld [vmem:[%s97 + $0x18] sm:$0xfc]
  %v3058 = vld [vmem:[%s97 + $0x100] sm:$0x3]
  %v3059 = vld [vmem:[%s97 + $0x108] sm:$0x3]
  %v3060 = vld [vmem:[%s97 + $0x110] sm:$0x3]
  %v3061 = vld [vmem:[%s97 + $0x118] sm:$0x3]
  %s3062 = scalar_lea.vmem %s1, 65
  %v3063 = vld [vmem:[%s3062] ss:$8 sm:$0xf]
  %v3065 = vlaneseq
  %v3066 = vshrl.u32 %v3065, 7
  %v3067 = vsub.s32 0, %v3066
  %v3068 = vrot.slane %v3063, %v3067
  %v3069 = vlaneseq
  %v3070 = vshrl.u32 %v3069, 7
  %v3071 = vsub.s32 1, %v3070
  %v3072 = vrot.slane %v3063, %v3071
  %v3073 = vlaneseq
  %v3074 = vshrl.u32 %v3073, 7
  %v3075 = vsub.s32 2, %v3074
  %v3076 = vrot.slane %v3063, %v3075
  %v3077 = vlaneseq
  %v3078 = vshrl.u32 %v3077, 7
  %v3079 = vsub.s32 3, %v3078
  %v3080 = vrot.slane %v3063, %v3079
  %v3085 = vmul.f32 %v3054, %v3068
  %v3086 = vmul.f32 %v3055, %v3072
  %v3087 = vmul.f32 %v3056, %v3076
  %v3088 = vmul.f32 %v3057, %v3080
  %v3089 = vmul.f32 %v102, %v3068
  %v3090 = vmul.f32 %v103, %v3072
  %v3091 = vmul.f32 %v104, %v3076
  %v3092 = vmul.f32 %v105, %v3080
  %v3093 = vmul.f32 %v106, %v3068
  %v3094 = vmul.f32 %v107, %v3072
  %v3095 = vmul.f32 %v108, %v3076
  %v3096 = vmul.f32 %v109, %v3080
  %v3097 = vmul.f32 %v110, %v3068
  %v3098 = vmul.f32 %v111, %v3072
  %v3099 = vmul.f32 %v112, %v3076
  %v3100 = vmul.f32 %v113, %v3080
  %v3101 = vmul.f32 %v114, %v3068
  %v3102 = vmul.f32 %v115, %v3072
  %v3103 = vmul.f32 %v116, %v3076
  %v3104 = vmul.f32 %v117, %v3080
  %v3105 = vmul.f32 %v118, %v3068
  %v3106 = vmul.f32 %v119, %v3072
  %v3107 = vmul.f32 %v120, %v3076
  %v3108 = vmul.f32 %v121, %v3080
  %v3109 = vmul.f32 %v122, %v3068
  %v3110 = vmul.f32 %v123, %v3072
  %v3111 = vmul.f32 %v124, %v3076
  %v3112 = vmul.f32 %v125, %v3080
  %v3113 = vmul.f32 %v126, %v3068
  %v3114 = vmul.f32 %v127, %v3072
  %v3115 = vmul.f32 %v128, %v3076
  %v3116 = vmul.f32 %v129, %v3080
  %v3117 = vmul.f32 %v3058, %v3068
  %v3118 = vmul.f32 %v3059, %v3072
  %v3119 = vmul.f32 %v3060, %v3076
  %v3120 = vmul.f32 %v3061, %v3080
  %v3157 = vrot.slane %v3085, 2
  %v3158 = vrot.slane %v3089, 2
  %v3159 = vsel %vm2921, %v3157, %v3158
  %v3160 = vrot.slane %v3086, 2
  %v3161 = vrot.slane %v3090, 2
  %v3162 = vsel %vm2921, %v3160, %v3161
  %v3163 = vrot.slane %v3087, 2
  %v3164 = vrot.slane %v3091, 2
  %v3165 = vsel %vm2921, %v3163, %v3164
  %v3166 = vrot.slane %v3088, 2
  %v3167 = vrot.slane %v3092, 2
  %v3168 = vsel %vm2921, %v3166, %v3167
  %v3169 = vrot.slane %v3093, 2
  %v3170 = vsel %vm2921, %v3158, %v3169
  %v3171 = vrot.slane %v3094, 2
  %v3172 = vsel %vm2921, %v3161, %v3171
  %v3173 = vrot.slane %v3095, 2
  %v3174 = vsel %vm2921, %v3164, %v3173
  %v3175 = vrot.slane %v3096, 2
  %v3176 = vsel %vm2921, %v3167, %v3175
  %v3177 = vrot.slane %v3097, 2
  %v3178 = vsel %vm2921, %v3169, %v3177
  %v3179 = vrot.slane %v3098, 2
  %v3180 = vsel %vm2921, %v3171, %v3179
  %v3181 = vrot.slane %v3099, 2
  %v3182 = vsel %vm2921, %v3173, %v3181
  %v3183 = vrot.slane %v3100, 2
  %v3184 = vsel %vm2921, %v3175, %v3183
  %v3185 = vrot.slane %v3101, 2
  %v3186 = vsel %vm2921, %v3177, %v3185
  %v3187 = vrot.slane %v3102, 2
  %v3188 = vsel %vm2921, %v3179, %v3187
  %v3189 = vrot.slane %v3103, 2
  %v3190 = vsel %vm2921, %v3181, %v3189
  %v3191 = vrot.slane %v3104, 2
  %v3192 = vsel %vm2921, %v3183, %v3191
  %v3193 = vrot.slane %v3105, 2
  %v3194 = vsel %vm2921, %v3185, %v3193
  %v3195 = vrot.slane %v3106, 2
  %v3196 = vsel %vm2921, %v3187, %v3195
  %v3197 = vrot.slane %v3107, 2
  %v3198 = vsel %vm2921, %v3189, %v3197
  %v3199 = vrot.slane %v3108, 2
  %v3200 = vsel %vm2921, %v3191, %v3199
  %v3201 = vrot.slane %v3109, 2
  %v3202 = vsel %vm2921, %v3193, %v3201
  %v3203 = vrot.slane %v3110, 2
  %v3204 = vsel %vm2921, %v3195, %v3203
  %v3205 = vrot.slane %v3111, 2
  %v3206 = vsel %vm2921, %v3197, %v3205
  %v3207 = vrot.slane %v3112, 2
  %v3208 = vsel %vm2921, %v3199, %v3207
  %v3209 = vrot.slane %v3113, 2
  %v3210 = vsel %vm2921, %v3201, %v3209
  %v3211 = vrot.slane %v3114, 2
  %v3212 = vsel %vm2921, %v3203, %v3211
  %v3213 = vrot.slane %v3115, 2
  %v3214 = vsel %vm2921, %v3205, %v3213
  %v3215 = vrot.slane %v3116, 2
  %v3216 = vsel %vm2921, %v3207, %v3215
  %v3217 = vrot.slane %v3117, 2
  %v3218 = vsel %vm2921, %v3209, %v3217
  %v3219 = vrot.slane %v3118, 2
  %v3220 = vsel %vm2921, %v3211, %v3219
  %v3221 = vrot.slane %v3119, 2
  %v3222 = vsel %vm2921, %v3213, %v3221
  %v3223 = vrot.slane %v3120, 2
  %v3224 = vsel %vm2921, %v3215, %v3223
  %v3257 = vadd.f32 %v3022, %v3159
  %v3258 = vadd.f32 %v3023, %v3162
  %v3259 = vadd.f32 %v3024, %v3165
  %v3260 = vadd.f32 %v3025, %v3168
  %v3261 = vadd.f32 %v3026, %v3170
  %v3262 = vadd.f32 %v3027, %v3172
  %v3263 = vadd.f32 %v3028, %v3174
  %v3264 = vadd.f32 %v3029, %v3176
  %v3265 = vadd.f32 %v3030, %v3178
  %v3266 = vadd.f32 %v3031, %v3180
  %v3267 = vadd.f32 %v3032, %v3182
  %v3268 = vadd.f32 %v3033, %v3184
  %v3269 = vadd.f32 %v3034, %v3186
  %v3270 = vadd.f32 %v3035, %v3188
  %v3271 = vadd.f32 %v3036, %v3190
  %v3272 = vadd.f32 %v3037, %v3192
  %v3273 = vadd.f32 %v3038, %v3194
  %v3274 = vadd.f32 %v3039, %v3196
  %v3275 = vadd.f32 %v3040, %v3198
  %v3276 = vadd.f32 %v3041, %v3200
  %v3277 = vadd.f32 %v3042, %v3202
  %v3278 = vadd.f32 %v3043, %v3204
  %v3279 = vadd.f32 %v3044, %v3206
  %v3280 = vadd.f32 %v3045, %v3208
  %v3281 = vadd.f32 %v3046, %v3210
  %v3282 = vadd.f32 %v3047, %v3212
  %v3283 = vadd.f32 %v3048, %v3214
  %v3284 = vadd.f32 %v3049, %v3216
  %v3285 = vadd.f32 %v3050, %v3218
  %v3286 = vadd.f32 %v3051, %v3220
  %v3287 = vadd.f32 %v3052, %v3222
  %v3288 = vadd.f32 %v3053, %v3224
  %v3289 = vld [vmem:[%s217] sm:$0xfc]
  %v3290 = vld [vmem:[%s217 + $0x8] sm:$0xfc]
  %v3291 = vld [vmem:[%s217 + $0x10] sm:$0xfc]
  %v3292 = vld [vmem:[%s217 + $0x18] sm:$0xfc]
  %v3293 = vld [vmem:[%s217 + $0x100] sm:$0x3]
  %v3294 = vld [vmem:[%s217 + $0x108] sm:$0x3]
  %v3295 = vld [vmem:[%s217 + $0x110] sm:$0x3]
  %v3296 = vld [vmem:[%s217 + $0x118] sm:$0x3]
  %s3297 = scalar_lea.vmem %s1, 66
  %v3298 = vld [vmem:[%s3297] ss:$8 sm:$0xf]
  %v3300 = vlaneseq
  %v3301 = vshrl.u32 %v3300, 7
  %v3302 = vsub.s32 0, %v3301
  %v3303 = vrot.slane %v3298, %v3302
  %v3304 = vlaneseq
  %v3305 = vshrl.u32 %v3304, 7
  %v3306 = vsub.s32 1, %v3305
  %v3307 = vrot.slane %v3298, %v3306
  %v3308 = vlaneseq
  %v3309 = vshrl.u32 %v3308, 7
  %v3310 = vsub.s32 2, %v3309
  %v3311 = vrot.slane %v3298, %v3310
  %v3312 = vlaneseq
  %v3313 = vshrl.u32 %v3312, 7
  %v3314 = vsub.s32 3, %v3313
  %v3315 = vrot.slane %v3298, %v3314
  %v3320 = vmul.f32 %v3289, %v3303
  %v3321 = vmul.f32 %v3290, %v3307
  %v3322 = vmul.f32 %v3291, %v3311
  %v3323 = vmul.f32 %v3292, %v3315
  %v3324 = vmul.f32 %v222, %v3303
  %v3325 = vmul.f32 %v223, %v3307
  %v3326 = vmul.f32 %v224, %v3311
  %v3327 = vmul.f32 %v225, %v3315
  %v3328 = vmul.f32 %v226, %v3303
  %v3329 = vmul.f32 %v227, %v3307
  %v3330 = vmul.f32 %v228, %v3311
  %v3331 = vmul.f32 %v229, %v3315
  %v3332 = vmul.f32 %v230, %v3303
  %v3333 = vmul.f32 %v231, %v3307
  %v3334 = vmul.f32 %v232, %v3311
  %v3335 = vmul.f32 %v233, %v3315
  %v3336 = vmul.f32 %v234, %v3303
  %v3337 = vmul.f32 %v235, %v3307
  %v3338 = vmul.f32 %v236, %v3311
  %v3339 = vmul.f32 %v237, %v3315
  %v3340 = vmul.f32 %v238, %v3303
  %v3341 = vmul.f32 %v239, %v3307
  %v3342 = vmul.f32 %v240, %v3311
  %v3343 = vmul.f32 %v241, %v3315
  %v3344 = vmul.f32 %v242, %v3303
  %v3345 = vmul.f32 %v243, %v3307
  %v3346 = vmul.f32 %v244, %v3311
  %v3347 = vmul.f32 %v245, %v3315
  %v3348 = vmul.f32 %v246, %v3303
  %v3349 = vmul.f32 %v247, %v3307
  %v3350 = vmul.f32 %v248, %v3311
  %v3351 = vmul.f32 %v249, %v3315
  %v3352 = vmul.f32 %v3293, %v3303
  %v3353 = vmul.f32 %v3294, %v3307
  %v3354 = vmul.f32 %v3295, %v3311
  %v3355 = vmul.f32 %v3296, %v3315
  %v3392 = vrot.slane %v3320, 2
  %v3393 = vrot.slane %v3324, 2
  %v3394 = vsel %vm2921, %v3392, %v3393
  %v3395 = vrot.slane %v3321, 2
  %v3396 = vrot.slane %v3325, 2
  %v3397 = vsel %vm2921, %v3395, %v3396
  %v3398 = vrot.slane %v3322, 2
  %v3399 = vrot.slane %v3326, 2
  %v3400 = vsel %vm2921, %v3398, %v3399
  %v3401 = vrot.slane %v3323, 2
  %v3402 = vrot.slane %v3327, 2
  %v3403 = vsel %vm2921, %v3401, %v3402
  %v3404 = vrot.slane %v3328, 2
  %v3405 = vsel %vm2921, %v3393, %v3404
  %v3406 = vrot.slane %v3329, 2
  %v3407 = vsel %vm2921, %v3396, %v3406
  %v3408 = vrot.slane %v3330, 2
  %v3409 = vsel %vm2921, %v3399, %v3408
  %v3410 = vrot.slane %v3331, 2
  %v3411 = vsel %vm2921, %v3402, %v3410
  %v3412 = vrot.slane %v3332, 2
  %v3413 = vsel %vm2921, %v3404, %v3412
  %v3414 = vrot.slane %v3333, 2
  %v3415 = vsel %vm2921, %v3406, %v3414
  %v3416 = vrot.slane %v3334, 2
  %v3417 = vsel %vm2921, %v3408, %v3416
  %v3418 = vrot.slane %v3335, 2
  %v3419 = vsel %vm2921, %v3410, %v3418
  %v3420 = vrot.slane %v3336, 2
  %v3421 = vsel %vm2921, %v3412, %v3420
  %v3422 = vrot.slane %v3337, 2
  %v3423 = vsel %vm2921, %v3414, %v3422
  %v3424 = vrot.slane %v3338, 2
  %v3425 = vsel %vm2921, %v3416, %v3424
  %v3426 = vrot.slane %v3339, 2
  %v3427 = vsel %vm2921, %v3418, %v3426
  %v3428 = vrot.slane %v3340, 2
  %v3429 = vsel %vm2921, %v3420, %v3428
  %v3430 = vrot.slane %v3341, 2
  %v3431 = vsel %vm2921, %v3422, %v3430
  %v3432 = vrot.slane %v3342, 2
  %v3433 = vsel %vm2921, %v3424, %v3432
  %v3434 = vrot.slane %v3343, 2
  %v3435 = vsel %vm2921, %v3426, %v3434
  %v3436 = vrot.slane %v3344, 2
  %v3437 = vsel %vm2921, %v3428, %v3436
  %v3438 = vrot.slane %v3345, 2
  %v3439 = vsel %vm2921, %v3430, %v3438
  %v3440 = vrot.slane %v3346, 2
  %v3441 = vsel %vm2921, %v3432, %v3440
  %v3442 = vrot.slane %v3347, 2
  %v3443 = vsel %vm2921, %v3434, %v3442
  %v3444 = vrot.slane %v3348, 2
  %v3445 = vsel %vm2921, %v3436, %v3444
  %v3446 = vrot.slane %v3349, 2
  %v3447 = vsel %vm2921, %v3438, %v3446
  %v3448 = vrot.slane %v3350, 2
  %v3449 = vsel %vm2921, %v3440, %v3448
  %v3450 = vrot.slane %v3351, 2
  %v3451 = vsel %vm2921, %v3442, %v3450
  %v3452 = vrot.slane %v3352, 2
  %v3453 = vsel %vm2921, %v3444, %v3452
  %v3454 = vrot.slane %v3353, 2
  %v3455 = vsel %vm2921, %v3446, %v3454
  %v3456 = vrot.slane %v3354, 2
  %v3457 = vsel %vm2921, %v3448, %v3456
  %v3458 = vrot.slane %v3355, 2
  %v3459 = vsel %vm2921, %v3450, %v3458
  %v3492 = vadd.f32 %v3257, %v3394
  %v3493 = vadd.f32 %v3258, %v3397
  %v3494 = vadd.f32 %v3259, %v3400
  %v3495 = vadd.f32 %v3260, %v3403
  %v3496 = vadd.f32 %v3261, %v3405
  %v3497 = vadd.f32 %v3262, %v3407
  %v3498 = vadd.f32 %v3263, %v3409
  %v3499 = vadd.f32 %v3264, %v3411
  %v3500 = vadd.f32 %v3265, %v3413
  %v3501 = vadd.f32 %v3266, %v3415
  %v3502 = vadd.f32 %v3267, %v3417
  %v3503 = vadd.f32 %v3268, %v3419
  %v3504 = vadd.f32 %v3269, %v3421
  %v3505 = vadd.f32 %v3270, %v3423
  %v3506 = vadd.f32 %v3271, %v3425
  %v3507 = vadd.f32 %v3272, %v3427
  %v3508 = vadd.f32 %v3273, %v3429
  %v3509 = vadd.f32 %v3274, %v3431
  %v3510 = vadd.f32 %v3275, %v3433
  %v3511 = vadd.f32 %v3276, %v3435
  %v3512 = vadd.f32 %v3277, %v3437
  %v3513 = vadd.f32 %v3278, %v3439
  %v3514 = vadd.f32 %v3279, %v3441
  %v3515 = vadd.f32 %v3280, %v3443
  %v3516 = vadd.f32 %v3281, %v3445
  %v3517 = vadd.f32 %v3282, %v3447
  %v3518 = vadd.f32 %v3283, %v3449
  %v3519 = vadd.f32 %v3284, %v3451
  %v3520 = vadd.f32 %v3285, %v3453
  %v3521 = vadd.f32 %v3286, %v3455
  %v3522 = vadd.f32 %v3287, %v3457
  %v3523 = vadd.f32 %v3288, %v3459
  %v3524 = vld [vmem:[%s337] sm:$0xfc]
  %v3525 = vld [vmem:[%s337 + $0x8] sm:$0xfc]
  %v3526 = vld [vmem:[%s337 + $0x10] sm:$0xfc]
  %v3527 = vld [vmem:[%s337 + $0x18] sm:$0xfc]
  %v3528 = vld [vmem:[%s337 + $0x100] sm:$0x3]
  %v3529 = vld [vmem:[%s337 + $0x108] sm:$0x3]
  %v3530 = vld [vmem:[%s337 + $0x110] sm:$0x3]
  %v3531 = vld [vmem:[%s337 + $0x118] sm:$0x3]
  %s3532 = scalar_lea.vmem %s1, 67
  %v3533 = vld [vmem:[%s3532] ss:$8 sm:$0xf]
  %v3535 = vlaneseq
  %v3536 = vshrl.u32 %v3535, 7
  %v3537 = vsub.s32 0, %v3536
  %v3538 = vrot.slane %v3533, %v3537
  %v3539 = vlaneseq
  %v3540 = vshrl.u32 %v3539, 7
  %v3541 = vsub.s32 1, %v3540
  %v3542 = vrot.slane %v3533, %v3541
  %v3543 = vlaneseq
  %v3544 = vshrl.u32 %v3543, 7
  %v3545 = vsub.s32 2, %v3544
  %v3546 = vrot.slane %v3533, %v3545
  %v3547 = vlaneseq
  %v3548 = vshrl.u32 %v3547, 7
  %v3549 = vsub.s32 3, %v3548
  %v3550 = vrot.slane %v3533, %v3549
  %v3555 = vmul.f32 %v3524, %v3538
  %v3556 = vmul.f32 %v3525, %v3542
  %v3557 = vmul.f32 %v3526, %v3546
  %v3558 = vmul.f32 %v3527, %v3550
  %v3559 = vmul.f32 %v342, %v3538
  %v3560 = vmul.f32 %v343, %v3542
  %v3561 = vmul.f32 %v344, %v3546
  %v3562 = vmul.f32 %v345, %v3550
  %v3563 = vmul.f32 %v346, %v3538
  %v3564 = vmul.f32 %v347, %v3542
  %v3565 = vmul.f32 %v348, %v3546
  %v3566 = vmul.f32 %v349, %v3550
  %v3567 = vmul.f32 %v350, %v3538
  %v3568 = vmul.f32 %v351, %v3542
  %v3569 = vmul.f32 %v352, %v3546
  %v3570 = vmul.f32 %v353, %v3550
  %v3571 = vmul.f32 %v354, %v3538
  %v3572 = vmul.f32 %v355, %v3542
  %v3573 = vmul.f32 %v356, %v3546
  %v3574 = vmul.f32 %v357, %v3550
  %v3575 = vmul.f32 %v358, %v3538
  %v3576 = vmul.f32 %v359, %v3542
  %v3577 = vmul.f32 %v360, %v3546
  %v3578 = vmul.f32 %v361, %v3550
  %v3579 = vmul.f32 %v362, %v3538
  %v3580 = vmul.f32 %v363, %v3542
  %v3581 = vmul.f32 %v364, %v3546
  %v3582 = vmul.f32 %v365, %v3550
  %v3583 = vmul.f32 %v366, %v3538
  %v3584 = vmul.f32 %v367, %v3542
  %v3585 = vmul.f32 %v368, %v3546
  %v3586 = vmul.f32 %v369, %v3550
  %v3587 = vmul.f32 %v3528, %v3538
  %v3588 = vmul.f32 %v3529, %v3542
  %v3589 = vmul.f32 %v3530, %v3546
  %v3590 = vmul.f32 %v3531, %v3550
  %v3627 = vrot.slane %v3555, 2
  %v3628 = vrot.slane %v3559, 2
  %v3629 = vsel %vm2921, %v3627, %v3628
  %v3630 = vrot.slane %v3556, 2
  %v3631 = vrot.slane %v3560, 2
  %v3632 = vsel %vm2921, %v3630, %v3631
  %v3633 = vrot.slane %v3557, 2
  %v3634 = vrot.slane %v3561, 2
  %v3635 = vsel %vm2921, %v3633, %v3634
  %v3636 = vrot.slane %v3558, 2
  %v3637 = vrot.slane %v3562, 2
  %v3638 = vsel %vm2921, %v3636, %v3637
  %v3639 = vrot.slane %v3563, 2
  %v3640 = vsel %vm2921, %v3628, %v3639
  %v3641 = vrot.slane %v3564, 2
  %v3642 = vsel %vm2921, %v3631, %v3641
  %v3643 = vrot.slane %v3565, 2
  %v3644 = vsel %vm2921, %v3634, %v3643
  %v3645 = vrot.slane %v3566, 2
  %v3646 = vsel %vm2921, %v3637, %v3645
  %v3647 = vrot.slane %v3567, 2
  %v3648 = vsel %vm2921, %v3639, %v3647
  %v3649 = vrot.slane %v3568, 2
  %v3650 = vsel %vm2921, %v3641, %v3649
  %v3651 = vrot.slane %v3569, 2
  %v3652 = vsel %vm2921, %v3643, %v3651
  %v3653 = vrot.slane %v3570, 2
  %v3654 = vsel %vm2921, %v3645, %v3653
  %v3655 = vrot.slane %v3571, 2
  %v3656 = vsel %vm2921, %v3647, %v3655
  %v3657 = vrot.slane %v3572, 2
  %v3658 = vsel %vm2921, %v3649, %v3657
  %v3659 = vrot.slane %v3573, 2
  %v3660 = vsel %vm2921, %v3651, %v3659
  %v3661 = vrot.slane %v3574, 2
  %v3662 = vsel %vm2921, %v3653, %v3661
  %v3663 = vrot.slane %v3575, 2
  %v3664 = vsel %vm2921, %v3655, %v3663
  %v3665 = vrot.slane %v3576, 2
  %v3666 = vsel %vm2921, %v3657, %v3665
  %v3667 = vrot.slane %v3577, 2
  %v3668 = vsel %vm2921, %v3659, %v3667
  %v3669 = vrot.slane %v3578, 2
  %v3670 = vsel %vm2921, %v3661, %v3669
  %v3671 = vrot.slane %v3579, 2
  %v3672 = vsel %vm2921, %v3663, %v3671
  %v3673 = vrot.slane %v3580, 2
  %v3674 = vsel %vm2921, %v3665, %v3673
  %v3675 = vrot.slane %v3581, 2
  %v3676 = vsel %vm2921, %v3667, %v3675
  %v3677 = vrot.slane %v3582, 2
  %v3678 = vsel %vm2921, %v3669, %v3677
  %v3679 = vrot.slane %v3583, 2
  %v3680 = vsel %vm2921, %v3671, %v3679
  %v3681 = vrot.slane %v3584, 2
  %v3682 = vsel %vm2921, %v3673, %v3681
  %v3683 = vrot.slane %v3585, 2
  %v3684 = vsel %vm2921, %v3675, %v3683
  %v3685 = vrot.slane %v3586, 2
  %v3686 = vsel %vm2921, %v3677, %v3685
  %v3687 = vrot.slane %v3587, 2
  %v3688 = vsel %vm2921, %v3679, %v3687
  %v3689 = vrot.slane %v3588, 2
  %v3690 = vsel %vm2921, %v3681, %v3689
  %v3691 = vrot.slane %v3589, 2
  %v3692 = vsel %vm2921, %v3683, %v3691
  %v3693 = vrot.slane %v3590, 2
  %v3694 = vsel %vm2921, %v3685, %v3693
  %v3727 = vadd.f32 %v3492, %v3629
  %v3728 = vadd.f32 %v3493, %v3632
  %v3729 = vadd.f32 %v3494, %v3635
  %v3730 = vadd.f32 %v3495, %v3638
  %v3731 = vadd.f32 %v3496, %v3640
  %v3732 = vadd.f32 %v3497, %v3642
  %v3733 = vadd.f32 %v3498, %v3644
  %v3734 = vadd.f32 %v3499, %v3646
  %v3735 = vadd.f32 %v3500, %v3648
  %v3736 = vadd.f32 %v3501, %v3650
  %v3737 = vadd.f32 %v3502, %v3652
  %v3738 = vadd.f32 %v3503, %v3654
  %v3739 = vadd.f32 %v3504, %v3656
  %v3740 = vadd.f32 %v3505, %v3658
  %v3741 = vadd.f32 %v3506, %v3660
  %v3742 = vadd.f32 %v3507, %v3662
  %v3743 = vadd.f32 %v3508, %v3664
  %v3744 = vadd.f32 %v3509, %v3666
  %v3745 = vadd.f32 %v3510, %v3668
  %v3746 = vadd.f32 %v3511, %v3670
  %v3747 = vadd.f32 %v3512, %v3672
  %v3748 = vadd.f32 %v3513, %v3674
  %v3749 = vadd.f32 %v3514, %v3676
  %v3750 = vadd.f32 %v3515, %v3678
  %v3751 = vadd.f32 %v3516, %v3680
  %v3752 = vadd.f32 %v3517, %v3682
  %v3753 = vadd.f32 %v3518, %v3684
  %v3754 = vadd.f32 %v3519, %v3686
  %v3755 = vadd.f32 %v3520, %v3688
  %v3756 = vadd.f32 %v3521, %v3690
  %v3757 = vadd.f32 %v3522, %v3692
  %v3758 = vadd.f32 %v3523, %v3694
  %v3759 = vld [vmem:[%s457] sm:$0xfc]
  %v3760 = vld [vmem:[%s457 + $0x8] sm:$0xfc]
  %v3761 = vld [vmem:[%s457 + $0x10] sm:$0xfc]
  %v3762 = vld [vmem:[%s457 + $0x18] sm:$0xfc]
  %v3763 = vld [vmem:[%s457 + $0x100] sm:$0x3]
  %v3764 = vld [vmem:[%s457 + $0x108] sm:$0x3]
  %v3765 = vld [vmem:[%s457 + $0x110] sm:$0x3]
  %v3766 = vld [vmem:[%s457 + $0x118] sm:$0x3]
  %s3767 = scalar_lea.vmem %s1, 68
  %v3768 = vld [vmem:[%s3767] ss:$8 sm:$0xf]
  %v3770 = vlaneseq
  %v3771 = vshrl.u32 %v3770, 7
  %v3772 = vsub.s32 0, %v3771
  %v3773 = vrot.slane %v3768, %v3772
  %v3774 = vlaneseq
  %v3775 = vshrl.u32 %v3774, 7
  %v3776 = vsub.s32 1, %v3775
  %v3777 = vrot.slane %v3768, %v3776
  %v3778 = vlaneseq
  %v3779 = vshrl.u32 %v3778, 7
  %v3780 = vsub.s32 2, %v3779
  %v3781 = vrot.slane %v3768, %v3780
  %v3782 = vlaneseq
  %v3783 = vshrl.u32 %v3782, 7
  %v3784 = vsub.s32 3, %v3783
  %v3785 = vrot.slane %v3768, %v3784
  %v3790 = vmul.f32 %v3759, %v3773
  %v3791 = vmul.f32 %v3760, %v3777
  %v3792 = vmul.f32 %v3761, %v3781
  %v3793 = vmul.f32 %v3762, %v3785
  %v3794 = vmul.f32 %v462, %v3773
  %v3795 = vmul.f32 %v463, %v3777
  %v3796 = vmul.f32 %v464, %v3781
  %v3797 = vmul.f32 %v465, %v3785
  %v3798 = vmul.f32 %v466, %v3773
  %v3799 = vmul.f32 %v467, %v3777
  %v3800 = vmul.f32 %v468, %v3781
  %v3801 = vmul.f32 %v469, %v3785
  %v3802 = vmul.f32 %v470, %v3773
  %v3803 = vmul.f32 %v471, %v3777
  %v3804 = vmul.f32 %v472, %v3781
  %v3805 = vmul.f32 %v473, %v3785
  %v3806 = vmul.f32 %v474, %v3773
  %v3807 = vmul.f32 %v475, %v3777
  %v3808 = vmul.f32 %v476, %v3781
  %v3809 = vmul.f32 %v477, %v3785
  %v3810 = vmul.f32 %v478, %v3773
  %v3811 = vmul.f32 %v479, %v3777
  %v3812 = vmul.f32 %v480, %v3781
  %v3813 = vmul.f32 %v481, %v3785
  %v3814 = vmul.f32 %v482, %v3773
  %v3815 = vmul.f32 %v483, %v3777
  %v3816 = vmul.f32 %v484, %v3781
  %v3817 = vmul.f32 %v485, %v3785
  %v3818 = vmul.f32 %v486, %v3773
  %v3819 = vmul.f32 %v487, %v3777
  %v3820 = vmul.f32 %v488, %v3781
  %v3821 = vmul.f32 %v489, %v3785
  %v3822 = vmul.f32 %v3763, %v3773
  %v3823 = vmul.f32 %v3764, %v3777
  %v3824 = vmul.f32 %v3765, %v3781
  %v3825 = vmul.f32 %v3766, %v3785
  %v3862 = vrot.slane %v3790, 2
  %v3863 = vrot.slane %v3794, 2
  %v3864 = vsel %vm2921, %v3862, %v3863
  %v3865 = vrot.slane %v3791, 2
  %v3866 = vrot.slane %v3795, 2
  %v3867 = vsel %vm2921, %v3865, %v3866
  %v3868 = vrot.slane %v3792, 2
  %v3869 = vrot.slane %v3796, 2
  %v3870 = vsel %vm2921, %v3868, %v3869
  %v3871 = vrot.slane %v3793, 2
  %v3872 = vrot.slane %v3797, 2
  %v3873 = vsel %vm2921, %v3871, %v3872
  %v3874 = vrot.slane %v3798, 2
  %v3875 = vsel %vm2921, %v3863, %v3874
  %v3876 = vrot.slane %v3799, 2
  %v3877 = vsel %vm2921, %v3866, %v3876
  %v3878 = vrot.slane %v3800, 2
  %v3879 = vsel %vm2921, %v3869, %v3878
  %v3880 = vrot.slane %v3801, 2
  %v3881 = vsel %vm2921, %v3872, %v3880
  %v3882 = vrot.slane %v3802, 2
  %v3883 = vsel %vm2921, %v3874, %v3882
  %v3884 = vrot.slane %v3803, 2
  %v3885 = vsel %vm2921, %v3876, %v3884
  %v3886 = vrot.slane %v3804, 2
  %v3887 = vsel %vm2921, %v3878, %v3886
  %v3888 = vrot.slane %v3805, 2
  %v3889 = vsel %vm2921, %v3880, %v3888
  %v3890 = vrot.slane %v3806, 2
  %v3891 = vsel %vm2921, %v3882, %v3890
  %v3892 = vrot.slane %v3807, 2
  %v3893 = vsel %vm2921, %v3884, %v3892
  %v3894 = vrot.slane %v3808, 2
  %v3895 = vsel %vm2921, %v3886, %v3894
  %v3896 = vrot.slane %v3809, 2
  %v3897 = vsel %vm2921, %v3888, %v3896
  %v3898 = vrot.slane %v3810, 2
  %v3899 = vsel %vm2921, %v3890, %v3898
  %v3900 = vrot.slane %v3811, 2
  %v3901 = vsel %vm2921, %v3892, %v3900
  %v3902 = vrot.slane %v3812, 2
  %v3903 = vsel %vm2921, %v3894, %v3902
  %v3904 = vrot.slane %v3813, 2
  %v3905 = vsel %vm2921, %v3896, %v3904
  %v3906 = vrot.slane %v3814, 2
  %v3907 = vsel %vm2921, %v3898, %v3906
  %v3908 = vrot.slane %v3815, 2
  %v3909 = vsel %vm2921, %v3900, %v3908
  %v3910 = vrot.slane %v3816, 2
  %v3911 = vsel %vm2921, %v3902, %v3910
  %v3912 = vrot.slane %v3817, 2
  %v3913 = vsel %vm2921, %v3904, %v3912
  %v3914 = vrot.slane %v3818, 2
  %v3915 = vsel %vm2921, %v3906, %v3914
  %v3916 = vrot.slane %v3819, 2
  %v3917 = vsel %vm2921, %v3908, %v3916
  %v3918 = vrot.slane %v3820, 2
  %v3919 = vsel %vm2921, %v3910, %v3918
  %v3920 = vrot.slane %v3821, 2
  %v3921 = vsel %vm2921, %v3912, %v3920
  %v3922 = vrot.slane %v3822, 2
  %v3923 = vsel %vm2921, %v3914, %v3922
  %v3924 = vrot.slane %v3823, 2
  %v3925 = vsel %vm2921, %v3916, %v3924
  %v3926 = vrot.slane %v3824, 2
  %v3927 = vsel %vm2921, %v3918, %v3926
  %v3928 = vrot.slane %v3825, 2
  %v3929 = vsel %vm2921, %v3920, %v3928
  %v3962 = vadd.f32 %v3727, %v3864
  %v3963 = vadd.f32 %v3728, %v3867
  %v3964 = vadd.f32 %v3729, %v3870
  %v3965 = vadd.f32 %v3730, %v3873
  %v3966 = vadd.f32 %v3731, %v3875
  %v3967 = vadd.f32 %v3732, %v3877
  %v3968 = vadd.f32 %v3733, %v3879
  %v3969 = vadd.f32 %v3734, %v3881
  %v3970 = vadd.f32 %v3735, %v3883
  %v3971 = vadd.f32 %v3736, %v3885
  %v3972 = vadd.f32 %v3737, %v3887
  %v3973 = vadd.f32 %v3738, %v3889
  %v3974 = vadd.f32 %v3739, %v3891
  %v3975 = vadd.f32 %v3740, %v3893
  %v3976 = vadd.f32 %v3741, %v3895
  %v3977 = vadd.f32 %v3742, %v3897
  %v3978 = vadd.f32 %v3743, %v3899
  %v3979 = vadd.f32 %v3744, %v3901
  %v3980 = vadd.f32 %v3745, %v3903
  %v3981 = vadd.f32 %v3746, %v3905
  %v3982 = vadd.f32 %v3747, %v3907
  %v3983 = vadd.f32 %v3748, %v3909
  %v3984 = vadd.f32 %v3749, %v3911
  %v3985 = vadd.f32 %v3750, %v3913
  %v3986 = vadd.f32 %v3751, %v3915
  %v3987 = vadd.f32 %v3752, %v3917
  %v3988 = vadd.f32 %v3753, %v3919
  %v3989 = vadd.f32 %v3754, %v3921
  %v3990 = vadd.f32 %v3755, %v3923
  %v3991 = vadd.f32 %v3756, %v3925
  %v3992 = vadd.f32 %v3757, %v3927
  %v3993 = vadd.f32 %v3758, %v3929
  %v3994 = vld [vmem:[%s577] sm:$0xfc]
  %v3995 = vld [vmem:[%s577 + $0x8] sm:$0xfc]
  %v3996 = vld [vmem:[%s577 + $0x10] sm:$0xfc]
  %v3997 = vld [vmem:[%s577 + $0x18] sm:$0xfc]
  %v3998 = vld [vmem:[%s577 + $0x100] sm:$0x3]
  %v3999 = vld [vmem:[%s577 + $0x108] sm:$0x3]
  %v4000 = vld [vmem:[%s577 + $0x110] sm:$0x3]
  %v4001 = vld [vmem:[%s577 + $0x118] sm:$0x3]
  %s4002 = scalar_lea.vmem %s1, 69
  %v4003 = vld [vmem:[%s4002] ss:$8 sm:$0xf]
  %v4005 = vlaneseq
  %v4006 = vshrl.u32 %v4005, 7
  %v4007 = vsub.s32 0, %v4006
  %v4008 = vrot.slane %v4003, %v4007
  %v4009 = vlaneseq
  %v4010 = vshrl.u32 %v4009, 7
  %v4011 = vsub.s32 1, %v4010
  %v4012 = vrot.slane %v4003, %v4011
  %v4013 = vlaneseq
  %v4014 = vshrl.u32 %v4013, 7
  %v4015 = vsub.s32 2, %v4014
  %v4016 = vrot.slane %v4003, %v4015
  %v4017 = vlaneseq
  %v4018 = vshrl.u32 %v4017, 7
  %v4019 = vsub.s32 3, %v4018
  %v4020 = vrot.slane %v4003, %v4019
  %v4025 = vmul.f32 %v3994, %v4008
  %v4026 = vmul.f32 %v3995, %v4012
  %v4027 = vmul.f32 %v3996, %v4016
  %v4028 = vmul.f32 %v3997, %v4020
  %v4029 = vmul.f32 %v582, %v4008
  %v4030 = vmul.f32 %v583, %v4012
  %v4031 = vmul.f32 %v584, %v4016
  %v4032 = vmul.f32 %v585, %v4020
  %v4033 = vmul.f32 %v586, %v4008
  %v4034 = vmul.f32 %v587, %v4012
  %v4035 = vmul.f32 %v588, %v4016
  %v4036 = vmul.f32 %v589, %v4020
  %v4037 = vmul.f32 %v590, %v4008
  %v4038 = vmul.f32 %v591, %v4012
  %v4039 = vmul.f32 %v592, %v4016
  %v4040 = vmul.f32 %v593, %v4020
  %v4041 = vmul.f32 %v594, %v4008
  %v4042 = vmul.f32 %v595, %v4012
  %v4043 = vmul.f32 %v596, %v4016
  %v4044 = vmul.f32 %v597, %v4020
  %v4045 = vmul.f32 %v598, %v4008
  %v4046 = vmul.f32 %v599, %v4012
  %v4047 = vmul.f32 %v600, %v4016
  %v4048 = vmul.f32 %v601, %v4020
  %v4049 = vmul.f32 %v602, %v4008
  %v4050 = vmul.f32 %v603, %v4012
  %v4051 = vmul.f32 %v604, %v4016
  %v4052 = vmul.f32 %v605, %v4020
  %v4053 = vmul.f32 %v606, %v4008
  %v4054 = vmul.f32 %v607, %v4012
  %v4055 = vmul.f32 %v608, %v4016
  %v4056 = vmul.f32 %v609, %v4020
  %v4057 = vmul.f32 %v3998, %v4008
  %v4058 = vmul.f32 %v3999, %v4012
  %v4059 = vmul.f32 %v4000, %v4016
  %v4060 = vmul.f32 %v4001, %v4020
  %v4097 = vrot.slane %v4025, 2
  %v4098 = vrot.slane %v4029, 2
  %v4099 = vsel %vm2921, %v4097, %v4098
  %v4100 = vrot.slane %v4026, 2
  %v4101 = vrot.slane %v4030, 2
  %v4102 = vsel %vm2921, %v4100, %v4101
  %v4103 = vrot.slane %v4027, 2
  %v4104 = vrot.slane %v4031, 2
  %v4105 = vsel %vm2921, %v4103, %v4104
  %v4106 = vrot.slane %v4028, 2
  %v4107 = vrot.slane %v4032, 2
  %v4108 = vsel %vm2921, %v4106, %v4107
  %v4109 = vrot.slane %v4033, 2
  %v4110 = vsel %vm2921, %v4098, %v4109
  %v4111 = vrot.slane %v4034, 2
  %v4112 = vsel %vm2921, %v4101, %v4111
  %v4113 = vrot.slane %v4035, 2
  %v4114 = vsel %vm2921, %v4104, %v4113
  %v4115 = vrot.slane %v4036, 2
  %v4116 = vsel %vm2921, %v4107, %v4115
  %v4117 = vrot.slane %v4037, 2
  %v4118 = vsel %vm2921, %v4109, %v4117
  %v4119 = vrot.slane %v4038, 2
  %v4120 = vsel %vm2921, %v4111, %v4119
  %v4121 = vrot.slane %v4039, 2
  %v4122 = vsel %vm2921, %v4113, %v4121
  %v4123 = vrot.slane %v4040, 2
  %v4124 = vsel %vm2921, %v4115, %v4123
  %v4125 = vrot.slane %v4041, 2
  %v4126 = vsel %vm2921, %v4117, %v4125
  %v4127 = vrot.slane %v4042, 2
  %v4128 = vsel %vm2921, %v4119, %v4127
  %v4129 = vrot.slane %v4043, 2
  %v4130 = vsel %vm2921, %v4121, %v4129
  %v4131 = vrot.slane %v4044, 2
  %v4132 = vsel %vm2921, %v4123, %v4131
  %v4133 = vrot.slane %v4045, 2
  %v4134 = vsel %vm2921, %v4125, %v4133
  %v4135 = vrot.slane %v4046, 2
  %v4136 = vsel %vm2921, %v4127, %v4135
  %v4137 = vrot.slane %v4047, 2
  %v4138 = vsel %vm2921, %v4129, %v4137
  %v4139 = vrot.slane %v4048, 2
  %v4140 = vsel %vm2921, %v4131, %v4139
  %v4141 = vrot.slane %v4049, 2
  %v4142 = vsel %vm2921, %v4133, %v4141
  %v4143 = vrot.slane %v4050, 2
  %v4144 = vsel %vm2921, %v4135, %v4143
  %v4145 = vrot.slane %v4051, 2
  %v4146 = vsel %vm2921, %v4137, %v4145
  %v4147 = vrot.slane %v4052, 2
  %v4148 = vsel %vm2921, %v4139, %v4147
  %v4149 = vrot.slane %v4053, 2
  %v4150 = vsel %vm2921, %v4141, %v4149
  %v4151 = vrot.slane %v4054, 2
  %v4152 = vsel %vm2921, %v4143, %v4151
  %v4153 = vrot.slane %v4055, 2
  %v4154 = vsel %vm2921, %v4145, %v4153
  %v4155 = vrot.slane %v4056, 2
  %v4156 = vsel %vm2921, %v4147, %v4155
  %v4157 = vrot.slane %v4057, 2
  %v4158 = vsel %vm2921, %v4149, %v4157
  %v4159 = vrot.slane %v4058, 2
  %v4160 = vsel %vm2921, %v4151, %v4159
  %v4161 = vrot.slane %v4059, 2
  %v4162 = vsel %vm2921, %v4153, %v4161
  %v4163 = vrot.slane %v4060, 2
  %v4164 = vsel %vm2921, %v4155, %v4163
  %v4197 = vadd.f32 %v3962, %v4099
  %v4198 = vadd.f32 %v3963, %v4102
  %v4199 = vadd.f32 %v3964, %v4105
  %v4200 = vadd.f32 %v3965, %v4108
  %v4201 = vadd.f32 %v3966, %v4110
  %v4202 = vadd.f32 %v3967, %v4112
  %v4203 = vadd.f32 %v3968, %v4114
  %v4204 = vadd.f32 %v3969, %v4116
  %v4205 = vadd.f32 %v3970, %v4118
  %v4206 = vadd.f32 %v3971, %v4120
  %v4207 = vadd.f32 %v3972, %v4122
  %v4208 = vadd.f32 %v3973, %v4124
  %v4209 = vadd.f32 %v3974, %v4126
  %v4210 = vadd.f32 %v3975, %v4128
  %v4211 = vadd.f32 %v3976, %v4130
  %v4212 = vadd.f32 %v3977, %v4132
  %v4213 = vadd.f32 %v3978, %v4134
  %v4214 = vadd.f32 %v3979, %v4136
  %v4215 = vadd.f32 %v3980, %v4138
  %v4216 = vadd.f32 %v3981, %v4140
  %v4217 = vadd.f32 %v3982, %v4142
  %v4218 = vadd.f32 %v3983, %v4144
  %v4219 = vadd.f32 %v3984, %v4146
  %v4220 = vadd.f32 %v3985, %v4148
  %v4221 = vadd.f32 %v3986, %v4150
  %v4222 = vadd.f32 %v3987, %v4152
  %v4223 = vadd.f32 %v3988, %v4154
  %v4224 = vadd.f32 %v3989, %v4156
  %v4225 = vadd.f32 %v3990, %v4158
  %v4226 = vadd.f32 %v3991, %v4160
  %v4227 = vadd.f32 %v3992, %v4162
  %v4228 = vadd.f32 %v3993, %v4164
  %v4229 = vld [vmem:[%s697] sm:$0xfc]
  %v4230 = vld [vmem:[%s697 + $0x8] sm:$0xfc]
  %v4231 = vld [vmem:[%s697 + $0x10] sm:$0xfc]
  %v4232 = vld [vmem:[%s697 + $0x18] sm:$0xfc]
  %v4233 = vld [vmem:[%s697 + $0x100] sm:$0x3]
  %v4234 = vld [vmem:[%s697 + $0x108] sm:$0x3]
  %v4235 = vld [vmem:[%s697 + $0x110] sm:$0x3]
  %v4236 = vld [vmem:[%s697 + $0x118] sm:$0x3]
  %s4237 = scalar_lea.vmem %s1, 70
  %v4238 = vld [vmem:[%s4237] ss:$8 sm:$0xf]
  %v4240 = vlaneseq
  %v4241 = vshrl.u32 %v4240, 7
  %v4242 = vsub.s32 0, %v4241
  %v4243 = vrot.slane %v4238, %v4242
  %v4244 = vlaneseq
  %v4245 = vshrl.u32 %v4244, 7
  %v4246 = vsub.s32 1, %v4245
  %v4247 = vrot.slane %v4238, %v4246
  %v4248 = vlaneseq
  %v4249 = vshrl.u32 %v4248, 7
  %v4250 = vsub.s32 2, %v4249
  %v4251 = vrot.slane %v4238, %v4250
  %v4252 = vlaneseq
  %v4253 = vshrl.u32 %v4252, 7
  %v4254 = vsub.s32 3, %v4253
  %v4255 = vrot.slane %v4238, %v4254
  %v4260 = vmul.f32 %v4229, %v4243
  %v4261 = vmul.f32 %v4230, %v4247
  %v4262 = vmul.f32 %v4231, %v4251
  %v4263 = vmul.f32 %v4232, %v4255
  %v4264 = vmul.f32 %v702, %v4243
  %v4265 = vmul.f32 %v703, %v4247
  %v4266 = vmul.f32 %v704, %v4251
  %v4267 = vmul.f32 %v705, %v4255
  %v4268 = vmul.f32 %v706, %v4243
  %v4269 = vmul.f32 %v707, %v4247
  %v4270 = vmul.f32 %v708, %v4251
  %v4271 = vmul.f32 %v709, %v4255
  %v4272 = vmul.f32 %v710, %v4243
  %v4273 = vmul.f32 %v711, %v4247
  %v4274 = vmul.f32 %v712, %v4251
  %v4275 = vmul.f32 %v713, %v4255
  %v4276 = vmul.f32 %v714, %v4243
  %v4277 = vmul.f32 %v715, %v4247
  %v4278 = vmul.f32 %v716, %v4251
  %v4279 = vmul.f32 %v717, %v4255
  %v4280 = vmul.f32 %v718, %v4243
  %v4281 = vmul.f32 %v719, %v4247
  %v4282 = vmul.f32 %v720, %v4251
  %v4283 = vmul.f32 %v721, %v4255
  %v4284 = vmul.f32 %v722, %v4243
  %v4285 = vmul.f32 %v723, %v4247
  %v4286 = vmul.f32 %v724, %v4251
  %v4287 = vmul.f32 %v725, %v4255
  %v4288 = vmul.f32 %v726, %v4243
  %v4289 = vmul.f32 %v727, %v4247
  %v4290 = vmul.f32 %v728, %v4251
  %v4291 = vmul.f32 %v729, %v4255
  %v4292 = vmul.f32 %v4233, %v4243
  %v4293 = vmul.f32 %v4234, %v4247
  %v4294 = vmul.f32 %v4235, %v4251
  %v4295 = vmul.f32 %v4236, %v4255
  %v4332 = vrot.slane %v4260, 2
  %v4333 = vrot.slane %v4264, 2
  %v4334 = vsel %vm2921, %v4332, %v4333
  %v4335 = vrot.slane %v4261, 2
  %v4336 = vrot.slane %v4265, 2
  %v4337 = vsel %vm2921, %v4335, %v4336
  %v4338 = vrot.slane %v4262, 2
  %v4339 = vrot.slane %v4266, 2
  %v4340 = vsel %vm2921, %v4338, %v4339
  %v4341 = vrot.slane %v4263, 2
  %v4342 = vrot.slane %v4267, 2
  %v4343 = vsel %vm2921, %v4341, %v4342
  %v4344 = vrot.slane %v4268, 2
  %v4345 = vsel %vm2921, %v4333, %v4344
  %v4346 = vrot.slane %v4269, 2
  %v4347 = vsel %vm2921, %v4336, %v4346
  %v4348 = vrot.slane %v4270, 2
  %v4349 = vsel %vm2921, %v4339, %v4348
  %v4350 = vrot.slane %v4271, 2
  %v4351 = vsel %vm2921, %v4342, %v4350
  %v4352 = vrot.slane %v4272, 2
  %v4353 = vsel %vm2921, %v4344, %v4352
  %v4354 = vrot.slane %v4273, 2
  %v4355 = vsel %vm2921, %v4346, %v4354
  %v4356 = vrot.slane %v4274, 2
  %v4357 = vsel %vm2921, %v4348, %v4356
  %v4358 = vrot.slane %v4275, 2
  %v4359 = vsel %vm2921, %v4350, %v4358
  %v4360 = vrot.slane %v4276, 2
  %v4361 = vsel %vm2921, %v4352, %v4360
  %v4362 = vrot.slane %v4277, 2
  %v4363 = vsel %vm2921, %v4354, %v4362
  %v4364 = vrot.slane %v4278, 2
  %v4365 = vsel %vm2921, %v4356, %v4364
  %v4366 = vrot.slane %v4279, 2
  %v4367 = vsel %vm2921, %v4358, %v4366
  %v4368 = vrot.slane %v4280, 2
  %v4369 = vsel %vm2921, %v4360, %v4368
  %v4370 = vrot.slane %v4281, 2
  %v4371 = vsel %vm2921, %v4362, %v4370
  %v4372 = vrot.slane %v4282, 2
  %v4373 = vsel %vm2921, %v4364, %v4372
  %v4374 = vrot.slane %v4283, 2
  %v4375 = vsel %vm2921, %v4366, %v4374
  %v4376 = vrot.slane %v4284, 2
  %v4377 = vsel %vm2921, %v4368, %v4376
  %v4378 = vrot.slane %v4285, 2
  %v4379 = vsel %vm2921, %v4370, %v4378
  %v4380 = vrot.slane %v4286, 2
  %v4381 = vsel %vm2921, %v4372, %v4380
  %v4382 = vrot.slane %v4287, 2
  %v4383 = vsel %vm2921, %v4374, %v4382
  %v4384 = vrot.slane %v4288, 2
  %v4385 = vsel %vm2921, %v4376, %v4384
  %v4386 = vrot.slane %v4289, 2
  %v4387 = vsel %vm2921, %v4378, %v4386
  %v4388 = vrot.slane %v4290, 2
  %v4389 = vsel %vm2921, %v4380, %v4388
  %v4390 = vrot.slane %v4291, 2
  %v4391 = vsel %vm2921, %v4382, %v4390
  %v4392 = vrot.slane %v4292, 2
  %v4393 = vsel %vm2921, %v4384, %v4392
  %v4394 = vrot.slane %v4293, 2
  %v4395 = vsel %vm2921, %v4386, %v4394
  %v4396 = vrot.slane %v4294, 2
  %v4397 = vsel %vm2921, %v4388, %v4396
  %v4398 = vrot.slane %v4295, 2
  %v4399 = vsel %vm2921, %v4390, %v4398
  %v4432 = vadd.f32 %v4197, %v4334
  %v4433 = vadd.f32 %v4198, %v4337
  %v4434 = vadd.f32 %v4199, %v4340
  %v4435 = vadd.f32 %v4200, %v4343
  %v4436 = vadd.f32 %v4201, %v4345
  %v4437 = vadd.f32 %v4202, %v4347
  %v4438 = vadd.f32 %v4203, %v4349
  %v4439 = vadd.f32 %v4204, %v4351
  %v4440 = vadd.f32 %v4205, %v4353
  %v4441 = vadd.f32 %v4206, %v4355
  %v4442 = vadd.f32 %v4207, %v4357
  %v4443 = vadd.f32 %v4208, %v4359
  %v4444 = vadd.f32 %v4209, %v4361
  %v4445 = vadd.f32 %v4210, %v4363
  %v4446 = vadd.f32 %v4211, %v4365
  %v4447 = vadd.f32 %v4212, %v4367
  %v4448 = vadd.f32 %v4213, %v4369
  %v4449 = vadd.f32 %v4214, %v4371
  %v4450 = vadd.f32 %v4215, %v4373
  %v4451 = vadd.f32 %v4216, %v4375
  %v4452 = vadd.f32 %v4217, %v4377
  %v4453 = vadd.f32 %v4218, %v4379
  %v4454 = vadd.f32 %v4219, %v4381
  %v4455 = vadd.f32 %v4220, %v4383
  %v4456 = vadd.f32 %v4221, %v4385
  %v4457 = vadd.f32 %v4222, %v4387
  %v4458 = vadd.f32 %v4223, %v4389
  %v4459 = vadd.f32 %v4224, %v4391
  %v4460 = vadd.f32 %v4225, %v4393
  %v4461 = vadd.f32 %v4226, %v4395
  %v4462 = vadd.f32 %v4227, %v4397
  %v4463 = vadd.f32 %v4228, %v4399
  %v4464 = vld [vmem:[%s817] sm:$0xfc]
  %v4465 = vld [vmem:[%s817 + $0x8] sm:$0xfc]
  %v4466 = vld [vmem:[%s817 + $0x10] sm:$0xfc]
  %v4467 = vld [vmem:[%s817 + $0x18] sm:$0xfc]
  %v4468 = vld [vmem:[%s817 + $0x100] sm:$0x3]
  %v4469 = vld [vmem:[%s817 + $0x108] sm:$0x3]
  %v4470 = vld [vmem:[%s817 + $0x110] sm:$0x3]
  %v4471 = vld [vmem:[%s817 + $0x118] sm:$0x3]
  %s4472 = scalar_lea.vmem %s1, 71
  %v4473 = vld [vmem:[%s4472] ss:$8 sm:$0xf]
  %v4475 = vlaneseq
  %v4476 = vshrl.u32 %v4475, 7
  %v4477 = vsub.s32 0, %v4476
  %v4478 = vrot.slane %v4473, %v4477
  %v4479 = vlaneseq
  %v4480 = vshrl.u32 %v4479, 7
  %v4481 = vsub.s32 1, %v4480
  %v4482 = vrot.slane %v4473, %v4481
  %v4483 = vlaneseq
  %v4484 = vshrl.u32 %v4483, 7
  %v4485 = vsub.s32 2, %v4484
  %v4486 = vrot.slane %v4473, %v4485
  %v4487 = vlaneseq
  %v4488 = vshrl.u32 %v4487, 7
  %v4489 = vsub.s32 3, %v4488
  %v4490 = vrot.slane %v4473, %v4489
  %v4495 = vmul.f32 %v4464, %v4478
  %v4496 = vmul.f32 %v4465, %v4482
  %v4497 = vmul.f32 %v4466, %v4486
  %v4498 = vmul.f32 %v4467, %v4490
  %v4499 = vmul.f32 %v822, %v4478
  %v4500 = vmul.f32 %v823, %v4482
  %v4501 = vmul.f32 %v824, %v4486
  %v4502 = vmul.f32 %v825, %v4490
  %v4503 = vmul.f32 %v826, %v4478
  %v4504 = vmul.f32 %v827, %v4482
  %v4505 = vmul.f32 %v828, %v4486
  %v4506 = vmul.f32 %v829, %v4490
  %v4507 = vmul.f32 %v830, %v4478
  %v4508 = vmul.f32 %v831, %v4482
  %v4509 = vmul.f32 %v832, %v4486
  %v4510 = vmul.f32 %v833, %v4490
  %v4511 = vmul.f32 %v834, %v4478
  %v4512 = vmul.f32 %v835, %v4482
  %v4513 = vmul.f32 %v836, %v4486
  %v4514 = vmul.f32 %v837, %v4490
  %v4515 = vmul.f32 %v838, %v4478
  %v4516 = vmul.f32 %v839, %v4482
  %v4517 = vmul.f32 %v840, %v4486
  %v4518 = vmul.f32 %v841, %v4490
  %v4519 = vmul.f32 %v842, %v4478
  %v4520 = vmul.f32 %v843, %v4482
  %v4521 = vmul.f32 %v844, %v4486
  %v4522 = vmul.f32 %v845, %v4490
  %v4523 = vmul.f32 %v846, %v4478
  %v4524 = vmul.f32 %v847, %v4482
  %v4525 = vmul.f32 %v848, %v4486
  %v4526 = vmul.f32 %v849, %v4490
  %v4527 = vmul.f32 %v4468, %v4478
  %v4528 = vmul.f32 %v4469, %v4482
  %v4529 = vmul.f32 %v4470, %v4486
  %v4530 = vmul.f32 %v4471, %v4490
  %v4567 = vrot.slane %v4495, 2
  %v4568 = vrot.slane %v4499, 2
  %v4569 = vsel %vm2921, %v4567, %v4568
  %v4570 = vrot.slane %v4496, 2
  %v4571 = vrot.slane %v4500, 2
  %v4572 = vsel %vm2921, %v4570, %v4571
  %v4573 = vrot.slane %v4497, 2
  %v4574 = vrot.slane %v4501, 2
  %v4575 = vsel %vm2921, %v4573, %v4574
  %v4576 = vrot.slane %v4498, 2
  %v4577 = vrot.slane %v4502, 2
  %v4578 = vsel %vm2921, %v4576, %v4577
  %v4579 = vrot.slane %v4503, 2
  %v4580 = vsel %vm2921, %v4568, %v4579
  %v4581 = vrot.slane %v4504, 2
  %v4582 = vsel %vm2921, %v4571, %v4581
  %v4583 = vrot.slane %v4505, 2
  %v4584 = vsel %vm2921, %v4574, %v4583
  %v4585 = vrot.slane %v4506, 2
  %v4586 = vsel %vm2921, %v4577, %v4585
  %v4587 = vrot.slane %v4507, 2
  %v4588 = vsel %vm2921, %v4579, %v4587
  %v4589 = vrot.slane %v4508, 2
  %v4590 = vsel %vm2921, %v4581, %v4589
  %v4591 = vrot.slane %v4509, 2
  %v4592 = vsel %vm2921, %v4583, %v4591
  %v4593 = vrot.slane %v4510, 2
  %v4594 = vsel %vm2921, %v4585, %v4593
  %v4595 = vrot.slane %v4511, 2
  %v4596 = vsel %vm2921, %v4587, %v4595
  %v4597 = vrot.slane %v4512, 2
  %v4598 = vsel %vm2921, %v4589, %v4597
  %v4599 = vrot.slane %v4513, 2
  %v4600 = vsel %vm2921, %v4591, %v4599
  %v4601 = vrot.slane %v4514, 2
  %v4602 = vsel %vm2921, %v4593, %v4601
  %v4603 = vrot.slane %v4515, 2
  %v4604 = vsel %vm2921, %v4595, %v4603
  %v4605 = vrot.slane %v4516, 2
  %v4606 = vsel %vm2921, %v4597, %v4605
  %v4607 = vrot.slane %v4517, 2
  %v4608 = vsel %vm2921, %v4599, %v4607
  %v4609 = vrot.slane %v4518, 2
  %v4610 = vsel %vm2921, %v4601, %v4609
  %v4611 = vrot.slane %v4519, 2
  %v4612 = vsel %vm2921, %v4603, %v4611
  %v4613 = vrot.slane %v4520, 2
  %v4614 = vsel %vm2921, %v4605, %v4613
  %v4615 = vrot.slane %v4521, 2
  %v4616 = vsel %vm2921, %v4607, %v4615
  %v4617 = vrot.slane %v4522, 2
  %v4618 = vsel %vm2921, %v4609, %v4617
  %v4619 = vrot.slane %v4523, 2
  %v4620 = vsel %vm2921, %v4611, %v4619
  %v4621 = vrot.slane %v4524, 2
  %v4622 = vsel %vm2921, %v4613, %v4621
  %v4623 = vrot.slane %v4525, 2
  %v4624 = vsel %vm2921, %v4615, %v4623
  %v4625 = vrot.slane %v4526, 2
  %v4626 = vsel %vm2921, %v4617, %v4625
  %v4627 = vrot.slane %v4527, 2
  %v4628 = vsel %vm2921, %v4619, %v4627
  %v4629 = vrot.slane %v4528, 2
  %v4630 = vsel %vm2921, %v4621, %v4629
  %v4631 = vrot.slane %v4529, 2
  %v4632 = vsel %vm2921, %v4623, %v4631
  %v4633 = vrot.slane %v4530, 2
  %v4634 = vsel %vm2921, %v4625, %v4633
  %v4667 = vadd.f32 %v4432, %v4569
  %v4668 = vadd.f32 %v4433, %v4572
  %v4669 = vadd.f32 %v4434, %v4575
  %v4670 = vadd.f32 %v4435, %v4578
  %v4671 = vadd.f32 %v4436, %v4580
  %v4672 = vadd.f32 %v4437, %v4582
  %v4673 = vadd.f32 %v4438, %v4584
  %v4674 = vadd.f32 %v4439, %v4586
  %v4675 = vadd.f32 %v4440, %v4588
  %v4676 = vadd.f32 %v4441, %v4590
  %v4677 = vadd.f32 %v4442, %v4592
  %v4678 = vadd.f32 %v4443, %v4594
  %v4679 = vadd.f32 %v4444, %v4596
  %v4680 = vadd.f32 %v4445, %v4598
  %v4681 = vadd.f32 %v4446, %v4600
  %v4682 = vadd.f32 %v4447, %v4602
  %v4683 = vadd.f32 %v4448, %v4604
  %v4684 = vadd.f32 %v4449, %v4606
  %v4685 = vadd.f32 %v4450, %v4608
  %v4686 = vadd.f32 %v4451, %v4610
  %v4687 = vadd.f32 %v4452, %v4612
  %v4688 = vadd.f32 %v4453, %v4614
  %v4689 = vadd.f32 %v4454, %v4616
  %v4690 = vadd.f32 %v4455, %v4618
  %v4691 = vadd.f32 %v4456, %v4620
  %v4692 = vadd.f32 %v4457, %v4622
  %v4693 = vadd.f32 %v4458, %v4624
  %v4694 = vadd.f32 %v4459, %v4626
  %v4695 = vadd.f32 %v4460, %v4628
  %v4696 = vadd.f32 %v4461, %v4630
  %v4697 = vadd.f32 %v4462, %v4632
  %v4698 = vadd.f32 %v4463, %v4634
  %v4699 = vld [vmem:[%s0 + $0x20] sm:$0xfe]
  %v4700 = vld [vmem:[%s0 + $0x28] sm:$0xfe]
  %v4701 = vld [vmem:[%s0 + $0x30] sm:$0xfe]
  %v4702 = vld [vmem:[%s0 + $0x38] sm:$0xfe]
  %v4703 = vld [vmem:[%s0 + $0x100] sm:$0xff]
  %v4704 = vld [vmem:[%s0 + $0x108] sm:$0xff]
  %v4705 = vld [vmem:[%s0 + $0x110] sm:$0xff]
  %v4706 = vld [vmem:[%s0 + $0x118] sm:$0xff]
  %v4707 = vld [vmem:[%s0 + $0x120] sm:$0x1]
  %v4708 = vld [vmem:[%s0 + $0x128] sm:$0x1]
  %v4709 = vld [vmem:[%s0 + $0x130] sm:$0x1]
  %v4710 = vld [vmem:[%s0 + $0x138] sm:$0x1]
  %s4711 = scalar_lea.vmem %s1, 96
  %v4712 = vld [vmem:[%s4711] ss:$8 sm:$0xf]
  %v4714 = vlaneseq
  %v4715 = vshrl.u32 %v4714, 7
  %v4716 = vsub.s32 0, %v4715
  %v4717 = vrot.slane %v4712, %v4716
  %v4718 = vlaneseq
  %v4719 = vshrl.u32 %v4718, 7
  %v4720 = vsub.s32 1, %v4719
  %v4721 = vrot.slane %v4712, %v4720
  %v4722 = vlaneseq
  %v4723 = vshrl.u32 %v4722, 7
  %v4724 = vsub.s32 2, %v4723
  %v4725 = vrot.slane %v4712, %v4724
  %v4726 = vlaneseq
  %v4727 = vshrl.u32 %v4726, 7
  %v4728 = vsub.s32 3, %v4727
  %v4729 = vrot.slane %v4712, %v4728
  %v4734 = vmul.f32 %v4699, %v4717
  %v4735 = vmul.f32 %v4700, %v4721
  %v4736 = vmul.f32 %v4701, %v4725
  %v4737 = vmul.f32 %v4702, %v4729
  %v4738 = vmul.f32 %v19, %v4717
  %v4739 = vmul.f32 %v20, %v4721
  %v4740 = vmul.f32 %v21, %v4725
  %v4741 = vmul.f32 %v22, %v4729
  %v4742 = vmul.f32 %v23, %v4717
  %v4743 = vmul.f32 %v24, %v4721
  %v4744 = vmul.f32 %v25, %v4725
  %v4745 = vmul.f32 %v26, %v4729
  %v4746 = vmul.f32 %v27, %v4717
  %v4747 = vmul.f32 %v28, %v4721
  %v4748 = vmul.f32 %v29, %v4725
  %v4749 = vmul.f32 %v30, %v4729
  %v4750 = vmul.f32 %v31, %v4717
  %v4751 = vmul.f32 %v32, %v4721
  %v4752 = vmul.f32 %v33, %v4725
  %v4753 = vmul.f32 %v34, %v4729
  %v4754 = vmul.f32 %v35, %v4717
  %v4755 = vmul.f32 %v36, %v4721
  %v4756 = vmul.f32 %v37, %v4725
  %v4757 = vmul.f32 %v38, %v4729
  %v4758 = vmul.f32 %v39, %v4717
  %v4759 = vmul.f32 %v40, %v4721
  %v4760 = vmul.f32 %v41, %v4725
  %v4761 = vmul.f32 %v42, %v4729
  %v4762 = vmul.f32 %v4703, %v4717
  %v4763 = vmul.f32 %v4704, %v4721
  %v4764 = vmul.f32 %v4705, %v4725
  %v4765 = vmul.f32 %v4706, %v4729
  %v4766 = vmul.f32 %v4707, %v4717
  %v4767 = vmul.f32 %v4708, %v4721
  %v4768 = vmul.f32 %v4709, %v4725
  %v4769 = vmul.f32 %v4710, %v4729
  %v4806 = vrot.slane %v4734, 1
  %v4807 = vrot.slane %v4738, 1
  %v4808 = vsel %vm1040, %v4806, %v4807
  %v4809 = vrot.slane %v4735, 1
  %v4810 = vrot.slane %v4739, 1
  %v4811 = vsel %vm1040, %v4809, %v4810
  %v4812 = vrot.slane %v4736, 1
  %v4813 = vrot.slane %v4740, 1
  %v4814 = vsel %vm1040, %v4812, %v4813
  %v4815 = vrot.slane %v4737, 1
  %v4816 = vrot.slane %v4741, 1
  %v4817 = vsel %vm1040, %v4815, %v4816
  %v4818 = vrot.slane %v4742, 1
  %v4819 = vsel %vm1040, %v4807, %v4818
  %v4820 = vrot.slane %v4743, 1
  %v4821 = vsel %vm1040, %v4810, %v4820
  %v4822 = vrot.slane %v4744, 1
  %v4823 = vsel %vm1040, %v4813, %v4822
  %v4824 = vrot.slane %v4745, 1
  %v4825 = vsel %vm1040, %v4816, %v4824
  %v4826 = vrot.slane %v4746, 1
  %v4827 = vsel %vm1040, %v4818, %v4826
  %v4828 = vrot.slane %v4747, 1
  %v4829 = vsel %vm1040, %v4820, %v4828
  %v4830 = vrot.slane %v4748, 1
  %v4831 = vsel %vm1040, %v4822, %v4830
  %v4832 = vrot.slane %v4749, 1
  %v4833 = vsel %vm1040, %v4824, %v4832
  %v4834 = vrot.slane %v4750, 1
  %v4835 = vsel %vm1040, %v4826, %v4834
  %v4836 = vrot.slane %v4751, 1
  %v4837 = vsel %vm1040, %v4828, %v4836
  %v4838 = vrot.slane %v4752, 1
  %v4839 = vsel %vm1040, %v4830, %v4838
  %v4840 = vrot.slane %v4753, 1
  %v4841 = vsel %vm1040, %v4832, %v4840
  %v4842 = vrot.slane %v4754, 1
  %v4843 = vsel %vm1040, %v4834, %v4842
  %v4844 = vrot.slane %v4755, 1
  %v4845 = vsel %vm1040, %v4836, %v4844
  %v4846 = vrot.slane %v4756, 1
  %v4847 = vsel %vm1040, %v4838, %v4846
  %v4848 = vrot.slane %v4757, 1
  %v4849 = vsel %vm1040, %v4840, %v4848
  %v4850 = vrot.slane %v4758, 1
  %v4851 = vsel %vm1040, %v4842, %v4850
  %v4852 = vrot.slane %v4759, 1
  %v4853 = vsel %vm1040, %v4844, %v4852
  %v4854 = vrot.slane %v4760, 1
  %v4855 = vsel %vm1040, %v4846, %v4854
  %v4856 = vrot.slane %v4761, 1
  %v4857 = vsel %vm1040, %v4848, %v4856
  %v4858 = vrot.slane %v4762, 1
  %v4859 = vsel %vm1040, %v4850, %v4858
  %v4860 = vrot.slane %v4763, 1
  %v4861 = vsel %vm1040, %v4852, %v4860
  %v4862 = vrot.slane %v4764, 1
  %v4863 = vsel %vm1040, %v4854, %v4862
  %v4864 = vrot.slane %v4765, 1
  %v4865 = vsel %vm1040, %v4856, %v4864
  %v4866 = vrot.slane %v4766, 1
  %v4867 = vsel %vm1040, %v4858, %v4866
  %v4868 = vrot.slane %v4767, 1
  %v4869 = vsel %vm1040, %v4860, %v4868
  %v4870 = vrot.slane %v4768, 1
  %v4871 = vsel %vm1040, %v4862, %v4870
  %v4872 = vrot.slane %v4769, 1
  %v4873 = vsel %vm1040, %v4864, %v4872
  %v4906 = vadd.f32 %v4667, %v4808
  %v4907 = vadd.f32 %v4668, %v4811
  %v4908 = vadd.f32 %v4669, %v4814
  %v4909 = vadd.f32 %v4670, %v4817
  %v4910 = vadd.f32 %v4671, %v4819
  %v4911 = vadd.f32 %v4672, %v4821
  %v4912 = vadd.f32 %v4673, %v4823
  %v4913 = vadd.f32 %v4674, %v4825
  %v4914 = vadd.f32 %v4675, %v4827
  %v4915 = vadd.f32 %v4676, %v4829
  %v4916 = vadd.f32 %v4677, %v4831
  %v4917 = vadd.f32 %v4678, %v4833
  %v4918 = vadd.f32 %v4679, %v4835
  %v4919 = vadd.f32 %v4680, %v4837
  %v4920 = vadd.f32 %v4681, %v4839
  %v4921 = vadd.f32 %v4682, %v4841
  %v4922 = vadd.f32 %v4683, %v4843
  %v4923 = vadd.f32 %v4684, %v4845
  %v4924 = vadd.f32 %v4685, %v4847
  %v4925 = vadd.f32 %v4686, %v4849
  %v4926 = vadd.f32 %v4687, %v4851
  %v4927 = vadd.f32 %v4688, %v4853
  %v4928 = vadd.f32 %v4689, %v4855
  %v4929 = vadd.f32 %v4690, %v4857
  %v4930 = vadd.f32 %v4691, %v4859
  %v4931 = vadd.f32 %v4692, %v4861
  %v4932 = vadd.f32 %v4693, %v4863
  %v4933 = vadd.f32 %v4694, %v4865
  %v4934 = vadd.f32 %v4695, %v4867
  %v4935 = vadd.f32 %v4696, %v4869
  %v4936 = vadd.f32 %v4697, %v4871
  %v4937 = vadd.f32 %v4698, %v4873
  %v4938 = vld [vmem:[%s97 + $0x20] sm:$0xfe]
  %v4939 = vld [vmem:[%s97 + $0x28] sm:$0xfe]
  %v4940 = vld [vmem:[%s97 + $0x30] sm:$0xfe]
  %v4941 = vld [vmem:[%s97 + $0x38] sm:$0xfe]
  %v4942 = vld [vmem:[%s97 + $0x100] sm:$0xff]
  %v4943 = vld [vmem:[%s97 + $0x108] sm:$0xff]
  %v4944 = vld [vmem:[%s97 + $0x110] sm:$0xff]
  %v4945 = vld [vmem:[%s97 + $0x118] sm:$0xff]
  %v4946 = vld [vmem:[%s97 + $0x120] sm:$0x1]
  %v4947 = vld [vmem:[%s97 + $0x128] sm:$0x1]
  %v4948 = vld [vmem:[%s97 + $0x130] sm:$0x1]
  %v4949 = vld [vmem:[%s97 + $0x138] sm:$0x1]
  %s4950 = scalar_lea.vmem %s1, 97
  %v4951 = vld [vmem:[%s4950] ss:$8 sm:$0xf]
  %v4953 = vlaneseq
  %v4954 = vshrl.u32 %v4953, 7
  %v4955 = vsub.s32 0, %v4954
  %v4956 = vrot.slane %v4951, %v4955
  %v4957 = vlaneseq
  %v4958 = vshrl.u32 %v4957, 7
  %v4959 = vsub.s32 1, %v4958
  %v4960 = vrot.slane %v4951, %v4959
  %v4961 = vlaneseq
  %v4962 = vshrl.u32 %v4961, 7
  %v4963 = vsub.s32 2, %v4962
  %v4964 = vrot.slane %v4951, %v4963
  %v4965 = vlaneseq
  %v4966 = vshrl.u32 %v4965, 7
  %v4967 = vsub.s32 3, %v4966
  %v4968 = vrot.slane %v4951, %v4967
  %v4973 = vmul.f32 %v4938, %v4956
  %v4974 = vmul.f32 %v4939, %v4960
  %v4975 = vmul.f32 %v4940, %v4964
  %v4976 = vmul.f32 %v4941, %v4968
  %v4977 = vmul.f32 %v106, %v4956
  %v4978 = vmul.f32 %v107, %v4960
  %v4979 = vmul.f32 %v108, %v4964
  %v4980 = vmul.f32 %v109, %v4968
  %v4981 = vmul.f32 %v110, %v4956
  %v4982 = vmul.f32 %v111, %v4960
  %v4983 = vmul.f32 %v112, %v4964
  %v4984 = vmul.f32 %v113, %v4968
  %v4985 = vmul.f32 %v114, %v4956
  %v4986 = vmul.f32 %v115, %v4960
  %v4987 = vmul.f32 %v116, %v4964
  %v4988 = vmul.f32 %v117, %v4968
  %v4989 = vmul.f32 %v118, %v4956
  %v4990 = vmul.f32 %v119, %v4960
  %v4991 = vmul.f32 %v120, %v4964
  %v4992 = vmul.f32 %v121, %v4968
  %v4993 = vmul.f32 %v122, %v4956
  %v4994 = vmul.f32 %v123, %v4960
  %v4995 = vmul.f32 %v124, %v4964
  %v4996 = vmul.f32 %v125, %v4968
  %v4997 = vmul.f32 %v126, %v4956
  %v4998 = vmul.f32 %v127, %v4960
  %v4999 = vmul.f32 %v128, %v4964
  %v5000 = vmul.f32 %v129, %v4968
  %v5001 = vmul.f32 %v4942, %v4956
  %v5002 = vmul.f32 %v4943, %v4960
  %v5003 = vmul.f32 %v4944, %v4964
  %v5004 = vmul.f32 %v4945, %v4968
  %v5005 = vmul.f32 %v4946, %v4956
  %v5006 = vmul.f32 %v4947, %v4960
  %v5007 = vmul.f32 %v4948, %v4964
  %v5008 = vmul.f32 %v4949, %v4968
  %v5045 = vrot.slane %v4973, 1
  %v5046 = vrot.slane %v4977, 1
  %v5047 = vsel %vm1040, %v5045, %v5046
  %v5048 = vrot.slane %v4974, 1
  %v5049 = vrot.slane %v4978, 1
  %v5050 = vsel %vm1040, %v5048, %v5049
  %v5051 = vrot.slane %v4975, 1
  %v5052 = vrot.slane %v4979, 1
  %v5053 = vsel %vm1040, %v5051, %v5052
  %v5054 = vrot.slane %v4976, 1
  %v5055 = vrot.slane %v4980, 1
  %v5056 = vsel %vm1040, %v5054, %v5055
  %v5057 = vrot.slane %v4981, 1
  %v5058 = vsel %vm1040, %v5046, %v5057
  %v5059 = vrot.slane %v4982, 1
  %v5060 = vsel %vm1040, %v5049, %v5059
  %v5061 = vrot.slane %v4983, 1
  %v5062 = vsel %vm1040, %v5052, %v5061
  %v5063 = vrot.slane %v4984, 1
  %v5064 = vsel %vm1040, %v5055, %v5063
  %v5065 = vrot.slane %v4985, 1
  %v5066 = vsel %vm1040, %v5057, %v5065
  %v5067 = vrot.slane %v4986, 1
  %v5068 = vsel %vm1040, %v5059, %v5067
  %v5069 = vrot.slane %v4987, 1
  %v5070 = vsel %vm1040, %v5061, %v5069
  %v5071 = vrot.slane %v4988, 1
  %v5072 = vsel %vm1040, %v5063, %v5071
  %v5073 = vrot.slane %v4989, 1
  %v5074 = vsel %vm1040, %v5065, %v5073
  %v5075 = vrot.slane %v4990, 1
  %v5076 = vsel %vm1040, %v5067, %v5075
  %v5077 = vrot.slane %v4991, 1
  %v5078 = vsel %vm1040, %v5069, %v5077
  %v5079 = vrot.slane %v4992, 1
  %v5080 = vsel %vm1040, %v5071, %v5079
  %v5081 = vrot.slane %v4993, 1
  %v5082 = vsel %vm1040, %v5073, %v5081
  %v5083 = vrot.slane %v4994, 1
  %v5084 = vsel %vm1040, %v5075, %v5083
  %v5085 = vrot.slane %v4995, 1
  %v5086 = vsel %vm1040, %v5077, %v5085
  %v5087 = vrot.slane %v4996, 1
  %v5088 = vsel %vm1040, %v5079, %v5087
  %v5089 = vrot.slane %v4997, 1
  %v5090 = vsel %vm1040, %v5081, %v5089
  %v5091 = vrot.slane %v4998, 1
  %v5092 = vsel %vm1040, %v5083, %v5091
  %v5093 = vrot.slane %v4999, 1
  %v5094 = vsel %vm1040, %v5085, %v5093
  %v5095 = vrot.slane %v5000, 1
  %v5096 = vsel %vm1040, %v5087, %v5095
  %v5097 = vrot.slane %v5001, 1
  %v5098 = vsel %vm1040, %v5089, %v5097
  %v5099 = vrot.slane %v5002, 1
  %v5100 = vsel %vm1040, %v5091, %v5099
  %v5101 = vrot.slane %v5003, 1
  %v5102 = vsel %vm1040, %v5093, %v5101
  %v5103 = vrot.slane %v5004, 1
  %v5104 = vsel %vm1040, %v5095, %v5103
  %v5105 = vrot.slane %v5005, 1
  %v5106 = vsel %vm1040, %v5097, %v5105
  %v5107 = vrot.slane %v5006, 1
  %v5108 = vsel %vm1040, %v5099, %v5107
  %v5109 = vrot.slane %v5007, 1
  %v5110 = vsel %vm1040, %v5101, %v5109
  %v5111 = vrot.slane %v5008, 1
  %v5112 = vsel %vm1040, %v5103, %v5111
  %v5145 = vadd.f32 %v4906, %v5047
  %v5146 = vadd.f32 %v4907, %v5050
  %v5147 = vadd.f32 %v4908, %v5053
  %v5148 = vadd.f32 %v4909, %v5056
  %v5149 = vadd.f32 %v4910, %v5058
  %v5150 = vadd.f32 %v4911, %v5060
  %v5151 = vadd.f32 %v4912, %v5062
  %v5152 = vadd.f32 %v4913, %v5064
  %v5153 = vadd.f32 %v4914, %v5066
  %v5154 = vadd.f32 %v4915, %v5068
  %v5155 = vadd.f32 %v4916, %v5070
  %v5156 = vadd.f32 %v4917, %v5072
  %v5157 = vadd.f32 %v4918, %v5074
  %v5158 = vadd.f32 %v4919, %v5076
  %v5159 = vadd.f32 %v4920, %v5078
  %v5160 = vadd.f32 %v4921, %v5080
  %v5161 = vadd.f32 %v4922, %v5082
  %v5162 = vadd.f32 %v4923, %v5084
  %v5163 = vadd.f32 %v4924, %v5086
  %v5164 = vadd.f32 %v4925, %v5088
  %v5165 = vadd.f32 %v4926, %v5090
  %v5166 = vadd.f32 %v4927, %v5092
  %v5167 = vadd.f32 %v4928, %v5094
  %v5168 = vadd.f32 %v4929, %v5096
  %v5169 = vadd.f32 %v4930, %v5098
  %v5170 = vadd.f32 %v4931, %v5100
  %v5171 = vadd.f32 %v4932, %v5102
  %v5172 = vadd.f32 %v4933, %v5104
  %v5173 = vadd.f32 %v4934, %v5106
  %v5174 = vadd.f32 %v4935, %v5108
  %v5175 = vadd.f32 %v4936, %v5110
  %v5176 = vadd.f32 %v4937, %v5112
  %v5177 = vld [vmem:[%s217 + $0x20] sm:$0xfe]
  %v5178 = vld [vmem:[%s217 + $0x28] sm:$0xfe]
  %v5179 = vld [vmem:[%s217 + $0x30] sm:$0xfe]
  %v5180 = vld [vmem:[%s217 + $0x38] sm:$0xfe]
  %v5181 = vld [vmem:[%s217 + $0x100] sm:$0xff]
  %v5182 = vld [vmem:[%s217 + $0x108] sm:$0xff]
  %v5183 = vld [vmem:[%s217 + $0x110] sm:$0xff]
  %v5184 = vld [vmem:[%s217 + $0x118] sm:$0xff]
  %v5185 = vld [vmem:[%s217 + $0x120] sm:$0x1]
  %v5186 = vld [vmem:[%s217 + $0x128] sm:$0x1]
  %v5187 = vld [vmem:[%s217 + $0x130] sm:$0x1]
  %v5188 = vld [vmem:[%s217 + $0x138] sm:$0x1]
  %s5189 = scalar_lea.vmem %s1, 98
  %v5190 = vld [vmem:[%s5189] ss:$8 sm:$0xf]
  %v5192 = vlaneseq
  %v5193 = vshrl.u32 %v5192, 7
  %v5194 = vsub.s32 0, %v5193
  %v5195 = vrot.slane %v5190, %v5194
  %v5196 = vlaneseq
  %v5197 = vshrl.u32 %v5196, 7
  %v5198 = vsub.s32 1, %v5197
  %v5199 = vrot.slane %v5190, %v5198
  %v5200 = vlaneseq
  %v5201 = vshrl.u32 %v5200, 7
  %v5202 = vsub.s32 2, %v5201
  %v5203 = vrot.slane %v5190, %v5202
  %v5204 = vlaneseq
  %v5205 = vshrl.u32 %v5204, 7
  %v5206 = vsub.s32 3, %v5205
  %v5207 = vrot.slane %v5190, %v5206
  %v5212 = vmul.f32 %v5177, %v5195
  %v5213 = vmul.f32 %v5178, %v5199
  %v5214 = vmul.f32 %v5179, %v5203
  %v5215 = vmul.f32 %v5180, %v5207
  %v5216 = vmul.f32 %v226, %v5195
  %v5217 = vmul.f32 %v227, %v5199
  %v5218 = vmul.f32 %v228, %v5203
  %v5219 = vmul.f32 %v229, %v5207
  %v5220 = vmul.f32 %v230, %v5195
  %v5221 = vmul.f32 %v231, %v5199
  %v5222 = vmul.f32 %v232, %v5203
  %v5223 = vmul.f32 %v233, %v5207
  %v5224 = vmul.f32 %v234, %v5195
  %v5225 = vmul.f32 %v235, %v5199
  %v5226 = vmul.f32 %v236, %v5203
  %v5227 = vmul.f32 %v237, %v5207
  %v5228 = vmul.f32 %v238, %v5195
  %v5229 = vmul.f32 %v239, %v5199
  %v5230 = vmul.f32 %v240, %v5203
  %v5231 = vmul.f32 %v241, %v5207
  %v5232 = vmul.f32 %v242, %v5195
  %v5233 = vmul.f32 %v243, %v5199
  %v5234 = vmul.f32 %v244, %v5203
  %v5235 = vmul.f32 %v245, %v5207
  %v5236 = vmul.f32 %v246, %v5195
  %v5237 = vmul.f32 %v247, %v5199
  %v5238 = vmul.f32 %v248, %v5203
  %v5239 = vmul.f32 %v249, %v5207
  %v5240 = vmul.f32 %v5181, %v5195
  %v5241 = vmul.f32 %v5182, %v5199
  %v5242 = vmul.f32 %v5183, %v5203
  %v5243 = vmul.f32 %v5184, %v5207
  %v5244 = vmul.f32 %v5185, %v5195
  %v5245 = vmul.f32 %v5186, %v5199
  %v5246 = vmul.f32 %v5187, %v5203
  %v5247 = vmul.f32 %v5188, %v5207
  %v5284 = vrot.slane %v5212, 1
  %v5285 = vrot.slane %v5216, 1
  %v5286 = vsel %vm1040, %v5284, %v5285
  %v5287 = vrot.slane %v5213, 1
  %v5288 = vrot.slane %v5217, 1
  %v5289 = vsel %vm1040, %v5287, %v5288
  %v5290 = vrot.slane %v5214, 1
  %v5291 = vrot.slane %v5218, 1
  %v5292 = vsel %vm1040, %v5290, %v5291
  %v5293 = vrot.slane %v5215, 1
  %v5294 = vrot.slane %v5219, 1
  %v5295 = vsel %vm1040, %v5293, %v5294
  %v5296 = vrot.slane %v5220, 1
  %v5297 = vsel %vm1040, %v5285, %v5296
  %v5298 = vrot.slane %v5221, 1
  %v5299 = vsel %vm1040, %v5288, %v5298
  %v5300 = vrot.slane %v5222, 1
  %v5301 = vsel %vm1040, %v5291, %v5300
  %v5302 = vrot.slane %v5223, 1
  %v5303 = vsel %vm1040, %v5294, %v5302
  %v5304 = vrot.slane %v5224, 1
  %v5305 = vsel %vm1040, %v5296, %v5304
  %v5306 = vrot.slane %v5225, 1
  %v5307 = vsel %vm1040, %v5298, %v5306
  %v5308 = vrot.slane %v5226, 1
  %v5309 = vsel %vm1040, %v5300, %v5308
  %v5310 = vrot.slane %v5227, 1
  %v5311 = vsel %vm1040, %v5302, %v5310
  %v5312 = vrot.slane %v5228, 1
  %v5313 = vsel %vm1040, %v5304, %v5312
  %v5314 = vrot.slane %v5229, 1
  %v5315 = vsel %vm1040, %v5306, %v5314
  %v5316 = vrot.slane %v5230, 1
  %v5317 = vsel %vm1040, %v5308, %v5316
  %v5318 = vrot.slane %v5231, 1
  %v5319 = vsel %vm1040, %v5310, %v5318
  %v5320 = vrot.slane %v5232, 1
  %v5321 = vsel %vm1040, %v5312, %v5320
  %v5322 = vrot.slane %v5233, 1
  %v5323 = vsel %vm1040, %v5314, %v5322
  %v5324 = vrot.slane %v5234, 1
  %v5325 = vsel %vm1040, %v5316, %v5324
  %v5326 = vrot.slane %v5235, 1
  %v5327 = vsel %vm1040, %v5318, %v5326
  %v5328 = vrot.slane %v5236, 1
  %v5329 = vsel %vm1040, %v5320, %v5328
  %v5330 = vrot.slane %v5237, 1
  %v5331 = vsel %vm1040, %v5322, %v5330
  %v5332 = vrot.slane %v5238, 1
  %v5333 = vsel %vm1040, %v5324, %v5332
  %v5334 = vrot.slane %v5239, 1
  %v5335 = vsel %vm1040, %v5326, %v5334
  %v5336 = vrot.slane %v5240, 1
  %v5337 = vsel %vm1040, %v5328, %v5336
  %v5338 = vrot.slane %v5241, 1
  %v5339 = vsel %vm1040, %v5330, %v5338
  %v5340 = vrot.slane %v5242, 1
  %v5341 = vsel %vm1040, %v5332, %v5340
  %v5342 = vrot.slane %v5243, 1
  %v5343 = vsel %vm1040, %v5334, %v5342
  %v5344 = vrot.slane %v5244, 1
  %v5345 = vsel %vm1040, %v5336, %v5344
  %v5346 = vrot.slane %v5245, 1
  %v5347 = vsel %vm1040, %v5338, %v5346
  %v5348 = vrot.slane %v5246, 1
  %v5349 = vsel %vm1040, %v5340, %v5348
  %v5350 = vrot.slane %v5247, 1
  %v5351 = vsel %vm1040, %v5342, %v5350
  %v5384 = vadd.f32 %v5145, %v5286
  %v5385 = vadd.f32 %v5146, %v5289
  %v5386 = vadd.f32 %v5147, %v5292
  %v5387 = vadd.f32 %v5148, %v5295
  %v5388 = vadd.f32 %v5149, %v5297
  %v5389 = vadd.f32 %v5150, %v5299
  %v5390 = vadd.f32 %v5151, %v5301
  %v5391 = vadd.f32 %v5152, %v5303
  %v5392 = vadd.f32 %v5153, %v5305
  %v5393 = vadd.f32 %v5154, %v5307
  %v5394 = vadd.f32 %v5155, %v5309
  %v5395 = vadd.f32 %v5156, %v5311
  %v5396 = vadd.f32 %v5157, %v5313
  %v5397 = vadd.f32 %v5158, %v5315
  %v5398 = vadd.f32 %v5159, %v5317
  %v5399 = vadd.f32 %v5160, %v5319
  %v5400 = vadd.f32 %v5161, %v5321
  %v5401 = vadd.f32 %v5162, %v5323
  %v5402 = vadd.f32 %v5163, %v5325
  %v5403 = vadd.f32 %v5164, %v5327
  %v5404 = vadd.f32 %v5165, %v5329
  %v5405 = vadd.f32 %v5166, %v5331
  %v5406 = vadd.f32 %v5167, %v5333
  %v5407 = vadd.f32 %v5168, %v5335
  %v5408 = vadd.f32 %v5169, %v5337
  %v5409 = vadd.f32 %v5170, %v5339
  %v5410 = vadd.f32 %v5171, %v5341
  %v5411 = vadd.f32 %v5172, %v5343
  %v5412 = vadd.f32 %v5173, %v5345
  %v5413 = vadd.f32 %v5174, %v5347
  %v5414 = vadd.f32 %v5175, %v5349
  %v5415 = vadd.f32 %v5176, %v5351
  %v5416 = vld [vmem:[%s337 + $0x20] sm:$0xfe]
  %v5417 = vld [vmem:[%s337 + $0x28] sm:$0xfe]
  %v5418 = vld [vmem:[%s337 + $0x30] sm:$0xfe]
  %v5419 = vld [vmem:[%s337 + $0x38] sm:$0xfe]
  %v5420 = vld [vmem:[%s337 + $0x100] sm:$0xff]
  %v5421 = vld [vmem:[%s337 + $0x108] sm:$0xff]
  %v5422 = vld [vmem:[%s337 + $0x110] sm:$0xff]
  %v5423 = vld [vmem:[%s337 + $0x118] sm:$0xff]
  %v5424 = vld [vmem:[%s337 + $0x120] sm:$0x1]
  %v5425 = vld [vmem:[%s337 + $0x128] sm:$0x1]
  %v5426 = vld [vmem:[%s337 + $0x130] sm:$0x1]
  %v5427 = vld [vmem:[%s337 + $0x138] sm:$0x1]
  %s5428 = scalar_lea.vmem %s1, 99
  %v5429 = vld [vmem:[%s5428] ss:$8 sm:$0xf]
  %v5431 = vlaneseq
  %v5432 = vshrl.u32 %v5431, 7
  %v5433 = vsub.s32 0, %v5432
  %v5434 = vrot.slane %v5429, %v5433
  %v5435 = vlaneseq
  %v5436 = vshrl.u32 %v5435, 7
  %v5437 = vsub.s32 1, %v5436
  %v5438 = vrot.slane %v5429, %v5437
  %v5439 = vlaneseq
  %v5440 = vshrl.u32 %v5439, 7
  %v5441 = vsub.s32 2, %v5440
  %v5442 = vrot.slane %v5429, %v5441
  %v5443 = vlaneseq
  %v5444 = vshrl.u32 %v5443, 7
  %v5445 = vsub.s32 3, %v5444
  %v5446 = vrot.slane %v5429, %v5445
  %v5451 = vmul.f32 %v5416, %v5434
  %v5452 = vmul.f32 %v5417, %v5438
  %v5453 = vmul.f32 %v5418, %v5442
  %v5454 = vmul.f32 %v5419, %v5446
  %v5455 = vmul.f32 %v346, %v5434
  %v5456 = vmul.f32 %v347, %v5438
  %v5457 = vmul.f32 %v348, %v5442
  %v5458 = vmul.f32 %v349, %v5446
  %v5459 = vmul.f32 %v350, %v5434
  %v5460 = vmul.f32 %v351, %v5438
  %v5461 = vmul.f32 %v352, %v5442
  %v5462 = vmul.f32 %v353, %v5446
  %v5463 = vmul.f32 %v354, %v5434
  %v5464 = vmul.f32 %v355, %v5438
  %v5465 = vmul.f32 %v356, %v5442
  %v5466 = vmul.f32 %v357, %v5446
  %v5467 = vmul.f32 %v358, %v5434
  %v5468 = vmul.f32 %v359, %v5438
  %v5469 = vmul.f32 %v360, %v5442
  %v5470 = vmul.f32 %v361, %v5446
  %v5471 = vmul.f32 %v362, %v5434
  %v5472 = vmul.f32 %v363, %v5438
  %v5473 = vmul.f32 %v364, %v5442
  %v5474 = vmul.f32 %v365, %v5446
  %v5475 = vmul.f32 %v366, %v5434
  %v5476 = vmul.f32 %v367, %v5438
  %v5477 = vmul.f32 %v368, %v5442
  %v5478 = vmul.f32 %v369, %v5446
  %v5479 = vmul.f32 %v5420, %v5434
  %v5480 = vmul.f32 %v5421, %v5438
  %v5481 = vmul.f32 %v5422, %v5442
  %v5482 = vmul.f32 %v5423, %v5446
  %v5483 = vmul.f32 %v5424, %v5434
  %v5484 = vmul.f32 %v5425, %v5438
  %v5485 = vmul.f32 %v5426, %v5442
  %v5486 = vmul.f32 %v5427, %v5446
  %v5523 = vrot.slane %v5451, 1
  %v5524 = vrot.slane %v5455, 1
  %v5525 = vsel %vm1040, %v5523, %v5524
  %v5526 = vrot.slane %v5452, 1
  %v5527 = vrot.slane %v5456, 1
  %v5528 = vsel %vm1040, %v5526, %v5527
  %v5529 = vrot.slane %v5453, 1
  %v5530 = vrot.slane %v5457, 1
  %v5531 = vsel %vm1040, %v5529, %v5530
  %v5532 = vrot.slane %v5454, 1
  %v5533 = vrot.slane %v5458, 1
  %v5534 = vsel %vm1040, %v5532, %v5533
  %v5535 = vrot.slane %v5459, 1
  %v5536 = vsel %vm1040, %v5524, %v5535
  %v5537 = vrot.slane %v5460, 1
  %v5538 = vsel %vm1040, %v5527, %v5537
  %v5539 = vrot.slane %v5461, 1
  %v5540 = vsel %vm1040, %v5530, %v5539
  %v5541 = vrot.slane %v5462, 1
  %v5542 = vsel %vm1040, %v5533, %v5541
  %v5543 = vrot.slane %v5463, 1
  %v5544 = vsel %vm1040, %v5535, %v5543
  %v5545 = vrot.slane %v5464, 1
  %v5546 = vsel %vm1040, %v5537, %v5545
  %v5547 = vrot.slane %v5465, 1
  %v5548 = vsel %vm1040, %v5539, %v5547
  %v5549 = vrot.slane %v5466, 1
  %v5550 = vsel %vm1040, %v5541, %v5549
  %v5551 = vrot.slane %v5467, 1
  %v5552 = vsel %vm1040, %v5543, %v5551
  %v5553 = vrot.slane %v5468, 1
  %v5554 = vsel %vm1040, %v5545, %v5553
  %v5555 = vrot.slane %v5469, 1
  %v5556 = vsel %vm1040, %v5547, %v5555
  %v5557 = vrot.slane %v5470, 1
  %v5558 = vsel %vm1040, %v5549, %v5557
  %v5559 = vrot.slane %v5471, 1
  %v5560 = vsel %vm1040, %v5551, %v5559
  %v5561 = vrot.slane %v5472, 1
  %v5562 = vsel %vm1040, %v5553, %v5561
  %v5563 = vrot.slane %v5473, 1
  %v5564 = vsel %vm1040, %v5555, %v5563
  %v5565 = vrot.slane %v5474, 1
  %v5566 = vsel %vm1040, %v5557, %v5565
  %v5567 = vrot.slane %v5475, 1
  %v5568 = vsel %vm1040, %v5559, %v5567
  %v5569 = vrot.slane %v5476, 1
  %v5570 = vsel %vm1040, %v5561, %v5569
  %v5571 = vrot.slane %v5477, 1
  %v5572 = vsel %vm1040, %v5563, %v5571
  %v5573 = vrot.slane %v5478, 1
  %v5574 = vsel %vm1040, %v5565, %v5573
  %v5575 = vrot.slane %v5479, 1
  %v5576 = vsel %vm1040, %v5567, %v5575
  %v5577 = vrot.slane %v5480, 1
  %v5578 = vsel %vm1040, %v5569, %v5577
  %v5579 = vrot.slane %v5481, 1
  %v5580 = vsel %vm1040, %v5571, %v5579
  %v5581 = vrot.slane %v5482, 1
  %v5582 = vsel %vm1040, %v5573, %v5581
  %v5583 = vrot.slane %v5483, 1
  %v5584 = vsel %vm1040, %v5575, %v5583
  %v5585 = vrot.slane %v5484, 1
  %v5586 = vsel %vm1040, %v5577, %v5585
  %v5587 = vrot.slane %v5485, 1
  %v5588 = vsel %vm1040, %v5579, %v5587
  %v5589 = vrot.slane %v5486, 1
  %v5590 = vsel %vm1040, %v5581, %v5589
  %v5623 = vadd.f32 %v5384, %v5525
  %v5624 = vadd.f32 %v5385, %v5528
  %v5625 = vadd.f32 %v5386, %v5531
  %v5626 = vadd.f32 %v5387, %v5534
  %v5627 = vadd.f32 %v5388, %v5536
  %v5628 = vadd.f32 %v5389, %v5538
  %v5629 = vadd.f32 %v5390, %v5540
  %v5630 = vadd.f32 %v5391, %v5542
  %v5631 = vadd.f32 %v5392, %v5544
  %v5632 = vadd.f32 %v5393, %v5546
  %v5633 = vadd.f32 %v5394, %v5548
  %v5634 = vadd.f32 %v5395, %v5550
  %v5635 = vadd.f32 %v5396, %v5552
  %v5636 = vadd.f32 %v5397, %v5554
  %v5637 = vadd.f32 %v5398, %v5556
  %v5638 = vadd.f32 %v5399, %v5558
  %v5639 = vadd.f32 %v5400, %v5560
  %v5640 = vadd.f32 %v5401, %v5562
  %v5641 = vadd.f32 %v5402, %v5564
  %v5642 = vadd.f32 %v5403, %v5566
  %v5643 = vadd.f32 %v5404, %v5568
  %v5644 = vadd.f32 %v5405, %v5570
  %v5645 = vadd.f32 %v5406, %v5572
  %v5646 = vadd.f32 %v5407, %v5574
  %v5647 = vadd.f32 %v5408, %v5576
  %v5648 = vadd.f32 %v5409, %v5578
  %v5649 = vadd.f32 %v5410, %v5580
  %v5650 = vadd.f32 %v5411, %v5582
  %v5651 = vadd.f32 %v5412, %v5584
  %v5652 = vadd.f32 %v5413, %v5586
  %v5653 = vadd.f32 %v5414, %v5588
  %v5654 = vadd.f32 %v5415, %v5590
  %v5655 = vld [vmem:[%s457 + $0x20] sm:$0xfe]
  %v5656 = vld [vmem:[%s457 + $0x28] sm:$0xfe]
  %v5657 = vld [vmem:[%s457 + $0x30] sm:$0xfe]
  %v5658 = vld [vmem:[%s457 + $0x38] sm:$0xfe]
  %v5659 = vld [vmem:[%s457 + $0x100] sm:$0xff]
  %v5660 = vld [vmem:[%s457 + $0x108] sm:$0xff]
  %v5661 = vld [vmem:[%s457 + $0x110] sm:$0xff]
  %v5662 = vld [vmem:[%s457 + $0x118] sm:$0xff]
  %v5663 = vld [vmem:[%s457 + $0x120] sm:$0x1]
  %v5664 = vld [vmem:[%s457 + $0x128] sm:$0x1]
  %v5665 = vld [vmem:[%s457 + $0x130] sm:$0x1]
  %v5666 = vld [vmem:[%s457 + $0x138] sm:$0x1]
  %s5667 = scalar_lea.vmem %s1, 100
  %v5668 = vld [vmem:[%s5667] ss:$8 sm:$0xf]
  %v5670 = vlaneseq
  %v5671 = vshrl.u32 %v5670, 7
  %v5672 = vsub.s32 0, %v5671
  %v5673 = vrot.slane %v5668, %v5672
  %v5674 = vlaneseq
  %v5675 = vshrl.u32 %v5674, 7
  %v5676 = vsub.s32 1, %v5675
  %v5677 = vrot.slane %v5668, %v5676
  %v5678 = vlaneseq
  %v5679 = vshrl.u32 %v5678, 7
  %v5680 = vsub.s32 2, %v5679
  %v5681 = vrot.slane %v5668, %v5680
  %v5682 = vlaneseq
  %v5683 = vshrl.u32 %v5682, 7
  %v5684 = vsub.s32 3, %v5683
  %v5685 = vrot.slane %v5668, %v5684
  %v5690 = vmul.f32 %v5655, %v5673
  %v5691 = vmul.f32 %v5656, %v5677
  %v5692 = vmul.f32 %v5657, %v5681
  %v5693 = vmul.f32 %v5658, %v5685
  %v5694 = vmul.f32 %v466, %v5673
  %v5695 = vmul.f32 %v467, %v5677
  %v5696 = vmul.f32 %v468, %v5681
  %v5697 = vmul.f32 %v469, %v5685
  %v5698 = vmul.f32 %v470, %v5673
  %v5699 = vmul.f32 %v471, %v5677
  %v5700 = vmul.f32 %v472, %v5681
  %v5701 = vmul.f32 %v473, %v5685
  %v5702 = vmul.f32 %v474, %v5673
  %v5703 = vmul.f32 %v475, %v5677
  %v5704 = vmul.f32 %v476, %v5681
  %v5705 = vmul.f32 %v477, %v5685
  %v5706 = vmul.f32 %v478, %v5673
  %v5707 = vmul.f32 %v479, %v5677
  %v5708 = vmul.f32 %v480, %v5681
  %v5709 = vmul.f32 %v481, %v5685
  %v5710 = vmul.f32 %v482, %v5673
  %v5711 = vmul.f32 %v483, %v5677
  %v5712 = vmul.f32 %v484, %v5681
  %v5713 = vmul.f32 %v485, %v5685
  %v5714 = vmul.f32 %v486, %v5673
  %v5715 = vmul.f32 %v487, %v5677
  %v5716 = vmul.f32 %v488, %v5681
  %v5717 = vmul.f32 %v489, %v5685
  %v5718 = vmul.f32 %v5659, %v5673
  %v5719 = vmul.f32 %v5660, %v5677
  %v5720 = vmul.f32 %v5661, %v5681
  %v5721 = vmul.f32 %v5662, %v5685
  %v5722 = vmul.f32 %v5663, %v5673
  %v5723 = vmul.f32 %v5664, %v5677
  %v5724 = vmul.f32 %v5665, %v5681
  %v5725 = vmul.f32 %v5666, %v5685
  %v5762 = vrot.slane %v5690, 1
  %v5763 = vrot.slane %v5694, 1
  %v5764 = vsel %vm1040, %v5762, %v5763
  %v5765 = vrot.slane %v5691, 1
  %v5766 = vrot.slane %v5695, 1
  %v5767 = vsel %vm1040, %v5765, %v5766
  %v5768 = vrot.slane %v5692, 1
  %v5769 = vrot.slane %v5696, 1
  %v5770 = vsel %vm1040, %v5768, %v5769
  %v5771 = vrot.slane %v5693, 1
  %v5772 = vrot.slane %v5697, 1
  %v5773 = vsel %vm1040, %v5771, %v5772
  %v5774 = vrot.slane %v5698, 1
  %v5775 = vsel %vm1040, %v5763, %v5774
  %v5776 = vrot.slane %v5699, 1
  %v5777 = vsel %vm1040, %v5766, %v5776
  %v5778 = vrot.slane %v5700, 1
  %v5779 = vsel %vm1040, %v5769, %v5778
  %v5780 = vrot.slane %v5701, 1
  %v5781 = vsel %vm1040, %v5772, %v5780
  %v5782 = vrot.slane %v5702, 1
  %v5783 = vsel %vm1040, %v5774, %v5782
  %v5784 = vrot.slane %v5703, 1
  %v5785 = vsel %vm1040, %v5776, %v5784
  %v5786 = vrot.slane %v5704, 1
  %v5787 = vsel %vm1040, %v5778, %v5786
  %v5788 = vrot.slane %v5705, 1
  %v5789 = vsel %vm1040, %v5780, %v5788
  %v5790 = vrot.slane %v5706, 1
  %v5791 = vsel %vm1040, %v5782, %v5790
  %v5792 = vrot.slane %v5707, 1
  %v5793 = vsel %vm1040, %v5784, %v5792
  %v5794 = vrot.slane %v5708, 1
  %v5795 = vsel %vm1040, %v5786, %v5794
  %v5796 = vrot.slane %v5709, 1
  %v5797 = vsel %vm1040, %v5788, %v5796
  %v5798 = vrot.slane %v5710, 1
  %v5799 = vsel %vm1040, %v5790, %v5798
  %v5800 = vrot.slane %v5711, 1
  %v5801 = vsel %vm1040, %v5792, %v5800
  %v5802 = vrot.slane %v5712, 1
  %v5803 = vsel %vm1040, %v5794, %v5802
  %v5804 = vrot.slane %v5713, 1
  %v5805 = vsel %vm1040, %v5796, %v5804
  %v5806 = vrot.slane %v5714, 1
  %v5807 = vsel %vm1040, %v5798, %v5806
  %v5808 = vrot.slane %v5715, 1
  %v5809 = vsel %vm1040, %v5800, %v5808
  %v5810 = vrot.slane %v5716, 1
  %v5811 = vsel %vm1040, %v5802, %v5810
  %v5812 = vrot.slane %v5717, 1
  %v5813 = vsel %vm1040, %v5804, %v5812
  %v5814 = vrot.slane %v5718, 1
  %v5815 = vsel %vm1040, %v5806, %v5814
  %v5816 = vrot.slane %v5719, 1
  %v5817 = vsel %vm1040, %v5808, %v5816
  %v5818 = vrot.slane %v5720, 1
  %v5819 = vsel %vm1040, %v5810, %v5818
  %v5820 = vrot.slane %v5721, 1
  %v5821 = vsel %vm1040, %v5812, %v5820
  %v5822 = vrot.slane %v5722, 1
  %v5823 = vsel %vm1040, %v5814, %v5822
  %v5824 = vrot.slane %v5723, 1
  %v5825 = vsel %vm1040, %v5816, %v5824
  %v5826 = vrot.slane %v5724, 1
  %v5827 = vsel %vm1040, %v5818, %v5826
  %v5828 = vrot.slane %v5725, 1
  %v5829 = vsel %vm1040, %v5820, %v5828
  %v5862 = vadd.f32 %v5623, %v5764
  %v5863 = vadd.f32 %v5624, %v5767
  %v5864 = vadd.f32 %v5625, %v5770
  %v5865 = vadd.f32 %v5626, %v5773
  %v5866 = vadd.f32 %v5627, %v5775
  %v5867 = vadd.f32 %v5628, %v5777
  %v5868 = vadd.f32 %v5629, %v5779
  %v5869 = vadd.f32 %v5630, %v5781
  %v5870 = vadd.f32 %v5631, %v5783
  %v5871 = vadd.f32 %v5632, %v5785
  %v5872 = vadd.f32 %v5633, %v5787
  %v5873 = vadd.f32 %v5634, %v5789
  %v5874 = vadd.f32 %v5635, %v5791
  %v5875 = vadd.f32 %v5636, %v5793
  %v5876 = vadd.f32 %v5637, %v5795
  %v5877 = vadd.f32 %v5638, %v5797
  %v5878 = vadd.f32 %v5639, %v5799
  %v5879 = vadd.f32 %v5640, %v5801
  %v5880 = vadd.f32 %v5641, %v5803
  %v5881 = vadd.f32 %v5642, %v5805
  %v5882 = vadd.f32 %v5643, %v5807
  %v5883 = vadd.f32 %v5644, %v5809
  %v5884 = vadd.f32 %v5645, %v5811
  %v5885 = vadd.f32 %v5646, %v5813
  %v5886 = vadd.f32 %v5647, %v5815
  %v5887 = vadd.f32 %v5648, %v5817
  %v5888 = vadd.f32 %v5649, %v5819
  %v5889 = vadd.f32 %v5650, %v5821
  %v5890 = vadd.f32 %v5651, %v5823
  %v5891 = vadd.f32 %v5652, %v5825
  %v5892 = vadd.f32 %v5653, %v5827
  %v5893 = vadd.f32 %v5654, %v5829
  %v5894 = vld [vmem:[%s577 + $0x20] sm:$0xfe]
  %v5895 = vld [vmem:[%s577 + $0x28] sm:$0xfe]
  %v5896 = vld [vmem:[%s577 + $0x30] sm:$0xfe]
  %v5897 = vld [vmem:[%s577 + $0x38] sm:$0xfe]
  %v5898 = vld [vmem:[%s577 + $0x100] sm:$0xff]
  %v5899 = vld [vmem:[%s577 + $0x108] sm:$0xff]
  %v5900 = vld [vmem:[%s577 + $0x110] sm:$0xff]
  %v5901 = vld [vmem:[%s577 + $0x118] sm:$0xff]
  %v5902 = vld [vmem:[%s577 + $0x120] sm:$0x1]
  %v5903 = vld [vmem:[%s577 + $0x128] sm:$0x1]
  %v5904 = vld [vmem:[%s577 + $0x130] sm:$0x1]
  %v5905 = vld [vmem:[%s577 + $0x138] sm:$0x1]
  %s5906 = scalar_lea.vmem %s1, 101
  %v5907 = vld [vmem:[%s5906] ss:$8 sm:$0xf]
  %v5909 = vlaneseq
  %v5910 = vshrl.u32 %v5909, 7
  %v5911 = vsub.s32 0, %v5910
  %v5912 = vrot.slane %v5907, %v5911
  %v5913 = vlaneseq
  %v5914 = vshrl.u32 %v5913, 7
  %v5915 = vsub.s32 1, %v5914
  %v5916 = vrot.slane %v5907, %v5915
  %v5917 = vlaneseq
  %v5918 = vshrl.u32 %v5917, 7
  %v5919 = vsub.s32 2, %v5918
  %v5920 = vrot.slane %v5907, %v5919
  %v5921 = vlaneseq
  %v5922 = vshrl.u32 %v5921, 7
  %v5923 = vsub.s32 3, %v5922
  %v5924 = vrot.slane %v5907, %v5923
  %v5929 = vmul.f32 %v5894, %v5912
  %v5930 = vmul.f32 %v5895, %v5916
  %v5931 = vmul.f32 %v5896, %v5920
  %v5932 = vmul.f32 %v5897, %v5924
  %v5933 = vmul.f32 %v586, %v5912
  %v5934 = vmul.f32 %v587, %v5916
  %v5935 = vmul.f32 %v588, %v5920
  %v5936 = vmul.f32 %v589, %v5924
  %v5937 = vmul.f32 %v590, %v5912
  %v5938 = vmul.f32 %v591, %v5916
  %v5939 = vmul.f32 %v592, %v5920
  %v5940 = vmul.f32 %v593, %v5924
  %v5941 = vmul.f32 %v594, %v5912
  %v5942 = vmul.f32 %v595, %v5916
  %v5943 = vmul.f32 %v596, %v5920
  %v5944 = vmul.f32 %v597, %v5924
  %v5945 = vmul.f32 %v598, %v5912
  %v5946 = vmul.f32 %v599, %v5916
  %v5947 = vmul.f32 %v600, %v5920
  %v5948 = vmul.f32 %v601, %v5924
  %v5949 = vmul.f32 %v602, %v5912
  %v5950 = vmul.f32 %v603, %v5916
  %v5951 = vmul.f32 %v604, %v5920
  %v5952 = vmul.f32 %v605, %v5924
  %v5953 = vmul.f32 %v606, %v5912
  %v5954 = vmul.f32 %v607, %v5916
  %v5955 = vmul.f32 %v608, %v5920
  %v5956 = vmul.f32 %v609, %v5924
  %v5957 = vmul.f32 %v5898, %v5912
  %v5958 = vmul.f32 %v5899, %v5916
  %v5959 = vmul.f32 %v5900, %v5920
  %v5960 = vmul.f32 %v5901, %v5924
  %v5961 = vmul.f32 %v5902, %v5912
  %v5962 = vmul.f32 %v5903, %v5916
  %v5963 = vmul.f32 %v5904, %v5920
  %v5964 = vmul.f32 %v5905, %v5924
  %v6001 = vrot.slane %v5929, 1
  %v6002 = vrot.slane %v5933, 1
  %v6003 = vsel %vm1040, %v6001, %v6002
  %v6004 = vrot.slane %v5930, 1
  %v6005 = vrot.slane %v5934, 1
  %v6006 = vsel %vm1040, %v6004, %v6005
  %v6007 = vrot.slane %v5931, 1
  %v6008 = vrot.slane %v5935, 1
  %v6009 = vsel %vm1040, %v6007, %v6008
  %v6010 = vrot.slane %v5932, 1
  %v6011 = vrot.slane %v5936, 1
  %v6012 = vsel %vm1040, %v6010, %v6011
  %v6013 = vrot.slane %v5937, 1
  %v6014 = vsel %vm1040, %v6002, %v6013
  %v6015 = vrot.slane %v5938, 1
  %v6016 = vsel %vm1040, %v6005, %v6015
  %v6017 = vrot.slane %v5939, 1
  %v6018 = vsel %vm1040, %v6008, %v6017
  %v6019 = vrot.slane %v5940, 1
  %v6020 = vsel %vm1040, %v6011, %v6019
  %v6021 = vrot.slane %v5941, 1
  %v6022 = vsel %vm1040, %v6013, %v6021
  %v6023 = vrot.slane %v5942, 1
  %v6024 = vsel %vm1040, %v6015, %v6023
  %v6025 = vrot.slane %v5943, 1
  %v6026 = vsel %vm1040, %v6017, %v6025
  %v6027 = vrot.slane %v5944, 1
  %v6028 = vsel %vm1040, %v6019, %v6027
  %v6029 = vrot.slane %v5945, 1
  %v6030 = vsel %vm1040, %v6021, %v6029
  %v6031 = vrot.slane %v5946, 1
  %v6032 = vsel %vm1040, %v6023, %v6031
  %v6033 = vrot.slane %v5947, 1
  %v6034 = vsel %vm1040, %v6025, %v6033
  %v6035 = vrot.slane %v5948, 1
  %v6036 = vsel %vm1040, %v6027, %v6035
  %v6037 = vrot.slane %v5949, 1
  %v6038 = vsel %vm1040, %v6029, %v6037
  %v6039 = vrot.slane %v5950, 1
  %v6040 = vsel %vm1040, %v6031, %v6039
  %v6041 = vrot.slane %v5951, 1
  %v6042 = vsel %vm1040, %v6033, %v6041
  %v6043 = vrot.slane %v5952, 1
  %v6044 = vsel %vm1040, %v6035, %v6043
  %v6045 = vrot.slane %v5953, 1
  %v6046 = vsel %vm1040, %v6037, %v6045
  %v6047 = vrot.slane %v5954, 1
  %v6048 = vsel %vm1040, %v6039, %v6047
  %v6049 = vrot.slane %v5955, 1
  %v6050 = vsel %vm1040, %v6041, %v6049
  %v6051 = vrot.slane %v5956, 1
  %v6052 = vsel %vm1040, %v6043, %v6051
  %v6053 = vrot.slane %v5957, 1
  %v6054 = vsel %vm1040, %v6045, %v6053
  %v6055 = vrot.slane %v5958, 1
  %v6056 = vsel %vm1040, %v6047, %v6055
  %v6057 = vrot.slane %v5959, 1
  %v6058 = vsel %vm1040, %v6049, %v6057
  %v6059 = vrot.slane %v5960, 1
  %v6060 = vsel %vm1040, %v6051, %v6059
  %v6061 = vrot.slane %v5961, 1
  %v6062 = vsel %vm1040, %v6053, %v6061
  %v6063 = vrot.slane %v5962, 1
  %v6064 = vsel %vm1040, %v6055, %v6063
  %v6065 = vrot.slane %v5963, 1
  %v6066 = vsel %vm1040, %v6057, %v6065
  %v6067 = vrot.slane %v5964, 1
  %v6068 = vsel %vm1040, %v6059, %v6067
  %v6101 = vadd.f32 %v5862, %v6003
  %v6102 = vadd.f32 %v5863, %v6006
  %v6103 = vadd.f32 %v5864, %v6009
  %v6104 = vadd.f32 %v5865, %v6012
  %v6105 = vadd.f32 %v5866, %v6014
  %v6106 = vadd.f32 %v5867, %v6016
  %v6107 = vadd.f32 %v5868, %v6018
  %v6108 = vadd.f32 %v5869, %v6020
  %v6109 = vadd.f32 %v5870, %v6022
  %v6110 = vadd.f32 %v5871, %v6024
  %v6111 = vadd.f32 %v5872, %v6026
  %v6112 = vadd.f32 %v5873, %v6028
  %v6113 = vadd.f32 %v5874, %v6030
  %v6114 = vadd.f32 %v5875, %v6032
  %v6115 = vadd.f32 %v5876, %v6034
  %v6116 = vadd.f32 %v5877, %v6036
  %v6117 = vadd.f32 %v5878, %v6038
  %v6118 = vadd.f32 %v5879, %v6040
  %v6119 = vadd.f32 %v5880, %v6042
  %v6120 = vadd.f32 %v5881, %v6044
  %v6121 = vadd.f32 %v5882, %v6046
  %v6122 = vadd.f32 %v5883, %v6048
  %v6123 = vadd.f32 %v5884, %v6050
  %v6124 = vadd.f32 %v5885, %v6052
  %v6125 = vadd.f32 %v5886, %v6054
  %v6126 = vadd.f32 %v5887, %v6056
  %v6127 = vadd.f32 %v5888, %v6058
  %v6128 = vadd.f32 %v5889, %v6060
  %v6129 = vadd.f32 %v5890, %v6062
  %v6130 = vadd.f32 %v5891, %v6064
  %v6131 = vadd.f32 %v5892, %v6066
  %v6132 = vadd.f32 %v5893, %v6068
  %v6133 = vld [vmem:[%s697 + $0x20] sm:$0xfe]
  %v6134 = vld [vmem:[%s697 + $0x28] sm:$0xfe]
  %v6135 = vld [vmem:[%s697 + $0x30] sm:$0xfe]
  %v6136 = vld [vmem:[%s697 + $0x38] sm:$0xfe]
  %v6137 = vld [vmem:[%s697 + $0x100] sm:$0xff]
  %v6138 = vld [vmem:[%s697 + $0x108] sm:$0xff]
  %v6139 = vld [vmem:[%s697 + $0x110] sm:$0xff]
  %v6140 = vld [vmem:[%s697 + $0x118] sm:$0xff]
  %v6141 = vld [vmem:[%s697 + $0x120] sm:$0x1]
  %v6142 = vld [vmem:[%s697 + $0x128] sm:$0x1]
  %v6143 = vld [vmem:[%s697 + $0x130] sm:$0x1]
  %v6144 = vld [vmem:[%s697 + $0x138] sm:$0x1]
  %s6145 = scalar_lea.vmem %s1, 102
  %v6146 = vld [vmem:[%s6145] ss:$8 sm:$0xf]
  %v6148 = vlaneseq
  %v6149 = vshrl.u32 %v6148, 7
  %v6150 = vsub.s32 0, %v6149
  %v6151 = vrot.slane %v6146, %v6150
  %v6152 = vlaneseq
  %v6153 = vshrl.u32 %v6152, 7
  %v6154 = vsub.s32 1, %v6153
  %v6155 = vrot.slane %v6146, %v6154
  %v6156 = vlaneseq
  %v6157 = vshrl.u32 %v6156, 7
  %v6158 = vsub.s32 2, %v6157
  %v6159 = vrot.slane %v6146, %v6158
  %v6160 = vlaneseq
  %v6161 = vshrl.u32 %v6160, 7
  %v6162 = vsub.s32 3, %v6161
  %v6163 = vrot.slane %v6146, %v6162
  %v6168 = vmul.f32 %v6133, %v6151
  %v6169 = vmul.f32 %v6134, %v6155
  %v6170 = vmul.f32 %v6135, %v6159
  %v6171 = vmul.f32 %v6136, %v6163
  %v6172 = vmul.f32 %v706, %v6151
  %v6173 = vmul.f32 %v707, %v6155
  %v6174 = vmul.f32 %v708, %v6159
  %v6175 = vmul.f32 %v709, %v6163
  %v6176 = vmul.f32 %v710, %v6151
  %v6177 = vmul.f32 %v711, %v6155
  %v6178 = vmul.f32 %v712, %v6159
  %v6179 = vmul.f32 %v713, %v6163
  %v6180 = vmul.f32 %v714, %v6151
  %v6181 = vmul.f32 %v715, %v6155
  %v6182 = vmul.f32 %v716, %v6159
  %v6183 = vmul.f32 %v717, %v6163
  %v6184 = vmul.f32 %v718, %v6151
  %v6185 = vmul.f32 %v719, %v6155
  %v6186 = vmul.f32 %v720, %v6159
  %v6187 = vmul.f32 %v721, %v6163
  %v6188 = vmul.f32 %v722, %v6151
  %v6189 = vmul.f32 %v723, %v6155
  %v6190 = vmul.f32 %v724, %v6159
  %v6191 = vmul.f32 %v725, %v6163
  %v6192 = vmul.f32 %v726, %v6151
  %v6193 = vmul.f32 %v727, %v6155
  %v6194 = vmul.f32 %v728, %v6159
  %v6195 = vmul.f32 %v729, %v6163
  %v6196 = vmul.f32 %v6137, %v6151
  %v6197 = vmul.f32 %v6138, %v6155
  %v6198 = vmul.f32 %v6139, %v6159
  %v6199 = vmul.f32 %v6140, %v6163
  %v6200 = vmul.f32 %v6141, %v6151
  %v6201 = vmul.f32 %v6142, %v6155
  %v6202 = vmul.f32 %v6143, %v6159
  %v6203 = vmul.f32 %v6144, %v6163
  %v6240 = vrot.slane %v6168, 1
  %v6241 = vrot.slane %v6172, 1
  %v6242 = vsel %vm1040, %v6240, %v6241
  %v6243 = vrot.slane %v6169, 1
  %v6244 = vrot.slane %v6173, 1
  %v6245 = vsel %vm1040, %v6243, %v6244
  %v6246 = vrot.slane %v6170, 1
  %v6247 = vrot.slane %v6174, 1
  %v6248 = vsel %vm1040, %v6246, %v6247
  %v6249 = vrot.slane %v6171, 1
  %v6250 = vrot.slane %v6175, 1
  %v6251 = vsel %vm1040, %v6249, %v6250
  %v6252 = vrot.slane %v6176, 1
  %v6253 = vsel %vm1040, %v6241, %v6252
  %v6254 = vrot.slane %v6177, 1
  %v6255 = vsel %vm1040, %v6244, %v6254
  %v6256 = vrot.slane %v6178, 1
  %v6257 = vsel %vm1040, %v6247, %v6256
  %v6258 = vrot.slane %v6179, 1
  %v6259 = vsel %vm1040, %v6250, %v6258
  %v6260 = vrot.slane %v6180, 1
  %v6261 = vsel %vm1040, %v6252, %v6260
  %v6262 = vrot.slane %v6181, 1
  %v6263 = vsel %vm1040, %v6254, %v6262
  %v6264 = vrot.slane %v6182, 1
  %v6265 = vsel %vm1040, %v6256, %v6264
  %v6266 = vrot.slane %v6183, 1
  %v6267 = vsel %vm1040, %v6258, %v6266
  %v6268 = vrot.slane %v6184, 1
  %v6269 = vsel %vm1040, %v6260, %v6268
  %v6270 = vrot.slane %v6185, 1
  %v6271 = vsel %vm1040, %v6262, %v6270
  %v6272 = vrot.slane %v6186, 1
  %v6273 = vsel %vm1040, %v6264, %v6272
  %v6274 = vrot.slane %v6187, 1
  %v6275 = vsel %vm1040, %v6266, %v6274
  %v6276 = vrot.slane %v6188, 1
  %v6277 = vsel %vm1040, %v6268, %v6276
  %v6278 = vrot.slane %v6189, 1
  %v6279 = vsel %vm1040, %v6270, %v6278
  %v6280 = vrot.slane %v6190, 1
  %v6281 = vsel %vm1040, %v6272, %v6280
  %v6282 = vrot.slane %v6191, 1
  %v6283 = vsel %vm1040, %v6274, %v6282
  %v6284 = vrot.slane %v6192, 1
  %v6285 = vsel %vm1040, %v6276, %v6284
  %v6286 = vrot.slane %v6193, 1
  %v6287 = vsel %vm1040, %v6278, %v6286
  %v6288 = vrot.slane %v6194, 1
  %v6289 = vsel %vm1040, %v6280, %v6288
  %v6290 = vrot.slane %v6195, 1
  %v6291 = vsel %vm1040, %v6282, %v6290
  %v6292 = vrot.slane %v6196, 1
  %v6293 = vsel %vm1040, %v6284, %v6292
  %v6294 = vrot.slane %v6197, 1
  %v6295 = vsel %vm1040, %v6286, %v6294
  %v6296 = vrot.slane %v6198, 1
  %v6297 = vsel %vm1040, %v6288, %v6296
  %v6298 = vrot.slane %v6199, 1
  %v6299 = vsel %vm1040, %v6290, %v6298
  %v6300 = vrot.slane %v6200, 1
  %v6301 = vsel %vm1040, %v6292, %v6300
  %v6302 = vrot.slane %v6201, 1
  %v6303 = vsel %vm1040, %v6294, %v6302
  %v6304 = vrot.slane %v6202, 1
  %v6305 = vsel %vm1040, %v6296, %v6304
  %v6306 = vrot.slane %v6203, 1
  %v6307 = vsel %vm1040, %v6298, %v6306
  %v6340 = vadd.f32 %v6101, %v6242
  %v6341 = vadd.f32 %v6102, %v6245
  %v6342 = vadd.f32 %v6103, %v6248
  %v6343 = vadd.f32 %v6104, %v6251
  %v6344 = vadd.f32 %v6105, %v6253
  %v6345 = vadd.f32 %v6106, %v6255
  %v6346 = vadd.f32 %v6107, %v6257
  %v6347 = vadd.f32 %v6108, %v6259
  %v6348 = vadd.f32 %v6109, %v6261
  %v6349 = vadd.f32 %v6110, %v6263
  %v6350 = vadd.f32 %v6111, %v6265
  %v6351 = vadd.f32 %v6112, %v6267
  %v6352 = vadd.f32 %v6113, %v6269
  %v6353 = vadd.f32 %v6114, %v6271
  %v6354 = vadd.f32 %v6115, %v6273
  %v6355 = vadd.f32 %v6116, %v6275
  %v6356 = vadd.f32 %v6117, %v6277
  %v6357 = vadd.f32 %v6118, %v6279
  %v6358 = vadd.f32 %v6119, %v6281
  %v6359 = vadd.f32 %v6120, %v6283
  %v6360 = vadd.f32 %v6121, %v6285
  %v6361 = vadd.f32 %v6122, %v6287
  %v6362 = vadd.f32 %v6123, %v6289
  %v6363 = vadd.f32 %v6124, %v6291
  %v6364 = vadd.f32 %v6125, %v6293
  %v6365 = vadd.f32 %v6126, %v6295
  %v6366 = vadd.f32 %v6127, %v6297
  %v6367 = vadd.f32 %v6128, %v6299
  %v6368 = vadd.f32 %v6129, %v6301
  %v6369 = vadd.f32 %v6130, %v6303
  %v6370 = vadd.f32 %v6131, %v6305
  %v6371 = vadd.f32 %v6132, %v6307
  %v6372 = vld [vmem:[%s817 + $0x20] sm:$0xfe]
  %v6373 = vld [vmem:[%s817 + $0x28] sm:$0xfe]
  %v6374 = vld [vmem:[%s817 + $0x30] sm:$0xfe]
  %v6375 = vld [vmem:[%s817 + $0x38] sm:$0xfe]
  %v6376 = vld [vmem:[%s817 + $0x100] sm:$0xff]
  %v6377 = vld [vmem:[%s817 + $0x108] sm:$0xff]
  %v6378 = vld [vmem:[%s817 + $0x110] sm:$0xff]
  %v6379 = vld [vmem:[%s817 + $0x118] sm:$0xff]
  %v6380 = vld [vmem:[%s817 + $0x120] sm:$0x1]
  %v6381 = vld [vmem:[%s817 + $0x128] sm:$0x1]
  %v6382 = vld [vmem:[%s817 + $0x130] sm:$0x1]
  %v6383 = vld [vmem:[%s817 + $0x138] sm:$0x1]
  %s6384 = scalar_lea.vmem %s1, 103
  %v6385 = vld [vmem:[%s6384] ss:$8 sm:$0xf]
  %v6387 = vlaneseq
  %v6388 = vshrl.u32 %v6387, 7
  %v6389 = vsub.s32 0, %v6388
  %v6390 = vrot.slane %v6385, %v6389
  %v6391 = vlaneseq
  %v6392 = vshrl.u32 %v6391, 7
  %v6393 = vsub.s32 1, %v6392
  %v6394 = vrot.slane %v6385, %v6393
  %v6395 = vlaneseq
  %v6396 = vshrl.u32 %v6395, 7
  %v6397 = vsub.s32 2, %v6396
  %v6398 = vrot.slane %v6385, %v6397
  %v6399 = vlaneseq
  %v6400 = vshrl.u32 %v6399, 7
  %v6401 = vsub.s32 3, %v6400
  %v6402 = vrot.slane %v6385, %v6401
  %v6407 = vmul.f32 %v6372, %v6390
  %v6408 = vmul.f32 %v6373, %v6394
  %v6409 = vmul.f32 %v6374, %v6398
  %v6410 = vmul.f32 %v6375, %v6402
  %v6411 = vmul.f32 %v826, %v6390
  %v6412 = vmul.f32 %v827, %v6394
  %v6413 = vmul.f32 %v828, %v6398
  %v6414 = vmul.f32 %v829, %v6402
  %v6415 = vmul.f32 %v830, %v6390
  %v6416 = vmul.f32 %v831, %v6394
  %v6417 = vmul.f32 %v832, %v6398
  %v6418 = vmul.f32 %v833, %v6402
  %v6419 = vmul.f32 %v834, %v6390
  %v6420 = vmul.f32 %v835, %v6394
  %v6421 = vmul.f32 %v836, %v6398
  %v6422 = vmul.f32 %v837, %v6402
  %v6423 = vmul.f32 %v838, %v6390
  %v6424 = vmul.f32 %v839, %v6394
  %v6425 = vmul.f32 %v840, %v6398
  %v6426 = vmul.f32 %v841, %v6402
  %v6427 = vmul.f32 %v842, %v6390
  %v6428 = vmul.f32 %v843, %v6394
  %v6429 = vmul.f32 %v844, %v6398
  %v6430 = vmul.f32 %v845, %v6402
  %v6431 = vmul.f32 %v846, %v6390
  %v6432 = vmul.f32 %v847, %v6394
  %v6433 = vmul.f32 %v848, %v6398
  %v6434 = vmul.f32 %v849, %v6402
  %v6435 = vmul.f32 %v6376, %v6390
  %v6436 = vmul.f32 %v6377, %v6394
  %v6437 = vmul.f32 %v6378, %v6398
  %v6438 = vmul.f32 %v6379, %v6402
  %v6439 = vmul.f32 %v6380, %v6390
  %v6440 = vmul.f32 %v6381, %v6394
  %v6441 = vmul.f32 %v6382, %v6398
  %v6442 = vmul.f32 %v6383, %v6402
  %v6479 = vrot.slane %v6407, 1
  %v6480 = vrot.slane %v6411, 1
  %v6481 = vsel %vm1040, %v6479, %v6480
  %v6482 = vrot.slane %v6408, 1
  %v6483 = vrot.slane %v6412, 1
  %v6484 = vsel %vm1040, %v6482, %v6483
  %v6485 = vrot.slane %v6409, 1
  %v6486 = vrot.slane %v6413, 1
  %v6487 = vsel %vm1040, %v6485, %v6486
  %v6488 = vrot.slane %v6410, 1
  %v6489 = vrot.slane %v6414, 1
  %v6490 = vsel %vm1040, %v6488, %v6489
  %v6491 = vrot.slane %v6415, 1
  %v6492 = vsel %vm1040, %v6480, %v6491
  %v6493 = vrot.slane %v6416, 1
  %v6494 = vsel %vm1040, %v6483, %v6493
  %v6495 = vrot.slane %v6417, 1
  %v6496 = vsel %vm1040, %v6486, %v6495
  %v6497 = vrot.slane %v6418, 1
  %v6498 = vsel %vm1040, %v6489, %v6497
  %v6499 = vrot.slane %v6419, 1
  %v6500 = vsel %vm1040, %v6491, %v6499
  %v6501 = vrot.slane %v6420, 1
  %v6502 = vsel %vm1040, %v6493, %v6501
  %v6503 = vrot.slane %v6421, 1
  %v6504 = vsel %vm1040, %v6495, %v6503
  %v6505 = vrot.slane %v6422, 1
  %v6506 = vsel %vm1040, %v6497, %v6505
  %v6507 = vrot.slane %v6423, 1
  %v6508 = vsel %vm1040, %v6499, %v6507
  %v6509 = vrot.slane %v6424, 1
  %v6510 = vsel %vm1040, %v6501, %v6509
  %v6511 = vrot.slane %v6425, 1
  %v6512 = vsel %vm1040, %v6503, %v6511
  %v6513 = vrot.slane %v6426, 1
  %v6514 = vsel %vm1040, %v6505, %v6513
  %v6515 = vrot.slane %v6427, 1
  %v6516 = vsel %vm1040, %v6507, %v6515
  %v6517 = vrot.slane %v6428, 1
  %v6518 = vsel %vm1040, %v6509, %v6517
  %v6519 = vrot.slane %v6429, 1
  %v6520 = vsel %vm1040, %v6511, %v6519
  %v6521 = vrot.slane %v6430, 1
  %v6522 = vsel %vm1040, %v6513, %v6521
  %v6523 = vrot.slane %v6431, 1
  %v6524 = vsel %vm1040, %v6515, %v6523
  %v6525 = vrot.slane %v6432, 1
  %v6526 = vsel %vm1040, %v6517, %v6525
  %v6527 = vrot.slane %v6433, 1
  %v6528 = vsel %vm1040, %v6519, %v6527
  %v6529 = vrot.slane %v6434, 1
  %v6530 = vsel %vm1040, %v6521, %v6529
  %v6531 = vrot.slane %v6435, 1
  %v6532 = vsel %vm1040, %v6523, %v6531
  %v6533 = vrot.slane %v6436, 1
  %v6534 = vsel %vm1040, %v6525, %v6533
  %v6535 = vrot.slane %v6437, 1
  %v6536 = vsel %vm1040, %v6527, %v6535
  %v6537 = vrot.slane %v6438, 1
  %v6538 = vsel %vm1040, %v6529, %v6537
  %v6539 = vrot.slane %v6439, 1
  %v6540 = vsel %vm1040, %v6531, %v6539
  %v6541 = vrot.slane %v6440, 1
  %v6542 = vsel %vm1040, %v6533, %v6541
  %v6543 = vrot.slane %v6441, 1
  %v6544 = vsel %vm1040, %v6535, %v6543
  %v6545 = vrot.slane %v6442, 1
  %v6546 = vsel %vm1040, %v6537, %v6545
  %v6579 = vadd.f32 %v6340, %v6481
  %v6580 = vadd.f32 %v6341, %v6484
  %v6581 = vadd.f32 %v6342, %v6487
  %v6582 = vadd.f32 %v6343, %v6490
  %v6583 = vadd.f32 %v6344, %v6492
  %v6584 = vadd.f32 %v6345, %v6494
  %v6585 = vadd.f32 %v6346, %v6496
  %v6586 = vadd.f32 %v6347, %v6498
  %v6587 = vadd.f32 %v6348, %v6500
  %v6588 = vadd.f32 %v6349, %v6502
  %v6589 = vadd.f32 %v6350, %v6504
  %v6590 = vadd.f32 %v6351, %v6506
  %v6591 = vadd.f32 %v6352, %v6508
  %v6592 = vadd.f32 %v6353, %v6510
  %v6593 = vadd.f32 %v6354, %v6512
  %v6594 = vadd.f32 %v6355, %v6514
  %v6595 = vadd.f32 %v6356, %v6516
  %v6596 = vadd.f32 %v6357, %v6518
  %v6597 = vadd.f32 %v6358, %v6520
  %v6598 = vadd.f32 %v6359, %v6522
  %v6599 = vadd.f32 %v6360, %v6524
  %v6600 = vadd.f32 %v6361, %v6526
  %v6601 = vadd.f32 %v6362, %v6528
  %v6602 = vadd.f32 %v6363, %v6530
  %v6603 = vadd.f32 %v6364, %v6532
  %v6604 = vadd.f32 %v6365, %v6534
  %v6605 = vadd.f32 %v6366, %v6536
  %v6606 = vadd.f32 %v6367, %v6538
  %v6607 = vadd.f32 %v6368, %v6540
  %v6608 = vadd.f32 %v6369, %v6542
  %v6609 = vadd.f32 %v6370, %v6544
  %v6610 = vadd.f32 %v6371, %v6546
  %v6611 = vld [vmem:[%s0 + $0x20] sm:$0xfc]
  %v6612 = vld [vmem:[%s0 + $0x28] sm:$0xfc]
  %v6613 = vld [vmem:[%s0 + $0x30] sm:$0xfc]
  %v6614 = vld [vmem:[%s0 + $0x38] sm:$0xfc]
  %v6615 = vld [vmem:[%s0 + $0x120] sm:$0x3]
  %v6616 = vld [vmem:[%s0 + $0x128] sm:$0x3]
  %v6617 = vld [vmem:[%s0 + $0x130] sm:$0x3]
  %v6618 = vld [vmem:[%s0 + $0x138] sm:$0x3]
  %s6619 = scalar_lea.vmem %s1, 128
  %v6620 = vld [vmem:[%s6619] ss:$8 sm:$0xf]
  %v6622 = vlaneseq
  %v6623 = vshrl.u32 %v6622, 7
  %v6624 = vsub.s32 0, %v6623
  %v6625 = vrot.slane %v6620, %v6624
  %v6626 = vlaneseq
  %v6627 = vshrl.u32 %v6626, 7
  %v6628 = vsub.s32 1, %v6627
  %v6629 = vrot.slane %v6620, %v6628
  %v6630 = vlaneseq
  %v6631 = vshrl.u32 %v6630, 7
  %v6632 = vsub.s32 2, %v6631
  %v6633 = vrot.slane %v6620, %v6632
  %v6634 = vlaneseq
  %v6635 = vshrl.u32 %v6634, 7
  %v6636 = vsub.s32 3, %v6635
  %v6637 = vrot.slane %v6620, %v6636
  %v6642 = vmul.f32 %v6611, %v6625
  %v6643 = vmul.f32 %v6612, %v6629
  %v6644 = vmul.f32 %v6613, %v6633
  %v6645 = vmul.f32 %v6614, %v6637
  %v6646 = vmul.f32 %v19, %v6625
  %v6647 = vmul.f32 %v20, %v6629
  %v6648 = vmul.f32 %v21, %v6633
  %v6649 = vmul.f32 %v22, %v6637
  %v6650 = vmul.f32 %v23, %v6625
  %v6651 = vmul.f32 %v24, %v6629
  %v6652 = vmul.f32 %v25, %v6633
  %v6653 = vmul.f32 %v26, %v6637
  %v6654 = vmul.f32 %v27, %v6625
  %v6655 = vmul.f32 %v28, %v6629
  %v6656 = vmul.f32 %v29, %v6633
  %v6657 = vmul.f32 %v30, %v6637
  %v6658 = vmul.f32 %v31, %v6625
  %v6659 = vmul.f32 %v32, %v6629
  %v6660 = vmul.f32 %v33, %v6633
  %v6661 = vmul.f32 %v34, %v6637
  %v6662 = vmul.f32 %v35, %v6625
  %v6663 = vmul.f32 %v36, %v6629
  %v6664 = vmul.f32 %v37, %v6633
  %v6665 = vmul.f32 %v38, %v6637
  %v6666 = vmul.f32 %v39, %v6625
  %v6667 = vmul.f32 %v40, %v6629
  %v6668 = vmul.f32 %v41, %v6633
  %v6669 = vmul.f32 %v42, %v6637
  %v6670 = vmul.f32 %v4703, %v6625
  %v6671 = vmul.f32 %v4704, %v6629
  %v6672 = vmul.f32 %v4705, %v6633
  %v6673 = vmul.f32 %v4706, %v6637
  %v6674 = vmul.f32 %v6615, %v6625
  %v6675 = vmul.f32 %v6616, %v6629
  %v6676 = vmul.f32 %v6617, %v6633
  %v6677 = vmul.f32 %v6618, %v6637
  %v6714 = vrot.slane %v6642, 2
  %v6715 = vrot.slane %v6646, 2
  %v6716 = vsel %vm2921, %v6714, %v6715
  %v6717 = vrot.slane %v6643, 2
  %v6718 = vrot.slane %v6647, 2
  %v6719 = vsel %vm2921, %v6717, %v6718
  %v6720 = vrot.slane %v6644, 2
  %v6721 = vrot.slane %v6648, 2
  %v6722 = vsel %vm2921, %v6720, %v6721
  %v6723 = vrot.slane %v6645, 2
  %v6724 = vrot.slane %v6649, 2
  %v6725 = vsel %vm2921, %v6723, %v6724
  %v6726 = vrot.slane %v6650, 2
  %v6727 = vsel %vm2921, %v6715, %v6726
  %v6728 = vrot.slane %v6651, 2
  %v6729 = vsel %vm2921, %v6718, %v6728
  %v6730 = vrot.slane %v6652, 2
  %v6731 = vsel %vm2921, %v6721, %v6730
  %v6732 = vrot.slane %v6653, 2
  %v6733 = vsel %vm2921, %v6724, %v6732
  %v6734 = vrot.slane %v6654, 2
  %v6735 = vsel %vm2921, %v6726, %v6734
  %v6736 = vrot.slane %v6655, 2
  %v6737 = vsel %vm2921, %v6728, %v6736
  %v6738 = vrot.slane %v6656, 2
  %v6739 = vsel %vm2921, %v6730, %v6738
  %v6740 = vrot.slane %v6657, 2
  %v6741 = vsel %vm2921, %v6732, %v6740
  %v6742 = vrot.slane %v6658, 2
  %v6743 = vsel %vm2921, %v6734, %v6742
  %v6744 = vrot.slane %v6659, 2
  %v6745 = vsel %vm2921, %v6736, %v6744
  %v6746 = vrot.slane %v6660, 2
  %v6747 = vsel %vm2921, %v6738, %v6746
  %v6748 = vrot.slane %v6661, 2
  %v6749 = vsel %vm2921, %v6740, %v6748
  %v6750 = vrot.slane %v6662, 2
  %v6751 = vsel %vm2921, %v6742, %v6750
  %v6752 = vrot.slane %v6663, 2
  %v6753 = vsel %vm2921, %v6744, %v6752
  %v6754 = vrot.slane %v6664, 2
  %v6755 = vsel %vm2921, %v6746, %v6754
  %v6756 = vrot.slane %v6665, 2
  %v6757 = vsel %vm2921, %v6748, %v6756
  %v6758 = vrot.slane %v6666, 2
  %v6759 = vsel %vm2921, %v6750, %v6758
  %v6760 = vrot.slane %v6667, 2
  %v6761 = vsel %vm2921, %v6752, %v6760
  %v6762 = vrot.slane %v6668, 2
  %v6763 = vsel %vm2921, %v6754, %v6762
  %v6764 = vrot.slane %v6669, 2
  %v6765 = vsel %vm2921, %v6756, %v6764
  %v6766 = vrot.slane %v6670, 2
  %v6767 = vsel %vm2921, %v6758, %v6766
  %v6768 = vrot.slane %v6671, 2
  %v6769 = vsel %vm2921, %v6760, %v6768
  %v6770 = vrot.slane %v6672, 2
  %v6771 = vsel %vm2921, %v6762, %v6770
  %v6772 = vrot.slane %v6673, 2
  %v6773 = vsel %vm2921, %v6764, %v6772
  %v6774 = vrot.slane %v6674, 2
  %v6775 = vsel %vm2921, %v6766, %v6774
  %v6776 = vrot.slane %v6675, 2
  %v6777 = vsel %vm2921, %v6768, %v6776
  %v6778 = vrot.slane %v6676, 2
  %v6779 = vsel %vm2921, %v6770, %v6778
  %v6780 = vrot.slane %v6677, 2
  %v6781 = vsel %vm2921, %v6772, %v6780
  %v6814 = vadd.f32 %v6579, %v6716
  %v6815 = vadd.f32 %v6580, %v6719
  %v6816 = vadd.f32 %v6581, %v6722
  %v6817 = vadd.f32 %v6582, %v6725
  %v6818 = vadd.f32 %v6583, %v6727
  %v6819 = vadd.f32 %v6584, %v6729
  %v6820 = vadd.f32 %v6585, %v6731
  %v6821 = vadd.f32 %v6586, %v6733
  %v6822 = vadd.f32 %v6587, %v6735
  %v6823 = vadd.f32 %v6588, %v6737
  %v6824 = vadd.f32 %v6589, %v6739
  %v6825 = vadd.f32 %v6590, %v6741
  %v6826 = vadd.f32 %v6591, %v6743
  %v6827 = vadd.f32 %v6592, %v6745
  %v6828 = vadd.f32 %v6593, %v6747
  %v6829 = vadd.f32 %v6594, %v6749
  %v6830 = vadd.f32 %v6595, %v6751
  %v6831 = vadd.f32 %v6596, %v6753
  %v6832 = vadd.f32 %v6597, %v6755
  %v6833 = vadd.f32 %v6598, %v6757
  %v6834 = vadd.f32 %v6599, %v6759
  %v6835 = vadd.f32 %v6600, %v6761
  %v6836 = vadd.f32 %v6601, %v6763
  %v6837 = vadd.f32 %v6602, %v6765
  %v6838 = vadd.f32 %v6603, %v6767
  %v6839 = vadd.f32 %v6604, %v6769
  %v6840 = vadd.f32 %v6605, %v6771
  %v6841 = vadd.f32 %v6606, %v6773
  %v6842 = vadd.f32 %v6607, %v6775
  %v6843 = vadd.f32 %v6608, %v6777
  %v6844 = vadd.f32 %v6609, %v6779
  %v6845 = vadd.f32 %v6610, %v6781
  %v6846 = vld [vmem:[%s97 + $0x20] sm:$0xfc]
  %v6847 = vld [vmem:[%s97 + $0x28] sm:$0xfc]
  %v6848 = vld [vmem:[%s97 + $0x30] sm:$0xfc]
  %v6849 = vld [vmem:[%s97 + $0x38] sm:$0xfc]
  %v6850 = vld [vmem:[%s97 + $0x120] sm:$0x3]
  %v6851 = vld [vmem:[%s97 + $0x128] sm:$0x3]
  %v6852 = vld [vmem:[%s97 + $0x130] sm:$0x3]
  %v6853 = vld [vmem:[%s97 + $0x138] sm:$0x3]
  %s6854 = scalar_lea.vmem %s1, 129
  %v6855 = vld [vmem:[%s6854] ss:$8 sm:$0xf]
  %v6857 = vlaneseq
  %v6858 = vshrl.u32 %v6857, 7
  %v6859 = vsub.s32 0, %v6858
  %v6860 = vrot.slane %v6855, %v6859
  %v6861 = vlaneseq
  %v6862 = vshrl.u32 %v6861, 7
  %v6863 = vsub.s32 1, %v6862
  %v6864 = vrot.slane %v6855, %v6863
  %v6865 = vlaneseq
  %v6866 = vshrl.u32 %v6865, 7
  %v6867 = vsub.s32 2, %v6866
  %v6868 = vrot.slane %v6855, %v6867
  %v6869 = vlaneseq
  %v6870 = vshrl.u32 %v6869, 7
  %v6871 = vsub.s32 3, %v6870
  %v6872 = vrot.slane %v6855, %v6871
  %v6877 = vmul.f32 %v6846, %v6860
  %v6878 = vmul.f32 %v6847, %v6864
  %v6879 = vmul.f32 %v6848, %v6868
  %v6880 = vmul.f32 %v6849, %v6872
  %v6881 = vmul.f32 %v106, %v6860
  %v6882 = vmul.f32 %v107, %v6864
  %v6883 = vmul.f32 %v108, %v6868
  %v6884 = vmul.f32 %v109, %v6872
  %v6885 = vmul.f32 %v110, %v6860
  %v6886 = vmul.f32 %v111, %v6864
  %v6887 = vmul.f32 %v112, %v6868
  %v6888 = vmul.f32 %v113, %v6872
  %v6889 = vmul.f32 %v114, %v6860
  %v6890 = vmul.f32 %v115, %v6864
  %v6891 = vmul.f32 %v116, %v6868
  %v6892 = vmul.f32 %v117, %v6872
  %v6893 = vmul.f32 %v118, %v6860
  %v6894 = vmul.f32 %v119, %v6864
  %v6895 = vmul.f32 %v120, %v6868
  %v6896 = vmul.f32 %v121, %v6872
  %v6897 = vmul.f32 %v122, %v6860
  %v6898 = vmul.f32 %v123, %v6864
  %v6899 = vmul.f32 %v124, %v6868
  %v6900 = vmul.f32 %v125, %v6872
  %v6901 = vmul.f32 %v126, %v6860
  %v6902 = vmul.f32 %v127, %v6864
  %v6903 = vmul.f32 %v128, %v6868
  %v6904 = vmul.f32 %v129, %v6872
  %v6905 = vmul.f32 %v4942, %v6860
  %v6906 = vmul.f32 %v4943, %v6864
  %v6907 = vmul.f32 %v4944, %v6868
  %v6908 = vmul.f32 %v4945, %v6872
  %v6909 = vmul.f32 %v6850, %v6860
  %v6910 = vmul.f32 %v6851, %v6864
  %v6911 = vmul.f32 %v6852, %v6868
  %v6912 = vmul.f32 %v6853, %v6872
  %v6949 = vrot.slane %v6877, 2
  %v6950 = vrot.slane %v6881, 2
  %v6951 = vsel %vm2921, %v6949, %v6950
  %v6952 = vrot.slane %v6878, 2
  %v6953 = vrot.slane %v6882, 2
  %v6954 = vsel %vm2921, %v6952, %v6953
  %v6955 = vrot.slane %v6879, 2
  %v6956 = vrot.slane %v6883, 2
  %v6957 = vsel %vm2921, %v6955, %v6956
  %v6958 = vrot.slane %v6880, 2
  %v6959 = vrot.slane %v6884, 2
  %v6960 = vsel %vm2921, %v6958, %v6959
  %v6961 = vrot.slane %v6885, 2
  %v6962 = vsel %vm2921, %v6950, %v6961
  %v6963 = vrot.slane %v6886, 2
  %v6964 = vsel %vm2921, %v6953, %v6963
  %v6965 = vrot.slane %v6887, 2
  %v6966 = vsel %vm2921, %v6956, %v6965
  %v6967 = vrot.slane %v6888, 2
  %v6968 = vsel %vm2921, %v6959, %v6967
  %v6969 = vrot.slane %v6889, 2
  %v6970 = vsel %vm2921, %v6961, %v6969
  %v6971 = vrot.slane %v6890, 2
  %v6972 = vsel %vm2921, %v6963, %v6971
  %v6973 = vrot.slane %v6891, 2
  %v6974 = vsel %vm2921, %v6965, %v6973
  %v6975 = vrot.slane %v6892, 2
  %v6976 = vsel %vm2921, %v6967, %v6975
  %v6977 = vrot.slane %v6893, 2
  %v6978 = vsel %vm2921, %v6969, %v6977
  %v6979 = vrot.slane %v6894, 2
  %v6980 = vsel %vm2921, %v6971, %v6979
  %v6981 = vrot.slane %v6895, 2
  %v6982 = vsel %vm2921, %v6973, %v6981
  %v6983 = vrot.slane %v6896, 2
  %v6984 = vsel %vm2921, %v6975, %v6983
  %v6985 = vrot.slane %v6897, 2
  %v6986 = vsel %vm2921, %v6977, %v6985
  %v6987 = vrot.slane %v6898, 2
  %v6988 = vsel %vm2921, %v6979, %v6987
  %v6989 = vrot.slane %v6899, 2
  %v6990 = vsel %vm2921, %v6981, %v6989
  %v6991 = vrot.slane %v6900, 2
  %v6992 = vsel %vm2921, %v6983, %v6991
  %v6993 = vrot.slane %v6901, 2
  %v6994 = vsel %vm2921, %v6985, %v6993
  %v6995 = vrot.slane %v6902, 2
  %v6996 = vsel %vm2921, %v6987, %v6995
  %v6997 = vrot.slane %v6903, 2
  %v6998 = vsel %vm2921, %v6989, %v6997
  %v6999 = vrot.slane %v6904, 2
  %v7000 = vsel %vm2921, %v6991, %v6999
  %v7001 = vrot.slane %v6905, 2
  %v7002 = vsel %vm2921, %v6993, %v7001
  %v7003 = vrot.slane %v6906, 2
  %v7004 = vsel %vm2921, %v6995, %v7003
  %v7005 = vrot.slane %v6907, 2
  %v7006 = vsel %vm2921, %v6997, %v7005
  %v7007 = vrot.slane %v6908, 2
  %v7008 = vsel %vm2921, %v6999, %v7007
  %v7009 = vrot.slane %v6909, 2
  %v7010 = vsel %vm2921, %v7001, %v7009
  %v7011 = vrot.slane %v6910, 2
  %v7012 = vsel %vm2921, %v7003, %v7011
  %v7013 = vrot.slane %v6911, 2
  %v7014 = vsel %vm2921, %v7005, %v7013
  %v7015 = vrot.slane %v6912, 2
  %v7016 = vsel %vm2921, %v7007, %v7015
  %v7049 = vadd.f32 %v6814, %v6951
  %v7050 = vadd.f32 %v6815, %v6954
  %v7051 = vadd.f32 %v6816, %v6957
  %v7052 = vadd.f32 %v6817, %v6960
  %v7053 = vadd.f32 %v6818, %v6962
  %v7054 = vadd.f32 %v6819, %v6964
  %v7055 = vadd.f32 %v6820, %v6966
  %v7056 = vadd.f32 %v6821, %v6968
  %v7057 = vadd.f32 %v6822, %v6970
  %v7058 = vadd.f32 %v6823, %v6972
  %v7059 = vadd.f32 %v6824, %v6974
  %v7060 = vadd.f32 %v6825, %v6976
  %v7061 = vadd.f32 %v6826, %v6978
  %v7062 = vadd.f32 %v6827, %v6980
  %v7063 = vadd.f32 %v6828, %v6982
  %v7064 = vadd.f32 %v6829, %v6984
  %v7065 = vadd.f32 %v6830, %v6986
  %v7066 = vadd.f32 %v6831, %v6988
  %v7067 = vadd.f32 %v6832, %v6990
  %v7068 = vadd.f32 %v6833, %v6992
  %v7069 = vadd.f32 %v6834, %v6994
  %v7070 = vadd.f32 %v6835, %v6996
  %v7071 = vadd.f32 %v6836, %v6998
  %v7072 = vadd.f32 %v6837, %v7000
  %v7073 = vadd.f32 %v6838, %v7002
  %v7074 = vadd.f32 %v6839, %v7004
  %v7075 = vadd.f32 %v6840, %v7006
  %v7076 = vadd.f32 %v6841, %v7008
  %v7077 = vadd.f32 %v6842, %v7010
  %v7078 = vadd.f32 %v6843, %v7012
  %v7079 = vadd.f32 %v6844, %v7014
  %v7080 = vadd.f32 %v6845, %v7016
  %v7081 = vld [vmem:[%s217 + $0x20] sm:$0xfc]
  %v7082 = vld [vmem:[%s217 + $0x28] sm:$0xfc]
  %v7083 = vld [vmem:[%s217 + $0x30] sm:$0xfc]
  %v7084 = vld [vmem:[%s217 + $0x38] sm:$0xfc]
  %v7085 = vld [vmem:[%s217 + $0x120] sm:$0x3]
  %v7086 = vld [vmem:[%s217 + $0x128] sm:$0x3]
  %v7087 = vld [vmem:[%s217 + $0x130] sm:$0x3]
  %v7088 = vld [vmem:[%s217 + $0x138] sm:$0x3]
  %s7089 = scalar_lea.vmem %s1, 130
  %v7090 = vld [vmem:[%s7089] ss:$8 sm:$0xf]
  %v7092 = vlaneseq
  %v7093 = vshrl.u32 %v7092, 7
  %v7094 = vsub.s32 0, %v7093
  %v7095 = vrot.slane %v7090, %v7094
  %v7096 = vlaneseq
  %v7097 = vshrl.u32 %v7096, 7
  %v7098 = vsub.s32 1, %v7097
  %v7099 = vrot.slane %v7090, %v7098
  %v7100 = vlaneseq
  %v7101 = vshrl.u32 %v7100, 7
  %v7102 = vsub.s32 2, %v7101
  %v7103 = vrot.slane %v7090, %v7102
  %v7104 = vlaneseq
  %v7105 = vshrl.u32 %v7104, 7
  %v7106 = vsub.s32 3, %v7105
  %v7107 = vrot.slane %v7090, %v7106
  %v7112 = vmul.f32 %v7081, %v7095
  %v7113 = vmul.f32 %v7082, %v7099
  %v7114 = vmul.f32 %v7083, %v7103
  %v7115 = vmul.f32 %v7084, %v7107
  %v7116 = vmul.f32 %v226, %v7095
  %v7117 = vmul.f32 %v227, %v7099
  %v7118 = vmul.f32 %v228, %v7103
  %v7119 = vmul.f32 %v229, %v7107
  %v7120 = vmul.f32 %v230, %v7095
  %v7121 = vmul.f32 %v231, %v7099
  %v7122 = vmul.f32 %v232, %v7103
  %v7123 = vmul.f32 %v233, %v7107
  %v7124 = vmul.f32 %v234, %v7095
  %v7125 = vmul.f32 %v235, %v7099
  %v7126 = vmul.f32 %v236, %v7103
  %v7127 = vmul.f32 %v237, %v7107
  %v7128 = vmul.f32 %v238, %v7095
  %v7129 = vmul.f32 %v239, %v7099
  %v7130 = vmul.f32 %v240, %v7103
  %v7131 = vmul.f32 %v241, %v7107
  %v7132 = vmul.f32 %v242, %v7095
  %v7133 = vmul.f32 %v243, %v7099
  %v7134 = vmul.f32 %v244, %v7103
  %v7135 = vmul.f32 %v245, %v7107
  %v7136 = vmul.f32 %v246, %v7095
  %v7137 = vmul.f32 %v247, %v7099
  %v7138 = vmul.f32 %v248, %v7103
  %v7139 = vmul.f32 %v249, %v7107
  %v7140 = vmul.f32 %v5181, %v7095
  %v7141 = vmul.f32 %v5182, %v7099
  %v7142 = vmul.f32 %v5183, %v7103
  %v7143 = vmul.f32 %v5184, %v7107
  %v7144 = vmul.f32 %v7085, %v7095
  %v7145 = vmul.f32 %v7086, %v7099
  %v7146 = vmul.f32 %v7087, %v7103
  %v7147 = vmul.f32 %v7088, %v7107
  %v7184 = vrot.slane %v7112, 2
  %v7185 = vrot.slane %v7116, 2
  %v7186 = vsel %vm2921, %v7184, %v7185
  %v7187 = vrot.slane %v7113, 2
  %v7188 = vrot.slane %v7117, 2
  %v7189 = vsel %vm2921, %v7187, %v7188
  %v7190 = vrot.slane %v7114, 2
  %v7191 = vrot.slane %v7118, 2
  %v7192 = vsel %vm2921, %v7190, %v7191
  %v7193 = vrot.slane %v7115, 2
  %v7194 = vrot.slane %v7119, 2
  %v7195 = vsel %vm2921, %v7193, %v7194
  %v7196 = vrot.slane %v7120, 2
  %v7197 = vsel %vm2921, %v7185, %v7196
  %v7198 = vrot.slane %v7121, 2
  %v7199 = vsel %vm2921, %v7188, %v7198
  %v7200 = vrot.slane %v7122, 2
  %v7201 = vsel %vm2921, %v7191, %v7200
  %v7202 = vrot.slane %v7123, 2
  %v7203 = vsel %vm2921, %v7194, %v7202
  %v7204 = vrot.slane %v7124, 2
  %v7205 = vsel %vm2921, %v7196, %v7204
  %v7206 = vrot.slane %v7125, 2
  %v7207 = vsel %vm2921, %v7198, %v7206
  %v7208 = vrot.slane %v7126, 2
  %v7209 = vsel %vm2921, %v7200, %v7208
  %v7210 = vrot.slane %v7127, 2
  %v7211 = vsel %vm2921, %v7202, %v7210
  %v7212 = vrot.slane %v7128, 2
  %v7213 = vsel %vm2921, %v7204, %v7212
  %v7214 = vrot.slane %v7129, 2
  %v7215 = vsel %vm2921, %v7206, %v7214
  %v7216 = vrot.slane %v7130, 2
  %v7217 = vsel %vm2921, %v7208, %v7216
  %v7218 = vrot.slane %v7131, 2
  %v7219 = vsel %vm2921, %v7210, %v7218
  %v7220 = vrot.slane %v7132, 2
  %v7221 = vsel %vm2921, %v7212, %v7220
  %v7222 = vrot.slane %v7133, 2
  %v7223 = vsel %vm2921, %v7214, %v7222
  %v7224 = vrot.slane %v7134, 2
  %v7225 = vsel %vm2921, %v7216, %v7224
  %v7226 = vrot.slane %v7135, 2
  %v7227 = vsel %vm2921, %v7218, %v7226
  %v7228 = vrot.slane %v7136, 2
  %v7229 = vsel %vm2921, %v7220, %v7228
  %v7230 = vrot.slane %v7137, 2
  %v7231 = vsel %vm2921, %v7222, %v7230
  %v7232 = vrot.slane %v7138, 2
  %v7233 = vsel %vm2921, %v7224, %v7232
  %v7234 = vrot.slane %v7139, 2
  %v7235 = vsel %vm2921, %v7226, %v7234
  %v7236 = vrot.slane %v7140, 2
  %v7237 = vsel %vm2921, %v7228, %v7236
  %v7238 = vrot.slane %v7141, 2
  %v7239 = vsel %vm2921, %v7230, %v7238
  %v7240 = vrot.slane %v7142, 2
  %v7241 = vsel %vm2921, %v7232, %v7240
  %v7242 = vrot.slane %v7143, 2
  %v7243 = vsel %vm2921, %v7234, %v7242
  %v7244 = vrot.slane %v7144, 2
  %v7245 = vsel %vm2921, %v7236, %v7244
  %v7246 = vrot.slane %v7145, 2
  %v7247 = vsel %vm2921, %v7238, %v7246
  %v7248 = vrot.slane %v7146, 2
  %v7249 = vsel %vm2921, %v7240, %v7248
  %v7250 = vrot.slane %v7147, 2
  %v7251 = vsel %vm2921, %v7242, %v7250
  %v7284 = vadd.f32 %v7049, %v7186
  %v7285 = vadd.f32 %v7050, %v7189
  %v7286 = vadd.f32 %v7051, %v7192
  %v7287 = vadd.f32 %v7052, %v7195
  %v7288 = vadd.f32 %v7053, %v7197
  %v7289 = vadd.f32 %v7054, %v7199
  %v7290 = vadd.f32 %v7055, %v7201
  %v7291 = vadd.f32 %v7056, %v7203
  %v7292 = vadd.f32 %v7057, %v7205
  %v7293 = vadd.f32 %v7058, %v7207
  %v7294 = vadd.f32 %v7059, %v7209
  %v7295 = vadd.f32 %v7060, %v7211
  %v7296 = vadd.f32 %v7061, %v7213
  %v7297 = vadd.f32 %v7062, %v7215
  %v7298 = vadd.f32 %v7063, %v7217
  %v7299 = vadd.f32 %v7064, %v7219
  %v7300 = vadd.f32 %v7065, %v7221
  %v7301 = vadd.f32 %v7066, %v7223
  %v7302 = vadd.f32 %v7067, %v7225
  %v7303 = vadd.f32 %v7068, %v7227
  %v7304 = vadd.f32 %v7069, %v7229
  %v7305 = vadd.f32 %v7070, %v7231
  %v7306 = vadd.f32 %v7071, %v7233
  %v7307 = vadd.f32 %v7072, %v7235
  %v7308 = vadd.f32 %v7073, %v7237
  %v7309 = vadd.f32 %v7074, %v7239
  %v7310 = vadd.f32 %v7075, %v7241
  %v7311 = vadd.f32 %v7076, %v7243
  %v7312 = vadd.f32 %v7077, %v7245
  %v7313 = vadd.f32 %v7078, %v7247
  %v7314 = vadd.f32 %v7079, %v7249
  %v7315 = vadd.f32 %v7080, %v7251
  %v7316 = vld [vmem:[%s337 + $0x20] sm:$0xfc]
  %v7317 = vld [vmem:[%s337 + $0x28] sm:$0xfc]
  %v7318 = vld [vmem:[%s337 + $0x30] sm:$0xfc]
  %v7319 = vld [vmem:[%s337 + $0x38] sm:$0xfc]
  %v7320 = vld [vmem:[%s337 + $0x120] sm:$0x3]
  %v7321 = vld [vmem:[%s337 + $0x128] sm:$0x3]
  %v7322 = vld [vmem:[%s337 + $0x130] sm:$0x3]
  %v7323 = vld [vmem:[%s337 + $0x138] sm:$0x3]
  %s7324 = scalar_lea.vmem %s1, 131
  %v7325 = vld [vmem:[%s7324] ss:$8 sm:$0xf]
  %v7327 = vlaneseq
  %v7328 = vshrl.u32 %v7327, 7
  %v7329 = vsub.s32 0, %v7328
  %v7330 = vrot.slane %v7325, %v7329
  %v7331 = vlaneseq
  %v7332 = vshrl.u32 %v7331, 7
  %v7333 = vsub.s32 1, %v7332
  %v7334 = vrot.slane %v7325, %v7333
  %v7335 = vlaneseq
  %v7336 = vshrl.u32 %v7335, 7
  %v7337 = vsub.s32 2, %v7336
  %v7338 = vrot.slane %v7325, %v7337
  %v7339 = vlaneseq
  %v7340 = vshrl.u32 %v7339, 7
  %v7341 = vsub.s32 3, %v7340
  %v7342 = vrot.slane %v7325, %v7341
  %v7347 = vmul.f32 %v7316, %v7330
  %v7348 = vmul.f32 %v7317, %v7334
  %v7349 = vmul.f32 %v7318, %v7338
  %v7350 = vmul.f32 %v7319, %v7342
  %v7351 = vmul.f32 %v346, %v7330
  %v7352 = vmul.f32 %v347, %v7334
  %v7353 = vmul.f32 %v348, %v7338
  %v7354 = vmul.f32 %v349, %v7342
  %v7355 = vmul.f32 %v350, %v7330
  %v7356 = vmul.f32 %v351, %v7334
  %v7357 = vmul.f32 %v352, %v7338
  %v7358 = vmul.f32 %v353, %v7342
  %v7359 = vmul.f32 %v354, %v7330
  %v7360 = vmul.f32 %v355, %v7334
  %v7361 = vmul.f32 %v356, %v7338
  %v7362 = vmul.f32 %v357, %v7342
  %v7363 = vmul.f32 %v358, %v7330
  %v7364 = vmul.f32 %v359, %v7334
  %v7365 = vmul.f32 %v360, %v7338
  %v7366 = vmul.f32 %v361, %v7342
  %v7367 = vmul.f32 %v362, %v7330
  %v7368 = vmul.f32 %v363, %v7334
  %v7369 = vmul.f32 %v364, %v7338
  %v7370 = vmul.f32 %v365, %v7342
  %v7371 = vmul.f32 %v366, %v7330
  %v7372 = vmul.f32 %v367, %v7334
  %v7373 = vmul.f32 %v368, %v7338
  %v7374 = vmul.f32 %v369, %v7342
  %v7375 = vmul.f32 %v5420, %v7330
  %v7376 = vmul.f32 %v5421, %v7334
  %v7377 = vmul.f32 %v5422, %v7338
  %v7378 = vmul.f32 %v5423, %v7342
  %v7379 = vmul.f32 %v7320, %v7330
  %v7380 = vmul.f32 %v7321, %v7334
  %v7381 = vmul.f32 %v7322, %v7338
  %v7382 = vmul.f32 %v7323, %v7342
  %v7419 = vrot.slane %v7347, 2
  %v7420 = vrot.slane %v7351, 2
  %v7421 = vsel %vm2921, %v7419, %v7420
  %v7422 = vrot.slane %v7348, 2
  %v7423 = vrot.slane %v7352, 2
  %v7424 = vsel %vm2921, %v7422, %v7423
  %v7425 = vrot.slane %v7349, 2
  %v7426 = vrot.slane %v7353, 2
  %v7427 = vsel %vm2921, %v7425, %v7426
  %v7428 = vrot.slane %v7350, 2
  %v7429 = vrot.slane %v7354, 2
  %v7430 = vsel %vm2921, %v7428, %v7429
  %v7431 = vrot.slane %v7355, 2
  %v7432 = vsel %vm2921, %v7420, %v7431
  %v7433 = vrot.slane %v7356, 2
  %v7434 = vsel %vm2921, %v7423, %v7433
  %v7435 = vrot.slane %v7357, 2
  %v7436 = vsel %vm2921, %v7426, %v7435
  %v7437 = vrot.slane %v7358, 2
  %v7438 = vsel %vm2921, %v7429, %v7437
  %v7439 = vrot.slane %v7359, 2
  %v7440 = vsel %vm2921, %v7431, %v7439
  %v7441 = vrot.slane %v7360, 2
  %v7442 = vsel %vm2921, %v7433, %v7441
  %v7443 = vrot.slane %v7361, 2
  %v7444 = vsel %vm2921, %v7435, %v7443
  %v7445 = vrot.slane %v7362, 2
  %v7446 = vsel %vm2921, %v7437, %v7445
  %v7447 = vrot.slane %v7363, 2
  %v7448 = vsel %vm2921, %v7439, %v7447
  %v7449 = vrot.slane %v7364, 2
  %v7450 = vsel %vm2921, %v7441, %v7449
  %v7451 = vrot.slane %v7365, 2
  %v7452 = vsel %vm2921, %v7443, %v7451
  %v7453 = vrot.slane %v7366, 2
  %v7454 = vsel %vm2921, %v7445, %v7453
  %v7455 = vrot.slane %v7367, 2
  %v7456 = vsel %vm2921, %v7447, %v7455
  %v7457 = vrot.slane %v7368, 2
  %v7458 = vsel %vm2921, %v7449, %v7457
  %v7459 = vrot.slane %v7369, 2
  %v7460 = vsel %vm2921, %v7451, %v7459
  %v7461 = vrot.slane %v7370, 2
  %v7462 = vsel %vm2921, %v7453, %v7461
  %v7463 = vrot.slane %v7371, 2
  %v7464 = vsel %vm2921, %v7455, %v7463
  %v7465 = vrot.slane %v7372, 2
  %v7466 = vsel %vm2921, %v7457, %v7465
  %v7467 = vrot.slane %v7373, 2
  %v7468 = vsel %vm2921, %v7459, %v7467
  %v7469 = vrot.slane %v7374, 2
  %v7470 = vsel %vm2921, %v7461, %v7469
  %v7471 = vrot.slane %v7375, 2
  %v7472 = vsel %vm2921, %v7463, %v7471
  %v7473 = vrot.slane %v7376, 2
  %v7474 = vsel %vm2921, %v7465, %v7473
  %v7475 = vrot.slane %v7377, 2
  %v7476 = vsel %vm2921, %v7467, %v7475
  %v7477 = vrot.slane %v7378, 2
  %v7478 = vsel %vm2921, %v7469, %v7477
  %v7479 = vrot.slane %v7379, 2
  %v7480 = vsel %vm2921, %v7471, %v7479
  %v7481 = vrot.slane %v7380, 2
  %v7482 = vsel %vm2921, %v7473, %v7481
  %v7483 = vrot.slane %v7381, 2
  %v7484 = vsel %vm2921, %v7475, %v7483
  %v7485 = vrot.slane %v7382, 2
  %v7486 = vsel %vm2921, %v7477, %v7485
  %v7519 = vadd.f32 %v7284, %v7421
  %v7520 = vadd.f32 %v7285, %v7424
  %v7521 = vadd.f32 %v7286, %v7427
  %v7522 = vadd.f32 %v7287, %v7430
  %v7523 = vadd.f32 %v7288, %v7432
  %v7524 = vadd.f32 %v7289, %v7434
  %v7525 = vadd.f32 %v7290, %v7436
  %v7526 = vadd.f32 %v7291, %v7438
  %v7527 = vadd.f32 %v7292, %v7440
  %v7528 = vadd.f32 %v7293, %v7442
  %v7529 = vadd.f32 %v7294, %v7444
  %v7530 = vadd.f32 %v7295, %v7446
  %v7531 = vadd.f32 %v7296, %v7448
  %v7532 = vadd.f32 %v7297, %v7450
  %v7533 = vadd.f32 %v7298, %v7452
  %v7534 = vadd.f32 %v7299, %v7454
  %v7535 = vadd.f32 %v7300, %v7456
  %v7536 = vadd.f32 %v7301, %v7458
  %v7537 = vadd.f32 %v7302, %v7460
  %v7538 = vadd.f32 %v7303, %v7462
  %v7539 = vadd.f32 %v7304, %v7464
  %v7540 = vadd.f32 %v7305, %v7466
  %v7541 = vadd.f32 %v7306, %v7468
  %v7542 = vadd.f32 %v7307, %v7470
  %v7543 = vadd.f32 %v7308, %v7472
  %v7544 = vadd.f32 %v7309, %v7474
  %v7545 = vadd.f32 %v7310, %v7476
  %v7546 = vadd.f32 %v7311, %v7478
  %v7547 = vadd.f32 %v7312, %v7480
  %v7548 = vadd.f32 %v7313, %v7482
  %v7549 = vadd.f32 %v7314, %v7484
  %v7550 = vadd.f32 %v7315, %v7486
  %v7551 = vld [vmem:[%s457 + $0x20] sm:$0xfc]
  %v7552 = vld [vmem:[%s457 + $0x28] sm:$0xfc]
  %v7553 = vld [vmem:[%s457 + $0x30] sm:$0xfc]
  %v7554 = vld [vmem:[%s457 + $0x38] sm:$0xfc]
  %v7555 = vld [vmem:[%s457 + $0x120] sm:$0x3]
  %v7556 = vld [vmem:[%s457 + $0x128] sm:$0x3]
  %v7557 = vld [vmem:[%s457 + $0x130] sm:$0x3]
  %v7558 = vld [vmem:[%s457 + $0x138] sm:$0x3]
  %s7559 = scalar_lea.vmem %s1, 132
  %v7560 = vld [vmem:[%s7559] ss:$8 sm:$0xf]
  %v7562 = vlaneseq
  %v7563 = vshrl.u32 %v7562, 7
  %v7564 = vsub.s32 0, %v7563
  %v7565 = vrot.slane %v7560, %v7564
  %v7566 = vlaneseq
  %v7567 = vshrl.u32 %v7566, 7
  %v7568 = vsub.s32 1, %v7567
  %v7569 = vrot.slane %v7560, %v7568
  %v7570 = vlaneseq
  %v7571 = vshrl.u32 %v7570, 7
  %v7572 = vsub.s32 2, %v7571
  %v7573 = vrot.slane %v7560, %v7572
  %v7574 = vlaneseq
  %v7575 = vshrl.u32 %v7574, 7
  %v7576 = vsub.s32 3, %v7575
  %v7577 = vrot.slane %v7560, %v7576
  %v7582 = vmul.f32 %v7551, %v7565
  %v7583 = vmul.f32 %v7552, %v7569
  %v7584 = vmul.f32 %v7553, %v7573
  %v7585 = vmul.f32 %v7554, %v7577
  %v7586 = vmul.f32 %v466, %v7565
  %v7587 = vmul.f32 %v467, %v7569
  %v7588 = vmul.f32 %v468, %v7573
  %v7589 = vmul.f32 %v469, %v7577
  %v7590 = vmul.f32 %v470, %v7565
  %v7591 = vmul.f32 %v471, %v7569
  %v7592 = vmul.f32 %v472, %v7573
  %v7593 = vmul.f32 %v473, %v7577
  %v7594 = vmul.f32 %v474, %v7565
  %v7595 = vmul.f32 %v475, %v7569
  %v7596 = vmul.f32 %v476, %v7573
  %v7597 = vmul.f32 %v477, %v7577
  %v7598 = vmul.f32 %v478, %v7565
  %v7599 = vmul.f32 %v479, %v7569
  %v7600 = vmul.f32 %v480, %v7573
  %v7601 = vmul.f32 %v481, %v7577
  %v7602 = vmul.f32 %v482, %v7565
  %v7603 = vmul.f32 %v483, %v7569
  %v7604 = vmul.f32 %v484, %v7573
  %v7605 = vmul.f32 %v485, %v7577
  %v7606 = vmul.f32 %v486, %v7565
  %v7607 = vmul.f32 %v487, %v7569
  %v7608 = vmul.f32 %v488, %v7573
  %v7609 = vmul.f32 %v489, %v7577
  %v7610 = vmul.f32 %v5659, %v7565
  %v7611 = vmul.f32 %v5660, %v7569
  %v7612 = vmul.f32 %v5661, %v7573
  %v7613 = vmul.f32 %v5662, %v7577
  %v7614 = vmul.f32 %v7555, %v7565
  %v7615 = vmul.f32 %v7556, %v7569
  %v7616 = vmul.f32 %v7557, %v7573
  %v7617 = vmul.f32 %v7558, %v7577
  %v7654 = vrot.slane %v7582, 2
  %v7655 = vrot.slane %v7586, 2
  %v7656 = vsel %vm2921, %v7654, %v7655
  %v7657 = vrot.slane %v7583, 2
  %v7658 = vrot.slane %v7587, 2
  %v7659 = vsel %vm2921, %v7657, %v7658
  %v7660 = vrot.slane %v7584, 2
  %v7661 = vrot.slane %v7588, 2
  %v7662 = vsel %vm2921, %v7660, %v7661
  %v7663 = vrot.slane %v7585, 2
  %v7664 = vrot.slane %v7589, 2
  %v7665 = vsel %vm2921, %v7663, %v7664
  %v7666 = vrot.slane %v7590, 2
  %v7667 = vsel %vm2921, %v7655, %v7666
  %v7668 = vrot.slane %v7591, 2
  %v7669 = vsel %vm2921, %v7658, %v7668
  %v7670 = vrot.slane %v7592, 2
  %v7671 = vsel %vm2921, %v7661, %v7670
  %v7672 = vrot.slane %v7593, 2
  %v7673 = vsel %vm2921, %v7664, %v7672
  %v7674 = vrot.slane %v7594, 2
  %v7675 = vsel %vm2921, %v7666, %v7674
  %v7676 = vrot.slane %v7595, 2
  %v7677 = vsel %vm2921, %v7668, %v7676
  %v7678 = vrot.slane %v7596, 2
  %v7679 = vsel %vm2921, %v7670, %v7678
  %v7680 = vrot.slane %v7597, 2
  %v7681 = vsel %vm2921, %v7672, %v7680
  %v7682 = vrot.slane %v7598, 2
  %v7683 = vsel %vm2921, %v7674, %v7682
  %v7684 = vrot.slane %v7599, 2
  %v7685 = vsel %vm2921, %v7676, %v7684
  %v7686 = vrot.slane %v7600, 2
  %v7687 = vsel %vm2921, %v7678, %v7686
  %v7688 = vrot.slane %v7601, 2
  %v7689 = vsel %vm2921, %v7680, %v7688
  %v7690 = vrot.slane %v7602, 2
  %v7691 = vsel %vm2921, %v7682, %v7690
  %v7692 = vrot.slane %v7603, 2
  %v7693 = vsel %vm2921, %v7684, %v7692
  %v7694 = vrot.slane %v7604, 2
  %v7695 = vsel %vm2921, %v7686, %v7694
  %v7696 = vrot.slane %v7605, 2
  %v7697 = vsel %vm2921, %v7688, %v7696
  %v7698 = vrot.slane %v7606, 2
  %v7699 = vsel %vm2921, %v7690, %v7698
  %v7700 = vrot.slane %v7607, 2
  %v7701 = vsel %vm2921, %v7692, %v7700
  %v7702 = vrot.slane %v7608, 2
  %v7703 = vsel %vm2921, %v7694, %v7702
  %v7704 = vrot.slane %v7609, 2
  %v7705 = vsel %vm2921, %v7696, %v7704
  %v7706 = vrot.slane %v7610, 2
  %v7707 = vsel %vm2921, %v7698, %v7706
  %v7708 = vrot.slane %v7611, 2
  %v7709 = vsel %vm2921, %v7700, %v7708
  %v7710 = vrot.slane %v7612, 2
  %v7711 = vsel %vm2921, %v7702, %v7710
  %v7712 = vrot.slane %v7613, 2
  %v7713 = vsel %vm2921, %v7704, %v7712
  %v7714 = vrot.slane %v7614, 2
  %v7715 = vsel %vm2921, %v7706, %v7714
  %v7716 = vrot.slane %v7615, 2
  %v7717 = vsel %vm2921, %v7708, %v7716
  %v7718 = vrot.slane %v7616, 2
  %v7719 = vsel %vm2921, %v7710, %v7718
  %v7720 = vrot.slane %v7617, 2
  %v7721 = vsel %vm2921, %v7712, %v7720
  %v7754 = vadd.f32 %v7519, %v7656
  %v7755 = vadd.f32 %v7520, %v7659
  %v7756 = vadd.f32 %v7521, %v7662
  %v7757 = vadd.f32 %v7522, %v7665
  %v7758 = vadd.f32 %v7523, %v7667
  %v7759 = vadd.f32 %v7524, %v7669
  %v7760 = vadd.f32 %v7525, %v7671
  %v7761 = vadd.f32 %v7526, %v7673
  %v7762 = vadd.f32 %v7527, %v7675
  %v7763 = vadd.f32 %v7528, %v7677
  %v7764 = vadd.f32 %v7529, %v7679
  %v7765 = vadd.f32 %v7530, %v7681
  %v7766 = vadd.f32 %v7531, %v7683
  %v7767 = vadd.f32 %v7532, %v7685
  %v7768 = vadd.f32 %v7533, %v7687
  %v7769 = vadd.f32 %v7534, %v7689
  %v7770 = vadd.f32 %v7535, %v7691
  %v7771 = vadd.f32 %v7536, %v7693
  %v7772 = vadd.f32 %v7537, %v7695
  %v7773 = vadd.f32 %v7538, %v7697
  %v7774 = vadd.f32 %v7539, %v7699
  %v7775 = vadd.f32 %v7540, %v7701
  %v7776 = vadd.f32 %v7541, %v7703
  %v7777 = vadd.f32 %v7542, %v7705
  %v7778 = vadd.f32 %v7543, %v7707
  %v7779 = vadd.f32 %v7544, %v7709
  %v7780 = vadd.f32 %v7545, %v7711
  %v7781 = vadd.f32 %v7546, %v7713
  %v7782 = vadd.f32 %v7547, %v7715
  %v7783 = vadd.f32 %v7548, %v7717
  %v7784 = vadd.f32 %v7549, %v7719
  %v7785 = vadd.f32 %v7550, %v7721
  %v7786 = vld [vmem:[%s577 + $0x20] sm:$0xfc]
  %v7787 = vld [vmem:[%s577 + $0x28] sm:$0xfc]
  %v7788 = vld [vmem:[%s577 + $0x30] sm:$0xfc]
  %v7789 = vld [vmem:[%s577 + $0x38] sm:$0xfc]
  %v7790 = vld [vmem:[%s577 + $0x120] sm:$0x3]
  %v7791 = vld [vmem:[%s577 + $0x128] sm:$0x3]
  %v7792 = vld [vmem:[%s577 + $0x130] sm:$0x3]
  %v7793 = vld [vmem:[%s577 + $0x138] sm:$0x3]
  %s7794 = scalar_lea.vmem %s1, 133
  %v7795 = vld [vmem:[%s7794] ss:$8 sm:$0xf]
  %v7797 = vlaneseq
  %v7798 = vshrl.u32 %v7797, 7
  %v7799 = vsub.s32 0, %v7798
  %v7800 = vrot.slane %v7795, %v7799
  %v7801 = vlaneseq
  %v7802 = vshrl.u32 %v7801, 7
  %v7803 = vsub.s32 1, %v7802
  %v7804 = vrot.slane %v7795, %v7803
  %v7805 = vlaneseq
  %v7806 = vshrl.u32 %v7805, 7
  %v7807 = vsub.s32 2, %v7806
  %v7808 = vrot.slane %v7795, %v7807
  %v7809 = vlaneseq
  %v7810 = vshrl.u32 %v7809, 7
  %v7811 = vsub.s32 3, %v7810
  %v7812 = vrot.slane %v7795, %v7811
  %v7817 = vmul.f32 %v7786, %v7800
  %v7818 = vmul.f32 %v7787, %v7804
  %v7819 = vmul.f32 %v7788, %v7808
  %v7820 = vmul.f32 %v7789, %v7812
  %v7821 = vmul.f32 %v586, %v7800
  %v7822 = vmul.f32 %v587, %v7804
  %v7823 = vmul.f32 %v588, %v7808
  %v7824 = vmul.f32 %v589, %v7812
  %v7825 = vmul.f32 %v590, %v7800
  %v7826 = vmul.f32 %v591, %v7804
  %v7827 = vmul.f32 %v592, %v7808
  %v7828 = vmul.f32 %v593, %v7812
  %v7829 = vmul.f32 %v594, %v7800
  %v7830 = vmul.f32 %v595, %v7804
  %v7831 = vmul.f32 %v596, %v7808
  %v7832 = vmul.f32 %v597, %v7812
  %v7833 = vmul.f32 %v598, %v7800
  %v7834 = vmul.f32 %v599, %v7804
  %v7835 = vmul.f32 %v600, %v7808
  %v7836 = vmul.f32 %v601, %v7812
  %v7837 = vmul.f32 %v602, %v7800
  %v7838 = vmul.f32 %v603, %v7804
  %v7839 = vmul.f32 %v604, %v7808
  %v7840 = vmul.f32 %v605, %v7812
  %v7841 = vmul.f32 %v606, %v7800
  %v7842 = vmul.f32 %v607, %v7804
  %v7843 = vmul.f32 %v608, %v7808
  %v7844 = vmul.f32 %v609, %v7812
  %v7845 = vmul.f32 %v5898, %v7800
  %v7846 = vmul.f32 %v5899, %v7804
  %v7847 = vmul.f32 %v5900, %v7808
  %v7848 = vmul.f32 %v5901, %v7812
  %v7849 = vmul.f32 %v7790, %v7800
  %v7850 = vmul.f32 %v7791, %v7804
  %v7851 = vmul.f32 %v7792, %v7808
  %v7852 = vmul.f32 %v7793, %v7812
  %v7889 = vrot.slane %v7817, 2
  %v7890 = vrot.slane %v7821, 2
  %v7891 = vsel %vm2921, %v7889, %v7890
  %v7892 = vrot.slane %v7818, 2
  %v7893 = vrot.slane %v7822, 2
  %v7894 = vsel %vm2921, %v7892, %v7893
  %v7895 = vrot.slane %v7819, 2
  %v7896 = vrot.slane %v7823, 2
  %v7897 = vsel %vm2921, %v7895, %v7896
  %v7898 = vrot.slane %v7820, 2
  %v7899 = vrot.slane %v7824, 2
  %v7900 = vsel %vm2921, %v7898, %v7899
  %v7901 = vrot.slane %v7825, 2
  %v7902 = vsel %vm2921, %v7890, %v7901
  %v7903 = vrot.slane %v7826, 2
  %v7904 = vsel %vm2921, %v7893, %v7903
  %v7905 = vrot.slane %v7827, 2
  %v7906 = vsel %vm2921, %v7896, %v7905
  %v7907 = vrot.slane %v7828, 2
  %v7908 = vsel %vm2921, %v7899, %v7907
  %v7909 = vrot.slane %v7829, 2
  %v7910 = vsel %vm2921, %v7901, %v7909
  %v7911 = vrot.slane %v7830, 2
  %v7912 = vsel %vm2921, %v7903, %v7911
  %v7913 = vrot.slane %v7831, 2
  %v7914 = vsel %vm2921, %v7905, %v7913
  %v7915 = vrot.slane %v7832, 2
  %v7916 = vsel %vm2921, %v7907, %v7915
  %v7917 = vrot.slane %v7833, 2
  %v7918 = vsel %vm2921, %v7909, %v7917
  %v7919 = vrot.slane %v7834, 2
  %v7920 = vsel %vm2921, %v7911, %v7919
  %v7921 = vrot.slane %v7835, 2
  %v7922 = vsel %vm2921, %v7913, %v7921
  %v7923 = vrot.slane %v7836, 2
  %v7924 = vsel %vm2921, %v7915, %v7923
  %v7925 = vrot.slane %v7837, 2
  %v7926 = vsel %vm2921, %v7917, %v7925
  %v7927 = vrot.slane %v7838, 2
  %v7928 = vsel %vm2921, %v7919, %v7927
  %v7929 = vrot.slane %v7839, 2
  %v7930 = vsel %vm2921, %v7921, %v7929
  %v7931 = vrot.slane %v7840, 2
  %v7932 = vsel %vm2921, %v7923, %v7931
  %v7933 = vrot.slane %v7841, 2
  %v7934 = vsel %vm2921, %v7925, %v7933
  %v7935 = vrot.slane %v7842, 2
  %v7936 = vsel %vm2921, %v7927, %v7935
  %v7937 = vrot.slane %v7843, 2
  %v7938 = vsel %vm2921, %v7929, %v7937
  %v7939 = vrot.slane %v7844, 2
  %v7940 = vsel %vm2921, %v7931, %v7939
  %v7941 = vrot.slane %v7845, 2
  %v7942 = vsel %vm2921, %v7933, %v7941
  %v7943 = vrot.slane %v7846, 2
  %v7944 = vsel %vm2921, %v7935, %v7943
  %v7945 = vrot.slane %v7847, 2
  %v7946 = vsel %vm2921, %v7937, %v7945
  %v7947 = vrot.slane %v7848, 2
  %v7948 = vsel %vm2921, %v7939, %v7947
  %v7949 = vrot.slane %v7849, 2
  %v7950 = vsel %vm2921, %v7941, %v7949
  %v7951 = vrot.slane %v7850, 2
  %v7952 = vsel %vm2921, %v7943, %v7951
  %v7953 = vrot.slane %v7851, 2
  %v7954 = vsel %vm2921, %v7945, %v7953
  %v7955 = vrot.slane %v7852, 2
  %v7956 = vsel %vm2921, %v7947, %v7955
  %v7989 = vadd.f32 %v7754, %v7891
  %v7990 = vadd.f32 %v7755, %v7894
  %v7991 = vadd.f32 %v7756, %v7897
  %v7992 = vadd.f32 %v7757, %v7900
  %v7993 = vadd.f32 %v7758, %v7902
  %v7994 = vadd.f32 %v7759, %v7904
  %v7995 = vadd.f32 %v7760, %v7906
  %v7996 = vadd.f32 %v7761, %v7908
  %v7997 = vadd.f32 %v7762, %v7910
  %v7998 = vadd.f32 %v7763, %v7912
  %v7999 = vadd.f32 %v7764, %v7914
  %v8000 = vadd.f32 %v7765, %v7916
  %v8001 = vadd.f32 %v7766, %v7918
  %v8002 = vadd.f32 %v7767, %v7920
  %v8003 = vadd.f32 %v7768, %v7922
  %v8004 = vadd.f32 %v7769, %v7924
  %v8005 = vadd.f32 %v7770, %v7926
  %v8006 = vadd.f32 %v7771, %v7928
  %v8007 = vadd.f32 %v7772, %v7930
  %v8008 = vadd.f32 %v7773, %v7932
  %v8009 = vadd.f32 %v7774, %v7934
  %v8010 = vadd.f32 %v7775, %v7936
  %v8011 = vadd.f32 %v7776, %v7938
  %v8012 = vadd.f32 %v7777, %v7940
  %v8013 = vadd.f32 %v7778, %v7942
  %v8014 = vadd.f32 %v7779, %v7944
  %v8015 = vadd.f32 %v7780, %v7946
  %v8016 = vadd.f32 %v7781, %v7948
  %v8017 = vadd.f32 %v7782, %v7950
  %v8018 = vadd.f32 %v7783, %v7952
  %v8019 = vadd.f32 %v7784, %v7954
  %v8020 = vadd.f32 %v7785, %v7956
  %v8021 = vld [vmem:[%s697 + $0x20] sm:$0xfc]
  %v8022 = vld [vmem:[%s697 + $0x28] sm:$0xfc]
  %v8023 = vld [vmem:[%s697 + $0x30] sm:$0xfc]
  %v8024 = vld [vmem:[%s697 + $0x38] sm:$0xfc]
  %v8025 = vld [vmem:[%s697 + $0x120] sm:$0x3]
  %v8026 = vld [vmem:[%s697 + $0x128] sm:$0x3]
  %v8027 = vld [vmem:[%s697 + $0x130] sm:$0x3]
  %v8028 = vld [vmem:[%s697 + $0x138] sm:$0x3]
  %s8029 = scalar_lea.vmem %s1, 134
  %v8030 = vld [vmem:[%s8029] ss:$8 sm:$0xf]
  %v8032 = vlaneseq
  %v8033 = vshrl.u32 %v8032, 7
  %v8034 = vsub.s32 0, %v8033
  %v8035 = vrot.slane %v8030, %v8034
  %v8036 = vlaneseq
  %v8037 = vshrl.u32 %v8036, 7
  %v8038 = vsub.s32 1, %v8037
  %v8039 = vrot.slane %v8030, %v8038
  %v8040 = vlaneseq
  %v8041 = vshrl.u32 %v8040, 7
  %v8042 = vsub.s32 2, %v8041
  %v8043 = vrot.slane %v8030, %v8042
  %v8044 = vlaneseq
  %v8045 = vshrl.u32 %v8044, 7
  %v8046 = vsub.s32 3, %v8045
  %v8047 = vrot.slane %v8030, %v8046
  %v8052 = vmul.f32 %v8021, %v8035
  %v8053 = vmul.f32 %v8022, %v8039
  %v8054 = vmul.f32 %v8023, %v8043
  %v8055 = vmul.f32 %v8024, %v8047
  %v8056 = vmul.f32 %v706, %v8035
  %v8057 = vmul.f32 %v707, %v8039
  %v8058 = vmul.f32 %v708, %v8043
  %v8059 = vmul.f32 %v709, %v8047
  %v8060 = vmul.f32 %v710, %v8035
  %v8061 = vmul.f32 %v711, %v8039
  %v8062 = vmul.f32 %v712, %v8043
  %v8063 = vmul.f32 %v713, %v8047
  %v8064 = vmul.f32 %v714, %v8035
  %v8065 = vmul.f32 %v715, %v8039
  %v8066 = vmul.f32 %v716, %v8043
  %v8067 = vmul.f32 %v717, %v8047
  %v8068 = vmul.f32 %v718, %v8035
  %v8069 = vmul.f32 %v719, %v8039
  %v8070 = vmul.f32 %v720, %v8043
  %v8071 = vmul.f32 %v721, %v8047
  %v8072 = vmul.f32 %v722, %v8035
  %v8073 = vmul.f32 %v723, %v8039
  %v8074 = vmul.f32 %v724, %v8043
  %v8075 = vmul.f32 %v725, %v8047
  %v8076 = vmul.f32 %v726, %v8035
  %v8077 = vmul.f32 %v727, %v8039
  %v8078 = vmul.f32 %v728, %v8043
  %v8079 = vmul.f32 %v729, %v8047
  %v8080 = vmul.f32 %v6137, %v8035
  %v8081 = vmul.f32 %v6138, %v8039
  %v8082 = vmul.f32 %v6139, %v8043
  %v8083 = vmul.f32 %v6140, %v8047
  %v8084 = vmul.f32 %v8025, %v8035
  %v8085 = vmul.f32 %v8026, %v8039
  %v8086 = vmul.f32 %v8027, %v8043
  %v8087 = vmul.f32 %v8028, %v8047
  %v8124 = vrot.slane %v8052, 2
  %v8125 = vrot.slane %v8056, 2
  %v8126 = vsel %vm2921, %v8124, %v8125
  %v8127 = vrot.slane %v8053, 2
  %v8128 = vrot.slane %v8057, 2
  %v8129 = vsel %vm2921, %v8127, %v8128
  %v8130 = vrot.slane %v8054, 2
  %v8131 = vrot.slane %v8058, 2
  %v8132 = vsel %vm2921, %v8130, %v8131
  %v8133 = vrot.slane %v8055, 2
  %v8134 = vrot.slane %v8059, 2
  %v8135 = vsel %vm2921, %v8133, %v8134
  %v8136 = vrot.slane %v8060, 2
  %v8137 = vsel %vm2921, %v8125, %v8136
  %v8138 = vrot.slane %v8061, 2
  %v8139 = vsel %vm2921, %v8128, %v8138
  %v8140 = vrot.slane %v8062, 2
  %v8141 = vsel %vm2921, %v8131, %v8140
  %v8142 = vrot.slane %v8063, 2
  %v8143 = vsel %vm2921, %v8134, %v8142
  %v8144 = vrot.slane %v8064, 2
  %v8145 = vsel %vm2921, %v8136, %v8144
  %v8146 = vrot.slane %v8065, 2
  %v8147 = vsel %vm2921, %v8138, %v8146
  %v8148 = vrot.slane %v8066, 2
  %v8149 = vsel %vm2921, %v8140, %v8148
  %v8150 = vrot.slane %v8067, 2
  %v8151 = vsel %vm2921, %v8142, %v8150
  %v8152 = vrot.slane %v8068, 2
  %v8153 = vsel %vm2921, %v8144, %v8152
  %v8154 = vrot.slane %v8069, 2
  %v8155 = vsel %vm2921, %v8146, %v8154
  %v8156 = vrot.slane %v8070, 2
  %v8157 = vsel %vm2921, %v8148, %v8156
  %v8158 = vrot.slane %v8071, 2
  %v8159 = vsel %vm2921, %v8150, %v8158
  %v8160 = vrot.slane %v8072, 2
  %v8161 = vsel %vm2921, %v8152, %v8160
  %v8162 = vrot.slane %v8073, 2
  %v8163 = vsel %vm2921, %v8154, %v8162
  %v8164 = vrot.slane %v8074, 2
  %v8165 = vsel %vm2921, %v8156, %v8164
  %v8166 = vrot.slane %v8075, 2
  %v8167 = vsel %vm2921, %v8158, %v8166
  %v8168 = vrot.slane %v8076, 2
  %v8169 = vsel %vm2921, %v8160, %v8168
  %v8170 = vrot.slane %v8077, 2
  %v8171 = vsel %vm2921, %v8162, %v8170
  %v8172 = vrot.slane %v8078, 2
  %v8173 = vsel %vm2921, %v8164, %v8172
  %v8174 = vrot.slane %v8079, 2
  %v8175 = vsel %vm2921, %v8166, %v8174
  %v8176 = vrot.slane %v8080, 2
  %v8177 = vsel %vm2921, %v8168, %v8176
  %v8178 = vrot.slane %v8081, 2
  %v8179 = vsel %vm2921, %v8170, %v8178
  %v8180 = vrot.slane %v8082, 2
  %v8181 = vsel %vm2921, %v8172, %v8180
  %v8182 = vrot.slane %v8083, 2
  %v8183 = vsel %vm2921, %v8174, %v8182
  %v8184 = vrot.slane %v8084, 2
  %v8185 = vsel %vm2921, %v8176, %v8184
  %v8186 = vrot.slane %v8085, 2
  %v8187 = vsel %vm2921, %v8178, %v8186
  %v8188 = vrot.slane %v8086, 2
  %v8189 = vsel %vm2921, %v8180, %v8188
  %v8190 = vrot.slane %v8087, 2
  %v8191 = vsel %vm2921, %v8182, %v8190
  %v8224 = vadd.f32 %v7989, %v8126
  %v8225 = vadd.f32 %v7990, %v8129
  %v8226 = vadd.f32 %v7991, %v8132
  %v8227 = vadd.f32 %v7992, %v8135
  %v8228 = vadd.f32 %v7993, %v8137
  %v8229 = vadd.f32 %v7994, %v8139
  %v8230 = vadd.f32 %v7995, %v8141
  %v8231 = vadd.f32 %v7996, %v8143
  %v8232 = vadd.f32 %v7997, %v8145
  %v8233 = vadd.f32 %v7998, %v8147
  %v8234 = vadd.f32 %v7999, %v8149
  %v8235 = vadd.f32 %v8000, %v8151
  %v8236 = vadd.f32 %v8001, %v8153
  %v8237 = vadd.f32 %v8002, %v8155
  %v8238 = vadd.f32 %v8003, %v8157
  %v8239 = vadd.f32 %v8004, %v8159
  %v8240 = vadd.f32 %v8005, %v8161
  %v8241 = vadd.f32 %v8006, %v8163
  %v8242 = vadd.f32 %v8007, %v8165
  %v8243 = vadd.f32 %v8008, %v8167
  %v8244 = vadd.f32 %v8009, %v8169
  %v8245 = vadd.f32 %v8010, %v8171
  %v8246 = vadd.f32 %v8011, %v8173
  %v8247 = vadd.f32 %v8012, %v8175
  %v8248 = vadd.f32 %v8013, %v8177
  %v8249 = vadd.f32 %v8014, %v8179
  %v8250 = vadd.f32 %v8015, %v8181
  %v8251 = vadd.f32 %v8016, %v8183
  %v8252 = vadd.f32 %v8017, %v8185
  %v8253 = vadd.f32 %v8018, %v8187
  %v8254 = vadd.f32 %v8019, %v8189
  %v8255 = vadd.f32 %v8020, %v8191
  %v8256 = vld [vmem:[%s817 + $0x20] sm:$0xfc]
  %v8257 = vld [vmem:[%s817 + $0x28] sm:$0xfc]
  %v8258 = vld [vmem:[%s817 + $0x30] sm:$0xfc]
  %v8259 = vld [vmem:[%s817 + $0x38] sm:$0xfc]
  %v8260 = vld [vmem:[%s817 + $0x120] sm:$0x3]
  %v8261 = vld [vmem:[%s817 + $0x128] sm:$0x3]
  %v8262 = vld [vmem:[%s817 + $0x130] sm:$0x3]
  %v8263 = vld [vmem:[%s817 + $0x138] sm:$0x3]
  %s8264 = scalar_lea.vmem %s1, 135
  %v8265 = vld [vmem:[%s8264] ss:$8 sm:$0xf]
  %v8267 = vlaneseq
  %v8268 = vshrl.u32 %v8267, 7
  %v8269 = vsub.s32 0, %v8268
  %v8270 = vrot.slane %v8265, %v8269
  %v8271 = vlaneseq
  %v8272 = vshrl.u32 %v8271, 7
  %v8273 = vsub.s32 1, %v8272
  %v8274 = vrot.slane %v8265, %v8273
  %v8275 = vlaneseq
  %v8276 = vshrl.u32 %v8275, 7
  %v8277 = vsub.s32 2, %v8276
  %v8278 = vrot.slane %v8265, %v8277
  %v8279 = vlaneseq
  %v8280 = vshrl.u32 %v8279, 7
  %v8281 = vsub.s32 3, %v8280
  %v8282 = vrot.slane %v8265, %v8281
  %v8287 = vmul.f32 %v8256, %v8270
  %v8288 = vmul.f32 %v8257, %v8274
  %v8289 = vmul.f32 %v8258, %v8278
  %v8290 = vmul.f32 %v8259, %v8282
  %v8291 = vmul.f32 %v826, %v8270
  %v8292 = vmul.f32 %v827, %v8274
  %v8293 = vmul.f32 %v828, %v8278
  %v8294 = vmul.f32 %v829, %v8282
  %v8295 = vmul.f32 %v830, %v8270
  %v8296 = vmul.f32 %v831, %v8274
  %v8297 = vmul.f32 %v832, %v8278
  %v8298 = vmul.f32 %v833, %v8282
  %v8299 = vmul.f32 %v834, %v8270
  %v8300 = vmul.f32 %v835, %v8274
  %v8301 = vmul.f32 %v836, %v8278
  %v8302 = vmul.f32 %v837, %v8282
  %v8303 = vmul.f32 %v838, %v8270
  %v8304 = vmul.f32 %v839, %v8274
  %v8305 = vmul.f32 %v840, %v8278
  %v8306 = vmul.f32 %v841, %v8282
  %v8307 = vmul.f32 %v842, %v8270
  %v8308 = vmul.f32 %v843, %v8274
  %v8309 = vmul.f32 %v844, %v8278
  %v8310 = vmul.f32 %v845, %v8282
  %v8311 = vmul.f32 %v846, %v8270
  %v8312 = vmul.f32 %v847, %v8274
  %v8313 = vmul.f32 %v848, %v8278
  %v8314 = vmul.f32 %v849, %v8282
  %v8315 = vmul.f32 %v6376, %v8270
  %v8316 = vmul.f32 %v6377, %v8274
  %v8317 = vmul.f32 %v6378, %v8278
  %v8318 = vmul.f32 %v6379, %v8282
  %v8319 = vmul.f32 %v8260, %v8270
  %v8320 = vmul.f32 %v8261, %v8274
  %v8321 = vmul.f32 %v8262, %v8278
  %v8322 = vmul.f32 %v8263, %v8282
  %v8359 = vrot.slane %v8287, 2
  %v8360 = vrot.slane %v8291, 2
  %v8361 = vsel %vm2921, %v8359, %v8360
  %v8362 = vrot.slane %v8288, 2
  %v8363 = vrot.slane %v8292, 2
  %v8364 = vsel %vm2921, %v8362, %v8363
  %v8365 = vrot.slane %v8289, 2
  %v8366 = vrot.slane %v8293, 2
  %v8367 = vsel %vm2921, %v8365, %v8366
  %v8368 = vrot.slane %v8290, 2
  %v8369 = vrot.slane %v8294, 2
  %v8370 = vsel %vm2921, %v8368, %v8369
  %v8371 = vrot.slane %v8295, 2
  %v8372 = vsel %vm2921, %v8360, %v8371
  %v8373 = vrot.slane %v8296, 2
  %v8374 = vsel %vm2921, %v8363, %v8373
  %v8375 = vrot.slane %v8297, 2
  %v8376 = vsel %vm2921, %v8366, %v8375
  %v8377 = vrot.slane %v8298, 2
  %v8378 = vsel %vm2921, %v8369, %v8377
  %v8379 = vrot.slane %v8299, 2
  %v8380 = vsel %vm2921, %v8371, %v8379
  %v8381 = vrot.slane %v8300, 2
  %v8382 = vsel %vm2921, %v8373, %v8381
  %v8383 = vrot.slane %v8301, 2
  %v8384 = vsel %vm2921, %v8375, %v8383
  %v8385 = vrot.slane %v8302, 2
  %v8386 = vsel %vm2921, %v8377, %v8385
  %v8387 = vrot.slane %v8303, 2
  %v8388 = vsel %vm2921, %v8379, %v8387
  %v8389 = vrot.slane %v8304, 2
  %v8390 = vsel %vm2921, %v8381, %v8389
  %v8391 = vrot.slane %v8305, 2
  %v8392 = vsel %vm2921, %v8383, %v8391
  %v8393 = vrot.slane %v8306, 2
  %v8394 = vsel %vm2921, %v8385, %v8393
  %v8395 = vrot.slane %v8307, 2
  %v8396 = vsel %vm2921, %v8387, %v8395
  %v8397 = vrot.slane %v8308, 2
  %v8398 = vsel %vm2921, %v8389, %v8397
  %v8399 = vrot.slane %v8309, 2
  %v8400 = vsel %vm2921, %v8391, %v8399
  %v8401 = vrot.slane %v8310, 2
  %v8402 = vsel %vm2921, %v8393, %v8401
  %v8403 = vrot.slane %v8311, 2
  %v8404 = vsel %vm2921, %v8395, %v8403
  %v8405 = vrot.slane %v8312, 2
  %v8406 = vsel %vm2921, %v8397, %v8405
  %v8407 = vrot.slane %v8313, 2
  %v8408 = vsel %vm2921, %v8399, %v8407
  %v8409 = vrot.slane %v8314, 2
  %v8410 = vsel %vm2921, %v8401, %v8409
  %v8411 = vrot.slane %v8315, 2
  %v8412 = vsel %vm2921, %v8403, %v8411
  %v8413 = vrot.slane %v8316, 2
  %v8414 = vsel %vm2921, %v8405, %v8413
  %v8415 = vrot.slane %v8317, 2
  %v8416 = vsel %vm2921, %v8407, %v8415
  %v8417 = vrot.slane %v8318, 2
  %v8418 = vsel %vm2921, %v8409, %v8417
  %v8419 = vrot.slane %v8319, 2
  %v8420 = vsel %vm2921, %v8411, %v8419
  %v8421 = vrot.slane %v8320, 2
  %v8422 = vsel %vm2921, %v8413, %v8421
  %v8423 = vrot.slane %v8321, 2
  %v8424 = vsel %vm2921, %v8415, %v8423
  %v8425 = vrot.slane %v8322, 2
  %v8426 = vsel %vm2921, %v8417, %v8425
  %v8459 = vadd.f32 %v8224, %v8361
  %v8460 = vadd.f32 %v8225, %v8364
  %v8461 = vadd.f32 %v8226, %v8367
  %v8462 = vadd.f32 %v8227, %v8370
  %v8463 = vadd.f32 %v8228, %v8372
  %v8464 = vadd.f32 %v8229, %v8374
  %v8465 = vadd.f32 %v8230, %v8376
  %v8466 = vadd.f32 %v8231, %v8378
  %v8467 = vadd.f32 %v8232, %v8380
  %v8468 = vadd.f32 %v8233, %v8382
  %v8469 = vadd.f32 %v8234, %v8384
  %v8470 = vadd.f32 %v8235, %v8386
  %v8471 = vadd.f32 %v8236, %v8388
  %v8472 = vadd.f32 %v8237, %v8390
  %v8473 = vadd.f32 %v8238, %v8392
  %v8474 = vadd.f32 %v8239, %v8394
  %v8475 = vadd.f32 %v8240, %v8396
  %v8476 = vadd.f32 %v8241, %v8398
  %v8477 = vadd.f32 %v8242, %v8400
  %v8478 = vadd.f32 %v8243, %v8402
  %v8479 = vadd.f32 %v8244, %v8404
  %v8480 = vadd.f32 %v8245, %v8406
  %v8481 = vadd.f32 %v8246, %v8408
  %v8482 = vadd.f32 %v8247, %v8410
  %v8483 = vadd.f32 %v8248, %v8412
  %v8484 = vadd.f32 %v8249, %v8414
  %v8485 = vadd.f32 %v8250, %v8416
  %v8486 = vadd.f32 %v8251, %v8418
  %v8487 = vadd.f32 %v8252, %v8420
  %v8488 = vadd.f32 %v8253, %v8422
  %v8489 = vadd.f32 %v8254, %v8424
  %v8490 = vadd.f32 %v8255, %v8426
  %v8491 = vld [vmem:[%s0 + $0x20] sm:$0xf8]
  %v8492 = vld [vmem:[%s0 + $0x28] sm:$0xf8]
  %v8493 = vld [vmem:[%s0 + $0x30] sm:$0xf8]
  %v8494 = vld [vmem:[%s0 + $0x38] sm:$0xf8]
  %v8495 = vld [vmem:[%s0 + $0x120] sm:$0x7]
  %v8496 = vld [vmem:[%s0 + $0x128] sm:$0x7]
  %v8497 = vld [vmem:[%s0 + $0x130] sm:$0x7]
  %v8498 = vld [vmem:[%s0 + $0x138] sm:$0x7]
  %s8499 = scalar_lea.vmem %s1, 160
  %v8500 = vld [vmem:[%s8499] ss:$8 sm:$0xf]
  %v8502 = vlaneseq
  %v8503 = vshrl.u32 %v8502, 7
  %v8504 = vsub.s32 0, %v8503
  %v8505 = vrot.slane %v8500, %v8504
  %v8506 = vlaneseq
  %v8507 = vshrl.u32 %v8506, 7
  %v8508 = vsub.s32 1, %v8507
  %v8509 = vrot.slane %v8500, %v8508
  %v8510 = vlaneseq
  %v8511 = vshrl.u32 %v8510, 7
  %v8512 = vsub.s32 2, %v8511
  %v8513 = vrot.slane %v8500, %v8512
  %v8514 = vlaneseq
  %v8515 = vshrl.u32 %v8514, 7
  %v8516 = vsub.s32 3, %v8515
  %v8517 = vrot.slane %v8500, %v8516
  %v8522 = vmul.f32 %v8491, %v8505
  %v8523 = vmul.f32 %v8492, %v8509
  %v8524 = vmul.f32 %v8493, %v8513
  %v8525 = vmul.f32 %v8494, %v8517
  %v8526 = vmul.f32 %v19, %v8505
  %v8527 = vmul.f32 %v20, %v8509
  %v8528 = vmul.f32 %v21, %v8513
  %v8529 = vmul.f32 %v22, %v8517
  %v8530 = vmul.f32 %v23, %v8505
  %v8531 = vmul.f32 %v24, %v8509
  %v8532 = vmul.f32 %v25, %v8513
  %v8533 = vmul.f32 %v26, %v8517
  %v8534 = vmul.f32 %v27, %v8505
  %v8535 = vmul.f32 %v28, %v8509
  %v8536 = vmul.f32 %v29, %v8513
  %v8537 = vmul.f32 %v30, %v8517
  %v8538 = vmul.f32 %v31, %v8505
  %v8539 = vmul.f32 %v32, %v8509
  %v8540 = vmul.f32 %v33, %v8513
  %v8541 = vmul.f32 %v34, %v8517
  %v8542 = vmul.f32 %v35, %v8505
  %v8543 = vmul.f32 %v36, %v8509
  %v8544 = vmul.f32 %v37, %v8513
  %v8545 = vmul.f32 %v38, %v8517
  %v8546 = vmul.f32 %v39, %v8505
  %v8547 = vmul.f32 %v40, %v8509
  %v8548 = vmul.f32 %v41, %v8513
  %v8549 = vmul.f32 %v42, %v8517
  %v8550 = vmul.f32 %v4703, %v8505
  %v8551 = vmul.f32 %v4704, %v8509
  %v8552 = vmul.f32 %v4705, %v8513
  %v8553 = vmul.f32 %v4706, %v8517
  %v8554 = vmul.f32 %v8495, %v8505
  %v8555 = vmul.f32 %v8496, %v8509
  %v8556 = vmul.f32 %v8497, %v8513
  %v8557 = vmul.f32 %v8498, %v8517
  %vm8594 = vcmask 1044480
  %v8595 = vrot.slane %v8522, 3
  %v8596 = vrot.slane %v8526, 3
  %v8597 = vsel %vm8594, %v8595, %v8596
  %v8598 = vrot.slane %v8523, 3
  %v8599 = vrot.slane %v8527, 3
  %v8600 = vsel %vm8594, %v8598, %v8599
  %v8601 = vrot.slane %v8524, 3
  %v8602 = vrot.slane %v8528, 3
  %v8603 = vsel %vm8594, %v8601, %v8602
  %v8604 = vrot.slane %v8525, 3
  %v8605 = vrot.slane %v8529, 3
  %v8606 = vsel %vm8594, %v8604, %v8605
  %v8607 = vrot.slane %v8530, 3
  %v8608 = vsel %vm8594, %v8596, %v8607
  %v8609 = vrot.slane %v8531, 3
  %v8610 = vsel %vm8594, %v8599, %v8609
  %v8611 = vrot.slane %v8532, 3
  %v8612 = vsel %vm8594, %v8602, %v8611
  %v8613 = vrot.slane %v8533, 3
  %v8614 = vsel %vm8594, %v8605, %v8613
  %v8615 = vrot.slane %v8534, 3
  %v8616 = vsel %vm8594, %v8607, %v8615
  %v8617 = vrot.slane %v8535, 3
  %v8618 = vsel %vm8594, %v8609, %v8617
  %v8619 = vrot.slane %v8536, 3
  %v8620 = vsel %vm8594, %v8611, %v8619
  %v8621 = vrot.slane %v8537, 3
  %v8622 = vsel %vm8594, %v8613, %v8621
  %v8623 = vrot.slane %v8538, 3
  %v8624 = vsel %vm8594, %v8615, %v8623
  %v8625 = vrot.slane %v8539, 3
  %v8626 = vsel %vm8594, %v8617, %v8625
  %v8627 = vrot.slane %v8540, 3
  %v8628 = vsel %vm8594, %v8619, %v8627
  %v8629 = vrot.slane %v8541, 3
  %v8630 = vsel %vm8594, %v8621, %v8629
  %v8631 = vrot.slane %v8542, 3
  %v8632 = vsel %vm8594, %v8623, %v8631
  %v8633 = vrot.slane %v8543, 3
  %v8634 = vsel %vm8594, %v8625, %v8633
  %v8635 = vrot.slane %v8544, 3
  %v8636 = vsel %vm8594, %v8627, %v8635
  %v8637 = vrot.slane %v8545, 3
  %v8638 = vsel %vm8594, %v8629, %v8637
  %v8639 = vrot.slane %v8546, 3
  %v8640 = vsel %vm8594, %v8631, %v8639
  %v8641 = vrot.slane %v8547, 3
  %v8642 = vsel %vm8594, %v8633, %v8641
  %v8643 = vrot.slane %v8548, 3
  %v8644 = vsel %vm8594, %v8635, %v8643
  %v8645 = vrot.slane %v8549, 3
  %v8646 = vsel %vm8594, %v8637, %v8645
  %v8647 = vrot.slane %v8550, 3
  %v8648 = vsel %vm8594, %v8639, %v8647
  %v8649 = vrot.slane %v8551, 3
  %v8650 = vsel %vm8594, %v8641, %v8649
  %v8651 = vrot.slane %v8552, 3
  %v8652 = vsel %vm8594, %v8643, %v8651
  %v8653 = vrot.slane %v8553, 3
  %v8654 = vsel %vm8594, %v8645, %v8653
  %v8655 = vrot.slane %v8554, 3
  %v8656 = vsel %vm8594, %v8647, %v8655
  %v8657 = vrot.slane %v8555, 3
  %v8658 = vsel %vm8594, %v8649, %v8657
  %v8659 = vrot.slane %v8556, 3
  %v8660 = vsel %vm8594, %v8651, %v8659
  %v8661 = vrot.slane %v8557, 3
  %v8662 = vsel %vm8594, %v8653, %v8661
  %v8695 = vadd.f32 %v8459, %v8597
  %v8696 = vadd.f32 %v8460, %v8600
  %v8697 = vadd.f32 %v8461, %v8603
  %v8698 = vadd.f32 %v8462, %v8606
  %v8699 = vadd.f32 %v8463, %v8608
  %v8700 = vadd.f32 %v8464, %v8610
  %v8701 = vadd.f32 %v8465, %v8612
  %v8702 = vadd.f32 %v8466, %v8614
  %v8703 = vadd.f32 %v8467, %v8616
  %v8704 = vadd.f32 %v8468, %v8618
  %v8705 = vadd.f32 %v8469, %v8620
  %v8706 = vadd.f32 %v8470, %v8622
  %v8707 = vadd.f32 %v8471, %v8624
  %v8708 = vadd.f32 %v8472, %v8626
  %v8709 = vadd.f32 %v8473, %v8628
  %v8710 = vadd.f32 %v8474, %v8630
  %v8711 = vadd.f32 %v8475, %v8632
  %v8712 = vadd.f32 %v8476, %v8634
  %v8713 = vadd.f32 %v8477, %v8636
  %v8714 = vadd.f32 %v8478, %v8638
  %v8715 = vadd.f32 %v8479, %v8640
  %v8716 = vadd.f32 %v8480, %v8642
  %v8717 = vadd.f32 %v8481, %v8644
  %v8718 = vadd.f32 %v8482, %v8646
  %v8719 = vadd.f32 %v8483, %v8648
  %v8720 = vadd.f32 %v8484, %v8650
  %v8721 = vadd.f32 %v8485, %v8652
  %v8722 = vadd.f32 %v8486, %v8654
  %v8723 = vadd.f32 %v8487, %v8656
  %v8724 = vadd.f32 %v8488, %v8658
  %v8725 = vadd.f32 %v8489, %v8660
  %v8726 = vadd.f32 %v8490, %v8662
  %v8727 = vld [vmem:[%s97 + $0x20] sm:$0xf8]
  %v8728 = vld [vmem:[%s97 + $0x28] sm:$0xf8]
  %v8729 = vld [vmem:[%s97 + $0x30] sm:$0xf8]
  %v8730 = vld [vmem:[%s97 + $0x38] sm:$0xf8]
  %v8731 = vld [vmem:[%s97 + $0x120] sm:$0x7]
  %v8732 = vld [vmem:[%s97 + $0x128] sm:$0x7]
  %v8733 = vld [vmem:[%s97 + $0x130] sm:$0x7]
  %v8734 = vld [vmem:[%s97 + $0x138] sm:$0x7]
  %s8735 = scalar_lea.vmem %s1, 161
  %v8736 = vld [vmem:[%s8735] ss:$8 sm:$0xf]
  %v8738 = vlaneseq
  %v8739 = vshrl.u32 %v8738, 7
  %v8740 = vsub.s32 0, %v8739
  %v8741 = vrot.slane %v8736, %v8740
  %v8742 = vlaneseq
  %v8743 = vshrl.u32 %v8742, 7
  %v8744 = vsub.s32 1, %v8743
  %v8745 = vrot.slane %v8736, %v8744
  %v8746 = vlaneseq
  %v8747 = vshrl.u32 %v8746, 7
  %v8748 = vsub.s32 2, %v8747
  %v8749 = vrot.slane %v8736, %v8748
  %v8750 = vlaneseq
  %v8751 = vshrl.u32 %v8750, 7
  %v8752 = vsub.s32 3, %v8751
  %v8753 = vrot.slane %v8736, %v8752
  %v8758 = vmul.f32 %v8727, %v8741
  %v8759 = vmul.f32 %v8728, %v8745
  %v8760 = vmul.f32 %v8729, %v8749
  %v8761 = vmul.f32 %v8730, %v8753
  %v8762 = vmul.f32 %v106, %v8741
  %v8763 = vmul.f32 %v107, %v8745
  %v8764 = vmul.f32 %v108, %v8749
  %v8765 = vmul.f32 %v109, %v8753
  %v8766 = vmul.f32 %v110, %v8741
  %v8767 = vmul.f32 %v111, %v8745
  %v8768 = vmul.f32 %v112, %v8749
  %v8769 = vmul.f32 %v113, %v8753
  %v8770 = vmul.f32 %v114, %v8741
  %v8771 = vmul.f32 %v115, %v8745
  %v8772 = vmul.f32 %v116, %v8749
  %v8773 = vmul.f32 %v117, %v8753
  %v8774 = vmul.f32 %v118, %v8741
  %v8775 = vmul.f32 %v119, %v8745
  %v8776 = vmul.f32 %v120, %v8749
  %v8777 = vmul.f32 %v121, %v8753
  %v8778 = vmul.f32 %v122, %v8741
  %v8779 = vmul.f32 %v123, %v8745
  %v8780 = vmul.f32 %v124, %v8749
  %v8781 = vmul.f32 %v125, %v8753
  %v8782 = vmul.f32 %v126, %v8741
  %v8783 = vmul.f32 %v127, %v8745
  %v8784 = vmul.f32 %v128, %v8749
  %v8785 = vmul.f32 %v129, %v8753
  %v8786 = vmul.f32 %v4942, %v8741
  %v8787 = vmul.f32 %v4943, %v8745
  %v8788 = vmul.f32 %v4944, %v8749
  %v8789 = vmul.f32 %v4945, %v8753
  %v8790 = vmul.f32 %v8731, %v8741
  %v8791 = vmul.f32 %v8732, %v8745
  %v8792 = vmul.f32 %v8733, %v8749
  %v8793 = vmul.f32 %v8734, %v8753
  %v8830 = vrot.slane %v8758, 3
  %v8831 = vrot.slane %v8762, 3
  %v8832 = vsel %vm8594, %v8830, %v8831
  %v8833 = vrot.slane %v8759, 3
  %v8834 = vrot.slane %v8763, 3
  %v8835 = vsel %vm8594, %v8833, %v8834
  %v8836 = vrot.slane %v8760, 3
  %v8837 = vrot.slane %v8764, 3
  %v8838 = vsel %vm8594, %v8836, %v8837
  %v8839 = vrot.slane %v8761, 3
  %v8840 = vrot.slane %v8765, 3
  %v8841 = vsel %vm8594, %v8839, %v8840
  %v8842 = vrot.slane %v8766, 3
  %v8843 = vsel %vm8594, %v8831, %v8842
  %v8844 = vrot.slane %v8767, 3
  %v8845 = vsel %vm8594, %v8834, %v8844
  %v8846 = vrot.slane %v8768, 3
  %v8847 = vsel %vm8594, %v8837, %v8846
  %v8848 = vrot.slane %v8769, 3
  %v8849 = vsel %vm8594, %v8840, %v8848
  %v8850 = vrot.slane %v8770, 3
  %v8851 = vsel %vm8594, %v8842, %v8850
  %v8852 = vrot.slane %v8771, 3
  %v8853 = vsel %vm8594, %v8844, %v8852
  %v8854 = vrot.slane %v8772, 3
  %v8855 = vsel %vm8594, %v8846, %v8854
  %v8856 = vrot.slane %v8773, 3
  %v8857 = vsel %vm8594, %v8848, %v8856
  %v8858 = vrot.slane %v8774, 3
  %v8859 = vsel %vm8594, %v8850, %v8858
  %v8860 = vrot.slane %v8775, 3
  %v8861 = vsel %vm8594, %v8852, %v8860
  %v8862 = vrot.slane %v8776, 3
  %v8863 = vsel %vm8594, %v8854, %v8862
  %v8864 = vrot.slane %v8777, 3
  %v8865 = vsel %vm8594, %v8856, %v8864
  %v8866 = vrot.slane %v8778, 3
  %v8867 = vsel %vm8594, %v8858, %v8866
  %v8868 = vrot.slane %v8779, 3
  %v8869 = vsel %vm8594, %v8860, %v8868
  %v8870 = vrot.slane %v8780, 3
  %v8871 = vsel %vm8594, %v8862, %v8870
  %v8872 = vrot.slane %v8781, 3
  %v8873 = vsel %vm8594, %v8864, %v8872
  %v8874 = vrot.slane %v8782, 3
  %v8875 = vsel %vm8594, %v8866, %v8874
  %v8876 = vrot.slane %v8783, 3
  %v8877 = vsel %vm8594, %v8868, %v8876
  %v8878 = vrot.slane %v8784, 3
  %v8879 = vsel %vm8594, %v8870, %v8878
  %v8880 = vrot.slane %v8785, 3
  %v8881 = vsel %vm8594, %v8872, %v8880
  %v8882 = vrot.slane %v8786, 3
  %v8883 = vsel %vm8594, %v8874, %v8882
  %v8884 = vrot.slane %v8787, 3
  %v8885 = vsel %vm8594, %v8876, %v8884
  %v8886 = vrot.slane %v8788, 3
  %v8887 = vsel %vm8594, %v8878, %v8886
  %v8888 = vrot.slane %v8789, 3
  %v8889 = vsel %vm8594, %v8880, %v8888
  %v8890 = vrot.slane %v8790, 3
  %v8891 = vsel %vm8594, %v8882, %v8890
  %v8892 = vrot.slane %v8791, 3
  %v8893 = vsel %vm8594, %v8884, %v8892
  %v8894 = vrot.slane %v8792, 3
  %v8895 = vsel %vm8594, %v8886, %v8894
  %v8896 = vrot.slane %v8793, 3
  %v8897 = vsel %vm8594, %v8888, %v8896
  %v8930 = vadd.f32 %v8695, %v8832
  %v8931 = vadd.f32 %v8696, %v8835
  %v8932 = vadd.f32 %v8697, %v8838
  %v8933 = vadd.f32 %v8698, %v8841
  %v8934 = vadd.f32 %v8699, %v8843
  %v8935 = vadd.f32 %v8700, %v8845
  %v8936 = vadd.f32 %v8701, %v8847
  %v8937 = vadd.f32 %v8702, %v8849
  %v8938 = vadd.f32 %v8703, %v8851
  %v8939 = vadd.f32 %v8704, %v8853
  %v8940 = vadd.f32 %v8705, %v8855
  %v8941 = vadd.f32 %v8706, %v8857
  %v8942 = vadd.f32 %v8707, %v8859
  %v8943 = vadd.f32 %v8708, %v8861
  %v8944 = vadd.f32 %v8709, %v8863
  %v8945 = vadd.f32 %v8710, %v8865
  %v8946 = vadd.f32 %v8711, %v8867
  %v8947 = vadd.f32 %v8712, %v8869
  %v8948 = vadd.f32 %v8713, %v8871
  %v8949 = vadd.f32 %v8714, %v8873
  %v8950 = vadd.f32 %v8715, %v8875
  %v8951 = vadd.f32 %v8716, %v8877
  %v8952 = vadd.f32 %v8717, %v8879
  %v8953 = vadd.f32 %v8718, %v8881
  %v8954 = vadd.f32 %v8719, %v8883
  %v8955 = vadd.f32 %v8720, %v8885
  %v8956 = vadd.f32 %v8721, %v8887
  %v8957 = vadd.f32 %v8722, %v8889
  %v8958 = vadd.f32 %v8723, %v8891
  %v8959 = vadd.f32 %v8724, %v8893
  %v8960 = vadd.f32 %v8725, %v8895
  %v8961 = vadd.f32 %v8726, %v8897
  %v8962 = vld [vmem:[%s217 + $0x20] sm:$0xf8]
  %v8963 = vld [vmem:[%s217 + $0x28] sm:$0xf8]
  %v8964 = vld [vmem:[%s217 + $0x30] sm:$0xf8]
  %v8965 = vld [vmem:[%s217 + $0x38] sm:$0xf8]
  %v8966 = vld [vmem:[%s217 + $0x120] sm:$0x7]
  %v8967 = vld [vmem:[%s217 + $0x128] sm:$0x7]
  %v8968 = vld [vmem:[%s217 + $0x130] sm:$0x7]
  %v8969 = vld [vmem:[%s217 + $0x138] sm:$0x7]
  %s8970 = scalar_lea.vmem %s1, 162
  %v8971 = vld [vmem:[%s8970] ss:$8 sm:$0xf]
  %v8973 = vlaneseq
  %v8974 = vshrl.u32 %v8973, 7
  %v8975 = vsub.s32 0, %v8974
  %v8976 = vrot.slane %v8971, %v8975
  %v8977 = vlaneseq
  %v8978 = vshrl.u32 %v8977, 7
  %v8979 = vsub.s32 1, %v8978
  %v8980 = vrot.slane %v8971, %v8979
  %v8981 = vlaneseq
  %v8982 = vshrl.u32 %v8981, 7
  %v8983 = vsub.s32 2, %v8982
  %v8984 = vrot.slane %v8971, %v8983
  %v8985 = vlaneseq
  %v8986 = vshrl.u32 %v8985, 7
  %v8987 = vsub.s32 3, %v8986
  %v8988 = vrot.slane %v8971, %v8987
  %v8993 = vmul.f32 %v8962, %v8976
  %v8994 = vmul.f32 %v8963, %v8980
  %v8995 = vmul.f32 %v8964, %v8984
  %v8996 = vmul.f32 %v8965, %v8988
  %v8997 = vmul.f32 %v226, %v8976
  %v8998 = vmul.f32 %v227, %v8980
  %v8999 = vmul.f32 %v228, %v8984
  %v9000 = vmul.f32 %v229, %v8988
  %v9001 = vmul.f32 %v230, %v8976
  %v9002 = vmul.f32 %v231, %v8980
  %v9003 = vmul.f32 %v232, %v8984
  %v9004 = vmul.f32 %v233, %v8988
  %v9005 = vmul.f32 %v234, %v8976
  %v9006 = vmul.f32 %v235, %v8980
  %v9007 = vmul.f32 %v236, %v8984
  %v9008 = vmul.f32 %v237, %v8988
  %v9009 = vmul.f32 %v238, %v8976
  %v9010 = vmul.f32 %v239, %v8980
  %v9011 = vmul.f32 %v240, %v8984
  %v9012 = vmul.f32 %v241, %v8988
  %v9013 = vmul.f32 %v242, %v8976
  %v9014 = vmul.f32 %v243, %v8980
  %v9015 = vmul.f32 %v244, %v8984
  %v9016 = vmul.f32 %v245, %v8988
  %v9017 = vmul.f32 %v246, %v8976
  %v9018 = vmul.f32 %v247, %v8980
  %v9019 = vmul.f32 %v248, %v8984
  %v9020 = vmul.f32 %v249, %v8988
  %v9021 = vmul.f32 %v5181, %v8976
  %v9022 = vmul.f32 %v5182, %v8980
  %v9023 = vmul.f32 %v5183, %v8984
  %v9024 = vmul.f32 %v5184, %v8988
  %v9025 = vmul.f32 %v8966, %v8976
  %v9026 = vmul.f32 %v8967, %v8980
  %v9027 = vmul.f32 %v8968, %v8984
  %v9028 = vmul.f32 %v8969, %v8988
  %v9065 = vrot.slane %v8993, 3
  %v9066 = vrot.slane %v8997, 3
  %v9067 = vsel %vm8594, %v9065, %v9066
  %v9068 = vrot.slane %v8994, 3
  %v9069 = vrot.slane %v8998, 3
  %v9070 = vsel %vm8594, %v9068, %v9069
  %v9071 = vrot.slane %v8995, 3
  %v9072 = vrot.slane %v8999, 3
  %v9073 = vsel %vm8594, %v9071, %v9072
  %v9074 = vrot.slane %v8996, 3
  %v9075 = vrot.slane %v9000, 3
  %v9076 = vsel %vm8594, %v9074, %v9075
  %v9077 = vrot.slane %v9001, 3
  %v9078 = vsel %vm8594, %v9066, %v9077
  %v9079 = vrot.slane %v9002, 3
  %v9080 = vsel %vm8594, %v9069, %v9079
  %v9081 = vrot.slane %v9003, 3
  %v9082 = vsel %vm8594, %v9072, %v9081
  %v9083 = vrot.slane %v9004, 3
  %v9084 = vsel %vm8594, %v9075, %v9083
  %v9085 = vrot.slane %v9005, 3
  %v9086 = vsel %vm8594, %v9077, %v9085
  %v9087 = vrot.slane %v9006, 3
  %v9088 = vsel %vm8594, %v9079, %v9087
  %v9089 = vrot.slane %v9007, 3
  %v9090 = vsel %vm8594, %v9081, %v9089
  %v9091 = vrot.slane %v9008, 3
  %v9092 = vsel %vm8594, %v9083, %v9091
  %v9093 = vrot.slane %v9009, 3
  %v9094 = vsel %vm8594, %v9085, %v9093
  %v9095 = vrot.slane %v9010, 3
  %v9096 = vsel %vm8594, %v9087, %v9095
  %v9097 = vrot.slane %v9011, 3
  %v9098 = vsel %vm8594, %v9089, %v9097
  %v9099 = vrot.slane %v9012, 3
  %v9100 = vsel %vm8594, %v9091, %v9099
  %v9101 = vrot.slane %v9013, 3
  %v9102 = vsel %vm8594, %v9093, %v9101
  %v9103 = vrot.slane %v9014, 3
  %v9104 = vsel %vm8594, %v9095, %v9103
  %v9105 = vrot.slane %v9015, 3
  %v9106 = vsel %vm8594, %v9097, %v9105
  %v9107 = vrot.slane %v9016, 3
  %v9108 = vsel %vm8594, %v9099, %v9107
  %v9109 = vrot.slane %v9017, 3
  %v9110 = vsel %vm8594, %v9101, %v9109
  %v9111 = vrot.slane %v9018, 3
  %v9112 = vsel %vm8594, %v9103, %v9111
  %v9113 = vrot.slane %v9019, 3
  %v9114 = vsel %vm8594, %v9105, %v9113
  %v9115 = vrot.slane %v9020, 3
  %v9116 = vsel %vm8594, %v9107, %v9115
  %v9117 = vrot.slane %v9021, 3
  %v9118 = vsel %vm8594, %v9109, %v9117
  %v9119 = vrot.slane %v9022, 3
  %v9120 = vsel %vm8594, %v9111, %v9119
  %v9121 = vrot.slane %v9023, 3
  %v9122 = vsel %vm8594, %v9113, %v9121
  %v9123 = vrot.slane %v9024, 3
  %v9124 = vsel %vm8594, %v9115, %v9123
  %v9125 = vrot.slane %v9025, 3
  %v9126 = vsel %vm8594, %v9117, %v9125
  %v9127 = vrot.slane %v9026, 3
  %v9128 = vsel %vm8594, %v9119, %v9127
  %v9129 = vrot.slane %v9027, 3
  %v9130 = vsel %vm8594, %v9121, %v9129
  %v9131 = vrot.slane %v9028, 3
  %v9132 = vsel %vm8594, %v9123, %v9131
  %v9165 = vadd.f32 %v8930, %v9067
  %v9166 = vadd.f32 %v8931, %v9070
  %v9167 = vadd.f32 %v8932, %v9073
  %v9168 = vadd.f32 %v8933, %v9076
  %v9169 = vadd.f32 %v8934, %v9078
  %v9170 = vadd.f32 %v8935, %v9080
  %v9171 = vadd.f32 %v8936, %v9082
  %v9172 = vadd.f32 %v8937, %v9084
  %v9173 = vadd.f32 %v8938, %v9086
  %v9174 = vadd.f32 %v8939, %v9088
  %v9175 = vadd.f32 %v8940, %v9090
  %v9176 = vadd.f32 %v8941, %v9092
  %v9177 = vadd.f32 %v8942, %v9094
  %v9178 = vadd.f32 %v8943, %v9096
  %v9179 = vadd.f32 %v8944, %v9098
  %v9180 = vadd.f32 %v8945, %v9100
  %v9181 = vadd.f32 %v8946, %v9102
  %v9182 = vadd.f32 %v8947, %v9104
  %v9183 = vadd.f32 %v8948, %v9106
  %v9184 = vadd.f32 %v8949, %v9108
  %v9185 = vadd.f32 %v8950, %v9110
  %v9186 = vadd.f32 %v8951, %v9112
  %v9187 = vadd.f32 %v8952, %v9114
  %v9188 = vadd.f32 %v8953, %v9116
  %v9189 = vadd.f32 %v8954, %v9118
  %v9190 = vadd.f32 %v8955, %v9120
  %v9191 = vadd.f32 %v8956, %v9122
  %v9192 = vadd.f32 %v8957, %v9124
  %v9193 = vadd.f32 %v8958, %v9126
  %v9194 = vadd.f32 %v8959, %v9128
  %v9195 = vadd.f32 %v8960, %v9130
  %v9196 = vadd.f32 %v8961, %v9132
  %v9197 = vld [vmem:[%s337 + $0x20] sm:$0xf8]
  %v9198 = vld [vmem:[%s337 + $0x28] sm:$0xf8]
  %v9199 = vld [vmem:[%s337 + $0x30] sm:$0xf8]
  %v9200 = vld [vmem:[%s337 + $0x38] sm:$0xf8]
  %v9201 = vld [vmem:[%s337 + $0x120] sm:$0x7]
  %v9202 = vld [vmem:[%s337 + $0x128] sm:$0x7]
  %v9203 = vld [vmem:[%s337 + $0x130] sm:$0x7]
  %v9204 = vld [vmem:[%s337 + $0x138] sm:$0x7]
  %s9205 = scalar_lea.vmem %s1, 163
  %v9206 = vld [vmem:[%s9205] ss:$8 sm:$0xf]
  %v9208 = vlaneseq
  %v9209 = vshrl.u32 %v9208, 7
  %v9210 = vsub.s32 0, %v9209
  %v9211 = vrot.slane %v9206, %v9210
  %v9212 = vlaneseq
  %v9213 = vshrl.u32 %v9212, 7
  %v9214 = vsub.s32 1, %v9213
  %v9215 = vrot.slane %v9206, %v9214
  %v9216 = vlaneseq
  %v9217 = vshrl.u32 %v9216, 7
  %v9218 = vsub.s32 2, %v9217
  %v9219 = vrot.slane %v9206, %v9218
  %v9220 = vlaneseq
  %v9221 = vshrl.u32 %v9220, 7
  %v9222 = vsub.s32 3, %v9221
  %v9223 = vrot.slane %v9206, %v9222
  %v9228 = vmul.f32 %v9197, %v9211
  %v9229 = vmul.f32 %v9198, %v9215
  %v9230 = vmul.f32 %v9199, %v9219
  %v9231 = vmul.f32 %v9200, %v9223
  %v9232 = vmul.f32 %v346, %v9211
  %v9233 = vmul.f32 %v347, %v9215
  %v9234 = vmul.f32 %v348, %v9219
  %v9235 = vmul.f32 %v349, %v9223
  %v9236 = vmul.f32 %v350, %v9211
  %v9237 = vmul.f32 %v351, %v9215
  %v9238 = vmul.f32 %v352, %v9219
  %v9239 = vmul.f32 %v353, %v9223
  %v9240 = vmul.f32 %v354, %v9211
  %v9241 = vmul.f32 %v355, %v9215
  %v9242 = vmul.f32 %v356, %v9219
  %v9243 = vmul.f32 %v357, %v9223
  %v9244 = vmul.f32 %v358, %v9211
  %v9245 = vmul.f32 %v359, %v9215
  %v9246 = vmul.f32 %v360, %v9219
  %v9247 = vmul.f32 %v361, %v9223
  %v9248 = vmul.f32 %v362, %v9211
  %v9249 = vmul.f32 %v363, %v9215
  %v9250 = vmul.f32 %v364, %v9219
  %v9251 = vmul.f32 %v365, %v9223
  %v9252 = vmul.f32 %v366, %v9211
  %v9253 = vmul.f32 %v367, %v9215
  %v9254 = vmul.f32 %v368, %v9219
  %v9255 = vmul.f32 %v369, %v9223
  %v9256 = vmul.f32 %v5420, %v9211
  %v9257 = vmul.f32 %v5421, %v9215
  %v9258 = vmul.f32 %v5422, %v9219
  %v9259 = vmul.f32 %v5423, %v9223
  %v9260 = vmul.f32 %v9201, %v9211
  %v9261 = vmul.f32 %v9202, %v9215
  %v9262 = vmul.f32 %v9203, %v9219
  %v9263 = vmul.f32 %v9204, %v9223
  %v9300 = vrot.slane %v9228, 3
  %v9301 = vrot.slane %v9232, 3
  %v9302 = vsel %vm8594, %v9300, %v9301
  %v9303 = vrot.slane %v9229, 3
  %v9304 = vrot.slane %v9233, 3
  %v9305 = vsel %vm8594, %v9303, %v9304
  %v9306 = vrot.slane %v9230, 3
  %v9307 = vrot.slane %v9234, 3
  %v9308 = vsel %vm8594, %v9306, %v9307
  %v9309 = vrot.slane %v9231, 3
  %v9310 = vrot.slane %v9235, 3
  %v9311 = vsel %vm8594, %v9309, %v9310
  %v9312 = vrot.slane %v9236, 3
  %v9313 = vsel %vm8594, %v9301, %v9312
  %v9314 = vrot.slane %v9237, 3
  %v9315 = vsel %vm8594, %v9304, %v9314
  %v9316 = vrot.slane %v9238, 3
  %v9317 = vsel %vm8594, %v9307, %v9316
  %v9318 = vrot.slane %v9239, 3
  %v9319 = vsel %vm8594, %v9310, %v9318
  %v9320 = vrot.slane %v9240, 3
  %v9321 = vsel %vm8594, %v9312, %v9320
  %v9322 = vrot.slane %v9241, 3
  %v9323 = vsel %vm8594, %v9314, %v9322
  %v9324 = vrot.slane %v9242, 3
  %v9325 = vsel %vm8594, %v9316, %v9324
  %v9326 = vrot.slane %v9243, 3
  %v9327 = vsel %vm8594, %v9318, %v9326
  %v9328 = vrot.slane %v9244, 3
  %v9329 = vsel %vm8594, %v9320, %v9328
  %v9330 = vrot.slane %v9245, 3
  %v9331 = vsel %vm8594, %v9322, %v9330
  %v9332 = vrot.slane %v9246, 3
  %v9333 = vsel %vm8594, %v9324, %v9332
  %v9334 = vrot.slane %v9247, 3
  %v9335 = vsel %vm8594, %v9326, %v9334
  %v9336 = vrot.slane %v9248, 3
  %v9337 = vsel %vm8594, %v9328, %v9336
  %v9338 = vrot.slane %v9249, 3
  %v9339 = vsel %vm8594, %v9330, %v9338
  %v9340 = vrot.slane %v9250, 3
  %v9341 = vsel %vm8594, %v9332, %v9340
  %v9342 = vrot.slane %v9251, 3
  %v9343 = vsel %vm8594, %v9334, %v9342
  %v9344 = vrot.slane %v9252, 3
  %v9345 = vsel %vm8594, %v9336, %v9344
  %v9346 = vrot.slane %v9253, 3
  %v9347 = vsel %vm8594, %v9338, %v9346
  %v9348 = vrot.slane %v9254, 3
  %v9349 = vsel %vm8594, %v9340, %v9348
  %v9350 = vrot.slane %v9255, 3
  %v9351 = vsel %vm8594, %v9342, %v9350
  %v9352 = vrot.slane %v9256, 3
  %v9353 = vsel %vm8594, %v9344, %v9352
  %v9354 = vrot.slane %v9257, 3
  %v9355 = vsel %vm8594, %v9346, %v9354
  %v9356 = vrot.slane %v9258, 3
  %v9357 = vsel %vm8594, %v9348, %v9356
  %v9358 = vrot.slane %v9259, 3
  %v9359 = vsel %vm8594, %v9350, %v9358
  %v9360 = vrot.slane %v9260, 3
  %v9361 = vsel %vm8594, %v9352, %v9360
  %v9362 = vrot.slane %v9261, 3
  %v9363 = vsel %vm8594, %v9354, %v9362
  %v9364 = vrot.slane %v9262, 3
  %v9365 = vsel %vm8594, %v9356, %v9364
  %v9366 = vrot.slane %v9263, 3
  %v9367 = vsel %vm8594, %v9358, %v9366
  %v9400 = vadd.f32 %v9165, %v9302
  %v9401 = vadd.f32 %v9166, %v9305
  %v9402 = vadd.f32 %v9167, %v9308
  %v9403 = vadd.f32 %v9168, %v9311
  %v9404 = vadd.f32 %v9169, %v9313
  %v9405 = vadd.f32 %v9170, %v9315
  %v9406 = vadd.f32 %v9171, %v9317
  %v9407 = vadd.f32 %v9172, %v9319
  %v9408 = vadd.f32 %v9173, %v9321
  %v9409 = vadd.f32 %v9174, %v9323
  %v9410 = vadd.f32 %v9175, %v9325
  %v9411 = vadd.f32 %v9176, %v9327
  %v9412 = vadd.f32 %v9177, %v9329
  %v9413 = vadd.f32 %v9178, %v9331
  %v9414 = vadd.f32 %v9179, %v9333
  %v9415 = vadd.f32 %v9180, %v9335
  %v9416 = vadd.f32 %v9181, %v9337
  %v9417 = vadd.f32 %v9182, %v9339
  %v9418 = vadd.f32 %v9183, %v9341
  %v9419 = vadd.f32 %v9184, %v9343
  %v9420 = vadd.f32 %v9185, %v9345
  %v9421 = vadd.f32 %v9186, %v9347
  %v9422 = vadd.f32 %v9187, %v9349
  %v9423 = vadd.f32 %v9188, %v9351
  %v9424 = vadd.f32 %v9189, %v9353
  %v9425 = vadd.f32 %v9190, %v9355
  %v9426 = vadd.f32 %v9191, %v9357
  %v9427 = vadd.f32 %v9192, %v9359
  %v9428 = vadd.f32 %v9193, %v9361
  %v9429 = vadd.f32 %v9194, %v9363
  %v9430 = vadd.f32 %v9195, %v9365
  %v9431 = vadd.f32 %v9196, %v9367
  %v9432 = vld [vmem:[%s457 + $0x20] sm:$0xf8]
  %v9433 = vld [vmem:[%s457 + $0x28] sm:$0xf8]
  %v9434 = vld [vmem:[%s457 + $0x30] sm:$0xf8]
  %v9435 = vld [vmem:[%s457 + $0x38] sm:$0xf8]
  %v9436 = vld [vmem:[%s457 + $0x120] sm:$0x7]
  %v9437 = vld [vmem:[%s457 + $0x128] sm:$0x7]
  %v9438 = vld [vmem:[%s457 + $0x130] sm:$0x7]
  %v9439 = vld [vmem:[%s457 + $0x138] sm:$0x7]
  %s9440 = scalar_lea.vmem %s1, 164
  %v9441 = vld [vmem:[%s9440] ss:$8 sm:$0xf]
  %v9443 = vlaneseq
  %v9444 = vshrl.u32 %v9443, 7
  %v9445 = vsub.s32 0, %v9444
  %v9446 = vrot.slane %v9441, %v9445
  %v9447 = vlaneseq
  %v9448 = vshrl.u32 %v9447, 7
  %v9449 = vsub.s32 1, %v9448
  %v9450 = vrot.slane %v9441, %v9449
  %v9451 = vlaneseq
  %v9452 = vshrl.u32 %v9451, 7
  %v9453 = vsub.s32 2, %v9452
  %v9454 = vrot.slane %v9441, %v9453
  %v9455 = vlaneseq
  %v9456 = vshrl.u32 %v9455, 7
  %v9457 = vsub.s32 3, %v9456
  %v9458 = vrot.slane %v9441, %v9457
  %v9463 = vmul.f32 %v9432, %v9446
  %v9464 = vmul.f32 %v9433, %v9450
  %v9465 = vmul.f32 %v9434, %v9454
  %v9466 = vmul.f32 %v9435, %v9458
  %v9467 = vmul.f32 %v466, %v9446
  %v9468 = vmul.f32 %v467, %v9450
  %v9469 = vmul.f32 %v468, %v9454
  %v9470 = vmul.f32 %v469, %v9458
  %v9471 = vmul.f32 %v470, %v9446
  %v9472 = vmul.f32 %v471, %v9450
  %v9473 = vmul.f32 %v472, %v9454
  %v9474 = vmul.f32 %v473, %v9458
  %v9475 = vmul.f32 %v474, %v9446
  %v9476 = vmul.f32 %v475, %v9450
  %v9477 = vmul.f32 %v476, %v9454
  %v9478 = vmul.f32 %v477, %v9458
  %v9479 = vmul.f32 %v478, %v9446
  %v9480 = vmul.f32 %v479, %v9450
  %v9481 = vmul.f32 %v480, %v9454
  %v9482 = vmul.f32 %v481, %v9458
  %v9483 = vmul.f32 %v482, %v9446
  %v9484 = vmul.f32 %v483, %v9450
  %v9485 = vmul.f32 %v484, %v9454
  %v9486 = vmul.f32 %v485, %v9458
  %v9487 = vmul.f32 %v486, %v9446
  %v9488 = vmul.f32 %v487, %v9450
  %v9489 = vmul.f32 %v488, %v9454
  %v9490 = vmul.f32 %v489, %v9458
  %v9491 = vmul.f32 %v5659, %v9446
  %v9492 = vmul.f32 %v5660, %v9450
  %v9493 = vmul.f32 %v5661, %v9454
  %v9494 = vmul.f32 %v5662, %v9458
  %v9495 = vmul.f32 %v9436, %v9446
  %v9496 = vmul.f32 %v9437, %v9450
  %v9497 = vmul.f32 %v9438, %v9454
  %v9498 = vmul.f32 %v9439, %v9458
  %v9535 = vrot.slane %v9463, 3
  %v9536 = vrot.slane %v9467, 3
  %v9537 = vsel %vm8594, %v9535, %v9536
  %v9538 = vrot.slane %v9464, 3
  %v9539 = vrot.slane %v9468, 3
  %v9540 = vsel %vm8594, %v9538, %v9539
  %v9541 = vrot.slane %v9465, 3
  %v9542 = vrot.slane %v9469, 3
  %v9543 = vsel %vm8594, %v9541, %v9542
  %v9544 = vrot.slane %v9466, 3
  %v9545 = vrot.slane %v9470, 3
  %v9546 = vsel %vm8594, %v9544, %v9545
  %v9547 = vrot.slane %v9471, 3
  %v9548 = vsel %vm8594, %v9536, %v9547
  %v9549 = vrot.slane %v9472, 3
  %v9550 = vsel %vm8594, %v9539, %v9549
  %v9551 = vrot.slane %v9473, 3
  %v9552 = vsel %vm8594, %v9542, %v9551
  %v9553 = vrot.slane %v9474, 3
  %v9554 = vsel %vm8594, %v9545, %v9553
  %v9555 = vrot.slane %v9475, 3
  %v9556 = vsel %vm8594, %v9547, %v9555
  %v9557 = vrot.slane %v9476, 3
  %v9558 = vsel %vm8594, %v9549, %v9557
  %v9559 = vrot.slane %v9477, 3
  %v9560 = vsel %vm8594, %v9551, %v9559
  %v9561 = vrot.slane %v9478, 3
  %v9562 = vsel %vm8594, %v9553, %v9561
  %v9563 = vrot.slane %v9479, 3
  %v9564 = vsel %vm8594, %v9555, %v9563
  %v9565 = vrot.slane %v9480, 3
  %v9566 = vsel %vm8594, %v9557, %v9565
  %v9567 = vrot.slane %v9481, 3
  %v9568 = vsel %vm8594, %v9559, %v9567
  %v9569 = vrot.slane %v9482, 3
  %v9570 = vsel %vm8594, %v9561, %v9569
  %v9571 = vrot.slane %v9483, 3
  %v9572 = vsel %vm8594, %v9563, %v9571
  %v9573 = vrot.slane %v9484, 3
  %v9574 = vsel %vm8594, %v9565, %v9573
  %v9575 = vrot.slane %v9485, 3
  %v9576 = vsel %vm8594, %v9567, %v9575
  %v9577 = vrot.slane %v9486, 3
  %v9578 = vsel %vm8594, %v9569, %v9577
  %v9579 = vrot.slane %v9487, 3
  %v9580 = vsel %vm8594, %v9571, %v9579
  %v9581 = vrot.slane %v9488, 3
  %v9582 = vsel %vm8594, %v9573, %v9581
  %v9583 = vrot.slane %v9489, 3
  %v9584 = vsel %vm8594, %v9575, %v9583
  %v9585 = vrot.slane %v9490, 3
  %v9586 = vsel %vm8594, %v9577, %v9585
  %v9587 = vrot.slane %v9491, 3
  %v9588 = vsel %vm8594, %v9579, %v9587
  %v9589 = vrot.slane %v9492, 3
  %v9590 = vsel %vm8594, %v9581, %v9589
  %v9591 = vrot.slane %v9493, 3
  %v9592 = vsel %vm8594, %v9583, %v9591
  %v9593 = vrot.slane %v9494, 3
  %v9594 = vsel %vm8594, %v9585, %v9593
  %v9595 = vrot.slane %v9495, 3
  %v9596 = vsel %vm8594, %v9587, %v9595
  %v9597 = vrot.slane %v9496, 3
  %v9598 = vsel %vm8594, %v9589, %v9597
  %v9599 = vrot.slane %v9497, 3
  %v9600 = vsel %vm8594, %v9591, %v9599
  %v9601 = vrot.slane %v9498, 3
  %v9602 = vsel %vm8594, %v9593, %v9601
  %v9635 = vadd.f32 %v9400, %v9537
  %v9636 = vadd.f32 %v9401, %v9540
  %v9637 = vadd.f32 %v9402, %v9543
  %v9638 = vadd.f32 %v9403, %v9546
  %v9639 = vadd.f32 %v9404, %v9548
  %v9640 = vadd.f32 %v9405, %v9550
  %v9641 = vadd.f32 %v9406, %v9552
  %v9642 = vadd.f32 %v9407, %v9554
  %v9643 = vadd.f32 %v9408, %v9556
  %v9644 = vadd.f32 %v9409, %v9558
  %v9645 = vadd.f32 %v9410, %v9560
  %v9646 = vadd.f32 %v9411, %v9562
  %v9647 = vadd.f32 %v9412, %v9564
  %v9648 = vadd.f32 %v9413, %v9566
  %v9649 = vadd.f32 %v9414, %v9568
  %v9650 = vadd.f32 %v9415, %v9570
  %v9651 = vadd.f32 %v9416, %v9572
  %v9652 = vadd.f32 %v9417, %v9574
  %v9653 = vadd.f32 %v9418, %v9576
  %v9654 = vadd.f32 %v9419, %v9578
  %v9655 = vadd.f32 %v9420, %v9580
  %v9656 = vadd.f32 %v9421, %v9582
  %v9657 = vadd.f32 %v9422, %v9584
  %v9658 = vadd.f32 %v9423, %v9586
  %v9659 = vadd.f32 %v9424, %v9588
  %v9660 = vadd.f32 %v9425, %v9590
  %v9661 = vadd.f32 %v9426, %v9592
  %v9662 = vadd.f32 %v9427, %v9594
  %v9663 = vadd.f32 %v9428, %v9596
  %v9664 = vadd.f32 %v9429, %v9598
  %v9665 = vadd.f32 %v9430, %v9600
  %v9666 = vadd.f32 %v9431, %v9602
  %v9667 = vld [vmem:[%s577 + $0x20] sm:$0xf8]
  %v9668 = vld [vmem:[%s577 + $0x28] sm:$0xf8]
  %v9669 = vld [vmem:[%s577 + $0x30] sm:$0xf8]
  %v9670 = vld [vmem:[%s577 + $0x38] sm:$0xf8]
  %v9671 = vld [vmem:[%s577 + $0x120] sm:$0x7]
  %v9672 = vld [vmem:[%s577 + $0x128] sm:$0x7]
  %v9673 = vld [vmem:[%s577 + $0x130] sm:$0x7]
  %v9674 = vld [vmem:[%s577 + $0x138] sm:$0x7]
  %s9675 = scalar_lea.vmem %s1, 165
  %v9676 = vld [vmem:[%s9675] ss:$8 sm:$0xf]
  %v9678 = vlaneseq
  %v9679 = vshrl.u32 %v9678, 7
  %v9680 = vsub.s32 0, %v9679
  %v9681 = vrot.slane %v9676, %v9680
  %v9682 = vlaneseq
  %v9683 = vshrl.u32 %v9682, 7
  %v9684 = vsub.s32 1, %v9683
  %v9685 = vrot.slane %v9676, %v9684
  %v9686 = vlaneseq
  %v9687 = vshrl.u32 %v9686, 7
  %v9688 = vsub.s32 2, %v9687
  %v9689 = vrot.slane %v9676, %v9688
  %v9690 = vlaneseq
  %v9691 = vshrl.u32 %v9690, 7
  %v9692 = vsub.s32 3, %v9691
  %v9693 = vrot.slane %v9676, %v9692
  %v9698 = vmul.f32 %v9667, %v9681
  %v9699 = vmul.f32 %v9668, %v9685
  %v9700 = vmul.f32 %v9669, %v9689
  %v9701 = vmul.f32 %v9670, %v9693
  %v9702 = vmul.f32 %v586, %v9681
  %v9703 = vmul.f32 %v587, %v9685
  %v9704 = vmul.f32 %v588, %v9689
  %v9705 = vmul.f32 %v589, %v9693
  %v9706 = vmul.f32 %v590, %v9681
  %v9707 = vmul.f32 %v591, %v9685
  %v9708 = vmul.f32 %v592, %v9689
  %v9709 = vmul.f32 %v593, %v9693
  %v9710 = vmul.f32 %v594, %v9681
  %v9711 = vmul.f32 %v595, %v9685
  %v9712 = vmul.f32 %v596, %v9689
  %v9713 = vmul.f32 %v597, %v9693
  %v9714 = vmul.f32 %v598, %v9681
  %v9715 = vmul.f32 %v599, %v9685
  %v9716 = vmul.f32 %v600, %v9689
  %v9717 = vmul.f32 %v601, %v9693
  %v9718 = vmul.f32 %v602, %v9681
  %v9719 = vmul.f32 %v603, %v9685
  %v9720 = vmul.f32 %v604, %v9689
  %v9721 = vmul.f32 %v605, %v9693
  %v9722 = vmul.f32 %v606, %v9681
  %v9723 = vmul.f32 %v607, %v9685
  %v9724 = vmul.f32 %v608, %v9689
  %v9725 = vmul.f32 %v609, %v9693
  %v9726 = vmul.f32 %v5898, %v9681
  %v9727 = vmul.f32 %v5899, %v9685
  %v9728 = vmul.f32 %v5900, %v9689
  %v9729 = vmul.f32 %v5901, %v9693
  %v9730 = vmul.f32 %v9671, %v9681
  %v9731 = vmul.f32 %v9672, %v9685
  %v9732 = vmul.f32 %v9673, %v9689
  %v9733 = vmul.f32 %v9674, %v9693
  %v9770 = vrot.slane %v9698, 3
  %v9771 = vrot.slane %v9702, 3
  %v9772 = vsel %vm8594, %v9770, %v9771
  %v9773 = vrot.slane %v9699, 3
  %v9774 = vrot.slane %v9703, 3
  %v9775 = vsel %vm8594, %v9773, %v9774
  %v9776 = vrot.slane %v9700, 3
  %v9777 = vrot.slane %v9704, 3
  %v9778 = vsel %vm8594, %v9776, %v9777
  %v9779 = vrot.slane %v9701, 3
  %v9780 = vrot.slane %v9705, 3
  %v9781 = vsel %vm8594, %v9779, %v9780
  %v9782 = vrot.slane %v9706, 3
  %v9783 = vsel %vm8594, %v9771, %v9782
  %v9784 = vrot.slane %v9707, 3
  %v9785 = vsel %vm8594, %v9774, %v9784
  %v9786 = vrot.slane %v9708, 3
  %v9787 = vsel %vm8594, %v9777, %v9786
  %v9788 = vrot.slane %v9709, 3
  %v9789 = vsel %vm8594, %v9780, %v9788
  %v9790 = vrot.slane %v9710, 3
  %v9791 = vsel %vm8594, %v9782, %v9790
  %v9792 = vrot.slane %v9711, 3
  %v9793 = vsel %vm8594, %v9784, %v9792
  %v9794 = vrot.slane %v9712, 3
  %v9795 = vsel %vm8594, %v9786, %v9794
  %v9796 = vrot.slane %v9713, 3
  %v9797 = vsel %vm8594, %v9788, %v9796
  %v9798 = vrot.slane %v9714, 3
  %v9799 = vsel %vm8594, %v9790, %v9798
  %v9800 = vrot.slane %v9715, 3
  %v9801 = vsel %vm8594, %v9792, %v9800
  %v9802 = vrot.slane %v9716, 3
  %v9803 = vsel %vm8594, %v9794, %v9802
  %v9804 = vrot.slane %v9717, 3
  %v9805 = vsel %vm8594, %v9796, %v9804
  %v9806 = vrot.slane %v9718, 3
  %v9807 = vsel %vm8594, %v9798, %v9806
  %v9808 = vrot.slane %v9719, 3
  %v9809 = vsel %vm8594, %v9800, %v9808
  %v9810 = vrot.slane %v9720, 3
  %v9811 = vsel %vm8594, %v9802, %v9810
  %v9812 = vrot.slane %v9721, 3
  %v9813 = vsel %vm8594, %v9804, %v9812
  %v9814 = vrot.slane %v9722, 3
  %v9815 = vsel %vm8594, %v9806, %v9814
  %v9816 = vrot.slane %v9723, 3
  %v9817 = vsel %vm8594, %v9808, %v9816
  %v9818 = vrot.slane %v9724, 3
  %v9819 = vsel %vm8594, %v9810, %v9818
  %v9820 = vrot.slane %v9725, 3
  %v9821 = vsel %vm8594, %v9812, %v9820
  %v9822 = vrot.slane %v9726, 3
  %v9823 = vsel %vm8594, %v9814, %v9822
  %v9824 = vrot.slane %v9727, 3
  %v9825 = vsel %vm8594, %v9816, %v9824
  %v9826 = vrot.slane %v9728, 3
  %v9827 = vsel %vm8594, %v9818, %v9826
  %v9828 = vrot.slane %v9729, 3
  %v9829 = vsel %vm8594, %v9820, %v9828
  %v9830 = vrot.slane %v9730, 3
  %v9831 = vsel %vm8594, %v9822, %v9830
  %v9832 = vrot.slane %v9731, 3
  %v9833 = vsel %vm8594, %v9824, %v9832
  %v9834 = vrot.slane %v9732, 3
  %v9835 = vsel %vm8594, %v9826, %v9834
  %v9836 = vrot.slane %v9733, 3
  %v9837 = vsel %vm8594, %v9828, %v9836
  %v9870 = vadd.f32 %v9635, %v9772
  %v9871 = vadd.f32 %v9636, %v9775
  %v9872 = vadd.f32 %v9637, %v9778
  %v9873 = vadd.f32 %v9638, %v9781
  %v9874 = vadd.f32 %v9639, %v9783
  %v9875 = vadd.f32 %v9640, %v9785
  %v9876 = vadd.f32 %v9641, %v9787
  %v9877 = vadd.f32 %v9642, %v9789
  %v9878 = vadd.f32 %v9643, %v9791
  %v9879 = vadd.f32 %v9644, %v9793
  %v9880 = vadd.f32 %v9645, %v9795
  %v9881 = vadd.f32 %v9646, %v9797
  %v9882 = vadd.f32 %v9647, %v9799
  %v9883 = vadd.f32 %v9648, %v9801
  %v9884 = vadd.f32 %v9649, %v9803
  %v9885 = vadd.f32 %v9650, %v9805
  %v9886 = vadd.f32 %v9651, %v9807
  %v9887 = vadd.f32 %v9652, %v9809
  %v9888 = vadd.f32 %v9653, %v9811
  %v9889 = vadd.f32 %v9654, %v9813
  %v9890 = vadd.f32 %v9655, %v9815
  %v9891 = vadd.f32 %v9656, %v9817
  %v9892 = vadd.f32 %v9657, %v9819
  %v9893 = vadd.f32 %v9658, %v9821
  %v9894 = vadd.f32 %v9659, %v9823
  %v9895 = vadd.f32 %v9660, %v9825
  %v9896 = vadd.f32 %v9661, %v9827
  %v9897 = vadd.f32 %v9662, %v9829
  %v9898 = vadd.f32 %v9663, %v9831
  %v9899 = vadd.f32 %v9664, %v9833
  %v9900 = vadd.f32 %v9665, %v9835
  %v9901 = vadd.f32 %v9666, %v9837
  %v9902 = vld [vmem:[%s697 + $0x20] sm:$0xf8]
  %v9903 = vld [vmem:[%s697 + $0x28] sm:$0xf8]
  %v9904 = vld [vmem:[%s697 + $0x30] sm:$0xf8]
  %v9905 = vld [vmem:[%s697 + $0x38] sm:$0xf8]
  %v9906 = vld [vmem:[%s697 + $0x120] sm:$0x7]
  %v9907 = vld [vmem:[%s697 + $0x128] sm:$0x7]
  %v9908 = vld [vmem:[%s697 + $0x130] sm:$0x7]
  %v9909 = vld [vmem:[%s697 + $0x138] sm:$0x7]
  %s9910 = scalar_lea.vmem %s1, 166
  %v9911 = vld [vmem:[%s9910] ss:$8 sm:$0xf]
  %v9913 = vlaneseq
  %v9914 = vshrl.u32 %v9913, 7
  %v9915 = vsub.s32 0, %v9914
  %v9916 = vrot.slane %v9911, %v9915
  %v9917 = vlaneseq
  %v9918 = vshrl.u32 %v9917, 7
  %v9919 = vsub.s32 1, %v9918
  %v9920 = vrot.slane %v9911, %v9919
  %v9921 = vlaneseq
  %v9922 = vshrl.u32 %v9921, 7
  %v9923 = vsub.s32 2, %v9922
  %v9924 = vrot.slane %v9911, %v9923
  %v9925 = vlaneseq
  %v9926 = vshrl.u32 %v9925, 7
  %v9927 = vsub.s32 3, %v9926
  %v9928 = vrot.slane %v9911, %v9927
  %v9933 = vmul.f32 %v9902, %v9916
  %v9934 = vmul.f32 %v9903, %v9920
  %v9935 = vmul.f32 %v9904, %v9924
  %v9936 = vmul.f32 %v9905, %v9928
  %v9937 = vmul.f32 %v706, %v9916
  %v9938 = vmul.f32 %v707, %v9920
  %v9939 = vmul.f32 %v708, %v9924
  %v9940 = vmul.f32 %v709, %v9928
  %v9941 = vmul.f32 %v710, %v9916
  %v9942 = vmul.f32 %v711, %v9920
  %v9943 = vmul.f32 %v712, %v9924
  %v9944 = vmul.f32 %v713, %v9928
  %v9945 = vmul.f32 %v714, %v9916
  %v9946 = vmul.f32 %v715, %v9920
  %v9947 = vmul.f32 %v716, %v9924
  %v9948 = vmul.f32 %v717, %v9928
  %v9949 = vmul.f32 %v718, %v9916
  %v9950 = vmul.f32 %v719, %v9920
  %v9951 = vmul.f32 %v720, %v9924
  %v9952 = vmul.f32 %v721, %v9928
  %v9953 = vmul.f32 %v722, %v9916
  %v9954 = vmul.f32 %v723, %v9920
  %v9955 = vmul.f32 %v724, %v9924
  %v9956 = vmul.f32 %v725, %v9928
  %v9957 = vmul.f32 %v726, %v9916
  %v9958 = vmul.f32 %v727, %v9920
  %v9959 = vmul.f32 %v728, %v9924
  %v9960 = vmul.f32 %v729, %v9928
  %v9961 = vmul.f32 %v6137, %v9916
  %v9962 = vmul.f32 %v6138, %v9920
  %v9963 = vmul.f32 %v6139, %v9924
  %v9964 = vmul.f32 %v6140, %v9928
  %v9965 = vmul.f32 %v9906, %v9916
  %v9966 = vmul.f32 %v9907, %v9920
  %v9967 = vmul.f32 %v9908, %v9924
  %v9968 = vmul.f32 %v9909, %v9928
  %v10005 = vrot.slane %v9933, 3
  %v10006 = vrot.slane %v9937, 3
  %v10007 = vsel %vm8594, %v10005, %v10006
  %v10008 = vrot.slane %v9934, 3
  %v10009 = vrot.slane %v9938, 3
  %v10010 = vsel %vm8594, %v10008, %v10009
  %v10011 = vrot.slane %v9935, 3
  %v10012 = vrot.slane %v9939, 3
  %v10013 = vsel %vm8594, %v10011, %v10012
  %v10014 = vrot.slane %v9936, 3
  %v10015 = vrot.slane %v9940, 3
  %v10016 = vsel %vm8594, %v10014, %v10015
  %v10017 = vrot.slane %v9941, 3
  %v10018 = vsel %vm8594, %v10006, %v10017
  %v10019 = vrot.slane %v9942, 3
  %v10020 = vsel %vm8594, %v10009, %v10019
  %v10021 = vrot.slane %v9943, 3
  %v10022 = vsel %vm8594, %v10012, %v10021
  %v10023 = vrot.slane %v9944, 3
  %v10024 = vsel %vm8594, %v10015, %v10023
  %v10025 = vrot.slane %v9945, 3
  %v10026 = vsel %vm8594, %v10017, %v10025
  %v10027 = vrot.slane %v9946, 3
  %v10028 = vsel %vm8594, %v10019, %v10027
  %v10029 = vrot.slane %v9947, 3
  %v10030 = vsel %vm8594, %v10021, %v10029
  %v10031 = vrot.slane %v9948, 3
  %v10032 = vsel %vm8594, %v10023, %v10031
  %v10033 = vrot.slane %v9949, 3
  %v10034 = vsel %vm8594, %v10025, %v10033
  %v10035 = vrot.slane %v9950, 3
  %v10036 = vsel %vm8594, %v10027, %v10035
  %v10037 = vrot.slane %v9951, 3
  %v10038 = vsel %vm8594, %v10029, %v10037
  %v10039 = vrot.slane %v9952, 3
  %v10040 = vsel %vm8594, %v10031, %v10039
  %v10041 = vrot.slane %v9953, 3
  %v10042 = vsel %vm8594, %v10033, %v10041
  %v10043 = vrot.slane %v9954, 3
  %v10044 = vsel %vm8594, %v10035, %v10043
  %v10045 = vrot.slane %v9955, 3
  %v10046 = vsel %vm8594, %v10037, %v10045
  %v10047 = vrot.slane %v9956, 3
  %v10048 = vsel %vm8594, %v10039, %v10047
  %v10049 = vrot.slane %v9957, 3
  %v10050 = vsel %vm8594, %v10041, %v10049
  %v10051 = vrot.slane %v9958, 3
  %v10052 = vsel %vm8594, %v10043, %v10051
  %v10053 = vrot.slane %v9959, 3
  %v10054 = vsel %vm8594, %v10045, %v10053
  %v10055 = vrot.slane %v9960, 3
  %v10056 = vsel %vm8594, %v10047, %v10055
  %v10057 = vrot.slane %v9961, 3
  %v10058 = vsel %vm8594, %v10049, %v10057
  %v10059 = vrot.slane %v9962, 3
  %v10060 = vsel %vm8594, %v10051, %v10059
  %v10061 = vrot.slane %v9963, 3
  %v10062 = vsel %vm8594, %v10053, %v10061
  %v10063 = vrot.slane %v9964, 3
  %v10064 = vsel %vm8594, %v10055, %v10063
  %v10065 = vrot.slane %v9965, 3
  %v10066 = vsel %vm8594, %v10057, %v10065
  %v10067 = vrot.slane %v9966, 3
  %v10068 = vsel %vm8594, %v10059, %v10067
  %v10069 = vrot.slane %v9967, 3
  %v10070 = vsel %vm8594, %v10061, %v10069
  %v10071 = vrot.slane %v9968, 3
  %v10072 = vsel %vm8594, %v10063, %v10071
  %v10105 = vadd.f32 %v9870, %v10007
  %v10106 = vadd.f32 %v9871, %v10010
  %v10107 = vadd.f32 %v9872, %v10013
  %v10108 = vadd.f32 %v9873, %v10016
  %v10109 = vadd.f32 %v9874, %v10018
  %v10110 = vadd.f32 %v9875, %v10020
  %v10111 = vadd.f32 %v9876, %v10022
  %v10112 = vadd.f32 %v9877, %v10024
  %v10113 = vadd.f32 %v9878, %v10026
  %v10114 = vadd.f32 %v9879, %v10028
  %v10115 = vadd.f32 %v9880, %v10030
  %v10116 = vadd.f32 %v9881, %v10032
  %v10117 = vadd.f32 %v9882, %v10034
  %v10118 = vadd.f32 %v9883, %v10036
  %v10119 = vadd.f32 %v9884, %v10038
  %v10120 = vadd.f32 %v9885, %v10040
  %v10121 = vadd.f32 %v9886, %v10042
  %v10122 = vadd.f32 %v9887, %v10044
  %v10123 = vadd.f32 %v9888, %v10046
  %v10124 = vadd.f32 %v9889, %v10048
  %v10125 = vadd.f32 %v9890, %v10050
  %v10126 = vadd.f32 %v9891, %v10052
  %v10127 = vadd.f32 %v9892, %v10054
  %v10128 = vadd.f32 %v9893, %v10056
  %v10129 = vadd.f32 %v9894, %v10058
  %v10130 = vadd.f32 %v9895, %v10060
  %v10131 = vadd.f32 %v9896, %v10062
  %v10132 = vadd.f32 %v9897, %v10064
  %v10133 = vadd.f32 %v9898, %v10066
  %v10134 = vadd.f32 %v9899, %v10068
  %v10135 = vadd.f32 %v9900, %v10070
  %v10136 = vadd.f32 %v9901, %v10072
  %v10137 = vld [vmem:[%s817 + $0x20] sm:$0xf8]
  %v10138 = vld [vmem:[%s817 + $0x28] sm:$0xf8]
  %v10139 = vld [vmem:[%s817 + $0x30] sm:$0xf8]
  %v10140 = vld [vmem:[%s817 + $0x38] sm:$0xf8]
  %v10141 = vld [vmem:[%s817 + $0x120] sm:$0x7]
  %v10142 = vld [vmem:[%s817 + $0x128] sm:$0x7]
  %v10143 = vld [vmem:[%s817 + $0x130] sm:$0x7]
  %v10144 = vld [vmem:[%s817 + $0x138] sm:$0x7]
  %s10145 = scalar_lea.vmem %s1, 167
  %v10146 = vld [vmem:[%s10145] ss:$8 sm:$0xf]
  %v10148 = vlaneseq
  %v10149 = vshrl.u32 %v10148, 7
  %v10150 = vsub.s32 0, %v10149
  %v10151 = vrot.slane %v10146, %v10150
  %v10152 = vlaneseq
  %v10153 = vshrl.u32 %v10152, 7
  %v10154 = vsub.s32 1, %v10153
  %v10155 = vrot.slane %v10146, %v10154
  %v10156 = vlaneseq
  %v10157 = vshrl.u32 %v10156, 7
  %v10158 = vsub.s32 2, %v10157
  %v10159 = vrot.slane %v10146, %v10158
  %v10160 = vlaneseq
  %v10161 = vshrl.u32 %v10160, 7
  %v10162 = vsub.s32 3, %v10161
  %v10163 = vrot.slane %v10146, %v10162
  %v10168 = vmul.f32 %v10137, %v10151
  %v10169 = vmul.f32 %v10138, %v10155
  %v10170 = vmul.f32 %v10139, %v10159
  %v10171 = vmul.f32 %v10140, %v10163
  %v10172 = vmul.f32 %v826, %v10151
  %v10173 = vmul.f32 %v827, %v10155
  %v10174 = vmul.f32 %v828, %v10159
  %v10175 = vmul.f32 %v829, %v10163
  %v10176 = vmul.f32 %v830, %v10151
  %v10177 = vmul.f32 %v831, %v10155
  %v10178 = vmul.f32 %v832, %v10159
  %v10179 = vmul.f32 %v833, %v10163
  %v10180 = vmul.f32 %v834, %v10151
  %v10181 = vmul.f32 %v835, %v10155
  %v10182 = vmul.f32 %v836, %v10159
  %v10183 = vmul.f32 %v837, %v10163
  %v10184 = vmul.f32 %v838, %v10151
  %v10185 = vmul.f32 %v839, %v10155
  %v10186 = vmul.f32 %v840, %v10159
  %v10187 = vmul.f32 %v841, %v10163
  %v10188 = vmul.f32 %v842, %v10151
  %v10189 = vmul.f32 %v843, %v10155
  %v10190 = vmul.f32 %v844, %v10159
  %v10191 = vmul.f32 %v845, %v10163
  %v10192 = vmul.f32 %v846, %v10151
  %v10193 = vmul.f32 %v847, %v10155
  %v10194 = vmul.f32 %v848, %v10159
  %v10195 = vmul.f32 %v849, %v10163
  %v10196 = vmul.f32 %v6376, %v10151
  %v10197 = vmul.f32 %v6377, %v10155
  %v10198 = vmul.f32 %v6378, %v10159
  %v10199 = vmul.f32 %v6379, %v10163
  %v10200 = vmul.f32 %v10141, %v10151
  %v10201 = vmul.f32 %v10142, %v10155
  %v10202 = vmul.f32 %v10143, %v10159
  %v10203 = vmul.f32 %v10144, %v10163
  %v10240 = vrot.slane %v10168, 3
  %v10241 = vrot.slane %v10172, 3
  %v10242 = vsel %vm8594, %v10240, %v10241
  %v10243 = vrot.slane %v10169, 3
  %v10244 = vrot.slane %v10173, 3
  %v10245 = vsel %vm8594, %v10243, %v10244
  %v10246 = vrot.slane %v10170, 3
  %v10247 = vrot.slane %v10174, 3
  %v10248 = vsel %vm8594, %v10246, %v10247
  %v10249 = vrot.slane %v10171, 3
  %v10250 = vrot.slane %v10175, 3
  %v10251 = vsel %vm8594, %v10249, %v10250
  %v10252 = vrot.slane %v10176, 3
  %v10253 = vsel %vm8594, %v10241, %v10252
  %v10254 = vrot.slane %v10177, 3
  %v10255 = vsel %vm8594, %v10244, %v10254
  %v10256 = vrot.slane %v10178, 3
  %v10257 = vsel %vm8594, %v10247, %v10256
  %v10258 = vrot.slane %v10179, 3
  %v10259 = vsel %vm8594, %v10250, %v10258
  %v10260 = vrot.slane %v10180, 3
  %v10261 = vsel %vm8594, %v10252, %v10260
  %v10262 = vrot.slane %v10181, 3
  %v10263 = vsel %vm8594, %v10254, %v10262
  %v10264 = vrot.slane %v10182, 3
  %v10265 = vsel %vm8594, %v10256, %v10264
  %v10266 = vrot.slane %v10183, 3
  %v10267 = vsel %vm8594, %v10258, %v10266
  %v10268 = vrot.slane %v10184, 3
  %v10269 = vsel %vm8594, %v10260, %v10268
  %v10270 = vrot.slane %v10185, 3
  %v10271 = vsel %vm8594, %v10262, %v10270
  %v10272 = vrot.slane %v10186, 3
  %v10273 = vsel %vm8594, %v10264, %v10272
  %v10274 = vrot.slane %v10187, 3
  %v10275 = vsel %vm8594, %v10266, %v10274
  %v10276 = vrot.slane %v10188, 3
  %v10277 = vsel %vm8594, %v10268, %v10276
  %v10278 = vrot.slane %v10189, 3
  %v10279 = vsel %vm8594, %v10270, %v10278
  %v10280 = vrot.slane %v10190, 3
  %v10281 = vsel %vm8594, %v10272, %v10280
  %v10282 = vrot.slane %v10191, 3
  %v10283 = vsel %vm8594, %v10274, %v10282
  %v10284 = vrot.slane %v10192, 3
  %v10285 = vsel %vm8594, %v10276, %v10284
  %v10286 = vrot.slane %v10193, 3
  %v10287 = vsel %vm8594, %v10278, %v10286
  %v10288 = vrot.slane %v10194, 3
  %v10289 = vsel %vm8594, %v10280, %v10288
  %v10290 = vrot.slane %v10195, 3
  %v10291 = vsel %vm8594, %v10282, %v10290
  %v10292 = vrot.slane %v10196, 3
  %v10293 = vsel %vm8594, %v10284, %v10292
  %v10294 = vrot.slane %v10197, 3
  %v10295 = vsel %vm8594, %v10286, %v10294
  %v10296 = vrot.slane %v10198, 3
  %v10297 = vsel %vm8594, %v10288, %v10296
  %v10298 = vrot.slane %v10199, 3
  %v10299 = vsel %vm8594, %v10290, %v10298
  %v10300 = vrot.slane %v10200, 3
  %v10301 = vsel %vm8594, %v10292, %v10300
  %v10302 = vrot.slane %v10201, 3
  %v10303 = vsel %vm8594, %v10294, %v10302
  %v10304 = vrot.slane %v10202, 3
  %v10305 = vsel %vm8594, %v10296, %v10304
  %v10306 = vrot.slane %v10203, 3
  %v10307 = vsel %vm8594, %v10298, %v10306
  %v10340 = vadd.f32 %v10105, %v10242
  %v10341 = vadd.f32 %v10106, %v10245
  %v10342 = vadd.f32 %v10107, %v10248
  %v10343 = vadd.f32 %v10108, %v10251
  %v10344 = vadd.f32 %v10109, %v10253
  %v10345 = vadd.f32 %v10110, %v10255
  %v10346 = vadd.f32 %v10111, %v10257
  %v10347 = vadd.f32 %v10112, %v10259
  %v10348 = vadd.f32 %v10113, %v10261
  %v10349 = vadd.f32 %v10114, %v10263
  %v10350 = vadd.f32 %v10115, %v10265
  %v10351 = vadd.f32 %v10116, %v10267
  %v10352 = vadd.f32 %v10117, %v10269
  %v10353 = vadd.f32 %v10118, %v10271
  %v10354 = vadd.f32 %v10119, %v10273
  %v10355 = vadd.f32 %v10120, %v10275
  %v10356 = vadd.f32 %v10121, %v10277
  %v10357 = vadd.f32 %v10122, %v10279
  %v10358 = vadd.f32 %v10123, %v10281
  %v10359 = vadd.f32 %v10124, %v10283
  %v10360 = vadd.f32 %v10125, %v10285
  %v10361 = vadd.f32 %v10126, %v10287
  %v10362 = vadd.f32 %v10127, %v10289
  %v10363 = vadd.f32 %v10128, %v10291
  %v10364 = vadd.f32 %v10129, %v10293
  %v10365 = vadd.f32 %v10130, %v10295
  %v10366 = vadd.f32 %v10131, %v10297
  %v10367 = vadd.f32 %v10132, %v10299
  %v10368 = vadd.f32 %v10133, %v10301
  %v10369 = vadd.f32 %v10134, %v10303
  %v10370 = vadd.f32 %v10135, %v10305
  %v10371 = vadd.f32 %v10136, %v10307
  %v10372 = vld [vmem:[%s0 + $0x40] sm:$0xfc]
  %v10373 = vld [vmem:[%s0 + $0x48] sm:$0xfc]
  %v10374 = vld [vmem:[%s0 + $0x50] sm:$0xfc]
  %v10375 = vld [vmem:[%s0 + $0x58] sm:$0xfc]
  %v10376 = vld [vmem:[%s0 + $0x120] sm:$0xff]
  %v10377 = vld [vmem:[%s0 + $0x128] sm:$0xff]
  %v10378 = vld [vmem:[%s0 + $0x130] sm:$0xff]
  %v10379 = vld [vmem:[%s0 + $0x138] sm:$0xff]
  %v10380 = vld [vmem:[%s0 + $0x140] sm:$0x3]
  %v10381 = vld [vmem:[%s0 + $0x148] sm:$0x3]
  %v10382 = vld [vmem:[%s0 + $0x150] sm:$0x3]
  %v10383 = vld [vmem:[%s0 + $0x158] sm:$0x3]
  %s10384 = scalar_lea.vmem %s1, 192
  %v10385 = vld [vmem:[%s10384] ss:$8 sm:$0xf]
  %v10387 = vlaneseq
  %v10388 = vshrl.u32 %v10387, 7
  %v10389 = vsub.s32 0, %v10388
  %v10390 = vrot.slane %v10385, %v10389
  %v10391 = vlaneseq
  %v10392 = vshrl.u32 %v10391, 7
  %v10393 = vsub.s32 1, %v10392
  %v10394 = vrot.slane %v10385, %v10393
  %v10395 = vlaneseq
  %v10396 = vshrl.u32 %v10395, 7
  %v10397 = vsub.s32 2, %v10396
  %v10398 = vrot.slane %v10385, %v10397
  %v10399 = vlaneseq
  %v10400 = vshrl.u32 %v10399, 7
  %v10401 = vsub.s32 3, %v10400
  %v10402 = vrot.slane %v10385, %v10401
  %v10407 = vmul.f32 %v10372, %v10390
  %v10408 = vmul.f32 %v10373, %v10394
  %v10409 = vmul.f32 %v10374, %v10398
  %v10410 = vmul.f32 %v10375, %v10402
  %v10411 = vmul.f32 %v23, %v10390
  %v10412 = vmul.f32 %v24, %v10394
  %v10413 = vmul.f32 %v25, %v10398
  %v10414 = vmul.f32 %v26, %v10402
  %v10415 = vmul.f32 %v27, %v10390
  %v10416 = vmul.f32 %v28, %v10394
  %v10417 = vmul.f32 %v29, %v10398
  %v10418 = vmul.f32 %v30, %v10402
  %v10419 = vmul.f32 %v31, %v10390
  %v10420 = vmul.f32 %v32, %v10394
  %v10421 = vmul.f32 %v33, %v10398
  %v10422 = vmul.f32 %v34, %v10402
  %v10423 = vmul.f32 %v35, %v10390
  %v10424 = vmul.f32 %v36, %v10394
  %v10425 = vmul.f32 %v37, %v10398
  %v10426 = vmul.f32 %v38, %v10402
  %v10427 = vmul.f32 %v39, %v10390
  %v10428 = vmul.f32 %v40, %v10394
  %v10429 = vmul.f32 %v41, %v10398
  %v10430 = vmul.f32 %v42, %v10402
  %v10431 = vmul.f32 %v4703, %v10390
  %v10432 = vmul.f32 %v4704, %v10394
  %v10433 = vmul.f32 %v4705, %v10398
  %v10434 = vmul.f32 %v4706, %v10402
  %v10435 = vmul.f32 %v10376, %v10390
  %v10436 = vmul.f32 %v10377, %v10394
  %v10437 = vmul.f32 %v10378, %v10398
  %v10438 = vmul.f32 %v10379, %v10402
  %v10439 = vmul.f32 %v10380, %v10390
  %v10440 = vmul.f32 %v10381, %v10394
  %v10441 = vmul.f32 %v10382, %v10398
  %v10442 = vmul.f32 %v10383, %v10402
  %v10479 = vrot.slane %v10407, 2
  %v10480 = vrot.slane %v10411, 2
  %v10481 = vsel %vm2921, %v10479, %v10480
  %v10482 = vrot.slane %v10408, 2
  %v10483 = vrot.slane %v10412, 2
  %v10484 = vsel %vm2921, %v10482, %v10483
  %v10485 = vrot.slane %v10409, 2
  %v10486 = vrot.slane %v10413, 2
  %v10487 = vsel %vm2921, %v10485, %v10486
  %v10488 = vrot.slane %v10410, 2
  %v10489 = vrot.slane %v10414, 2
  %v10490 = vsel %vm2921, %v10488, %v10489
  %v10491 = vrot.slane %v10415, 2
  %v10492 = vsel %vm2921, %v10480, %v10491
  %v10493 = vrot.slane %v10416, 2
  %v10494 = vsel %vm2921, %v10483, %v10493
  %v10495 = vrot.slane %v10417, 2
  %v10496 = vsel %vm2921, %v10486, %v10495
  %v10497 = vrot.slane %v10418, 2
  %v10498 = vsel %vm2921, %v10489, %v10497
  %v10499 = vrot.slane %v10419, 2
  %v10500 = vsel %vm2921, %v10491, %v10499
  %v10501 = vrot.slane %v10420, 2
  %v10502 = vsel %vm2921, %v10493, %v10501
  %v10503 = vrot.slane %v10421, 2
  %v10504 = vsel %vm2921, %v10495, %v10503
  %v10505 = vrot.slane %v10422, 2
  %v10506 = vsel %vm2921, %v10497, %v10505
  %v10507 = vrot.slane %v10423, 2
  %v10508 = vsel %vm2921, %v10499, %v10507
  %v10509 = vrot.slane %v10424, 2
  %v10510 = vsel %vm2921, %v10501, %v10509
  %v10511 = vrot.slane %v10425, 2
  %v10512 = vsel %vm2921, %v10503, %v10511
  %v10513 = vrot.slane %v10426, 2
  %v10514 = vsel %vm2921, %v10505, %v10513
  %v10515 = vrot.slane %v10427, 2
  %v10516 = vsel %vm2921, %v10507, %v10515
  %v10517 = vrot.slane %v10428, 2
  %v10518 = vsel %vm2921, %v10509, %v10517
  %v10519 = vrot.slane %v10429, 2
  %v10520 = vsel %vm2921, %v10511, %v10519
  %v10521 = vrot.slane %v10430, 2
  %v10522 = vsel %vm2921, %v10513, %v10521
  %v10523 = vrot.slane %v10431, 2
  %v10524 = vsel %vm2921, %v10515, %v10523
  %v10525 = vrot.slane %v10432, 2
  %v10526 = vsel %vm2921, %v10517, %v10525
  %v10527 = vrot.slane %v10433, 2
  %v10528 = vsel %vm2921, %v10519, %v10527
  %v10529 = vrot.slane %v10434, 2
  %v10530 = vsel %vm2921, %v10521, %v10529
  %v10531 = vrot.slane %v10435, 2
  %v10532 = vsel %vm2921, %v10523, %v10531
  %v10533 = vrot.slane %v10436, 2
  %v10534 = vsel %vm2921, %v10525, %v10533
  %v10535 = vrot.slane %v10437, 2
  %v10536 = vsel %vm2921, %v10527, %v10535
  %v10537 = vrot.slane %v10438, 2
  %v10538 = vsel %vm2921, %v10529, %v10537
  %v10539 = vrot.slane %v10439, 2
  %v10540 = vsel %vm2921, %v10531, %v10539
  %v10541 = vrot.slane %v10440, 2
  %v10542 = vsel %vm2921, %v10533, %v10541
  %v10543 = vrot.slane %v10441, 2
  %v10544 = vsel %vm2921, %v10535, %v10543
  %v10545 = vrot.slane %v10442, 2
  %v10546 = vsel %vm2921, %v10537, %v10545
  %v10579 = vadd.f32 %v10340, %v10481
  %v10580 = vadd.f32 %v10341, %v10484
  %v10581 = vadd.f32 %v10342, %v10487
  %v10582 = vadd.f32 %v10343, %v10490
  %v10583 = vadd.f32 %v10344, %v10492
  %v10584 = vadd.f32 %v10345, %v10494
  %v10585 = vadd.f32 %v10346, %v10496
  %v10586 = vadd.f32 %v10347, %v10498
  %v10587 = vadd.f32 %v10348, %v10500
  %v10588 = vadd.f32 %v10349, %v10502
  %v10589 = vadd.f32 %v10350, %v10504
  %v10590 = vadd.f32 %v10351, %v10506
  %v10591 = vadd.f32 %v10352, %v10508
  %v10592 = vadd.f32 %v10353, %v10510
  %v10593 = vadd.f32 %v10354, %v10512
  %v10594 = vadd.f32 %v10355, %v10514
  %v10595 = vadd.f32 %v10356, %v10516
  %v10596 = vadd.f32 %v10357, %v10518
  %v10597 = vadd.f32 %v10358, %v10520
  %v10598 = vadd.f32 %v10359, %v10522
  %v10599 = vadd.f32 %v10360, %v10524
  %v10600 = vadd.f32 %v10361, %v10526
  %v10601 = vadd.f32 %v10362, %v10528
  %v10602 = vadd.f32 %v10363, %v10530
  %v10603 = vadd.f32 %v10364, %v10532
  %v10604 = vadd.f32 %v10365, %v10534
  %v10605 = vadd.f32 %v10366, %v10536
  %v10606 = vadd.f32 %v10367, %v10538
  %v10607 = vadd.f32 %v10368, %v10540
  %v10608 = vadd.f32 %v10369, %v10542
  %v10609 = vadd.f32 %v10370, %v10544
  %v10610 = vadd.f32 %v10371, %v10546
  %v10611 = vld [vmem:[%s97 + $0x40] sm:$0xfc]
  %v10612 = vld [vmem:[%s97 + $0x48] sm:$0xfc]
  %v10613 = vld [vmem:[%s97 + $0x50] sm:$0xfc]
  %v10614 = vld [vmem:[%s97 + $0x58] sm:$0xfc]
  %v10615 = vld [vmem:[%s97 + $0x120] sm:$0xff]
  %v10616 = vld [vmem:[%s97 + $0x128] sm:$0xff]
  %v10617 = vld [vmem:[%s97 + $0x130] sm:$0xff]
  %v10618 = vld [vmem:[%s97 + $0x138] sm:$0xff]
  %v10619 = vld [vmem:[%s97 + $0x140] sm:$0x3]
  %v10620 = vld [vmem:[%s97 + $0x148] sm:$0x3]
  %v10621 = vld [vmem:[%s97 + $0x150] sm:$0x3]
  %v10622 = vld [vmem:[%s97 + $0x158] sm:$0x3]
  %s10623 = scalar_lea.vmem %s1, 193
  %v10624 = vld [vmem:[%s10623] ss:$8 sm:$0xf]
  %v10626 = vlaneseq
  %v10627 = vshrl.u32 %v10626, 7
  %v10628 = vsub.s32 0, %v10627
  %v10629 = vrot.slane %v10624, %v10628
  %v10630 = vlaneseq
  %v10631 = vshrl.u32 %v10630, 7
  %v10632 = vsub.s32 1, %v10631
  %v10633 = vrot.slane %v10624, %v10632
  %v10634 = vlaneseq
  %v10635 = vshrl.u32 %v10634, 7
  %v10636 = vsub.s32 2, %v10635
  %v10637 = vrot.slane %v10624, %v10636
  %v10638 = vlaneseq
  %v10639 = vshrl.u32 %v10638, 7
  %v10640 = vsub.s32 3, %v10639
  %v10641 = vrot.slane %v10624, %v10640
  %v10646 = vmul.f32 %v10611, %v10629
  %v10647 = vmul.f32 %v10612, %v10633
  %v10648 = vmul.f32 %v10613, %v10637
  %v10649 = vmul.f32 %v10614, %v10641
  %v10650 = vmul.f32 %v110, %v10629
  %v10651 = vmul.f32 %v111, %v10633
  %v10652 = vmul.f32 %v112, %v10637
  %v10653 = vmul.f32 %v113, %v10641
  %v10654 = vmul.f32 %v114, %v10629
  %v10655 = vmul.f32 %v115, %v10633
  %v10656 = vmul.f32 %v116, %v10637
  %v10657 = vmul.f32 %v117, %v10641
  %v10658 = vmul.f32 %v118, %v10629
  %v10659 = vmul.f32 %v119, %v10633
  %v10660 = vmul.f32 %v120, %v10637
  %v10661 = vmul.f32 %v121, %v10641
  %v10662 = vmul.f32 %v122, %v10629
  %v10663 = vmul.f32 %v123, %v10633
  %v10664 = vmul.f32 %v124, %v10637
  %v10665 = vmul.f32 %v125, %v10641
  %v10666 = vmul.f32 %v126, %v10629
  %v10667 = vmul.f32 %v127, %v10633
  %v10668 = vmul.f32 %v128, %v10637
  %v10669 = vmul.f32 %v129, %v10641
  %v10670 = vmul.f32 %v4942, %v10629
  %v10671 = vmul.f32 %v4943, %v10633
  %v10672 = vmul.f32 %v4944, %v10637
  %v10673 = vmul.f32 %v4945, %v10641
  %v10674 = vmul.f32 %v10615, %v10629
  %v10675 = vmul.f32 %v10616, %v10633
  %v10676 = vmul.f32 %v10617, %v10637
  %v10677 = vmul.f32 %v10618, %v10641
  %v10678 = vmul.f32 %v10619, %v10629
  %v10679 = vmul.f32 %v10620, %v10633
  %v10680 = vmul.f32 %v10621, %v10637
  %v10681 = vmul.f32 %v10622, %v10641
  %v10718 = vrot.slane %v10646, 2
  %v10719 = vrot.slane %v10650, 2
  %v10720 = vsel %vm2921, %v10718, %v10719
  %v10721 = vrot.slane %v10647, 2
  %v10722 = vrot.slane %v10651, 2
  %v10723 = vsel %vm2921, %v10721, %v10722
  %v10724 = vrot.slane %v10648, 2
  %v10725 = vrot.slane %v10652, 2
  %v10726 = vsel %vm2921, %v10724, %v10725
  %v10727 = vrot.slane %v10649, 2
  %v10728 = vrot.slane %v10653, 2
  %v10729 = vsel %vm2921, %v10727, %v10728
  %v10730 = vrot.slane %v10654, 2
  %v10731 = vsel %vm2921, %v10719, %v10730
  %v10732 = vrot.slane %v10655, 2
  %v10733 = vsel %vm2921, %v10722, %v10732
  %v10734 = vrot.slane %v10656, 2
  %v10735 = vsel %vm2921, %v10725, %v10734
  %v10736 = vrot.slane %v10657, 2
  %v10737 = vsel %vm2921, %v10728, %v10736
  %v10738 = vrot.slane %v10658, 2
  %v10739 = vsel %vm2921, %v10730, %v10738
  %v10740 = vrot.slane %v10659, 2
  %v10741 = vsel %vm2921, %v10732, %v10740
  %v10742 = vrot.slane %v10660, 2
  %v10743 = vsel %vm2921, %v10734, %v10742
  %v10744 = vrot.slane %v10661, 2
  %v10745 = vsel %vm2921, %v10736, %v10744
  %v10746 = vrot.slane %v10662, 2
  %v10747 = vsel %vm2921, %v10738, %v10746
  %v10748 = vrot.slane %v10663, 2
  %v10749 = vsel %vm2921, %v10740, %v10748
  %v10750 = vrot.slane %v10664, 2
  %v10751 = vsel %vm2921, %v10742, %v10750
  %v10752 = vrot.slane %v10665, 2
  %v10753 = vsel %vm2921, %v10744, %v10752
  %v10754 = vrot.slane %v10666, 2
  %v10755 = vsel %vm2921, %v10746, %v10754
  %v10756 = vrot.slane %v10667, 2
  %v10757 = vsel %vm2921, %v10748, %v10756
  %v10758 = vrot.slane %v10668, 2
  %v10759 = vsel %vm2921, %v10750, %v10758
  %v10760 = vrot.slane %v10669, 2
  %v10761 = vsel %vm2921, %v10752, %v10760
  %v10762 = vrot.slane %v10670, 2
  %v10763 = vsel %vm2921, %v10754, %v10762
  %v10764 = vrot.slane %v10671, 2
  %v10765 = vsel %vm2921, %v10756, %v10764
  %v10766 = vrot.slane %v10672, 2
  %v10767 = vsel %vm2921, %v10758, %v10766
  %v10768 = vrot.slane %v10673, 2
  %v10769 = vsel %vm2921, %v10760, %v10768
  %v10770 = vrot.slane %v10674, 2
  %v10771 = vsel %vm2921, %v10762, %v10770
  %v10772 = vrot.slane %v10675, 2
  %v10773 = vsel %vm2921, %v10764, %v10772
  %v10774 = vrot.slane %v10676, 2
  %v10775 = vsel %vm2921, %v10766, %v10774
  %v10776 = vrot.slane %v10677, 2
  %v10777 = vsel %vm2921, %v10768, %v10776
  %v10778 = vrot.slane %v10678, 2
  %v10779 = vsel %vm2921, %v10770, %v10778
  %v10780 = vrot.slane %v10679, 2
  %v10781 = vsel %vm2921, %v10772, %v10780
  %v10782 = vrot.slane %v10680, 2
  %v10783 = vsel %vm2921, %v10774, %v10782
  %v10784 = vrot.slane %v10681, 2
  %v10785 = vsel %vm2921, %v10776, %v10784
  %v10818 = vadd.f32 %v10579, %v10720
  %v10819 = vadd.f32 %v10580, %v10723
  %v10820 = vadd.f32 %v10581, %v10726
  %v10821 = vadd.f32 %v10582, %v10729
  %v10822 = vadd.f32 %v10583, %v10731
  %v10823 = vadd.f32 %v10584, %v10733
  %v10824 = vadd.f32 %v10585, %v10735
  %v10825 = vadd.f32 %v10586, %v10737
  %v10826 = vadd.f32 %v10587, %v10739
  %v10827 = vadd.f32 %v10588, %v10741
  %v10828 = vadd.f32 %v10589, %v10743
  %v10829 = vadd.f32 %v10590, %v10745
  %v10830 = vadd.f32 %v10591, %v10747
  %v10831 = vadd.f32 %v10592, %v10749
  %v10832 = vadd.f32 %v10593, %v10751
  %v10833 = vadd.f32 %v10594, %v10753
  %v10834 = vadd.f32 %v10595, %v10755
  %v10835 = vadd.f32 %v10596, %v10757
  %v10836 = vadd.f32 %v10597, %v10759
  %v10837 = vadd.f32 %v10598, %v10761
  %v10838 = vadd.f32 %v10599, %v10763
  %v10839 = vadd.f32 %v10600, %v10765
  %v10840 = vadd.f32 %v10601, %v10767
  %v10841 = vadd.f32 %v10602, %v10769
  %v10842 = vadd.f32 %v10603, %v10771
  %v10843 = vadd.f32 %v10604, %v10773
  %v10844 = vadd.f32 %v10605, %v10775
  %v10845 = vadd.f32 %v10606, %v10777
  %v10846 = vadd.f32 %v10607, %v10779
  %v10847 = vadd.f32 %v10608, %v10781
  %v10848 = vadd.f32 %v10609, %v10783
  %v10849 = vadd.f32 %v10610, %v10785
  %v10850 = vld [vmem:[%s217 + $0x40] sm:$0xfc]
  %v10851 = vld [vmem:[%s217 + $0x48] sm:$0xfc]
  %v10852 = vld [vmem:[%s217 + $0x50] sm:$0xfc]
  %v10853 = vld [vmem:[%s217 + $0x58] sm:$0xfc]
  %v10854 = vld [vmem:[%s217 + $0x120] sm:$0xff]
  %v10855 = vld [vmem:[%s217 + $0x128] sm:$0xff]
  %v10856 = vld [vmem:[%s217 + $0x130] sm:$0xff]
  %v10857 = vld [vmem:[%s217 + $0x138] sm:$0xff]
  %v10858 = vld [vmem:[%s217 + $0x140] sm:$0x3]
  %v10859 = vld [vmem:[%s217 + $0x148] sm:$0x3]
  %v10860 = vld [vmem:[%s217 + $0x150] sm:$0x3]
  %v10861 = vld [vmem:[%s217 + $0x158] sm:$0x3]
  %s10862 = scalar_lea.vmem %s1, 194
  %v10863 = vld [vmem:[%s10862] ss:$8 sm:$0xf]
  %v10865 = vlaneseq
  %v10866 = vshrl.u32 %v10865, 7
  %v10867 = vsub.s32 0, %v10866
  %v10868 = vrot.slane %v10863, %v10867
  %v10869 = vlaneseq
  %v10870 = vshrl.u32 %v10869, 7
  %v10871 = vsub.s32 1, %v10870
  %v10872 = vrot.slane %v10863, %v10871
  %v10873 = vlaneseq
  %v10874 = vshrl.u32 %v10873, 7
  %v10875 = vsub.s32 2, %v10874
  %v10876 = vrot.slane %v10863, %v10875
  %v10877 = vlaneseq
  %v10878 = vshrl.u32 %v10877, 7
  %v10879 = vsub.s32 3, %v10878
  %v10880 = vrot.slane %v10863, %v10879
  %v10885 = vmul.f32 %v10850, %v10868
  %v10886 = vmul.f32 %v10851, %v10872
  %v10887 = vmul.f32 %v10852, %v10876
  %v10888 = vmul.f32 %v10853, %v10880
  %v10889 = vmul.f32 %v230, %v10868
  %v10890 = vmul.f32 %v231, %v10872
  %v10891 = vmul.f32 %v232, %v10876
  %v10892 = vmul.f32 %v233, %v10880
  %v10893 = vmul.f32 %v234, %v10868
  %v10894 = vmul.f32 %v235, %v10872
  %v10895 = vmul.f32 %v236, %v10876
  %v10896 = vmul.f32 %v237, %v10880
  %v10897 = vmul.f32 %v238, %v10868
  %v10898 = vmul.f32 %v239, %v10872
  %v10899 = vmul.f32 %v240, %v10876
  %v10900 = vmul.f32 %v241, %v10880
  %v10901 = vmul.f32 %v242, %v10868
  %v10902 = vmul.f32 %v243, %v10872
  %v10903 = vmul.f32 %v244, %v10876
  %v10904 = vmul.f32 %v245, %v10880
  %v10905 = vmul.f32 %v246, %v10868
  %v10906 = vmul.f32 %v247, %v10872
  %v10907 = vmul.f32 %v248, %v10876
  %v10908 = vmul.f32 %v249, %v10880
  %v10909 = vmul.f32 %v5181, %v10868
  %v10910 = vmul.f32 %v5182, %v10872
  %v10911 = vmul.f32 %v5183, %v10876
  %v10912 = vmul.f32 %v5184, %v10880
  %v10913 = vmul.f32 %v10854, %v10868
  %v10914 = vmul.f32 %v10855, %v10872
  %v10915 = vmul.f32 %v10856, %v10876
  %v10916 = vmul.f32 %v10857, %v10880
  %v10917 = vmul.f32 %v10858, %v10868
  %v10918 = vmul.f32 %v10859, %v10872
  %v10919 = vmul.f32 %v10860, %v10876
  %v10920 = vmul.f32 %v10861, %v10880
  %v10957 = vrot.slane %v10885, 2
  %v10958 = vrot.slane %v10889, 2
  %v10959 = vsel %vm2921, %v10957, %v10958
  %v10960 = vrot.slane %v10886, 2
  %v10961 = vrot.slane %v10890, 2
  %v10962 = vsel %vm2921, %v10960, %v10961
  %v10963 = vrot.slane %v10887, 2
  %v10964 = vrot.slane %v10891, 2
  %v10965 = vsel %vm2921, %v10963, %v10964
  %v10966 = vrot.slane %v10888, 2
  %v10967 = vrot.slane %v10892, 2
  %v10968 = vsel %vm2921, %v10966, %v10967
  %v10969 = vrot.slane %v10893, 2
  %v10970 = vsel %vm2921, %v10958, %v10969
  %v10971 = vrot.slane %v10894, 2
  %v10972 = vsel %vm2921, %v10961, %v10971
  %v10973 = vrot.slane %v10895, 2
  %v10974 = vsel %vm2921, %v10964, %v10973
  %v10975 = vrot.slane %v10896, 2
  %v10976 = vsel %vm2921, %v10967, %v10975
  %v10977 = vrot.slane %v10897, 2
  %v10978 = vsel %vm2921, %v10969, %v10977
  %v10979 = vrot.slane %v10898, 2
  %v10980 = vsel %vm2921, %v10971, %v10979
  %v10981 = vrot.slane %v10899, 2
  %v10982 = vsel %vm2921, %v10973, %v10981
  %v10983 = vrot.slane %v10900, 2
  %v10984 = vsel %vm2921, %v10975, %v10983
  %v10985 = vrot.slane %v10901, 2
  %v10986 = vsel %vm2921, %v10977, %v10985
  %v10987 = vrot.slane %v10902, 2
  %v10988 = vsel %vm2921, %v10979, %v10987
  %v10989 = vrot.slane %v10903, 2
  %v10990 = vsel %vm2921, %v10981, %v10989
  %v10991 = vrot.slane %v10904, 2
  %v10992 = vsel %vm2921, %v10983, %v10991
  %v10993 = vrot.slane %v10905, 2
  %v10994 = vsel %vm2921, %v10985, %v10993
  %v10995 = vrot.slane %v10906, 2
  %v10996 = vsel %vm2921, %v10987, %v10995
  %v10997 = vrot.slane %v10907, 2
  %v10998 = vsel %vm2921, %v10989, %v10997
  %v10999 = vrot.slane %v10908, 2
  %v11000 = vsel %vm2921, %v10991, %v10999
  %v11001 = vrot.slane %v10909, 2
  %v11002 = vsel %vm2921, %v10993, %v11001
  %v11003 = vrot.slane %v10910, 2
  %v11004 = vsel %vm2921, %v10995, %v11003
  %v11005 = vrot.slane %v10911, 2
  %v11006 = vsel %vm2921, %v10997, %v11005
  %v11007 = vrot.slane %v10912, 2
  %v11008 = vsel %vm2921, %v10999, %v11007
  %v11009 = vrot.slane %v10913, 2
  %v11010 = vsel %vm2921, %v11001, %v11009
  %v11011 = vrot.slane %v10914, 2
  %v11012 = vsel %vm2921, %v11003, %v11011
  %v11013 = vrot.slane %v10915, 2
  %v11014 = vsel %vm2921, %v11005, %v11013
  %v11015 = vrot.slane %v10916, 2
  %v11016 = vsel %vm2921, %v11007, %v11015
  %v11017 = vrot.slane %v10917, 2
  %v11018 = vsel %vm2921, %v11009, %v11017
  %v11019 = vrot.slane %v10918, 2
  %v11020 = vsel %vm2921, %v11011, %v11019
  %v11021 = vrot.slane %v10919, 2
  %v11022 = vsel %vm2921, %v11013, %v11021
  %v11023 = vrot.slane %v10920, 2
  %v11024 = vsel %vm2921, %v11015, %v11023
  %v11057 = vadd.f32 %v10818, %v10959
  %v11058 = vadd.f32 %v10819, %v10962
  %v11059 = vadd.f32 %v10820, %v10965
  %v11060 = vadd.f32 %v10821, %v10968
  %v11061 = vadd.f32 %v10822, %v10970
  %v11062 = vadd.f32 %v10823, %v10972
  %v11063 = vadd.f32 %v10824, %v10974
  %v11064 = vadd.f32 %v10825, %v10976
  %v11065 = vadd.f32 %v10826, %v10978
  %v11066 = vadd.f32 %v10827, %v10980
  %v11067 = vadd.f32 %v10828, %v10982
  %v11068 = vadd.f32 %v10829, %v10984
  %v11069 = vadd.f32 %v10830, %v10986
  %v11070 = vadd.f32 %v10831, %v10988
  %v11071 = vadd.f32 %v10832, %v10990
  %v11072 = vadd.f32 %v10833, %v10992
  %v11073 = vadd.f32 %v10834, %v10994
  %v11074 = vadd.f32 %v10835, %v10996
  %v11075 = vadd.f32 %v10836, %v10998
  %v11076 = vadd.f32 %v10837, %v11000
  %v11077 = vadd.f32 %v10838, %v11002
  %v11078 = vadd.f32 %v10839, %v11004
  %v11079 = vadd.f32 %v10840, %v11006
  %v11080 = vadd.f32 %v10841, %v11008
  %v11081 = vadd.f32 %v10842, %v11010
  %v11082 = vadd.f32 %v10843, %v11012
  %v11083 = vadd.f32 %v10844, %v11014
  %v11084 = vadd.f32 %v10845, %v11016
  %v11085 = vadd.f32 %v10846, %v11018
  %v11086 = vadd.f32 %v10847, %v11020
  %v11087 = vadd.f32 %v10848, %v11022
  %v11088 = vadd.f32 %v10849, %v11024
  %v11089 = vld [vmem:[%s337 + $0x40] sm:$0xfc]
  %v11090 = vld [vmem:[%s337 + $0x48] sm:$0xfc]
  %v11091 = vld [vmem:[%s337 + $0x50] sm:$0xfc]
  %v11092 = vld [vmem:[%s337 + $0x58] sm:$0xfc]
  %v11093 = vld [vmem:[%s337 + $0x120] sm:$0xff]
  %v11094 = vld [vmem:[%s337 + $0x128] sm:$0xff]
  %v11095 = vld [vmem:[%s337 + $0x130] sm:$0xff]
  %v11096 = vld [vmem:[%s337 + $0x138] sm:$0xff]
  %v11097 = vld [vmem:[%s337 + $0x140] sm:$0x3]
  %v11098 = vld [vmem:[%s337 + $0x148] sm:$0x3]
  %v11099 = vld [vmem:[%s337 + $0x150] sm:$0x3]
  %v11100 = vld [vmem:[%s337 + $0x158] sm:$0x3]
  %s11101 = scalar_lea.vmem %s1, 195
  %v11102 = vld [vmem:[%s11101] ss:$8 sm:$0xf]
  %v11104 = vlaneseq
  %v11105 = vshrl.u32 %v11104, 7
  %v11106 = vsub.s32 0, %v11105
  %v11107 = vrot.slane %v11102, %v11106
  %v11108 = vlaneseq
  %v11109 = vshrl.u32 %v11108, 7
  %v11110 = vsub.s32 1, %v11109
  %v11111 = vrot.slane %v11102, %v11110
  %v11112 = vlaneseq
  %v11113 = vshrl.u32 %v11112, 7
  %v11114 = vsub.s32 2, %v11113
  %v11115 = vrot.slane %v11102, %v11114
  %v11116 = vlaneseq
  %v11117 = vshrl.u32 %v11116, 7
  %v11118 = vsub.s32 3, %v11117
  %v11119 = vrot.slane %v11102, %v11118
  %v11124 = vmul.f32 %v11089, %v11107
  %v11125 = vmul.f32 %v11090, %v11111
  %v11126 = vmul.f32 %v11091, %v11115
  %v11127 = vmul.f32 %v11092, %v11119
  %v11128 = vmul.f32 %v350, %v11107
  %v11129 = vmul.f32 %v351, %v11111
  %v11130 = vmul.f32 %v352, %v11115
  %v11131 = vmul.f32 %v353, %v11119
  %v11132 = vmul.f32 %v354, %v11107
  %v11133 = vmul.f32 %v355, %v11111
  %v11134 = vmul.f32 %v356, %v11115
  %v11135 = vmul.f32 %v357, %v11119
  %v11136 = vmul.f32 %v358, %v11107
  %v11137 = vmul.f32 %v359, %v11111
  %v11138 = vmul.f32 %v360, %v11115
  %v11139 = vmul.f32 %v361, %v11119
  %v11140 = vmul.f32 %v362, %v11107
  %v11141 = vmul.f32 %v363, %v11111
  %v11142 = vmul.f32 %v364, %v11115
  %v11143 = vmul.f32 %v365, %v11119
  %v11144 = vmul.f32 %v366, %v11107
  %v11145 = vmul.f32 %v367, %v11111
  %v11146 = vmul.f32 %v368, %v11115
  %v11147 = vmul.f32 %v369, %v11119
  %v11148 = vmul.f32 %v5420, %v11107
  %v11149 = vmul.f32 %v5421, %v11111
  %v11150 = vmul.f32 %v5422, %v11115
  %v11151 = vmul.f32 %v5423, %v11119
  %v11152 = vmul.f32 %v11093, %v11107
  %v11153 = vmul.f32 %v11094, %v11111
  %v11154 = vmul.f32 %v11095, %v11115
  %v11155 = vmul.f32 %v11096, %v11119
  %v11156 = vmul.f32 %v11097, %v11107
  %v11157 = vmul.f32 %v11098, %v11111
  %v11158 = vmul.f32 %v11099, %v11115
  %v11159 = vmul.f32 %v11100, %v11119
  %v11196 = vrot.slane %v11124, 2
  %v11197 = vrot.slane %v11128, 2
  %v11198 = vsel %vm2921, %v11196, %v11197
  %v11199 = vrot.slane %v11125, 2
  %v11200 = vrot.slane %v11129, 2
  %v11201 = vsel %vm2921, %v11199, %v11200
  %v11202 = vrot.slane %v11126, 2
  %v11203 = vrot.slane %v11130, 2
  %v11204 = vsel %vm2921, %v11202, %v11203
  %v11205 = vrot.slane %v11127, 2
  %v11206 = vrot.slane %v11131, 2
  %v11207 = vsel %vm2921, %v11205, %v11206
  %v11208 = vrot.slane %v11132, 2
  %v11209 = vsel %vm2921, %v11197, %v11208
  %v11210 = vrot.slane %v11133, 2
  %v11211 = vsel %vm2921, %v11200, %v11210
  %v11212 = vrot.slane %v11134, 2
  %v11213 = vsel %vm2921, %v11203, %v11212
  %v11214 = vrot.slane %v11135, 2
  %v11215 = vsel %vm2921, %v11206, %v11214
  %v11216 = vrot.slane %v11136, 2
  %v11217 = vsel %vm2921, %v11208, %v11216
  %v11218 = vrot.slane %v11137, 2
  %v11219 = vsel %vm2921, %v11210, %v11218
  %v11220 = vrot.slane %v11138, 2
  %v11221 = vsel %vm2921, %v11212, %v11220
  %v11222 = vrot.slane %v11139, 2
  %v11223 = vsel %vm2921, %v11214, %v11222
  %v11224 = vrot.slane %v11140, 2
  %v11225 = vsel %vm2921, %v11216, %v11224
  %v11226 = vrot.slane %v11141, 2
  %v11227 = vsel %vm2921, %v11218, %v11226
  %v11228 = vrot.slane %v11142, 2
  %v11229 = vsel %vm2921, %v11220, %v11228
  %v11230 = vrot.slane %v11143, 2
  %v11231 = vsel %vm2921, %v11222, %v11230
  %v11232 = vrot.slane %v11144, 2
  %v11233 = vsel %vm2921, %v11224, %v11232
  %v11234 = vrot.slane %v11145, 2
  %v11235 = vsel %vm2921, %v11226, %v11234
  %v11236 = vrot.slane %v11146, 2
  %v11237 = vsel %vm2921, %v11228, %v11236
  %v11238 = vrot.slane %v11147, 2
  %v11239 = vsel %vm2921, %v11230, %v11238
  %v11240 = vrot.slane %v11148, 2
  %v11241 = vsel %vm2921, %v11232, %v11240
  %v11242 = vrot.slane %v11149, 2
  %v11243 = vsel %vm2921, %v11234, %v11242
  %v11244 = vrot.slane %v11150, 2
  %v11245 = vsel %vm2921, %v11236, %v11244
  %v11246 = vrot.slane %v11151, 2
  %v11247 = vsel %vm2921, %v11238, %v11246
  %v11248 = vrot.slane %v11152, 2
  %v11249 = vsel %vm2921, %v11240, %v11248
  %v11250 = vrot.slane %v11153, 2
  %v11251 = vsel %vm2921, %v11242, %v11250
  %v11252 = vrot.slane %v11154, 2
  %v11253 = vsel %vm2921, %v11244, %v11252
  %v11254 = vrot.slane %v11155, 2
  %v11255 = vsel %vm2921, %v11246, %v11254
  %v11256 = vrot.slane %v11156, 2
  %v11257 = vsel %vm2921, %v11248, %v11256
  %v11258 = vrot.slane %v11157, 2
  %v11259 = vsel %vm2921, %v11250, %v11258
  %v11260 = vrot.slane %v11158, 2
  %v11261 = vsel %vm2921, %v11252, %v11260
  %v11262 = vrot.slane %v11159, 2
  %v11263 = vsel %vm2921, %v11254, %v11262
  %v11296 = vadd.f32 %v11057, %v11198
  %v11297 = vadd.f32 %v11058, %v11201
  %v11298 = vadd.f32 %v11059, %v11204
  %v11299 = vadd.f32 %v11060, %v11207
  %v11300 = vadd.f32 %v11061, %v11209
  %v11301 = vadd.f32 %v11062, %v11211
  %v11302 = vadd.f32 %v11063, %v11213
  %v11303 = vadd.f32 %v11064, %v11215
  %v11304 = vadd.f32 %v11065, %v11217
  %v11305 = vadd.f32 %v11066, %v11219
  %v11306 = vadd.f32 %v11067, %v11221
  %v11307 = vadd.f32 %v11068, %v11223
  %v11308 = vadd.f32 %v11069, %v11225
  %v11309 = vadd.f32 %v11070, %v11227
  %v11310 = vadd.f32 %v11071, %v11229
  %v11311 = vadd.f32 %v11072, %v11231
  %v11312 = vadd.f32 %v11073, %v11233
  %v11313 = vadd.f32 %v11074, %v11235
  %v11314 = vadd.f32 %v11075, %v11237
  %v11315 = vadd.f32 %v11076, %v11239
  %v11316 = vadd.f32 %v11077, %v11241
  %v11317 = vadd.f32 %v11078, %v11243
  %v11318 = vadd.f32 %v11079, %v11245
  %v11319 = vadd.f32 %v11080, %v11247
  %v11320 = vadd.f32 %v11081, %v11249
  %v11321 = vadd.f32 %v11082, %v11251
  %v11322 = vadd.f32 %v11083, %v11253
  %v11323 = vadd.f32 %v11084, %v11255
  %v11324 = vadd.f32 %v11085, %v11257
  %v11325 = vadd.f32 %v11086, %v11259
  %v11326 = vadd.f32 %v11087, %v11261
  %v11327 = vadd.f32 %v11088, %v11263
  %v11328 = vld [vmem:[%s457 + $0x40] sm:$0xfc]
  %v11329 = vld [vmem:[%s457 + $0x48] sm:$0xfc]
  %v11330 = vld [vmem:[%s457 + $0x50] sm:$0xfc]
  %v11331 = vld [vmem:[%s457 + $0x58] sm:$0xfc]
  %v11332 = vld [vmem:[%s457 + $0x120] sm:$0xff]
  %v11333 = vld [vmem:[%s457 + $0x128] sm:$0xff]
  %v11334 = vld [vmem:[%s457 + $0x130] sm:$0xff]
  %v11335 = vld [vmem:[%s457 + $0x138] sm:$0xff]
  %v11336 = vld [vmem:[%s457 + $0x140] sm:$0x3]
  %v11337 = vld [vmem:[%s457 + $0x148] sm:$0x3]
  %v11338 = vld [vmem:[%s457 + $0x150] sm:$0x3]
  %v11339 = vld [vmem:[%s457 + $0x158] sm:$0x3]
  %s11340 = scalar_lea.vmem %s1, 196
  %v11341 = vld [vmem:[%s11340] ss:$8 sm:$0xf]
  %v11343 = vlaneseq
  %v11344 = vshrl.u32 %v11343, 7
  %v11345 = vsub.s32 0, %v11344
  %v11346 = vrot.slane %v11341, %v11345
  %v11347 = vlaneseq
  %v11348 = vshrl.u32 %v11347, 7
  %v11349 = vsub.s32 1, %v11348
  %v11350 = vrot.slane %v11341, %v11349
  %v11351 = vlaneseq
  %v11352 = vshrl.u32 %v11351, 7
  %v11353 = vsub.s32 2, %v11352
  %v11354 = vrot.slane %v11341, %v11353
  %v11355 = vlaneseq
  %v11356 = vshrl.u32 %v11355, 7
  %v11357 = vsub.s32 3, %v11356
  %v11358 = vrot.slane %v11341, %v11357
  %v11363 = vmul.f32 %v11328, %v11346
  %v11364 = vmul.f32 %v11329, %v11350
  %v11365 = vmul.f32 %v11330, %v11354
  %v11366 = vmul.f32 %v11331, %v11358
  %v11367 = vmul.f32 %v470, %v11346
  %v11368 = vmul.f32 %v471, %v11350
  %v11369 = vmul.f32 %v472, %v11354
  %v11370 = vmul.f32 %v473, %v11358
  %v11371 = vmul.f32 %v474, %v11346
  %v11372 = vmul.f32 %v475, %v11350
  %v11373 = vmul.f32 %v476, %v11354
  %v11374 = vmul.f32 %v477, %v11358
  %v11375 = vmul.f32 %v478, %v11346
  %v11376 = vmul.f32 %v479, %v11350
  %v11377 = vmul.f32 %v480, %v11354
  %v11378 = vmul.f32 %v481, %v11358
  %v11379 = vmul.f32 %v482, %v11346
  %v11380 = vmul.f32 %v483, %v11350
  %v11381 = vmul.f32 %v484, %v11354
  %v11382 = vmul.f32 %v485, %v11358
  %v11383 = vmul.f32 %v486, %v11346
  %v11384 = vmul.f32 %v487, %v11350
  %v11385 = vmul.f32 %v488, %v11354
  %v11386 = vmul.f32 %v489, %v11358
  %v11387 = vmul.f32 %v5659, %v11346
  %v11388 = vmul.f32 %v5660, %v11350
  %v11389 = vmul.f32 %v5661, %v11354
  %v11390 = vmul.f32 %v5662, %v11358
  %v11391 = vmul.f32 %v11332, %v11346
  %v11392 = vmul.f32 %v11333, %v11350
  %v11393 = vmul.f32 %v11334, %v11354
  %v11394 = vmul.f32 %v11335, %v11358
  %v11395 = vmul.f32 %v11336, %v11346
  %v11396 = vmul.f32 %v11337, %v11350
  %v11397 = vmul.f32 %v11338, %v11354
  %v11398 = vmul.f32 %v11339, %v11358
  %v11435 = vrot.slane %v11363, 2
  %v11436 = vrot.slane %v11367, 2
  %v11437 = vsel %vm2921, %v11435, %v11436
  %v11438 = vrot.slane %v11364, 2
  %v11439 = vrot.slane %v11368, 2
  %v11440 = vsel %vm2921, %v11438, %v11439
  %v11441 = vrot.slane %v11365, 2
  %v11442 = vrot.slane %v11369, 2
  %v11443 = vsel %vm2921, %v11441, %v11442
  %v11444 = vrot.slane %v11366, 2
  %v11445 = vrot.slane %v11370, 2
  %v11446 = vsel %vm2921, %v11444, %v11445
  %v11447 = vrot.slane %v11371, 2
  %v11448 = vsel %vm2921, %v11436, %v11447
  %v11449 = vrot.slane %v11372, 2
  %v11450 = vsel %vm2921, %v11439, %v11449
  %v11451 = vrot.slane %v11373, 2
  %v11452 = vsel %vm2921, %v11442, %v11451
  %v11453 = vrot.slane %v11374, 2
  %v11454 = vsel %vm2921, %v11445, %v11453
  %v11455 = vrot.slane %v11375, 2
  %v11456 = vsel %vm2921, %v11447, %v11455
  %v11457 = vrot.slane %v11376, 2
  %v11458 = vsel %vm2921, %v11449, %v11457
  %v11459 = vrot.slane %v11377, 2
  %v11460 = vsel %vm2921, %v11451, %v11459
  %v11461 = vrot.slane %v11378, 2
  %v11462 = vsel %vm2921, %v11453, %v11461
  %v11463 = vrot.slane %v11379, 2
  %v11464 = vsel %vm2921, %v11455, %v11463
  %v11465 = vrot.slane %v11380, 2
  %v11466 = vsel %vm2921, %v11457, %v11465
  %v11467 = vrot.slane %v11381, 2
  %v11468 = vsel %vm2921, %v11459, %v11467
  %v11469 = vrot.slane %v11382, 2
  %v11470 = vsel %vm2921, %v11461, %v11469
  %v11471 = vrot.slane %v11383, 2
  %v11472 = vsel %vm2921, %v11463, %v11471
  %v11473 = vrot.slane %v11384, 2
  %v11474 = vsel %vm2921, %v11465, %v11473
  %v11475 = vrot.slane %v11385, 2
  %v11476 = vsel %vm2921, %v11467, %v11475
  %v11477 = vrot.slane %v11386, 2
  %v11478 = vsel %vm2921, %v11469, %v11477
  %v11479 = vrot.slane %v11387, 2
  %v11480 = vsel %vm2921, %v11471, %v11479
  %v11481 = vrot.slane %v11388, 2
  %v11482 = vsel %vm2921, %v11473, %v11481
  %v11483 = vrot.slane %v11389, 2
  %v11484 = vsel %vm2921, %v11475, %v11483
  %v11485 = vrot.slane %v11390, 2
  %v11486 = vsel %vm2921, %v11477, %v11485
  %v11487 = vrot.slane %v11391, 2
  %v11488 = vsel %vm2921, %v11479, %v11487
  %v11489 = vrot.slane %v11392, 2
  %v11490 = vsel %vm2921, %v11481, %v11489
  %v11491 = vrot.slane %v11393, 2
  %v11492 = vsel %vm2921, %v11483, %v11491
  %v11493 = vrot.slane %v11394, 2
  %v11494 = vsel %vm2921, %v11485, %v11493
  %v11495 = vrot.slane %v11395, 2
  %v11496 = vsel %vm2921, %v11487, %v11495
  %v11497 = vrot.slane %v11396, 2
  %v11498 = vsel %vm2921, %v11489, %v11497
  %v11499 = vrot.slane %v11397, 2
  %v11500 = vsel %vm2921, %v11491, %v11499
  %v11501 = vrot.slane %v11398, 2
  %v11502 = vsel %vm2921, %v11493, %v11501
  %v11535 = vadd.f32 %v11296, %v11437
  %v11536 = vadd.f32 %v11297, %v11440
  %v11537 = vadd.f32 %v11298, %v11443
  %v11538 = vadd.f32 %v11299, %v11446
  %v11539 = vadd.f32 %v11300, %v11448
  %v11540 = vadd.f32 %v11301, %v11450
  %v11541 = vadd.f32 %v11302, %v11452
  %v11542 = vadd.f32 %v11303, %v11454
  %v11543 = vadd.f32 %v11304, %v11456
  %v11544 = vadd.f32 %v11305, %v11458
  %v11545 = vadd.f32 %v11306, %v11460
  %v11546 = vadd.f32 %v11307, %v11462
  %v11547 = vadd.f32 %v11308, %v11464
  %v11548 = vadd.f32 %v11309, %v11466
  %v11549 = vadd.f32 %v11310, %v11468
  %v11550 = vadd.f32 %v11311, %v11470
  %v11551 = vadd.f32 %v11312, %v11472
  %v11552 = vadd.f32 %v11313, %v11474
  %v11553 = vadd.f32 %v11314, %v11476
  %v11554 = vadd.f32 %v11315, %v11478
  %v11555 = vadd.f32 %v11316, %v11480
  %v11556 = vadd.f32 %v11317, %v11482
  %v11557 = vadd.f32 %v11318, %v11484
  %v11558 = vadd.f32 %v11319, %v11486
  %v11559 = vadd.f32 %v11320, %v11488
  %v11560 = vadd.f32 %v11321, %v11490
  %v11561 = vadd.f32 %v11322, %v11492
  %v11562 = vadd.f32 %v11323, %v11494
  %v11563 = vadd.f32 %v11324, %v11496
  %v11564 = vadd.f32 %v11325, %v11498
  %v11565 = vadd.f32 %v11326, %v11500
  %v11566 = vadd.f32 %v11327, %v11502
  %v11567 = vld [vmem:[%s577 + $0x40] sm:$0xfc]
  %v11568 = vld [vmem:[%s577 + $0x48] sm:$0xfc]
  %v11569 = vld [vmem:[%s577 + $0x50] sm:$0xfc]
  %v11570 = vld [vmem:[%s577 + $0x58] sm:$0xfc]
  %v11571 = vld [vmem:[%s577 + $0x120] sm:$0xff]
  %v11572 = vld [vmem:[%s577 + $0x128] sm:$0xff]
  %v11573 = vld [vmem:[%s577 + $0x130] sm:$0xff]
  %v11574 = vld [vmem:[%s577 + $0x138] sm:$0xff]
  %v11575 = vld [vmem:[%s577 + $0x140] sm:$0x3]
  %v11576 = vld [vmem:[%s577 + $0x148] sm:$0x3]
  %v11577 = vld [vmem:[%s577 + $0x150] sm:$0x3]
  %v11578 = vld [vmem:[%s577 + $0x158] sm:$0x3]
  %s11579 = scalar_lea.vmem %s1, 197
  %v11580 = vld [vmem:[%s11579] ss:$8 sm:$0xf]
  %v11582 = vlaneseq
  %v11583 = vshrl.u32 %v11582, 7
  %v11584 = vsub.s32 0, %v11583
  %v11585 = vrot.slane %v11580, %v11584
  %v11586 = vlaneseq
  %v11587 = vshrl.u32 %v11586, 7
  %v11588 = vsub.s32 1, %v11587
  %v11589 = vrot.slane %v11580, %v11588
  %v11590 = vlaneseq
  %v11591 = vshrl.u32 %v11590, 7
  %v11592 = vsub.s32 2, %v11591
  %v11593 = vrot.slane %v11580, %v11592
  %v11594 = vlaneseq
  %v11595 = vshrl.u32 %v11594, 7
  %v11596 = vsub.s32 3, %v11595
  %v11597 = vrot.slane %v11580, %v11596
  %v11602 = vmul.f32 %v11567, %v11585
  %v11603 = vmul.f32 %v11568, %v11589
  %v11604 = vmul.f32 %v11569, %v11593
  %v11605 = vmul.f32 %v11570, %v11597
  %v11606 = vmul.f32 %v590, %v11585
  %v11607 = vmul.f32 %v591, %v11589
  %v11608 = vmul.f32 %v592, %v11593
  %v11609 = vmul.f32 %v593, %v11597
  %v11610 = vmul.f32 %v594, %v11585
  %v11611 = vmul.f32 %v595, %v11589
  %v11612 = vmul.f32 %v596, %v11593
  %v11613 = vmul.f32 %v597, %v11597
  %v11614 = vmul.f32 %v598, %v11585
  %v11615 = vmul.f32 %v599, %v11589
  %v11616 = vmul.f32 %v600, %v11593
  %v11617 = vmul.f32 %v601, %v11597
  %v11618 = vmul.f32 %v602, %v11585
  %v11619 = vmul.f32 %v603, %v11589
  %v11620 = vmul.f32 %v604, %v11593
  %v11621 = vmul.f32 %v605, %v11597
  %v11622 = vmul.f32 %v606, %v11585
  %v11623 = vmul.f32 %v607, %v11589
  %v11624 = vmul.f32 %v608, %v11593
  %v11625 = vmul.f32 %v609, %v11597
  %v11626 = vmul.f32 %v5898, %v11585
  %v11627 = vmul.f32 %v5899, %v11589
  %v11628 = vmul.f32 %v5900, %v11593
  %v11629 = vmul.f32 %v5901, %v11597
  %v11630 = vmul.f32 %v11571, %v11585
  %v11631 = vmul.f32 %v11572, %v11589
  %v11632 = vmul.f32 %v11573, %v11593
  %v11633 = vmul.f32 %v11574, %v11597
  %v11634 = vmul.f32 %v11575, %v11585
  %v11635 = vmul.f32 %v11576, %v11589
  %v11636 = vmul.f32 %v11577, %v11593
  %v11637 = vmul.f32 %v11578, %v11597
  %v11674 = vrot.slane %v11602, 2
  %v11675 = vrot.slane %v11606, 2
  %v11676 = vsel %vm2921, %v11674, %v11675
  %v11677 = vrot.slane %v11603, 2
  %v11678 = vrot.slane %v11607, 2
  %v11679 = vsel %vm2921, %v11677, %v11678
  %v11680 = vrot.slane %v11604, 2
  %v11681 = vrot.slane %v11608, 2
  %v11682 = vsel %vm2921, %v11680, %v11681
  %v11683 = vrot.slane %v11605, 2
  %v11684 = vrot.slane %v11609, 2
  %v11685 = vsel %vm2921, %v11683, %v11684
  %v11686 = vrot.slane %v11610, 2
  %v11687 = vsel %vm2921, %v11675, %v11686
  %v11688 = vrot.slane %v11611, 2
  %v11689 = vsel %vm2921, %v11678, %v11688
  %v11690 = vrot.slane %v11612, 2
  %v11691 = vsel %vm2921, %v11681, %v11690
  %v11692 = vrot.slane %v11613, 2
  %v11693 = vsel %vm2921, %v11684, %v11692
  %v11694 = vrot.slane %v11614, 2
  %v11695 = vsel %vm2921, %v11686, %v11694
  %v11696 = vrot.slane %v11615, 2
  %v11697 = vsel %vm2921, %v11688, %v11696
  %v11698 = vrot.slane %v11616, 2
  %v11699 = vsel %vm2921, %v11690, %v11698
  %v11700 = vrot.slane %v11617, 2
  %v11701 = vsel %vm2921, %v11692, %v11700
  %v11702 = vrot.slane %v11618, 2
  %v11703 = vsel %vm2921, %v11694, %v11702
  %v11704 = vrot.slane %v11619, 2
  %v11705 = vsel %vm2921, %v11696, %v11704
  %v11706 = vrot.slane %v11620, 2
  %v11707 = vsel %vm2921, %v11698, %v11706
  %v11708 = vrot.slane %v11621, 2
  %v11709 = vsel %vm2921, %v11700, %v11708
  %v11710 = vrot.slane %v11622, 2
  %v11711 = vsel %vm2921, %v11702, %v11710
  %v11712 = vrot.slane %v11623, 2
  %v11713 = vsel %vm2921, %v11704, %v11712
  %v11714 = vrot.slane %v11624, 2
  %v11715 = vsel %vm2921, %v11706, %v11714
  %v11716 = vrot.slane %v11625, 2
  %v11717 = vsel %vm2921, %v11708, %v11716
  %v11718 = vrot.slane %v11626, 2
  %v11719 = vsel %vm2921, %v11710, %v11718
  %v11720 = vrot.slane %v11627, 2
  %v11721 = vsel %vm2921, %v11712, %v11720
  %v11722 = vrot.slane %v11628, 2
  %v11723 = vsel %vm2921, %v11714, %v11722
  %v11724 = vrot.slane %v11629, 2
  %v11725 = vsel %vm2921, %v11716, %v11724
  %v11726 = vrot.slane %v11630, 2
  %v11727 = vsel %vm2921, %v11718, %v11726
  %v11728 = vrot.slane %v11631, 2
  %v11729 = vsel %vm2921, %v11720, %v11728
  %v11730 = vrot.slane %v11632, 2
  %v11731 = vsel %vm2921, %v11722, %v11730
  %v11732 = vrot.slane %v11633, 2
  %v11733 = vsel %vm2921, %v11724, %v11732
  %v11734 = vrot.slane %v11634, 2
  %v11735 = vsel %vm2921, %v11726, %v11734
  %v11736 = vrot.slane %v11635, 2
  %v11737 = vsel %vm2921, %v11728, %v11736
  %v11738 = vrot.slane %v11636, 2
  %v11739 = vsel %vm2921, %v11730, %v11738
  %v11740 = vrot.slane %v11637, 2
  %v11741 = vsel %vm2921, %v11732, %v11740
  %v11774 = vadd.f32 %v11535, %v11676
  %v11775 = vadd.f32 %v11536, %v11679
  %v11776 = vadd.f32 %v11537, %v11682
  %v11777 = vadd.f32 %v11538, %v11685
  %v11778 = vadd.f32 %v11539, %v11687
  %v11779 = vadd.f32 %v11540, %v11689
  %v11780 = vadd.f32 %v11541, %v11691
  %v11781 = vadd.f32 %v11542, %v11693
  %v11782 = vadd.f32 %v11543, %v11695
  %v11783 = vadd.f32 %v11544, %v11697
  %v11784 = vadd.f32 %v11545, %v11699
  %v11785 = vadd.f32 %v11546, %v11701
  %v11786 = vadd.f32 %v11547, %v11703
  %v11787 = vadd.f32 %v11548, %v11705
  %v11788 = vadd.f32 %v11549, %v11707
  %v11789 = vadd.f32 %v11550, %v11709
  %v11790 = vadd.f32 %v11551, %v11711
  %v11791 = vadd.f32 %v11552, %v11713
  %v11792 = vadd.f32 %v11553, %v11715
  %v11793 = vadd.f32 %v11554, %v11717
  %v11794 = vadd.f32 %v11555, %v11719
  %v11795 = vadd.f32 %v11556, %v11721
  %v11796 = vadd.f32 %v11557, %v11723
  %v11797 = vadd.f32 %v11558, %v11725
  %v11798 = vadd.f32 %v11559, %v11727
  %v11799 = vadd.f32 %v11560, %v11729
  %v11800 = vadd.f32 %v11561, %v11731
  %v11801 = vadd.f32 %v11562, %v11733
  %v11802 = vadd.f32 %v11563, %v11735
  %v11803 = vadd.f32 %v11564, %v11737
  %v11804 = vadd.f32 %v11565, %v11739
  %v11805 = vadd.f32 %v11566, %v11741
  %v11806 = vld [vmem:[%s697 + $0x40] sm:$0xfc]
  %v11807 = vld [vmem:[%s697 + $0x48] sm:$0xfc]
  %v11808 = vld [vmem:[%s697 + $0x50] sm:$0xfc]
  %v11809 = vld [vmem:[%s697 + $0x58] sm:$0xfc]
  %v11810 = vld [vmem:[%s697 + $0x120] sm:$0xff]
  %v11811 = vld [vmem:[%s697 + $0x128] sm:$0xff]
  %v11812 = vld [vmem:[%s697 + $0x130] sm:$0xff]
  %v11813 = vld [vmem:[%s697 + $0x138] sm:$0xff]
  %v11814 = vld [vmem:[%s697 + $0x140] sm:$0x3]
  %v11815 = vld [vmem:[%s697 + $0x148] sm:$0x3]
  %v11816 = vld [vmem:[%s697 + $0x150] sm:$0x3]
  %v11817 = vld [vmem:[%s697 + $0x158] sm:$0x3]
  %s11818 = scalar_lea.vmem %s1, 198
  %v11819 = vld [vmem:[%s11818] ss:$8 sm:$0xf]
  %v11821 = vlaneseq
  %v11822 = vshrl.u32 %v11821, 7
  %v11823 = vsub.s32 0, %v11822
  %v11824 = vrot.slane %v11819, %v11823
  %v11825 = vlaneseq
  %v11826 = vshrl.u32 %v11825, 7
  %v11827 = vsub.s32 1, %v11826
  %v11828 = vrot.slane %v11819, %v11827
  %v11829 = vlaneseq
  %v11830 = vshrl.u32 %v11829, 7
  %v11831 = vsub.s32 2, %v11830
  %v11832 = vrot.slane %v11819, %v11831
  %v11833 = vlaneseq
  %v11834 = vshrl.u32 %v11833, 7
  %v11835 = vsub.s32 3, %v11834
  %v11836 = vrot.slane %v11819, %v11835
  %v11841 = vmul.f32 %v11806, %v11824
  %v11842 = vmul.f32 %v11807, %v11828
  %v11843 = vmul.f32 %v11808, %v11832
  %v11844 = vmul.f32 %v11809, %v11836
  %v11845 = vmul.f32 %v710, %v11824
  %v11846 = vmul.f32 %v711, %v11828
  %v11847 = vmul.f32 %v712, %v11832
  %v11848 = vmul.f32 %v713, %v11836
  %v11849 = vmul.f32 %v714, %v11824
  %v11850 = vmul.f32 %v715, %v11828
  %v11851 = vmul.f32 %v716, %v11832
  %v11852 = vmul.f32 %v717, %v11836
  %v11853 = vmul.f32 %v718, %v11824
  %v11854 = vmul.f32 %v719, %v11828
  %v11855 = vmul.f32 %v720, %v11832
  %v11856 = vmul.f32 %v721, %v11836
  %v11857 = vmul.f32 %v722, %v11824
  %v11858 = vmul.f32 %v723, %v11828
  %v11859 = vmul.f32 %v724, %v11832
  %v11860 = vmul.f32 %v725, %v11836
  %v11861 = vmul.f32 %v726, %v11824
  %v11862 = vmul.f32 %v727, %v11828
  %v11863 = vmul.f32 %v728, %v11832
  %v11864 = vmul.f32 %v729, %v11836
  %v11865 = vmul.f32 %v6137, %v11824
  %v11866 = vmul.f32 %v6138, %v11828
  %v11867 = vmul.f32 %v6139, %v11832
  %v11868 = vmul.f32 %v6140, %v11836
  %v11869 = vmul.f32 %v11810, %v11824
  %v11870 = vmul.f32 %v11811, %v11828
  %v11871 = vmul.f32 %v11812, %v11832
  %v11872 = vmul.f32 %v11813, %v11836
  %v11873 = vmul.f32 %v11814, %v11824
  %v11874 = vmul.f32 %v11815, %v11828
  %v11875 = vmul.f32 %v11816, %v11832
  %v11876 = vmul.f32 %v11817, %v11836
  %v11913 = vrot.slane %v11841, 2
  %v11914 = vrot.slane %v11845, 2
  %v11915 = vsel %vm2921, %v11913, %v11914
  %v11916 = vrot.slane %v11842, 2
  %v11917 = vrot.slane %v11846, 2
  %v11918 = vsel %vm2921, %v11916, %v11917
  %v11919 = vrot.slane %v11843, 2
  %v11920 = vrot.slane %v11847, 2
  %v11921 = vsel %vm2921, %v11919, %v11920
  %v11922 = vrot.slane %v11844, 2
  %v11923 = vrot.slane %v11848, 2
  %v11924 = vsel %vm2921, %v11922, %v11923
  %v11925 = vrot.slane %v11849, 2
  %v11926 = vsel %vm2921, %v11914, %v11925
  %v11927 = vrot.slane %v11850, 2
  %v11928 = vsel %vm2921, %v11917, %v11927
  %v11929 = vrot.slane %v11851, 2
  %v11930 = vsel %vm2921, %v11920, %v11929
  %v11931 = vrot.slane %v11852, 2
  %v11932 = vsel %vm2921, %v11923, %v11931
  %v11933 = vrot.slane %v11853, 2
  %v11934 = vsel %vm2921, %v11925, %v11933
  %v11935 = vrot.slane %v11854, 2
  %v11936 = vsel %vm2921, %v11927, %v11935
  %v11937 = vrot.slane %v11855, 2
  %v11938 = vsel %vm2921, %v11929, %v11937
  %v11939 = vrot.slane %v11856, 2
  %v11940 = vsel %vm2921, %v11931, %v11939
  %v11941 = vrot.slane %v11857, 2
  %v11942 = vsel %vm2921, %v11933, %v11941
  %v11943 = vrot.slane %v11858, 2
  %v11944 = vsel %vm2921, %v11935, %v11943
  %v11945 = vrot.slane %v11859, 2
  %v11946 = vsel %vm2921, %v11937, %v11945
  %v11947 = vrot.slane %v11860, 2
  %v11948 = vsel %vm2921, %v11939, %v11947
  %v11949 = vrot.slane %v11861, 2
  %v11950 = vsel %vm2921, %v11941, %v11949
  %v11951 = vrot.slane %v11862, 2
  %v11952 = vsel %vm2921, %v11943, %v11951
  %v11953 = vrot.slane %v11863, 2
  %v11954 = vsel %vm2921, %v11945, %v11953
  %v11955 = vrot.slane %v11864, 2
  %v11956 = vsel %vm2921, %v11947, %v11955
  %v11957 = vrot.slane %v11865, 2
  %v11958 = vsel %vm2921, %v11949, %v11957
  %v11959 = vrot.slane %v11866, 2
  %v11960 = vsel %vm2921, %v11951, %v11959
  %v11961 = vrot.slane %v11867, 2
  %v11962 = vsel %vm2921, %v11953, %v11961
  %v11963 = vrot.slane %v11868, 2
  %v11964 = vsel %vm2921, %v11955, %v11963
  %v11965 = vrot.slane %v11869, 2
  %v11966 = vsel %vm2921, %v11957, %v11965
  %v11967 = vrot.slane %v11870, 2
  %v11968 = vsel %vm2921, %v11959, %v11967
  %v11969 = vrot.slane %v11871, 2
  %v11970 = vsel %vm2921, %v11961, %v11969
  %v11971 = vrot.slane %v11872, 2
  %v11972 = vsel %vm2921, %v11963, %v11971
  %v11973 = vrot.slane %v11873, 2
  %v11974 = vsel %vm2921, %v11965, %v11973
  %v11975 = vrot.slane %v11874, 2
  %v11976 = vsel %vm2921, %v11967, %v11975
  %v11977 = vrot.slane %v11875, 2
  %v11978 = vsel %vm2921, %v11969, %v11977
  %v11979 = vrot.slane %v11876, 2
  %v11980 = vsel %vm2921, %v11971, %v11979
  %v12013 = vadd.f32 %v11774, %v11915
  %v12014 = vadd.f32 %v11775, %v11918
  %v12015 = vadd.f32 %v11776, %v11921
  %v12016 = vadd.f32 %v11777, %v11924
  %v12017 = vadd.f32 %v11778, %v11926
  %v12018 = vadd.f32 %v11779, %v11928
  %v12019 = vadd.f32 %v11780, %v11930
  %v12020 = vadd.f32 %v11781, %v11932
  %v12021 = vadd.f32 %v11782, %v11934
  %v12022 = vadd.f32 %v11783, %v11936
  %v12023 = vadd.f32 %v11784, %v11938
  %v12024 = vadd.f32 %v11785, %v11940
  %v12025 = vadd.f32 %v11786, %v11942
  %v12026 = vadd.f32 %v11787, %v11944
  %v12027 = vadd.f32 %v11788, %v11946
  %v12028 = vadd.f32 %v11789, %v11948
  %v12029 = vadd.f32 %v11790, %v11950
  %v12030 = vadd.f32 %v11791, %v11952
  %v12031 = vadd.f32 %v11792, %v11954
  %v12032 = vadd.f32 %v11793, %v11956
  %v12033 = vadd.f32 %v11794, %v11958
  %v12034 = vadd.f32 %v11795, %v11960
  %v12035 = vadd.f32 %v11796, %v11962
  %v12036 = vadd.f32 %v11797, %v11964
  %v12037 = vadd.f32 %v11798, %v11966
  %v12038 = vadd.f32 %v11799, %v11968
  %v12039 = vadd.f32 %v11800, %v11970
  %v12040 = vadd.f32 %v11801, %v11972
  %v12041 = vadd.f32 %v11802, %v11974
  %v12042 = vadd.f32 %v11803, %v11976
  %v12043 = vadd.f32 %v11804, %v11978
  %v12044 = vadd.f32 %v11805, %v11980
  %v12045 = vld [vmem:[%s817 + $0x40] sm:$0xfc]
  %v12046 = vld [vmem:[%s817 + $0x48] sm:$0xfc]
  %v12047 = vld [vmem:[%s817 + $0x50] sm:$0xfc]
  %v12048 = vld [vmem:[%s817 + $0x58] sm:$0xfc]
  %v12049 = vld [vmem:[%s817 + $0x120] sm:$0xff]
  %v12050 = vld [vmem:[%s817 + $0x128] sm:$0xff]
  %v12051 = vld [vmem:[%s817 + $0x130] sm:$0xff]
  %v12052 = vld [vmem:[%s817 + $0x138] sm:$0xff]
  %v12053 = vld [vmem:[%s817 + $0x140] sm:$0x3]
  %v12054 = vld [vmem:[%s817 + $0x148] sm:$0x3]
  %v12055 = vld [vmem:[%s817 + $0x150] sm:$0x3]
  %v12056 = vld [vmem:[%s817 + $0x158] sm:$0x3]
  %s12057 = scalar_lea.vmem %s1, 199
  %v12058 = vld [vmem:[%s12057] ss:$8 sm:$0xf]
  %v12060 = vlaneseq
  %v12061 = vshrl.u32 %v12060, 7
  %v12062 = vsub.s32 0, %v12061
  %v12063 = vrot.slane %v12058, %v12062
  %v12064 = vlaneseq
  %v12065 = vshrl.u32 %v12064, 7
  %v12066 = vsub.s32 1, %v12065
  %v12067 = vrot.slane %v12058, %v12066
  %v12068 = vlaneseq
  %v12069 = vshrl.u32 %v12068, 7
  %v12070 = vsub.s32 2, %v12069
  %v12071 = vrot.slane %v12058, %v12070
  %v12072 = vlaneseq
  %v12073 = vshrl.u32 %v12072, 7
  %v12074 = vsub.s32 3, %v12073
  %v12075 = vrot.slane %v12058, %v12074
  %v12080 = vmul.f32 %v12045, %v12063
  %v12081 = vmul.f32 %v12046, %v12067
  %v12082 = vmul.f32 %v12047, %v12071
  %v12083 = vmul.f32 %v12048, %v12075
  %v12084 = vmul.f32 %v830, %v12063
  %v12085 = vmul.f32 %v831, %v12067
  %v12086 = vmul.f32 %v832, %v12071
  %v12087 = vmul.f32 %v833, %v12075
  %v12088 = vmul.f32 %v834, %v12063
  %v12089 = vmul.f32 %v835, %v12067
  %v12090 = vmul.f32 %v836, %v12071
  %v12091 = vmul.f32 %v837, %v12075
  %v12092 = vmul.f32 %v838, %v12063
  %v12093 = vmul.f32 %v839, %v12067
  %v12094 = vmul.f32 %v840, %v12071
  %v12095 = vmul.f32 %v841, %v12075
  %v12096 = vmul.f32 %v842, %v12063
  %v12097 = vmul.f32 %v843, %v12067
  %v12098 = vmul.f32 %v844, %v12071
  %v12099 = vmul.f32 %v845, %v12075
  %v12100 = vmul.f32 %v846, %v12063
  %v12101 = vmul.f32 %v847, %v12067
  %v12102 = vmul.f32 %v848, %v12071
  %v12103 = vmul.f32 %v849, %v12075
  %v12104 = vmul.f32 %v6376, %v12063
  %v12105 = vmul.f32 %v6377, %v12067
  %v12106 = vmul.f32 %v6378, %v12071
  %v12107 = vmul.f32 %v6379, %v12075
  %v12108 = vmul.f32 %v12049, %v12063
  %v12109 = vmul.f32 %v12050, %v12067
  %v12110 = vmul.f32 %v12051, %v12071
  %v12111 = vmul.f32 %v12052, %v12075
  %v12112 = vmul.f32 %v12053, %v12063
  %v12113 = vmul.f32 %v12054, %v12067
  %v12114 = vmul.f32 %v12055, %v12071
  %v12115 = vmul.f32 %v12056, %v12075
  %v12152 = vrot.slane %v12080, 2
  %v12153 = vrot.slane %v12084, 2
  %v12154 = vsel %vm2921, %v12152, %v12153
  %v12155 = vrot.slane %v12081, 2
  %v12156 = vrot.slane %v12085, 2
  %v12157 = vsel %vm2921, %v12155, %v12156
  %v12158 = vrot.slane %v12082, 2
  %v12159 = vrot.slane %v12086, 2
  %v12160 = vsel %vm2921, %v12158, %v12159
  %v12161 = vrot.slane %v12083, 2
  %v12162 = vrot.slane %v12087, 2
  %v12163 = vsel %vm2921, %v12161, %v12162
  %v12164 = vrot.slane %v12088, 2
  %v12165 = vsel %vm2921, %v12153, %v12164
  %v12166 = vrot.slane %v12089, 2
  %v12167 = vsel %vm2921, %v12156, %v12166
  %v12168 = vrot.slane %v12090, 2
  %v12169 = vsel %vm2921, %v12159, %v12168
  %v12170 = vrot.slane %v12091, 2
  %v12171 = vsel %vm2921, %v12162, %v12170
  %v12172 = vrot.slane %v12092, 2
  %v12173 = vsel %vm2921, %v12164, %v12172
  %v12174 = vrot.slane %v12093, 2
  %v12175 = vsel %vm2921, %v12166, %v12174
  %v12176 = vrot.slane %v12094, 2
  %v12177 = vsel %vm2921, %v12168, %v12176
  %v12178 = vrot.slane %v12095, 2
  %v12179 = vsel %vm2921, %v12170, %v12178
  %v12180 = vrot.slane %v12096, 2
  %v12181 = vsel %vm2921, %v12172, %v12180
  %v12182 = vrot.slane %v12097, 2
  %v12183 = vsel %vm2921, %v12174, %v12182
  %v12184 = vrot.slane %v12098, 2
  %v12185 = vsel %vm2921, %v12176, %v12184
  %v12186 = vrot.slane %v12099, 2
  %v12187 = vsel %vm2921, %v12178, %v12186
  %v12188 = vrot.slane %v12100, 2
  %v12189 = vsel %vm2921, %v12180, %v12188
  %v12190 = vrot.slane %v12101, 2
  %v12191 = vsel %vm2921, %v12182, %v12190
  %v12192 = vrot.slane %v12102, 2
  %v12193 = vsel %vm2921, %v12184, %v12192
  %v12194 = vrot.slane %v12103, 2
  %v12195 = vsel %vm2921, %v12186, %v12194
  %v12196 = vrot.slane %v12104, 2
  %v12197 = vsel %vm2921, %v12188, %v12196
  %v12198 = vrot.slane %v12105, 2
  %v12199 = vsel %vm2921, %v12190, %v12198
  %v12200 = vrot.slane %v12106, 2
  %v12201 = vsel %vm2921, %v12192, %v12200
  %v12202 = vrot.slane %v12107, 2
  %v12203 = vsel %vm2921, %v12194, %v12202
  %v12204 = vrot.slane %v12108, 2
  %v12205 = vsel %vm2921, %v12196, %v12204
  %v12206 = vrot.slane %v12109, 2
  %v12207 = vsel %vm2921, %v12198, %v12206
  %v12208 = vrot.slane %v12110, 2
  %v12209 = vsel %vm2921, %v12200, %v12208
  %v12210 = vrot.slane %v12111, 2
  %v12211 = vsel %vm2921, %v12202, %v12210
  %v12212 = vrot.slane %v12112, 2
  %v12213 = vsel %vm2921, %v12204, %v12212
  %v12214 = vrot.slane %v12113, 2
  %v12215 = vsel %vm2921, %v12206, %v12214
  %v12216 = vrot.slane %v12114, 2
  %v12217 = vsel %vm2921, %v12208, %v12216
  %v12218 = vrot.slane %v12115, 2
  %v12219 = vsel %vm2921, %v12210, %v12218
  %v12252 = vadd.f32 %v12013, %v12154
  %v12253 = vadd.f32 %v12014, %v12157
  %v12254 = vadd.f32 %v12015, %v12160
  %v12255 = vadd.f32 %v12016, %v12163
  %v12256 = vadd.f32 %v12017, %v12165
  %v12257 = vadd.f32 %v12018, %v12167
  %v12258 = vadd.f32 %v12019, %v12169
  %v12259 = vadd.f32 %v12020, %v12171
  %v12260 = vadd.f32 %v12021, %v12173
  %v12261 = vadd.f32 %v12022, %v12175
  %v12262 = vadd.f32 %v12023, %v12177
  %v12263 = vadd.f32 %v12024, %v12179
  %v12264 = vadd.f32 %v12025, %v12181
  %v12265 = vadd.f32 %v12026, %v12183
  %v12266 = vadd.f32 %v12027, %v12185
  %v12267 = vadd.f32 %v12028, %v12187
  %v12268 = vadd.f32 %v12029, %v12189
  %v12269 = vadd.f32 %v12030, %v12191
  %v12270 = vadd.f32 %v12031, %v12193
  %v12271 = vadd.f32 %v12032, %v12195
  %v12272 = vadd.f32 %v12033, %v12197
  %v12273 = vadd.f32 %v12034, %v12199
  %v12274 = vadd.f32 %v12035, %v12201
  %v12275 = vadd.f32 %v12036, %v12203
  %v12276 = vadd.f32 %v12037, %v12205
  %v12277 = vadd.f32 %v12038, %v12207
  %v12278 = vadd.f32 %v12039, %v12209
  %v12279 = vadd.f32 %v12040, %v12211
  %v12280 = vadd.f32 %v12041, %v12213
  %v12281 = vadd.f32 %v12042, %v12215
  %v12282 = vadd.f32 %v12043, %v12217
  %v12283 = vadd.f32 %v12044, %v12219
  %v12284 = vld [vmem:[%s0 + $0x40] sm:$0xf8]
  %v12285 = vld [vmem:[%s0 + $0x48] sm:$0xf8]
  %v12286 = vld [vmem:[%s0 + $0x50] sm:$0xf8]
  %v12287 = vld [vmem:[%s0 + $0x58] sm:$0xf8]
  %v12288 = vld [vmem:[%s0 + $0x140] sm:$0x7]
  %v12289 = vld [vmem:[%s0 + $0x148] sm:$0x7]
  %v12290 = vld [vmem:[%s0 + $0x150] sm:$0x7]
  %v12291 = vld [vmem:[%s0 + $0x158] sm:$0x7]
  %s12292 = scalar_lea.vmem %s1, 224
  %v12293 = vld [vmem:[%s12292] ss:$8 sm:$0xf]
  %v12295 = vlaneseq
  %v12296 = vshrl.u32 %v12295, 7
  %v12297 = vsub.s32 0, %v12296
  %v12298 = vrot.slane %v12293, %v12297
  %v12299 = vlaneseq
  %v12300 = vshrl.u32 %v12299, 7
  %v12301 = vsub.s32 1, %v12300
  %v12302 = vrot.slane %v12293, %v12301
  %v12303 = vlaneseq
  %v12304 = vshrl.u32 %v12303, 7
  %v12305 = vsub.s32 2, %v12304
  %v12306 = vrot.slane %v12293, %v12305
  %v12307 = vlaneseq
  %v12308 = vshrl.u32 %v12307, 7
  %v12309 = vsub.s32 3, %v12308
  %v12310 = vrot.slane %v12293, %v12309
  %v12315 = vmul.f32 %v12284, %v12298
  %v12316 = vmul.f32 %v12285, %v12302
  %v12317 = vmul.f32 %v12286, %v12306
  %v12318 = vmul.f32 %v12287, %v12310
  %v12319 = vmul.f32 %v23, %v12298
  %v12320 = vmul.f32 %v24, %v12302
  %v12321 = vmul.f32 %v25, %v12306
  %v12322 = vmul.f32 %v26, %v12310
  %v12323 = vmul.f32 %v27, %v12298
  %v12324 = vmul.f32 %v28, %v12302
  %v12325 = vmul.f32 %v29, %v12306
  %v12326 = vmul.f32 %v30, %v12310
  %v12327 = vmul.f32 %v31, %v12298
  %v12328 = vmul.f32 %v32, %v12302
  %v12329 = vmul.f32 %v33, %v12306
  %v12330 = vmul.f32 %v34, %v12310
  %v12331 = vmul.f32 %v35, %v12298
  %v12332 = vmul.f32 %v36, %v12302
  %v12333 = vmul.f32 %v37, %v12306
  %v12334 = vmul.f32 %v38, %v12310
  %v12335 = vmul.f32 %v39, %v12298
  %v12336 = vmul.f32 %v40, %v12302
  %v12337 = vmul.f32 %v41, %v12306
  %v12338 = vmul.f32 %v42, %v12310
  %v12339 = vmul.f32 %v4703, %v12298
  %v12340 = vmul.f32 %v4704, %v12302
  %v12341 = vmul.f32 %v4705, %v12306
  %v12342 = vmul.f32 %v4706, %v12310
  %v12343 = vmul.f32 %v10376, %v12298
  %v12344 = vmul.f32 %v10377, %v12302
  %v12345 = vmul.f32 %v10378, %v12306
  %v12346 = vmul.f32 %v10379, %v12310
  %v12347 = vmul.f32 %v12288, %v12298
  %v12348 = vmul.f32 %v12289, %v12302
  %v12349 = vmul.f32 %v12290, %v12306
  %v12350 = vmul.f32 %v12291, %v12310
  %v12387 = vrot.slane %v12315, 3
  %v12388 = vrot.slane %v12319, 3
  %v12389 = vsel %vm8594, %v12387, %v12388
  %v12390 = vrot.slane %v12316, 3
  %v12391 = vrot.slane %v12320, 3
  %v12392 = vsel %vm8594, %v12390, %v12391
  %v12393 = vrot.slane %v12317, 3
  %v12394 = vrot.slane %v12321, 3
  %v12395 = vsel %vm8594, %v12393, %v12394
  %v12396 = vrot.slane %v12318, 3
  %v12397 = vrot.slane %v12322, 3
  %v12398 = vsel %vm8594, %v12396, %v12397
  %v12399 = vrot.slane %v12323, 3
  %v12400 = vsel %vm8594, %v12388, %v12399
  %v12401 = vrot.slane %v12324, 3
  %v12402 = vsel %vm8594, %v12391, %v12401
  %v12403 = vrot.slane %v12325, 3
  %v12404 = vsel %vm8594, %v12394, %v12403
  %v12405 = vrot.slane %v12326, 3
  %v12406 = vsel %vm8594, %v12397, %v12405
  %v12407 = vrot.slane %v12327, 3
  %v12408 = vsel %vm8594, %v12399, %v12407
  %v12409 = vrot.slane %v12328, 3
  %v12410 = vsel %vm8594, %v12401, %v12409
  %v12411 = vrot.slane %v12329, 3
  %v12412 = vsel %vm8594, %v12403, %v12411
  %v12413 = vrot.slane %v12330, 3
  %v12414 = vsel %vm8594, %v12405, %v12413
  %v12415 = vrot.slane %v12331, 3
  %v12416 = vsel %vm8594, %v12407, %v12415
  %v12417 = vrot.slane %v12332, 3
  %v12418 = vsel %vm8594, %v12409, %v12417
  %v12419 = vrot.slane %v12333, 3
  %v12420 = vsel %vm8594, %v12411, %v12419
  %v12421 = vrot.slane %v12334, 3
  %v12422 = vsel %vm8594, %v12413, %v12421
  %v12423 = vrot.slane %v12335, 3
  %v12424 = vsel %vm8594, %v12415, %v12423
  %v12425 = vrot.slane %v12336, 3
  %v12426 = vsel %vm8594, %v12417, %v12425
  %v12427 = vrot.slane %v12337, 3
  %v12428 = vsel %vm8594, %v12419, %v12427
  %v12429 = vrot.slane %v12338, 3
  %v12430 = vsel %vm8594, %v12421, %v12429
  %v12431 = vrot.slane %v12339, 3
  %v12432 = vsel %vm8594, %v12423, %v12431
  %v12433 = vrot.slane %v12340, 3
  %v12434 = vsel %vm8594, %v12425, %v12433
  %v12435 = vrot.slane %v12341, 3
  %v12436 = vsel %vm8594, %v12427, %v12435
  %v12437 = vrot.slane %v12342, 3
  %v12438 = vsel %vm8594, %v12429, %v12437
  %v12439 = vrot.slane %v12343, 3
  %v12440 = vsel %vm8594, %v12431, %v12439
  %v12441 = vrot.slane %v12344, 3
  %v12442 = vsel %vm8594, %v12433, %v12441
  %v12443 = vrot.slane %v12345, 3
  %v12444 = vsel %vm8594, %v12435, %v12443
  %v12445 = vrot.slane %v12346, 3
  %v12446 = vsel %vm8594, %v12437, %v12445
  %v12447 = vrot.slane %v12347, 3
  %v12448 = vsel %vm8594, %v12439, %v12447
  %v12449 = vrot.slane %v12348, 3
  %v12450 = vsel %vm8594, %v12441, %v12449
  %v12451 = vrot.slane %v12349, 3
  %v12452 = vsel %vm8594, %v12443, %v12451
  %v12453 = vrot.slane %v12350, 3
  %v12454 = vsel %vm8594, %v12445, %v12453
  %v12487 = vadd.f32 %v12252, %v12389
  %v12488 = vadd.f32 %v12253, %v12392
  %v12489 = vadd.f32 %v12254, %v12395
  %v12490 = vadd.f32 %v12255, %v12398
  %v12491 = vadd.f32 %v12256, %v12400
  %v12492 = vadd.f32 %v12257, %v12402
  %v12493 = vadd.f32 %v12258, %v12404
  %v12494 = vadd.f32 %v12259, %v12406
  %v12495 = vadd.f32 %v12260, %v12408
  %v12496 = vadd.f32 %v12261, %v12410
  %v12497 = vadd.f32 %v12262, %v12412
  %v12498 = vadd.f32 %v12263, %v12414
  %v12499 = vadd.f32 %v12264, %v12416
  %v12500 = vadd.f32 %v12265, %v12418
  %v12501 = vadd.f32 %v12266, %v12420
  %v12502 = vadd.f32 %v12267, %v12422
  %v12503 = vadd.f32 %v12268, %v12424
  %v12504 = vadd.f32 %v12269, %v12426
  %v12505 = vadd.f32 %v12270, %v12428
  %v12506 = vadd.f32 %v12271, %v12430
  %v12507 = vadd.f32 %v12272, %v12432
  %v12508 = vadd.f32 %v12273, %v12434
  %v12509 = vadd.f32 %v12274, %v12436
  %v12510 = vadd.f32 %v12275, %v12438
  %v12511 = vadd.f32 %v12276, %v12440
  %v12512 = vadd.f32 %v12277, %v12442
  %v12513 = vadd.f32 %v12278, %v12444
  %v12514 = vadd.f32 %v12279, %v12446
  %v12515 = vadd.f32 %v12280, %v12448
  %v12516 = vadd.f32 %v12281, %v12450
  %v12517 = vadd.f32 %v12282, %v12452
  %v12518 = vadd.f32 %v12283, %v12454
  %v12519 = vld [vmem:[%s97 + $0x40] sm:$0xf8]
  %v12520 = vld [vmem:[%s97 + $0x48] sm:$0xf8]
  %v12521 = vld [vmem:[%s97 + $0x50] sm:$0xf8]
  %v12522 = vld [vmem:[%s97 + $0x58] sm:$0xf8]
  %v12523 = vld [vmem:[%s97 + $0x140] sm:$0x7]
  %v12524 = vld [vmem:[%s97 + $0x148] sm:$0x7]
  %v12525 = vld [vmem:[%s97 + $0x150] sm:$0x7]
  %v12526 = vld [vmem:[%s97 + $0x158] sm:$0x7]
  %s12527 = scalar_lea.vmem %s1, 225
  %v12528 = vld [vmem:[%s12527] ss:$8 sm:$0xf]
  %v12530 = vlaneseq
  %v12531 = vshrl.u32 %v12530, 7
  %v12532 = vsub.s32 0, %v12531
  %v12533 = vrot.slane %v12528, %v12532
  %v12534 = vlaneseq
  %v12535 = vshrl.u32 %v12534, 7
  %v12536 = vsub.s32 1, %v12535
  %v12537 = vrot.slane %v12528, %v12536
  %v12538 = vlaneseq
  %v12539 = vshrl.u32 %v12538, 7
  %v12540 = vsub.s32 2, %v12539
  %v12541 = vrot.slane %v12528, %v12540
  %v12542 = vlaneseq
  %v12543 = vshrl.u32 %v12542, 7
  %v12544 = vsub.s32 3, %v12543
  %v12545 = vrot.slane %v12528, %v12544
  %v12550 = vmul.f32 %v12519, %v12533
  %v12551 = vmul.f32 %v12520, %v12537
  %v12552 = vmul.f32 %v12521, %v12541
  %v12553 = vmul.f32 %v12522, %v12545
  %v12554 = vmul.f32 %v110, %v12533
  %v12555 = vmul.f32 %v111, %v12537
  %v12556 = vmul.f32 %v112, %v12541
  %v12557 = vmul.f32 %v113, %v12545
  %v12558 = vmul.f32 %v114, %v12533
  %v12559 = vmul.f32 %v115, %v12537
  %v12560 = vmul.f32 %v116, %v12541
  %v12561 = vmul.f32 %v117, %v12545
  %v12562 = vmul.f32 %v118, %v12533
  %v12563 = vmul.f32 %v119, %v12537
  %v12564 = vmul.f32 %v120, %v12541
  %v12565 = vmul.f32 %v121, %v12545
  %v12566 = vmul.f32 %v122, %v12533
  %v12567 = vmul.f32 %v123, %v12537
  %v12568 = vmul.f32 %v124, %v12541
  %v12569 = vmul.f32 %v125, %v12545
  %v12570 = vmul.f32 %v126, %v12533
  %v12571 = vmul.f32 %v127, %v12537
  %v12572 = vmul.f32 %v128, %v12541
  %v12573 = vmul.f32 %v129, %v12545
  %v12574 = vmul.f32 %v4942, %v12533
  %v12575 = vmul.f32 %v4943, %v12537
  %v12576 = vmul.f32 %v4944, %v12541
  %v12577 = vmul.f32 %v4945, %v12545
  %v12578 = vmul.f32 %v10615, %v12533
  %v12579 = vmul.f32 %v10616, %v12537
  %v12580 = vmul.f32 %v10617, %v12541
  %v12581 = vmul.f32 %v10618, %v12545
  %v12582 = vmul.f32 %v12523, %v12533
  %v12583 = vmul.f32 %v12524, %v12537
  %v12584 = vmul.f32 %v12525, %v12541
  %v12585 = vmul.f32 %v12526, %v12545
  %v12622 = vrot.slane %v12550, 3
  %v12623 = vrot.slane %v12554, 3
  %v12624 = vsel %vm8594, %v12622, %v12623
  %v12625 = vrot.slane %v12551, 3
  %v12626 = vrot.slane %v12555, 3
  %v12627 = vsel %vm8594, %v12625, %v12626
  %v12628 = vrot.slane %v12552, 3
  %v12629 = vrot.slane %v12556, 3
  %v12630 = vsel %vm8594, %v12628, %v12629
  %v12631 = vrot.slane %v12553, 3
  %v12632 = vrot.slane %v12557, 3
  %v12633 = vsel %vm8594, %v12631, %v12632
  %v12634 = vrot.slane %v12558, 3
  %v12635 = vsel %vm8594, %v12623, %v12634
  %v12636 = vrot.slane %v12559, 3
  %v12637 = vsel %vm8594, %v12626, %v12636
  %v12638 = vrot.slane %v12560, 3
  %v12639 = vsel %vm8594, %v12629, %v12638
  %v12640 = vrot.slane %v12561, 3
  %v12641 = vsel %vm8594, %v12632, %v12640
  %v12642 = vrot.slane %v12562, 3
  %v12643 = vsel %vm8594, %v12634, %v12642
  %v12644 = vrot.slane %v12563, 3
  %v12645 = vsel %vm8594, %v12636, %v12644
  %v12646 = vrot.slane %v12564, 3
  %v12647 = vsel %vm8594, %v12638, %v12646
  %v12648 = vrot.slane %v12565, 3
  %v12649 = vsel %vm8594, %v12640, %v12648
  %v12650 = vrot.slane %v12566, 3
  %v12651 = vsel %vm8594, %v12642, %v12650
  %v12652 = vrot.slane %v12567, 3
  %v12653 = vsel %vm8594, %v12644, %v12652
  %v12654 = vrot.slane %v12568, 3
  %v12655 = vsel %vm8594, %v12646, %v12654
  %v12656 = vrot.slane %v12569, 3
  %v12657 = vsel %vm8594, %v12648, %v12656
  %v12658 = vrot.slane %v12570, 3
  %v12659 = vsel %vm8594, %v12650, %v12658
  %v12660 = vrot.slane %v12571, 3
  %v12661 = vsel %vm8594, %v12652, %v12660
  %v12662 = vrot.slane %v12572, 3
  %v12663 = vsel %vm8594, %v12654, %v12662
  %v12664 = vrot.slane %v12573, 3
  %v12665 = vsel %vm8594, %v12656, %v12664
  %v12666 = vrot.slane %v12574, 3
  %v12667 = vsel %vm8594, %v12658, %v12666
  %v12668 = vrot.slane %v12575, 3
  %v12669 = vsel %vm8594, %v12660, %v12668
  %v12670 = vrot.slane %v12576, 3
  %v12671 = vsel %vm8594, %v12662, %v12670
  %v12672 = vrot.slane %v12577, 3
  %v12673 = vsel %vm8594, %v12664, %v12672
  %v12674 = vrot.slane %v12578, 3
  %v12675 = vsel %vm8594, %v12666, %v12674
  %v12676 = vrot.slane %v12579, 3
  %v12677 = vsel %vm8594, %v12668, %v12676
  %v12678 = vrot.slane %v12580, 3
  %v12679 = vsel %vm8594, %v12670, %v12678
  %v12680 = vrot.slane %v12581, 3
  %v12681 = vsel %vm8594, %v12672, %v12680
  %v12682 = vrot.slane %v12582, 3
  %v12683 = vsel %vm8594, %v12674, %v12682
  %v12684 = vrot.slane %v12583, 3
  %v12685 = vsel %vm8594, %v12676, %v12684
  %v12686 = vrot.slane %v12584, 3
  %v12687 = vsel %vm8594, %v12678, %v12686
  %v12688 = vrot.slane %v12585, 3
  %v12689 = vsel %vm8594, %v12680, %v12688
  %v12722 = vadd.f32 %v12487, %v12624
  %v12723 = vadd.f32 %v12488, %v12627
  %v12724 = vadd.f32 %v12489, %v12630
  %v12725 = vadd.f32 %v12490, %v12633
  %v12726 = vadd.f32 %v12491, %v12635
  %v12727 = vadd.f32 %v12492, %v12637
  %v12728 = vadd.f32 %v12493, %v12639
  %v12729 = vadd.f32 %v12494, %v12641
  %v12730 = vadd.f32 %v12495, %v12643
  %v12731 = vadd.f32 %v12496, %v12645
  %v12732 = vadd.f32 %v12497, %v12647
  %v12733 = vadd.f32 %v12498, %v12649
  %v12734 = vadd.f32 %v12499, %v12651
  %v12735 = vadd.f32 %v12500, %v12653
  %v12736 = vadd.f32 %v12501, %v12655
  %v12737 = vadd.f32 %v12502, %v12657
  %v12738 = vadd.f32 %v12503, %v12659
  %v12739 = vadd.f32 %v12504, %v12661
  %v12740 = vadd.f32 %v12505, %v12663
  %v12741 = vadd.f32 %v12506, %v12665
  %v12742 = vadd.f32 %v12507, %v12667
  %v12743 = vadd.f32 %v12508, %v12669
  %v12744 = vadd.f32 %v12509, %v12671
  %v12745 = vadd.f32 %v12510, %v12673
  %v12746 = vadd.f32 %v12511, %v12675
  %v12747 = vadd.f32 %v12512, %v12677
  %v12748 = vadd.f32 %v12513, %v12679
  %v12749 = vadd.f32 %v12514, %v12681
  %v12750 = vadd.f32 %v12515, %v12683
  %v12751 = vadd.f32 %v12516, %v12685
  %v12752 = vadd.f32 %v12517, %v12687
  %v12753 = vadd.f32 %v12518, %v12689
  %v12754 = vld [vmem:[%s217 + $0x40] sm:$0xf8]
  %v12755 = vld [vmem:[%s217 + $0x48] sm:$0xf8]
  %v12756 = vld [vmem:[%s217 + $0x50] sm:$0xf8]
  %v12757 = vld [vmem:[%s217 + $0x58] sm:$0xf8]
  %v12758 = vld [vmem:[%s217 + $0x140] sm:$0x7]
  %v12759 = vld [vmem:[%s217 + $0x148] sm:$0x7]
  %v12760 = vld [vmem:[%s217 + $0x150] sm:$0x7]
  %v12761 = vld [vmem:[%s217 + $0x158] sm:$0x7]
  %s12762 = scalar_lea.vmem %s1, 226
  %v12763 = vld [vmem:[%s12762] ss:$8 sm:$0xf]
  %v12765 = vlaneseq
  %v12766 = vshrl.u32 %v12765, 7
  %v12767 = vsub.s32 0, %v12766
  %v12768 = vrot.slane %v12763, %v12767
  %v12769 = vlaneseq
  %v12770 = vshrl.u32 %v12769, 7
  %v12771 = vsub.s32 1, %v12770
  %v12772 = vrot.slane %v12763, %v12771
  %v12773 = vlaneseq
  %v12774 = vshrl.u32 %v12773, 7
  %v12775 = vsub.s32 2, %v12774
  %v12776 = vrot.slane %v12763, %v12775
  %v12777 = vlaneseq
  %v12778 = vshrl.u32 %v12777, 7
  %v12779 = vsub.s32 3, %v12778
  %v12780 = vrot.slane %v12763, %v12779
  %v12785 = vmul.f32 %v12754, %v12768
  %v12786 = vmul.f32 %v12755, %v12772
  %v12787 = vmul.f32 %v12756, %v12776
  %v12788 = vmul.f32 %v12757, %v12780
  %v12789 = vmul.f32 %v230, %v12768
  %v12790 = vmul.f32 %v231, %v12772
  %v12791 = vmul.f32 %v232, %v12776
  %v12792 = vmul.f32 %v233, %v12780
  %v12793 = vmul.f32 %v234, %v12768
  %v12794 = vmul.f32 %v235, %v12772
  %v12795 = vmul.f32 %v236, %v12776
  %v12796 = vmul.f32 %v237, %v12780
  %v12797 = vmul.f32 %v238, %v12768
  %v12798 = vmul.f32 %v239, %v12772
  %v12799 = vmul.f32 %v240, %v12776
  %v12800 = vmul.f32 %v241, %v12780
  %v12801 = vmul.f32 %v242, %v12768
  %v12802 = vmul.f32 %v243, %v12772
  %v12803 = vmul.f32 %v244, %v12776
  %v12804 = vmul.f32 %v245, %v12780
  %v12805 = vmul.f32 %v246, %v12768
  %v12806 = vmul.f32 %v247, %v12772
  %v12807 = vmul.f32 %v248, %v12776
  %v12808 = vmul.f32 %v249, %v12780
  %v12809 = vmul.f32 %v5181, %v12768
  %v12810 = vmul.f32 %v5182, %v12772
  %v12811 = vmul.f32 %v5183, %v12776
  %v12812 = vmul.f32 %v5184, %v12780
  %v12813 = vmul.f32 %v10854, %v12768
  %v12814 = vmul.f32 %v10855, %v12772
  %v12815 = vmul.f32 %v10856, %v12776
  %v12816 = vmul.f32 %v10857, %v12780
  %v12817 = vmul.f32 %v12758, %v12768
  %v12818 = vmul.f32 %v12759, %v12772
  %v12819 = vmul.f32 %v12760, %v12776
  %v12820 = vmul.f32 %v12761, %v12780
  %v12857 = vrot.slane %v12785, 3
  %v12858 = vrot.slane %v12789, 3
  %v12859 = vsel %vm8594, %v12857, %v12858
  %v12860 = vrot.slane %v12786, 3
  %v12861 = vrot.slane %v12790, 3
  %v12862 = vsel %vm8594, %v12860, %v12861
  %v12863 = vrot.slane %v12787, 3
  %v12864 = vrot.slane %v12791, 3
  %v12865 = vsel %vm8594, %v12863, %v12864
  %v12866 = vrot.slane %v12788, 3
  %v12867 = vrot.slane %v12792, 3
  %v12868 = vsel %vm8594, %v12866, %v12867
  %v12869 = vrot.slane %v12793, 3
  %v12870 = vsel %vm8594, %v12858, %v12869
  %v12871 = vrot.slane %v12794, 3
  %v12872 = vsel %vm8594, %v12861, %v12871
  %v12873 = vrot.slane %v12795, 3
  %v12874 = vsel %vm8594, %v12864, %v12873
  %v12875 = vrot.slane %v12796, 3
  %v12876 = vsel %vm8594, %v12867, %v12875
  %v12877 = vrot.slane %v12797, 3
  %v12878 = vsel %vm8594, %v12869, %v12877
  %v12879 = vrot.slane %v12798, 3
  %v12880 = vsel %vm8594, %v12871, %v12879
  %v12881 = vrot.slane %v12799, 3
  %v12882 = vsel %vm8594, %v12873, %v12881
  %v12883 = vrot.slane %v12800, 3
  %v12884 = vsel %vm8594, %v12875, %v12883
  %v12885 = vrot.slane %v12801, 3
  %v12886 = vsel %vm8594, %v12877, %v12885
  %v12887 = vrot.slane %v12802, 3
  %v12888 = vsel %vm8594, %v12879, %v12887
  %v12889 = vrot.slane %v12803, 3
  %v12890 = vsel %vm8594, %v12881, %v12889
  %v12891 = vrot.slane %v12804, 3
  %v12892 = vsel %vm8594, %v12883, %v12891
  %v12893 = vrot.slane %v12805, 3
  %v12894 = vsel %vm8594, %v12885, %v12893
  %v12895 = vrot.slane %v12806, 3
  %v12896 = vsel %vm8594, %v12887, %v12895
  %v12897 = vrot.slane %v12807, 3
  %v12898 = vsel %vm8594, %v12889, %v12897
  %v12899 = vrot.slane %v12808, 3
  %v12900 = vsel %vm8594, %v12891, %v12899
  %v12901 = vrot.slane %v12809, 3
  %v12902 = vsel %vm8594, %v12893, %v12901
  %v12903 = vrot.slane %v12810, 3
  %v12904 = vsel %vm8594, %v12895, %v12903
  %v12905 = vrot.slane %v12811, 3
  %v12906 = vsel %vm8594, %v12897, %v12905
  %v12907 = vrot.slane %v12812, 3
  %v12908 = vsel %vm8594, %v12899, %v12907
  %v12909 = vrot.slane %v12813, 3
  %v12910 = vsel %vm8594, %v12901, %v12909
  %v12911 = vrot.slane %v12814, 3
  %v12912 = vsel %vm8594, %v12903, %v12911
  %v12913 = vrot.slane %v12815, 3
  %v12914 = vsel %vm8594, %v12905, %v12913
  %v12915 = vrot.slane %v12816, 3
  %v12916 = vsel %vm8594, %v12907, %v12915
  %v12917 = vrot.slane %v12817, 3
  %v12918 = vsel %vm8594, %v12909, %v12917
  %v12919 = vrot.slane %v12818, 3
  %v12920 = vsel %vm8594, %v12911, %v12919
  %v12921 = vrot.slane %v12819, 3
  %v12922 = vsel %vm8594, %v12913, %v12921
  %v12923 = vrot.slane %v12820, 3
  %v12924 = vsel %vm8594, %v12915, %v12923
  %v12957 = vadd.f32 %v12722, %v12859
  %v12958 = vadd.f32 %v12723, %v12862
  %v12959 = vadd.f32 %v12724, %v12865
  %v12960 = vadd.f32 %v12725, %v12868
  %v12961 = vadd.f32 %v12726, %v12870
  %v12962 = vadd.f32 %v12727, %v12872
  %v12963 = vadd.f32 %v12728, %v12874
  %v12964 = vadd.f32 %v12729, %v12876
  %v12965 = vadd.f32 %v12730, %v12878
  %v12966 = vadd.f32 %v12731, %v12880
  %v12967 = vadd.f32 %v12732, %v12882
  %v12968 = vadd.f32 %v12733, %v12884
  %v12969 = vadd.f32 %v12734, %v12886
  %v12970 = vadd.f32 %v12735, %v12888
  %v12971 = vadd.f32 %v12736, %v12890
  %v12972 = vadd.f32 %v12737, %v12892
  %v12973 = vadd.f32 %v12738, %v12894
  %v12974 = vadd.f32 %v12739, %v12896
  %v12975 = vadd.f32 %v12740, %v12898
  %v12976 = vadd.f32 %v12741, %v12900
  %v12977 = vadd.f32 %v12742, %v12902
  %v12978 = vadd.f32 %v12743, %v12904
  %v12979 = vadd.f32 %v12744, %v12906
  %v12980 = vadd.f32 %v12745, %v12908
  %v12981 = vadd.f32 %v12746, %v12910
  %v12982 = vadd.f32 %v12747, %v12912
  %v12983 = vadd.f32 %v12748, %v12914
  %v12984 = vadd.f32 %v12749, %v12916
  %v12985 = vadd.f32 %v12750, %v12918
  %v12986 = vadd.f32 %v12751, %v12920
  %v12987 = vadd.f32 %v12752, %v12922
  %v12988 = vadd.f32 %v12753, %v12924
  %v12989 = vld [vmem:[%s337 + $0x40] sm:$0xf8]
  %v12990 = vld [vmem:[%s337 + $0x48] sm:$0xf8]
  %v12991 = vld [vmem:[%s337 + $0x50] sm:$0xf8]
  %v12992 = vld [vmem:[%s337 + $0x58] sm:$0xf8]
  %v12993 = vld [vmem:[%s337 + $0x140] sm:$0x7]
  %v12994 = vld [vmem:[%s337 + $0x148] sm:$0x7]
  %v12995 = vld [vmem:[%s337 + $0x150] sm:$0x7]
  %v12996 = vld [vmem:[%s337 + $0x158] sm:$0x7]
  %s12997 = scalar_lea.vmem %s1, 227
  %v12998 = vld [vmem:[%s12997] ss:$8 sm:$0xf]
  %v13000 = vlaneseq
  %v13001 = vshrl.u32 %v13000, 7
  %v13002 = vsub.s32 0, %v13001
  %v13003 = vrot.slane %v12998, %v13002
  %v13004 = vlaneseq
  %v13005 = vshrl.u32 %v13004, 7
  %v13006 = vsub.s32 1, %v13005
  %v13007 = vrot.slane %v12998, %v13006
  %v13008 = vlaneseq
  %v13009 = vshrl.u32 %v13008, 7
  %v13010 = vsub.s32 2, %v13009
  %v13011 = vrot.slane %v12998, %v13010
  %v13012 = vlaneseq
  %v13013 = vshrl.u32 %v13012, 7
  %v13014 = vsub.s32 3, %v13013
  %v13015 = vrot.slane %v12998, %v13014
  %v13020 = vmul.f32 %v12989, %v13003
  %v13021 = vmul.f32 %v12990, %v13007
  %v13022 = vmul.f32 %v12991, %v13011
  %v13023 = vmul.f32 %v12992, %v13015
  %v13024 = vmul.f32 %v350, %v13003
  %v13025 = vmul.f32 %v351, %v13007
  %v13026 = vmul.f32 %v352, %v13011
  %v13027 = vmul.f32 %v353, %v13015
  %v13028 = vmul.f32 %v354, %v13003
  %v13029 = vmul.f32 %v355, %v13007
  %v13030 = vmul.f32 %v356, %v13011
  %v13031 = vmul.f32 %v357, %v13015
  %v13032 = vmul.f32 %v358, %v13003
  %v13033 = vmul.f32 %v359, %v13007
  %v13034 = vmul.f32 %v360, %v13011
  %v13035 = vmul.f32 %v361, %v13015
  %v13036 = vmul.f32 %v362, %v13003
  %v13037 = vmul.f32 %v363, %v13007
  %v13038 = vmul.f32 %v364, %v13011
  %v13039 = vmul.f32 %v365, %v13015
  %v13040 = vmul.f32 %v366, %v13003
  %v13041 = vmul.f32 %v367, %v13007
  %v13042 = vmul.f32 %v368, %v13011
  %v13043 = vmul.f32 %v369, %v13015
  %v13044 = vmul.f32 %v5420, %v13003
  %v13045 = vmul.f32 %v5421, %v13007
  %v13046 = vmul.f32 %v5422, %v13011
  %v13047 = vmul.f32 %v5423, %v13015
  %v13048 = vmul.f32 %v11093, %v13003
  %v13049 = vmul.f32 %v11094, %v13007
  %v13050 = vmul.f32 %v11095, %v13011
  %v13051 = vmul.f32 %v11096, %v13015
  %v13052 = vmul.f32 %v12993, %v13003
  %v13053 = vmul.f32 %v12994, %v13007
  %v13054 = vmul.f32 %v12995, %v13011
  %v13055 = vmul.f32 %v12996, %v13015
  %v13092 = vrot.slane %v13020, 3
  %v13093 = vrot.slane %v13024, 3
  %v13094 = vsel %vm8594, %v13092, %v13093
  %v13095 = vrot.slane %v13021, 3
  %v13096 = vrot.slane %v13025, 3
  %v13097 = vsel %vm8594, %v13095, %v13096
  %v13098 = vrot.slane %v13022, 3
  %v13099 = vrot.slane %v13026, 3
  %v13100 = vsel %vm8594, %v13098, %v13099
  %v13101 = vrot.slane %v13023, 3
  %v13102 = vrot.slane %v13027, 3
  %v13103 = vsel %vm8594, %v13101, %v13102
  %v13104 = vrot.slane %v13028, 3
  %v13105 = vsel %vm8594, %v13093, %v13104
  %v13106 = vrot.slane %v13029, 3
  %v13107 = vsel %vm8594, %v13096, %v13106
  %v13108 = vrot.slane %v13030, 3
  %v13109 = vsel %vm8594, %v13099, %v13108
  %v13110 = vrot.slane %v13031, 3
  %v13111 = vsel %vm8594, %v13102, %v13110
  %v13112 = vrot.slane %v13032, 3
  %v13113 = vsel %vm8594, %v13104, %v13112
  %v13114 = vrot.slane %v13033, 3
  %v13115 = vsel %vm8594, %v13106, %v13114
  %v13116 = vrot.slane %v13034, 3
  %v13117 = vsel %vm8594, %v13108, %v13116
  %v13118 = vrot.slane %v13035, 3
  %v13119 = vsel %vm8594, %v13110, %v13118
  %v13120 = vrot.slane %v13036, 3
  %v13121 = vsel %vm8594, %v13112, %v13120
  %v13122 = vrot.slane %v13037, 3
  %v13123 = vsel %vm8594, %v13114, %v13122
  %v13124 = vrot.slane %v13038, 3
  %v13125 = vsel %vm8594, %v13116, %v13124
  %v13126 = vrot.slane %v13039, 3
  %v13127 = vsel %vm8594, %v13118, %v13126
  %v13128 = vrot.slane %v13040, 3
  %v13129 = vsel %vm8594, %v13120, %v13128
  %v13130 = vrot.slane %v13041, 3
  %v13131 = vsel %vm8594, %v13122, %v13130
  %v13132 = vrot.slane %v13042, 3
  %v13133 = vsel %vm8594, %v13124, %v13132
  %v13134 = vrot.slane %v13043, 3
  %v13135 = vsel %vm8594, %v13126, %v13134
  %v13136 = vrot.slane %v13044, 3
  %v13137 = vsel %vm8594, %v13128, %v13136
  %v13138 = vrot.slane %v13045, 3
  %v13139 = vsel %vm8594, %v13130, %v13138
  %v13140 = vrot.slane %v13046, 3
  %v13141 = vsel %vm8594, %v13132, %v13140
  %v13142 = vrot.slane %v13047, 3
  %v13143 = vsel %vm8594, %v13134, %v13142
  %v13144 = vrot.slane %v13048, 3
  %v13145 = vsel %vm8594, %v13136, %v13144
  %v13146 = vrot.slane %v13049, 3
  %v13147 = vsel %vm8594, %v13138, %v13146
  %v13148 = vrot.slane %v13050, 3
  %v13149 = vsel %vm8594, %v13140, %v13148
  %v13150 = vrot.slane %v13051, 3
  %v13151 = vsel %vm8594, %v13142, %v13150
  %v13152 = vrot.slane %v13052, 3
  %v13153 = vsel %vm8594, %v13144, %v13152
  %v13154 = vrot.slane %v13053, 3
  %v13155 = vsel %vm8594, %v13146, %v13154
  %v13156 = vrot.slane %v13054, 3
  %v13157 = vsel %vm8594, %v13148, %v13156
  %v13158 = vrot.slane %v13055, 3
  %v13159 = vsel %vm8594, %v13150, %v13158
  %v13192 = vadd.f32 %v12957, %v13094
  %v13193 = vadd.f32 %v12958, %v13097
  %v13194 = vadd.f32 %v12959, %v13100
  %v13195 = vadd.f32 %v12960, %v13103
  %v13196 = vadd.f32 %v12961, %v13105
  %v13197 = vadd.f32 %v12962, %v13107
  %v13198 = vadd.f32 %v12963, %v13109
  %v13199 = vadd.f32 %v12964, %v13111
  %v13200 = vadd.f32 %v12965, %v13113
  %v13201 = vadd.f32 %v12966, %v13115
  %v13202 = vadd.f32 %v12967, %v13117
  %v13203 = vadd.f32 %v12968, %v13119
  %v13204 = vadd.f32 %v12969, %v13121
  %v13205 = vadd.f32 %v12970, %v13123
  %v13206 = vadd.f32 %v12971, %v13125
  %v13207 = vadd.f32 %v12972, %v13127
  %v13208 = vadd.f32 %v12973, %v13129
  %v13209 = vadd.f32 %v12974, %v13131
  %v13210 = vadd.f32 %v12975, %v13133
  %v13211 = vadd.f32 %v12976, %v13135
  %v13212 = vadd.f32 %v12977, %v13137
  %v13213 = vadd.f32 %v12978, %v13139
  %v13214 = vadd.f32 %v12979, %v13141
  %v13215 = vadd.f32 %v12980, %v13143
  %v13216 = vadd.f32 %v12981, %v13145
  %v13217 = vadd.f32 %v12982, %v13147
  %v13218 = vadd.f32 %v12983, %v13149
  %v13219 = vadd.f32 %v12984, %v13151
  %v13220 = vadd.f32 %v12985, %v13153
  %v13221 = vadd.f32 %v12986, %v13155
  %v13222 = vadd.f32 %v12987, %v13157
  %v13223 = vadd.f32 %v12988, %v13159
  %v13224 = vld [vmem:[%s457 + $0x40] sm:$0xf8]
  %v13225 = vld [vmem:[%s457 + $0x48] sm:$0xf8]
  %v13226 = vld [vmem:[%s457 + $0x50] sm:$0xf8]
  %v13227 = vld [vmem:[%s457 + $0x58] sm:$0xf8]
  %v13228 = vld [vmem:[%s457 + $0x140] sm:$0x7]
  %v13229 = vld [vmem:[%s457 + $0x148] sm:$0x7]
  %v13230 = vld [vmem:[%s457 + $0x150] sm:$0x7]
  %v13231 = vld [vmem:[%s457 + $0x158] sm:$0x7]
  %s13232 = scalar_lea.vmem %s1, 228
  %v13233 = vld [vmem:[%s13232] ss:$8 sm:$0xf]
  %v13235 = vlaneseq
  %v13236 = vshrl.u32 %v13235, 7
  %v13237 = vsub.s32 0, %v13236
  %v13238 = vrot.slane %v13233, %v13237
  %v13239 = vlaneseq
  %v13240 = vshrl.u32 %v13239, 7
  %v13241 = vsub.s32 1, %v13240
  %v13242 = vrot.slane %v13233, %v13241
  %v13243 = vlaneseq
  %v13244 = vshrl.u32 %v13243, 7
  %v13245 = vsub.s32 2, %v13244
  %v13246 = vrot.slane %v13233, %v13245
  %v13247 = vlaneseq
  %v13248 = vshrl.u32 %v13247, 7
  %v13249 = vsub.s32 3, %v13248
  %v13250 = vrot.slane %v13233, %v13249
  %v13255 = vmul.f32 %v13224, %v13238
  %v13256 = vmul.f32 %v13225, %v13242
  %v13257 = vmul.f32 %v13226, %v13246
  %v13258 = vmul.f32 %v13227, %v13250
  %v13259 = vmul.f32 %v470, %v13238
  %v13260 = vmul.f32 %v471, %v13242
  %v13261 = vmul.f32 %v472, %v13246
  %v13262 = vmul.f32 %v473, %v13250
  %v13263 = vmul.f32 %v474, %v13238
  %v13264 = vmul.f32 %v475, %v13242
  %v13265 = vmul.f32 %v476, %v13246
  %v13266 = vmul.f32 %v477, %v13250
  %v13267 = vmul.f32 %v478, %v13238
  %v13268 = vmul.f32 %v479, %v13242
  %v13269 = vmul.f32 %v480, %v13246
  %v13270 = vmul.f32 %v481, %v13250
  %v13271 = vmul.f32 %v482, %v13238
  %v13272 = vmul.f32 %v483, %v13242
  %v13273 = vmul.f32 %v484, %v13246
  %v13274 = vmul.f32 %v485, %v13250
  %v13275 = vmul.f32 %v486, %v13238
  %v13276 = vmul.f32 %v487, %v13242
  %v13277 = vmul.f32 %v488, %v13246
  %v13278 = vmul.f32 %v489, %v13250
  %v13279 = vmul.f32 %v5659, %v13238
  %v13280 = vmul.f32 %v5660, %v13242
  %v13281 = vmul.f32 %v5661, %v13246
  %v13282 = vmul.f32 %v5662, %v13250
  %v13283 = vmul.f32 %v11332, %v13238
  %v13284 = vmul.f32 %v11333, %v13242
  %v13285 = vmul.f32 %v11334, %v13246
  %v13286 = vmul.f32 %v11335, %v13250
  %v13287 = vmul.f32 %v13228, %v13238
  %v13288 = vmul.f32 %v13229, %v13242
  %v13289 = vmul.f32 %v13230, %v13246
  %v13290 = vmul.f32 %v13231, %v13250
  %v13327 = vrot.slane %v13255, 3
  %v13328 = vrot.slane %v13259, 3
  %v13329 = vsel %vm8594, %v13327, %v13328
  %v13330 = vrot.slane %v13256, 3
  %v13331 = vrot.slane %v13260, 3
  %v13332 = vsel %vm8594, %v13330, %v13331
  %v13333 = vrot.slane %v13257, 3
  %v13334 = vrot.slane %v13261, 3
  %v13335 = vsel %vm8594, %v13333, %v13334
  %v13336 = vrot.slane %v13258, 3
  %v13337 = vrot.slane %v13262, 3
  %v13338 = vsel %vm8594, %v13336, %v13337
  %v13339 = vrot.slane %v13263, 3
  %v13340 = vsel %vm8594, %v13328, %v13339
  %v13341 = vrot.slane %v13264, 3
  %v13342 = vsel %vm8594, %v13331, %v13341
  %v13343 = vrot.slane %v13265, 3
  %v13344 = vsel %vm8594, %v13334, %v13343
  %v13345 = vrot.slane %v13266, 3
  %v13346 = vsel %vm8594, %v13337, %v13345
  %v13347 = vrot.slane %v13267, 3
  %v13348 = vsel %vm8594, %v13339, %v13347
  %v13349 = vrot.slane %v13268, 3
  %v13350 = vsel %vm8594, %v13341, %v13349
  %v13351 = vrot.slane %v13269, 3
  %v13352 = vsel %vm8594, %v13343, %v13351
  %v13353 = vrot.slane %v13270, 3
  %v13354 = vsel %vm8594, %v13345, %v13353
  %v13355 = vrot.slane %v13271, 3
  %v13356 = vsel %vm8594, %v13347, %v13355
  %v13357 = vrot.slane %v13272, 3
  %v13358 = vsel %vm8594, %v13349, %v13357
  %v13359 = vrot.slane %v13273, 3
  %v13360 = vsel %vm8594, %v13351, %v13359
  %v13361 = vrot.slane %v13274, 3
  %v13362 = vsel %vm8594, %v13353, %v13361
  %v13363 = vrot.slane %v13275, 3
  %v13364 = vsel %vm8594, %v13355, %v13363
  %v13365 = vrot.slane %v13276, 3
  %v13366 = vsel %vm8594, %v13357, %v13365
  %v13367 = vrot.slane %v13277, 3
  %v13368 = vsel %vm8594, %v13359, %v13367
  %v13369 = vrot.slane %v13278, 3
  %v13370 = vsel %vm8594, %v13361, %v13369
  %v13371 = vrot.slane %v13279, 3
  %v13372 = vsel %vm8594, %v13363, %v13371
  %v13373 = vrot.slane %v13280, 3
  %v13374 = vsel %vm8594, %v13365, %v13373
  %v13375 = vrot.slane %v13281, 3
  %v13376 = vsel %vm8594, %v13367, %v13375
  %v13377 = vrot.slane %v13282, 3
  %v13378 = vsel %vm8594, %v13369, %v13377
  %v13379 = vrot.slane %v13283, 3
  %v13380 = vsel %vm8594, %v13371, %v13379
  %v13381 = vrot.slane %v13284, 3
  %v13382 = vsel %vm8594, %v13373, %v13381
  %v13383 = vrot.slane %v13285, 3
  %v13384 = vsel %vm8594, %v13375, %v13383
  %v13385 = vrot.slane %v13286, 3
  %v13386 = vsel %vm8594, %v13377, %v13385
  %v13387 = vrot.slane %v13287, 3
  %v13388 = vsel %vm8594, %v13379, %v13387
  %v13389 = vrot.slane %v13288, 3
  %v13390 = vsel %vm8594, %v13381, %v13389
  %v13391 = vrot.slane %v13289, 3
  %v13392 = vsel %vm8594, %v13383, %v13391
  %v13393 = vrot.slane %v13290, 3
  %v13394 = vsel %vm8594, %v13385, %v13393
  %v13427 = vadd.f32 %v13192, %v13329
  %v13428 = vadd.f32 %v13193, %v13332
  %v13429 = vadd.f32 %v13194, %v13335
  %v13430 = vadd.f32 %v13195, %v13338
  %v13431 = vadd.f32 %v13196, %v13340
  %v13432 = vadd.f32 %v13197, %v13342
  %v13433 = vadd.f32 %v13198, %v13344
  %v13434 = vadd.f32 %v13199, %v13346
  %v13435 = vadd.f32 %v13200, %v13348
  %v13436 = vadd.f32 %v13201, %v13350
  %v13437 = vadd.f32 %v13202, %v13352
  %v13438 = vadd.f32 %v13203, %v13354
  %v13439 = vadd.f32 %v13204, %v13356
  %v13440 = vadd.f32 %v13205, %v13358
  %v13441 = vadd.f32 %v13206, %v13360
  %v13442 = vadd.f32 %v13207, %v13362
  %v13443 = vadd.f32 %v13208, %v13364
  %v13444 = vadd.f32 %v13209, %v13366
  %v13445 = vadd.f32 %v13210, %v13368
  %v13446 = vadd.f32 %v13211, %v13370
  %v13447 = vadd.f32 %v13212, %v13372
  %v13448 = vadd.f32 %v13213, %v13374
  %v13449 = vadd.f32 %v13214, %v13376
  %v13450 = vadd.f32 %v13215, %v13378
  %v13451 = vadd.f32 %v13216, %v13380
  %v13452 = vadd.f32 %v13217, %v13382
  %v13453 = vadd.f32 %v13218, %v13384
  %v13454 = vadd.f32 %v13219, %v13386
  %v13455 = vadd.f32 %v13220, %v13388
  %v13456 = vadd.f32 %v13221, %v13390
  %v13457 = vadd.f32 %v13222, %v13392
  %v13458 = vadd.f32 %v13223, %v13394
  %v13459 = vld [vmem:[%s577 + $0x40] sm:$0xf8]
  %v13460 = vld [vmem:[%s577 + $0x48] sm:$0xf8]
  %v13461 = vld [vmem:[%s577 + $0x50] sm:$0xf8]
  %v13462 = vld [vmem:[%s577 + $0x58] sm:$0xf8]
  %v13463 = vld [vmem:[%s577 + $0x140] sm:$0x7]
  %v13464 = vld [vmem:[%s577 + $0x148] sm:$0x7]
  %v13465 = vld [vmem:[%s577 + $0x150] sm:$0x7]
  %v13466 = vld [vmem:[%s577 + $0x158] sm:$0x7]
  %s13467 = scalar_lea.vmem %s1, 229
  %v13468 = vld [vmem:[%s13467] ss:$8 sm:$0xf]
  %v13470 = vlaneseq
  %v13471 = vshrl.u32 %v13470, 7
  %v13472 = vsub.s32 0, %v13471
  %v13473 = vrot.slane %v13468, %v13472
  %v13474 = vlaneseq
  %v13475 = vshrl.u32 %v13474, 7
  %v13476 = vsub.s32 1, %v13475
  %v13477 = vrot.slane %v13468, %v13476
  %v13478 = vlaneseq
  %v13479 = vshrl.u32 %v13478, 7
  %v13480 = vsub.s32 2, %v13479
  %v13481 = vrot.slane %v13468, %v13480
  %v13482 = vlaneseq
  %v13483 = vshrl.u32 %v13482, 7
  %v13484 = vsub.s32 3, %v13483
  %v13485 = vrot.slane %v13468, %v13484
  %v13490 = vmul.f32 %v13459, %v13473
  %v13491 = vmul.f32 %v13460, %v13477
  %v13492 = vmul.f32 %v13461, %v13481
  %v13493 = vmul.f32 %v13462, %v13485
  %v13494 = vmul.f32 %v590, %v13473
  %v13495 = vmul.f32 %v591, %v13477
  %v13496 = vmul.f32 %v592, %v13481
  %v13497 = vmul.f32 %v593, %v13485
  %v13498 = vmul.f32 %v594, %v13473
  %v13499 = vmul.f32 %v595, %v13477
  %v13500 = vmul.f32 %v596, %v13481
  %v13501 = vmul.f32 %v597, %v13485
  %v13502 = vmul.f32 %v598, %v13473
  %v13503 = vmul.f32 %v599, %v13477
  %v13504 = vmul.f32 %v600, %v13481
  %v13505 = vmul.f32 %v601, %v13485
  %v13506 = vmul.f32 %v602, %v13473
  %v13507 = vmul.f32 %v603, %v13477
  %v13508 = vmul.f32 %v604, %v13481
  %v13509 = vmul.f32 %v605, %v13485
  %v13510 = vmul.f32 %v606, %v13473
  %v13511 = vmul.f32 %v607, %v13477
  %v13512 = vmul.f32 %v608, %v13481
  %v13513 = vmul.f32 %v609, %v13485
  %v13514 = vmul.f32 %v5898, %v13473
  %v13515 = vmul.f32 %v5899, %v13477
  %v13516 = vmul.f32 %v5900, %v13481
  %v13517 = vmul.f32 %v5901, %v13485
  %v13518 = vmul.f32 %v11571, %v13473
  %v13519 = vmul.f32 %v11572, %v13477
  %v13520 = vmul.f32 %v11573, %v13481
  %v13521 = vmul.f32 %v11574, %v13485
  %v13522 = vmul.f32 %v13463, %v13473
  %v13523 = vmul.f32 %v13464, %v13477
  %v13524 = vmul.f32 %v13465, %v13481
  %v13525 = vmul.f32 %v13466, %v13485
  %v13562 = vrot.slane %v13490, 3
  %v13563 = vrot.slane %v13494, 3
  %v13564 = vsel %vm8594, %v13562, %v13563
  %v13565 = vrot.slane %v13491, 3
  %v13566 = vrot.slane %v13495, 3
  %v13567 = vsel %vm8594, %v13565, %v13566
  %v13568 = vrot.slane %v13492, 3
  %v13569 = vrot.slane %v13496, 3
  %v13570 = vsel %vm8594, %v13568, %v13569
  %v13571 = vrot.slane %v13493, 3
  %v13572 = vrot.slane %v13497, 3
  %v13573 = vsel %vm8594, %v13571, %v13572
  %v13574 = vrot.slane %v13498, 3
  %v13575 = vsel %vm8594, %v13563, %v13574
  %v13576 = vrot.slane %v13499, 3
  %v13577 = vsel %vm8594, %v13566, %v13576
  %v13578 = vrot.slane %v13500, 3
  %v13579 = vsel %vm8594, %v13569, %v13578
  %v13580 = vrot.slane %v13501, 3
  %v13581 = vsel %vm8594, %v13572, %v13580
  %v13582 = vrot.slane %v13502, 3
  %v13583 = vsel %vm8594, %v13574, %v13582
  %v13584 = vrot.slane %v13503, 3
  %v13585 = vsel %vm8594, %v13576, %v13584
  %v13586 = vrot.slane %v13504, 3
  %v13587 = vsel %vm8594, %v13578, %v13586
  %v13588 = vrot.slane %v13505, 3
  %v13589 = vsel %vm8594, %v13580, %v13588
  %v13590 = vrot.slane %v13506, 3
  %v13591 = vsel %vm8594, %v13582, %v13590
  %v13592 = vrot.slane %v13507, 3
  %v13593 = vsel %vm8594, %v13584, %v13592
  %v13594 = vrot.slane %v13508, 3
  %v13595 = vsel %vm8594, %v13586, %v13594
  %v13596 = vrot.slane %v13509, 3
  %v13597 = vsel %vm8594, %v13588, %v13596
  %v13598 = vrot.slane %v13510, 3
  %v13599 = vsel %vm8594, %v13590, %v13598
  %v13600 = vrot.slane %v13511, 3
  %v13601 = vsel %vm8594, %v13592, %v13600
  %v13602 = vrot.slane %v13512, 3
  %v13603 = vsel %vm8594, %v13594, %v13602
  %v13604 = vrot.slane %v13513, 3
  %v13605 = vsel %vm8594, %v13596, %v13604
  %v13606 = vrot.slane %v13514, 3
  %v13607 = vsel %vm8594, %v13598, %v13606
  %v13608 = vrot.slane %v13515, 3
  %v13609 = vsel %vm8594, %v13600, %v13608
  %v13610 = vrot.slane %v13516, 3
  %v13611 = vsel %vm8594, %v13602, %v13610
  %v13612 = vrot.slane %v13517, 3
  %v13613 = vsel %vm8594, %v13604, %v13612
  %v13614 = vrot.slane %v13518, 3
  %v13615 = vsel %vm8594, %v13606, %v13614
  %v13616 = vrot.slane %v13519, 3
  %v13617 = vsel %vm8594, %v13608, %v13616
  %v13618 = vrot.slane %v13520, 3
  %v13619 = vsel %vm8594, %v13610, %v13618
  %v13620 = vrot.slane %v13521, 3
  %v13621 = vsel %vm8594, %v13612, %v13620
  %v13622 = vrot.slane %v13522, 3
  %v13623 = vsel %vm8594, %v13614, %v13622
  %v13624 = vrot.slane %v13523, 3
  %v13625 = vsel %vm8594, %v13616, %v13624
  %v13626 = vrot.slane %v13524, 3
  %v13627 = vsel %vm8594, %v13618, %v13626
  %v13628 = vrot.slane %v13525, 3
  %v13629 = vsel %vm8594, %v13620, %v13628
  %v13662 = vadd.f32 %v13427, %v13564
  %v13663 = vadd.f32 %v13428, %v13567
  %v13664 = vadd.f32 %v13429, %v13570
  %v13665 = vadd.f32 %v13430, %v13573
  %v13666 = vadd.f32 %v13431, %v13575
  %v13667 = vadd.f32 %v13432, %v13577
  %v13668 = vadd.f32 %v13433, %v13579
  %v13669 = vadd.f32 %v13434, %v13581
  %v13670 = vadd.f32 %v13435, %v13583
  %v13671 = vadd.f32 %v13436, %v13585
  %v13672 = vadd.f32 %v13437, %v13587
  %v13673 = vadd.f32 %v13438, %v13589
  %v13674 = vadd.f32 %v13439, %v13591
  %v13675 = vadd.f32 %v13440, %v13593
  %v13676 = vadd.f32 %v13441, %v13595
  %v13677 = vadd.f32 %v13442, %v13597
  %v13678 = vadd.f32 %v13443, %v13599
  %v13679 = vadd.f32 %v13444, %v13601
  %v13680 = vadd.f32 %v13445, %v13603
  %v13681 = vadd.f32 %v13446, %v13605
  %v13682 = vadd.f32 %v13447, %v13607
  %v13683 = vadd.f32 %v13448, %v13609
  %v13684 = vadd.f32 %v13449, %v13611
  %v13685 = vadd.f32 %v13450, %v13613
  %v13686 = vadd.f32 %v13451, %v13615
  %v13687 = vadd.f32 %v13452, %v13617
  %v13688 = vadd.f32 %v13453, %v13619
  %v13689 = vadd.f32 %v13454, %v13621
  %v13690 = vadd.f32 %v13455, %v13623
  %v13691 = vadd.f32 %v13456, %v13625
  %v13692 = vadd.f32 %v13457, %v13627
  %v13693 = vadd.f32 %v13458, %v13629
  %v13694 = vld [vmem:[%s697 + $0x40] sm:$0xf8]
  %v13695 = vld [vmem:[%s697 + $0x48] sm:$0xf8]
  %v13696 = vld [vmem:[%s697 + $0x50] sm:$0xf8]
  %v13697 = vld [vmem:[%s697 + $0x58] sm:$0xf8]
  %v13698 = vld [vmem:[%s697 + $0x140] sm:$0x7]
  %v13699 = vld [vmem:[%s697 + $0x148] sm:$0x7]
  %v13700 = vld [vmem:[%s697 + $0x150] sm:$0x7]
  %v13701 = vld [vmem:[%s697 + $0x158] sm:$0x7]
  %s13702 = scalar_lea.vmem %s1, 230
  %v13703 = vld [vmem:[%s13702] ss:$8 sm:$0xf]
  %v13705 = vlaneseq
  %v13706 = vshrl.u32 %v13705, 7
  %v13707 = vsub.s32 0, %v13706
  %v13708 = vrot.slane %v13703, %v13707
  %v13709 = vlaneseq
  %v13710 = vshrl.u32 %v13709, 7
  %v13711 = vsub.s32 1, %v13710
  %v13712 = vrot.slane %v13703, %v13711
  %v13713 = vlaneseq
  %v13714 = vshrl.u32 %v13713, 7
  %v13715 = vsub.s32 2, %v13714
  %v13716 = vrot.slane %v13703, %v13715
  %v13717 = vlaneseq
  %v13718 = vshrl.u32 %v13717, 7
  %v13719 = vsub.s32 3, %v13718
  %v13720 = vrot.slane %v13703, %v13719
  %v13725 = vmul.f32 %v13694, %v13708
  %v13726 = vmul.f32 %v13695, %v13712
  %v13727 = vmul.f32 %v13696, %v13716
  %v13728 = vmul.f32 %v13697, %v13720
  %v13729 = vmul.f32 %v710, %v13708
  %v13730 = vmul.f32 %v711, %v13712
  %v13731 = vmul.f32 %v712, %v13716
  %v13732 = vmul.f32 %v713, %v13720
  %v13733 = vmul.f32 %v714, %v13708
  %v13734 = vmul.f32 %v715, %v13712
  %v13735 = vmul.f32 %v716, %v13716
  %v13736 = vmul.f32 %v717, %v13720
  %v13737 = vmul.f32 %v718, %v13708
  %v13738 = vmul.f32 %v719, %v13712
  %v13739 = vmul.f32 %v720, %v13716
  %v13740 = vmul.f32 %v721, %v13720
  %v13741 = vmul.f32 %v722, %v13708
  %v13742 = vmul.f32 %v723, %v13712
  %v13743 = vmul.f32 %v724, %v13716
  %v13744 = vmul.f32 %v725, %v13720
  %v13745 = vmul.f32 %v726, %v13708
  %v13746 = vmul.f32 %v727, %v13712
  %v13747 = vmul.f32 %v728, %v13716
  %v13748 = vmul.f32 %v729, %v13720
  %v13749 = vmul.f32 %v6137, %v13708
  %v13750 = vmul.f32 %v6138, %v13712
  %v13751 = vmul.f32 %v6139, %v13716
  %v13752 = vmul.f32 %v6140, %v13720
  %v13753 = vmul.f32 %v11810, %v13708
  %v13754 = vmul.f32 %v11811, %v13712
  %v13755 = vmul.f32 %v11812, %v13716
  %v13756 = vmul.f32 %v11813, %v13720
  %v13757 = vmul.f32 %v13698, %v13708
  %v13758 = vmul.f32 %v13699, %v13712
  %v13759 = vmul.f32 %v13700, %v13716
  %v13760 = vmul.f32 %v13701, %v13720
  %v13797 = vrot.slane %v13725, 3
  %v13798 = vrot.slane %v13729, 3
  %v13799 = vsel %vm8594, %v13797, %v13798
  %v13800 = vrot.slane %v13726, 3
  %v13801 = vrot.slane %v13730, 3
  %v13802 = vsel %vm8594, %v13800, %v13801
  %v13803 = vrot.slane %v13727, 3
  %v13804 = vrot.slane %v13731, 3
  %v13805 = vsel %vm8594, %v13803, %v13804
  %v13806 = vrot.slane %v13728, 3
  %v13807 = vrot.slane %v13732, 3
  %v13808 = vsel %vm8594, %v13806, %v13807
  %v13809 = vrot.slane %v13733, 3
  %v13810 = vsel %vm8594, %v13798, %v13809
  %v13811 = vrot.slane %v13734, 3
  %v13812 = vsel %vm8594, %v13801, %v13811
  %v13813 = vrot.slane %v13735, 3
  %v13814 = vsel %vm8594, %v13804, %v13813
  %v13815 = vrot.slane %v13736, 3
  %v13816 = vsel %vm8594, %v13807, %v13815
  %v13817 = vrot.slane %v13737, 3
  %v13818 = vsel %vm8594, %v13809, %v13817
  %v13819 = vrot.slane %v13738, 3
  %v13820 = vsel %vm8594, %v13811, %v13819
  %v13821 = vrot.slane %v13739, 3
  %v13822 = vsel %vm8594, %v13813, %v13821
  %v13823 = vrot.slane %v13740, 3
  %v13824 = vsel %vm8594, %v13815, %v13823
  %v13825 = vrot.slane %v13741, 3
  %v13826 = vsel %vm8594, %v13817, %v13825
  %v13827 = vrot.slane %v13742, 3
  %v13828 = vsel %vm8594, %v13819, %v13827
  %v13829 = vrot.slane %v13743, 3
  %v13830 = vsel %vm8594, %v13821, %v13829
  %v13831 = vrot.slane %v13744, 3
  %v13832 = vsel %vm8594, %v13823, %v13831
  %v13833 = vrot.slane %v13745, 3
  %v13834 = vsel %vm8594, %v13825, %v13833
  %v13835 = vrot.slane %v13746, 3
  %v13836 = vsel %vm8594, %v13827, %v13835
  %v13837 = vrot.slane %v13747, 3
  %v13838 = vsel %vm8594, %v13829, %v13837
  %v13839 = vrot.slane %v13748, 3
  %v13840 = vsel %vm8594, %v13831, %v13839
  %v13841 = vrot.slane %v13749, 3
  %v13842 = vsel %vm8594, %v13833, %v13841
  %v13843 = vrot.slane %v13750, 3
  %v13844 = vsel %vm8594, %v13835, %v13843
  %v13845 = vrot.slane %v13751, 3
  %v13846 = vsel %vm8594, %v13837, %v13845
  %v13847 = vrot.slane %v13752, 3
  %v13848 = vsel %vm8594, %v13839, %v13847
  %v13849 = vrot.slane %v13753, 3
  %v13850 = vsel %vm8594, %v13841, %v13849
  %v13851 = vrot.slane %v13754, 3
  %v13852 = vsel %vm8594, %v13843, %v13851
  %v13853 = vrot.slane %v13755, 3
  %v13854 = vsel %vm8594, %v13845, %v13853
  %v13855 = vrot.slane %v13756, 3
  %v13856 = vsel %vm8594, %v13847, %v13855
  %v13857 = vrot.slane %v13757, 3
  %v13858 = vsel %vm8594, %v13849, %v13857
  %v13859 = vrot.slane %v13758, 3
  %v13860 = vsel %vm8594, %v13851, %v13859
  %v13861 = vrot.slane %v13759, 3
  %v13862 = vsel %vm8594, %v13853, %v13861
  %v13863 = vrot.slane %v13760, 3
  %v13864 = vsel %vm8594, %v13855, %v13863
  %v13897 = vadd.f32 %v13662, %v13799
  %v13898 = vadd.f32 %v13663, %v13802
  %v13899 = vadd.f32 %v13664, %v13805
  %v13900 = vadd.f32 %v13665, %v13808
  %v13901 = vadd.f32 %v13666, %v13810
  %v13902 = vadd.f32 %v13667, %v13812
  %v13903 = vadd.f32 %v13668, %v13814
  %v13904 = vadd.f32 %v13669, %v13816
  %v13905 = vadd.f32 %v13670, %v13818
  %v13906 = vadd.f32 %v13671, %v13820
  %v13907 = vadd.f32 %v13672, %v13822
  %v13908 = vadd.f32 %v13673, %v13824
  %v13909 = vadd.f32 %v13674, %v13826
  %v13910 = vadd.f32 %v13675, %v13828
  %v13911 = vadd.f32 %v13676, %v13830
  %v13912 = vadd.f32 %v13677, %v13832
  %v13913 = vadd.f32 %v13678, %v13834
  %v13914 = vadd.f32 %v13679, %v13836
  %v13915 = vadd.f32 %v13680, %v13838
  %v13916 = vadd.f32 %v13681, %v13840
  %v13917 = vadd.f32 %v13682, %v13842
  %v13918 = vadd.f32 %v13683, %v13844
  %v13919 = vadd.f32 %v13684, %v13846
  %v13920 = vadd.f32 %v13685, %v13848
  %v13921 = vadd.f32 %v13686, %v13850
  %v13922 = vadd.f32 %v13687, %v13852
  %v13923 = vadd.f32 %v13688, %v13854
  %v13924 = vadd.f32 %v13689, %v13856
  %v13925 = vadd.f32 %v13690, %v13858
  %v13926 = vadd.f32 %v13691, %v13860
  %v13927 = vadd.f32 %v13692, %v13862
  %v13928 = vadd.f32 %v13693, %v13864
  %v13929 = vld [vmem:[%s817 + $0x40] sm:$0xf8]
  %v13930 = vld [vmem:[%s817 + $0x48] sm:$0xf8]
  %v13931 = vld [vmem:[%s817 + $0x50] sm:$0xf8]
  %v13932 = vld [vmem:[%s817 + $0x58] sm:$0xf8]
  %v13933 = vld [vmem:[%s817 + $0x140] sm:$0x7]
  %v13934 = vld [vmem:[%s817 + $0x148] sm:$0x7]
  %v13935 = vld [vmem:[%s817 + $0x150] sm:$0x7]
  %v13936 = vld [vmem:[%s817 + $0x158] sm:$0x7]
  %s13937 = scalar_lea.vmem %s1, 231
  %v13938 = vld [vmem:[%s13937] ss:$8 sm:$0xf]
  %v13940 = vlaneseq
  %v13941 = vshrl.u32 %v13940, 7
  %v13942 = vsub.s32 0, %v13941
  %v13943 = vrot.slane %v13938, %v13942
  %v13944 = vlaneseq
  %v13945 = vshrl.u32 %v13944, 7
  %v13946 = vsub.s32 1, %v13945
  %v13947 = vrot.slane %v13938, %v13946
  %v13948 = vlaneseq
  %v13949 = vshrl.u32 %v13948, 7
  %v13950 = vsub.s32 2, %v13949
  %v13951 = vrot.slane %v13938, %v13950
  %v13952 = vlaneseq
  %v13953 = vshrl.u32 %v13952, 7
  %v13954 = vsub.s32 3, %v13953
  %v13955 = vrot.slane %v13938, %v13954
  %v13960 = vmul.f32 %v13929, %v13943
  %v13961 = vmul.f32 %v13930, %v13947
  %v13962 = vmul.f32 %v13931, %v13951
  %v13963 = vmul.f32 %v13932, %v13955
  %v13964 = vmul.f32 %v830, %v13943
  %v13965 = vmul.f32 %v831, %v13947
  %v13966 = vmul.f32 %v832, %v13951
  %v13967 = vmul.f32 %v833, %v13955
  %v13968 = vmul.f32 %v834, %v13943
  %v13969 = vmul.f32 %v835, %v13947
  %v13970 = vmul.f32 %v836, %v13951
  %v13971 = vmul.f32 %v837, %v13955
  %v13972 = vmul.f32 %v838, %v13943
  %v13973 = vmul.f32 %v839, %v13947
  %v13974 = vmul.f32 %v840, %v13951
  %v13975 = vmul.f32 %v841, %v13955
  %v13976 = vmul.f32 %v842, %v13943
  %v13977 = vmul.f32 %v843, %v13947
  %v13978 = vmul.f32 %v844, %v13951
  %v13979 = vmul.f32 %v845, %v13955
  %v13980 = vmul.f32 %v846, %v13943
  %v13981 = vmul.f32 %v847, %v13947
  %v13982 = vmul.f32 %v848, %v13951
  %v13983 = vmul.f32 %v849, %v13955
  %v13984 = vmul.f32 %v6376, %v13943
  %v13985 = vmul.f32 %v6377, %v13947
  %v13986 = vmul.f32 %v6378, %v13951
  %v13987 = vmul.f32 %v6379, %v13955
  %v13988 = vmul.f32 %v12049, %v13943
  %v13989 = vmul.f32 %v12050, %v13947
  %v13990 = vmul.f32 %v12051, %v13951
  %v13991 = vmul.f32 %v12052, %v13955
  %v13992 = vmul.f32 %v13933, %v13943
  %v13993 = vmul.f32 %v13934, %v13947
  %v13994 = vmul.f32 %v13935, %v13951
  %v13995 = vmul.f32 %v13936, %v13955
  %v14032 = vrot.slane %v13960, 3
  %v14033 = vrot.slane %v13964, 3
  %v14034 = vsel %vm8594, %v14032, %v14033
  %v14035 = vrot.slane %v13961, 3
  %v14036 = vrot.slane %v13965, 3
  %v14037 = vsel %vm8594, %v14035, %v14036
  %v14038 = vrot.slane %v13962, 3
  %v14039 = vrot.slane %v13966, 3
  %v14040 = vsel %vm8594, %v14038, %v14039
  %v14041 = vrot.slane %v13963, 3
  %v14042 = vrot.slane %v13967, 3
  %v14043 = vsel %vm8594, %v14041, %v14042
  %v14044 = vrot.slane %v13968, 3
  %v14045 = vsel %vm8594, %v14033, %v14044
  %v14046 = vrot.slane %v13969, 3
  %v14047 = vsel %vm8594, %v14036, %v14046
  %v14048 = vrot.slane %v13970, 3
  %v14049 = vsel %vm8594, %v14039, %v14048
  %v14050 = vrot.slane %v13971, 3
  %v14051 = vsel %vm8594, %v14042, %v14050
  %v14052 = vrot.slane %v13972, 3
  %v14053 = vsel %vm8594, %v14044, %v14052
  %v14054 = vrot.slane %v13973, 3
  %v14055 = vsel %vm8594, %v14046, %v14054
  %v14056 = vrot.slane %v13974, 3
  %v14057 = vsel %vm8594, %v14048, %v14056
  %v14058 = vrot.slane %v13975, 3
  %v14059 = vsel %vm8594, %v14050, %v14058
  %v14060 = vrot.slane %v13976, 3
  %v14061 = vsel %vm8594, %v14052, %v14060
  %v14062 = vrot.slane %v13977, 3
  %v14063 = vsel %vm8594, %v14054, %v14062
  %v14064 = vrot.slane %v13978, 3
  %v14065 = vsel %vm8594, %v14056, %v14064
  %v14066 = vrot.slane %v13979, 3
  %v14067 = vsel %vm8594, %v14058, %v14066
  %v14068 = vrot.slane %v13980, 3
  %v14069 = vsel %vm8594, %v14060, %v14068
  %v14070 = vrot.slane %v13981, 3
  %v14071 = vsel %vm8594, %v14062, %v14070
  %v14072 = vrot.slane %v13982, 3
  %v14073 = vsel %vm8594, %v14064, %v14072
  %v14074 = vrot.slane %v13983, 3
  %v14075 = vsel %vm8594, %v14066, %v14074
  %v14076 = vrot.slane %v13984, 3
  %v14077 = vsel %vm8594, %v14068, %v14076
  %v14078 = vrot.slane %v13985, 3
  %v14079 = vsel %vm8594, %v14070, %v14078
  %v14080 = vrot.slane %v13986, 3
  %v14081 = vsel %vm8594, %v14072, %v14080
  %v14082 = vrot.slane %v13987, 3
  %v14083 = vsel %vm8594, %v14074, %v14082
  %v14084 = vrot.slane %v13988, 3
  %v14085 = vsel %vm8594, %v14076, %v14084
  %v14086 = vrot.slane %v13989, 3
  %v14087 = vsel %vm8594, %v14078, %v14086
  %v14088 = vrot.slane %v13990, 3
  %v14089 = vsel %vm8594, %v14080, %v14088
  %v14090 = vrot.slane %v13991, 3
  %v14091 = vsel %vm8594, %v14082, %v14090
  %v14092 = vrot.slane %v13992, 3
  %v14093 = vsel %vm8594, %v14084, %v14092
  %v14094 = vrot.slane %v13993, 3
  %v14095 = vsel %vm8594, %v14086, %v14094
  %v14096 = vrot.slane %v13994, 3
  %v14097 = vsel %vm8594, %v14088, %v14096
  %v14098 = vrot.slane %v13995, 3
  %v14099 = vsel %vm8594, %v14090, %v14098
  %v14132 = vadd.f32 %v13897, %v14034
  %v14133 = vadd.f32 %v13898, %v14037
  %v14134 = vadd.f32 %v13899, %v14040
  %v14135 = vadd.f32 %v13900, %v14043
  %v14136 = vadd.f32 %v13901, %v14045
  %v14137 = vadd.f32 %v13902, %v14047
  %v14138 = vadd.f32 %v13903, %v14049
  %v14139 = vadd.f32 %v13904, %v14051
  %v14140 = vadd.f32 %v13905, %v14053
  %v14141 = vadd.f32 %v13906, %v14055
  %v14142 = vadd.f32 %v13907, %v14057
  %v14143 = vadd.f32 %v13908, %v14059
  %v14144 = vadd.f32 %v13909, %v14061
  %v14145 = vadd.f32 %v13910, %v14063
  %v14146 = vadd.f32 %v13911, %v14065
  %v14147 = vadd.f32 %v13912, %v14067
  %v14148 = vadd.f32 %v13913, %v14069
  %v14149 = vadd.f32 %v13914, %v14071
  %v14150 = vadd.f32 %v13915, %v14073
  %v14151 = vadd.f32 %v13916, %v14075
  %v14152 = vadd.f32 %v13917, %v14077
  %v14153 = vadd.f32 %v13918, %v14079
  %v14154 = vadd.f32 %v13919, %v14081
  %v14155 = vadd.f32 %v13920, %v14083
  %v14156 = vadd.f32 %v13921, %v14085
  %v14157 = vadd.f32 %v13922, %v14087
  %v14158 = vadd.f32 %v13923, %v14089
  %v14159 = vadd.f32 %v13924, %v14091
  %v14160 = vadd.f32 %v13925, %v14093
  %v14161 = vadd.f32 %v13926, %v14095
  %v14162 = vadd.f32 %v13927, %v14097
  %v14163 = vadd.f32 %v13928, %v14099
  %v14164 = vld [vmem:[%s0 + $0x40] sm:$0xf0]
  %v14165 = vld [vmem:[%s0 + $0x48] sm:$0xf0]
  %v14166 = vld [vmem:[%s0 + $0x50] sm:$0xf0]
  %v14167 = vld [vmem:[%s0 + $0x58] sm:$0xf0]
  %v14168 = vld [vmem:[%s0 + $0x140] sm:$0xf]
  %v14169 = vld [vmem:[%s0 + $0x148] sm:$0xf]
  %v14170 = vld [vmem:[%s0 + $0x150] sm:$0xf]
  %v14171 = vld [vmem:[%s0 + $0x158] sm:$0xf]
  %s14172 = scalar_lea.vmem %s1, 256
  %v14173 = vld [vmem:[%s14172] ss:$8 sm:$0xf]
  %v14175 = vlaneseq
  %v14176 = vshrl.u32 %v14175, 7
  %v14177 = vsub.s32 0, %v14176
  %v14178 = vrot.slane %v14173, %v14177
  %v14179 = vlaneseq
  %v14180 = vshrl.u32 %v14179, 7
  %v14181 = vsub.s32 1, %v14180
  %v14182 = vrot.slane %v14173, %v14181
  %v14183 = vlaneseq
  %v14184 = vshrl.u32 %v14183, 7
  %v14185 = vsub.s32 2, %v14184
  %v14186 = vrot.slane %v14173, %v14185
  %v14187 = vlaneseq
  %v14188 = vshrl.u32 %v14187, 7
  %v14189 = vsub.s32 3, %v14188
  %v14190 = vrot.slane %v14173, %v14189
  %v14195 = vmul.f32 %v14164, %v14178
  %v14196 = vmul.f32 %v14165, %v14182
  %v14197 = vmul.f32 %v14166, %v14186
  %v14198 = vmul.f32 %v14167, %v14190
  %v14199 = vmul.f32 %v23, %v14178
  %v14200 = vmul.f32 %v24, %v14182
  %v14201 = vmul.f32 %v25, %v14186
  %v14202 = vmul.f32 %v26, %v14190
  %v14203 = vmul.f32 %v27, %v14178
  %v14204 = vmul.f32 %v28, %v14182
  %v14205 = vmul.f32 %v29, %v14186
  %v14206 = vmul.f32 %v30, %v14190
  %v14207 = vmul.f32 %v31, %v14178
  %v14208 = vmul.f32 %v32, %v14182
  %v14209 = vmul.f32 %v33, %v14186
  %v14210 = vmul.f32 %v34, %v14190
  %v14211 = vmul.f32 %v35, %v14178
  %v14212 = vmul.f32 %v36, %v14182
  %v14213 = vmul.f32 %v37, %v14186
  %v14214 = vmul.f32 %v38, %v14190
  %v14215 = vmul.f32 %v39, %v14178
  %v14216 = vmul.f32 %v40, %v14182
  %v14217 = vmul.f32 %v41, %v14186
  %v14218 = vmul.f32 %v42, %v14190
  %v14219 = vmul.f32 %v4703, %v14178
  %v14220 = vmul.f32 %v4704, %v14182
  %v14221 = vmul.f32 %v4705, %v14186
  %v14222 = vmul.f32 %v4706, %v14190
  %v14223 = vmul.f32 %v10376, %v14178
  %v14224 = vmul.f32 %v10377, %v14182
  %v14225 = vmul.f32 %v10378, %v14186
  %v14226 = vmul.f32 %v10379, %v14190
  %v14227 = vmul.f32 %v14168, %v14178
  %v14228 = vmul.f32 %v14169, %v14182
  %v14229 = vmul.f32 %v14170, %v14186
  %v14230 = vmul.f32 %v14171, %v14190
  %vm14267 = vcmask 1043456
  %v14268 = vrot.slane %v14195, 4
  %v14269 = vrot.slane %v14199, 4
  %v14270 = vsel %vm14267, %v14268, %v14269
  %v14271 = vrot.slane %v14196, 4
  %v14272 = vrot.slane %v14200, 4
  %v14273 = vsel %vm14267, %v14271, %v14272
  %v14274 = vrot.slane %v14197, 4
  %v14275 = vrot.slane %v14201, 4
  %v14276 = vsel %vm14267, %v14274, %v14275
  %v14277 = vrot.slane %v14198, 4
  %v14278 = vrot.slane %v14202, 4
  %v14279 = vsel %vm14267, %v14277, %v14278
  %v14280 = vrot.slane %v14203, 4
  %v14281 = vsel %vm14267, %v14269, %v14280
  %v14282 = vrot.slane %v14204, 4
  %v14283 = vsel %vm14267, %v14272, %v14282
  %v14284 = vrot.slane %v14205, 4
  %v14285 = vsel %vm14267, %v14275, %v14284
  %v14286 = vrot.slane %v14206, 4
  %v14287 = vsel %vm14267, %v14278, %v14286
  %v14288 = vrot.slane %v14207, 4
  %v14289 = vsel %vm14267, %v14280, %v14288
  %v14290 = vrot.slane %v14208, 4
  %v14291 = vsel %vm14267, %v14282, %v14290
  %v14292 = vrot.slane %v14209, 4
  %v14293 = vsel %vm14267, %v14284, %v14292
  %v14294 = vrot.slane %v14210, 4
  %v14295 = vsel %vm14267, %v14286, %v14294
  %v14296 = vrot.slane %v14211, 4
  %v14297 = vsel %vm14267, %v14288, %v14296
  %v14298 = vrot.slane %v14212, 4
  %v14299 = vsel %vm14267, %v14290, %v14298
  %v14300 = vrot.slane %v14213, 4
  %v14301 = vsel %vm14267, %v14292, %v14300
  %v14302 = vrot.slane %v14214, 4
  %v14303 = vsel %vm14267, %v14294, %v14302
  %v14304 = vrot.slane %v14215, 4
  %v14305 = vsel %vm14267, %v14296, %v14304
  %v14306 = vrot.slane %v14216, 4
  %v14307 = vsel %vm14267, %v14298, %v14306
  %v14308 = vrot.slane %v14217, 4
  %v14309 = vsel %vm14267, %v14300, %v14308
  %v14310 = vrot.slane %v14218, 4
  %v14311 = vsel %vm14267, %v14302, %v14310
  %v14312 = vrot.slane %v14219, 4
  %v14313 = vsel %vm14267, %v14304, %v14312
  %v14314 = vrot.slane %v14220, 4
  %v14315 = vsel %vm14267, %v14306, %v14314
  %v14316 = vrot.slane %v14221, 4
  %v14317 = vsel %vm14267, %v14308, %v14316
  %v14318 = vrot.slane %v14222, 4
  %v14319 = vsel %vm14267, %v14310, %v14318
  %v14320 = vrot.slane %v14223, 4
  %v14321 = vsel %vm14267, %v14312, %v14320
  %v14322 = vrot.slane %v14224, 4
  %v14323 = vsel %vm14267, %v14314, %v14322
  %v14324 = vrot.slane %v14225, 4
  %v14325 = vsel %vm14267, %v14316, %v14324
  %v14326 = vrot.slane %v14226, 4
  %v14327 = vsel %vm14267, %v14318, %v14326
  %v14328 = vrot.slane %v14227, 4
  %v14329 = vsel %vm14267, %v14320, %v14328
  %v14330 = vrot.slane %v14228, 4
  %v14331 = vsel %vm14267, %v14322, %v14330
  %v14332 = vrot.slane %v14229, 4
  %v14333 = vsel %vm14267, %v14324, %v14332
  %v14334 = vrot.slane %v14230, 4
  %v14335 = vsel %vm14267, %v14326, %v14334
  %v14368 = vadd.f32 %v14132, %v14270
  %v14369 = vadd.f32 %v14133, %v14273
  %v14370 = vadd.f32 %v14134, %v14276
  %v14371 = vadd.f32 %v14135, %v14279
  %v14372 = vadd.f32 %v14136, %v14281
  %v14373 = vadd.f32 %v14137, %v14283
  %v14374 = vadd.f32 %v14138, %v14285
  %v14375 = vadd.f32 %v14139, %v14287
  %v14376 = vadd.f32 %v14140, %v14289
  %v14377 = vadd.f32 %v14141, %v14291
  %v14378 = vadd.f32 %v14142, %v14293
  %v14379 = vadd.f32 %v14143, %v14295
  %v14380 = vadd.f32 %v14144, %v14297
  %v14381 = vadd.f32 %v14145, %v14299
  %v14382 = vadd.f32 %v14146, %v14301
  %v14383 = vadd.f32 %v14147, %v14303
  %v14384 = vadd.f32 %v14148, %v14305
  %v14385 = vadd.f32 %v14149, %v14307
  %v14386 = vadd.f32 %v14150, %v14309
  %v14387 = vadd.f32 %v14151, %v14311
  %v14388 = vadd.f32 %v14152, %v14313
  %v14389 = vadd.f32 %v14153, %v14315
  %v14390 = vadd.f32 %v14154, %v14317
  %v14391 = vadd.f32 %v14155, %v14319
  %v14392 = vadd.f32 %v14156, %v14321
  %v14393 = vadd.f32 %v14157, %v14323
  %v14394 = vadd.f32 %v14158, %v14325
  %v14395 = vadd.f32 %v14159, %v14327
  %v14396 = vadd.f32 %v14160, %v14329
  %v14397 = vadd.f32 %v14161, %v14331
  %v14398 = vadd.f32 %v14162, %v14333
  %v14399 = vadd.f32 %v14163, %v14335
  %v14400 = vld [vmem:[%s97 + $0x40] sm:$0xf0]
  %v14401 = vld [vmem:[%s97 + $0x48] sm:$0xf0]
  %v14402 = vld [vmem:[%s97 + $0x50] sm:$0xf0]
  %v14403 = vld [vmem:[%s97 + $0x58] sm:$0xf0]
  %v14404 = vld [vmem:[%s97 + $0x140] sm:$0xf]
  %v14405 = vld [vmem:[%s97 + $0x148] sm:$0xf]
  %v14406 = vld [vmem:[%s97 + $0x150] sm:$0xf]
  %v14407 = vld [vmem:[%s97 + $0x158] sm:$0xf]
  %s14408 = scalar_lea.vmem %s1, 257
  %v14409 = vld [vmem:[%s14408] ss:$8 sm:$0xf]
  %v14411 = vlaneseq
  %v14412 = vshrl.u32 %v14411, 7
  %v14413 = vsub.s32 0, %v14412
  %v14414 = vrot.slane %v14409, %v14413
  %v14415 = vlaneseq
  %v14416 = vshrl.u32 %v14415, 7
  %v14417 = vsub.s32 1, %v14416
  %v14418 = vrot.slane %v14409, %v14417
  %v14419 = vlaneseq
  %v14420 = vshrl.u32 %v14419, 7
  %v14421 = vsub.s32 2, %v14420
  %v14422 = vrot.slane %v14409, %v14421
  %v14423 = vlaneseq
  %v14424 = vshrl.u32 %v14423, 7
  %v14425 = vsub.s32 3, %v14424
  %v14426 = vrot.slane %v14409, %v14425
  %v14431 = vmul.f32 %v14400, %v14414
  %v14432 = vmul.f32 %v14401, %v14418
  %v14433 = vmul.f32 %v14402, %v14422
  %v14434 = vmul.f32 %v14403, %v14426
  %v14435 = vmul.f32 %v110, %v14414
  %v14436 = vmul.f32 %v111, %v14418
  %v14437 = vmul.f32 %v112, %v14422
  %v14438 = vmul.f32 %v113, %v14426
  %v14439 = vmul.f32 %v114, %v14414
  %v14440 = vmul.f32 %v115, %v14418
  %v14441 = vmul.f32 %v116, %v14422
  %v14442 = vmul.f32 %v117, %v14426
  %v14443 = vmul.f32 %v118, %v14414
  %v14444 = vmul.f32 %v119, %v14418
  %v14445 = vmul.f32 %v120, %v14422
  %v14446 = vmul.f32 %v121, %v14426
  %v14447 = vmul.f32 %v122, %v14414
  %v14448 = vmul.f32 %v123, %v14418
  %v14449 = vmul.f32 %v124, %v14422
  %v14450 = vmul.f32 %v125, %v14426
  %v14451 = vmul.f32 %v126, %v14414
  %v14452 = vmul.f32 %v127, %v14418
  %v14453 = vmul.f32 %v128, %v14422
  %v14454 = vmul.f32 %v129, %v14426
  %v14455 = vmul.f32 %v4942, %v14414
  %v14456 = vmul.f32 %v4943, %v14418
  %v14457 = vmul.f32 %v4944, %v14422
  %v14458 = vmul.f32 %v4945, %v14426
  %v14459 = vmul.f32 %v10615, %v14414
  %v14460 = vmul.f32 %v10616, %v14418
  %v14461 = vmul.f32 %v10617, %v14422
  %v14462 = vmul.f32 %v10618, %v14426
  %v14463 = vmul.f32 %v14404, %v14414
  %v14464 = vmul.f32 %v14405, %v14418
  %v14465 = vmul.f32 %v14406, %v14422
  %v14466 = vmul.f32 %v14407, %v14426
  %v14503 = vrot.slane %v14431, 4
  %v14504 = vrot.slane %v14435, 4
  %v14505 = vsel %vm14267, %v14503, %v14504
  %v14506 = vrot.slane %v14432, 4
  %v14507 = vrot.slane %v14436, 4
  %v14508 = vsel %vm14267, %v14506, %v14507
  %v14509 = vrot.slane %v14433, 4
  %v14510 = vrot.slane %v14437, 4
  %v14511 = vsel %vm14267, %v14509, %v14510
  %v14512 = vrot.slane %v14434, 4
  %v14513 = vrot.slane %v14438, 4
  %v14514 = vsel %vm14267, %v14512, %v14513
  %v14515 = vrot.slane %v14439, 4
  %v14516 = vsel %vm14267, %v14504, %v14515
  %v14517 = vrot.slane %v14440, 4
  %v14518 = vsel %vm14267, %v14507, %v14517
  %v14519 = vrot.slane %v14441, 4
  %v14520 = vsel %vm14267, %v14510, %v14519
  %v14521 = vrot.slane %v14442, 4
  %v14522 = vsel %vm14267, %v14513, %v14521
  %v14523 = vrot.slane %v14443, 4
  %v14524 = vsel %vm14267, %v14515, %v14523
  %v14525 = vrot.slane %v14444, 4
  %v14526 = vsel %vm14267, %v14517, %v14525
  %v14527 = vrot.slane %v14445, 4
  %v14528 = vsel %vm14267, %v14519, %v14527
  %v14529 = vrot.slane %v14446, 4
  %v14530 = vsel %vm14267, %v14521, %v14529
  %v14531 = vrot.slane %v14447, 4
  %v14532 = vsel %vm14267, %v14523, %v14531
  %v14533 = vrot.slane %v14448, 4
  %v14534 = vsel %vm14267, %v14525, %v14533
  %v14535 = vrot.slane %v14449, 4
  %v14536 = vsel %vm14267, %v14527, %v14535
  %v14537 = vrot.slane %v14450, 4
  %v14538 = vsel %vm14267, %v14529, %v14537
  %v14539 = vrot.slane %v14451, 4
  %v14540 = vsel %vm14267, %v14531, %v14539
  %v14541 = vrot.slane %v14452, 4
  %v14542 = vsel %vm14267, %v14533, %v14541
  %v14543 = vrot.slane %v14453, 4
  %v14544 = vsel %vm14267, %v14535, %v14543
  %v14545 = vrot.slane %v14454, 4
  %v14546 = vsel %vm14267, %v14537, %v14545
  %v14547 = vrot.slane %v14455, 4
  %v14548 = vsel %vm14267, %v14539, %v14547
  %v14549 = vrot.slane %v14456, 4
  %v14550 = vsel %vm14267, %v14541, %v14549
  %v14551 = vrot.slane %v14457, 4
  %v14552 = vsel %vm14267, %v14543, %v14551
  %v14553 = vrot.slane %v14458, 4
  %v14554 = vsel %vm14267, %v14545, %v14553
  %v14555 = vrot.slane %v14459, 4
  %v14556 = vsel %vm14267, %v14547, %v14555
  %v14557 = vrot.slane %v14460, 4
  %v14558 = vsel %vm14267, %v14549, %v14557
  %v14559 = vrot.slane %v14461, 4
  %v14560 = vsel %vm14267, %v14551, %v14559
  %v14561 = vrot.slane %v14462, 4
  %v14562 = vsel %vm14267, %v14553, %v14561
  %v14563 = vrot.slane %v14463, 4
  %v14564 = vsel %vm14267, %v14555, %v14563
  %v14565 = vrot.slane %v14464, 4
  %v14566 = vsel %vm14267, %v14557, %v14565
  %v14567 = vrot.slane %v14465, 4
  %v14568 = vsel %vm14267, %v14559, %v14567
  %v14569 = vrot.slane %v14466, 4
  %v14570 = vsel %vm14267, %v14561, %v14569
  %v14603 = vadd.f32 %v14368, %v14505
  %v14604 = vadd.f32 %v14369, %v14508
  %v14605 = vadd.f32 %v14370, %v14511
  %v14606 = vadd.f32 %v14371, %v14514
  %v14607 = vadd.f32 %v14372, %v14516
  %v14608 = vadd.f32 %v14373, %v14518
  %v14609 = vadd.f32 %v14374, %v14520
  %v14610 = vadd.f32 %v14375, %v14522
  %v14611 = vadd.f32 %v14376, %v14524
  %v14612 = vadd.f32 %v14377, %v14526
  %v14613 = vadd.f32 %v14378, %v14528
  %v14614 = vadd.f32 %v14379, %v14530
  %v14615 = vadd.f32 %v14380, %v14532
  %v14616 = vadd.f32 %v14381, %v14534
  %v14617 = vadd.f32 %v14382, %v14536
  %v14618 = vadd.f32 %v14383, %v14538
  %v14619 = vadd.f32 %v14384, %v14540
  %v14620 = vadd.f32 %v14385, %v14542
  %v14621 = vadd.f32 %v14386, %v14544
  %v14622 = vadd.f32 %v14387, %v14546
  %v14623 = vadd.f32 %v14388, %v14548
  %v14624 = vadd.f32 %v14389, %v14550
  %v14625 = vadd.f32 %v14390, %v14552
  %v14626 = vadd.f32 %v14391, %v14554
  %v14627 = vadd.f32 %v14392, %v14556
  %v14628 = vadd.f32 %v14393, %v14558
  %v14629 = vadd.f32 %v14394, %v14560
  %v14630 = vadd.f32 %v14395, %v14562
  %v14631 = vadd.f32 %v14396, %v14564
  %v14632 = vadd.f32 %v14397, %v14566
  %v14633 = vadd.f32 %v14398, %v14568
  %v14634 = vadd.f32 %v14399, %v14570
  %v14635 = vld [vmem:[%s217 + $0x40] sm:$0xf0]
  %v14636 = vld [vmem:[%s217 + $0x48] sm:$0xf0]
  %v14637 = vld [vmem:[%s217 + $0x50] sm:$0xf0]
  %v14638 = vld [vmem:[%s217 + $0x58] sm:$0xf0]
  %v14639 = vld [vmem:[%s217 + $0x140] sm:$0xf]
  %v14640 = vld [vmem:[%s217 + $0x148] sm:$0xf]
  %v14641 = vld [vmem:[%s217 + $0x150] sm:$0xf]
  %v14642 = vld [vmem:[%s217 + $0x158] sm:$0xf]
  %s14643 = scalar_lea.vmem %s1, 258
  %v14644 = vld [vmem:[%s14643] ss:$8 sm:$0xf]
  %v14646 = vlaneseq
  %v14647 = vshrl.u32 %v14646, 7
  %v14648 = vsub.s32 0, %v14647
  %v14649 = vrot.slane %v14644, %v14648
  %v14650 = vlaneseq
  %v14651 = vshrl.u32 %v14650, 7
  %v14652 = vsub.s32 1, %v14651
  %v14653 = vrot.slane %v14644, %v14652
  %v14654 = vlaneseq
  %v14655 = vshrl.u32 %v14654, 7
  %v14656 = vsub.s32 2, %v14655
  %v14657 = vrot.slane %v14644, %v14656
  %v14658 = vlaneseq
  %v14659 = vshrl.u32 %v14658, 7
  %v14660 = vsub.s32 3, %v14659
  %v14661 = vrot.slane %v14644, %v14660
  %v14666 = vmul.f32 %v14635, %v14649
  %v14667 = vmul.f32 %v14636, %v14653
  %v14668 = vmul.f32 %v14637, %v14657
  %v14669 = vmul.f32 %v14638, %v14661
  %v14670 = vmul.f32 %v230, %v14649
  %v14671 = vmul.f32 %v231, %v14653
  %v14672 = vmul.f32 %v232, %v14657
  %v14673 = vmul.f32 %v233, %v14661
  %v14674 = vmul.f32 %v234, %v14649
  %v14675 = vmul.f32 %v235, %v14653
  %v14676 = vmul.f32 %v236, %v14657
  %v14677 = vmul.f32 %v237, %v14661
  %v14678 = vmul.f32 %v238, %v14649
  %v14679 = vmul.f32 %v239, %v14653
  %v14680 = vmul.f32 %v240, %v14657
  %v14681 = vmul.f32 %v241, %v14661
  %v14682 = vmul.f32 %v242, %v14649
  %v14683 = vmul.f32 %v243, %v14653
  %v14684 = vmul.f32 %v244, %v14657
  %v14685 = vmul.f32 %v245, %v14661
  %v14686 = vmul.f32 %v246, %v14649
  %v14687 = vmul.f32 %v247, %v14653
  %v14688 = vmul.f32 %v248, %v14657
  %v14689 = vmul.f32 %v249, %v14661
  %v14690 = vmul.f32 %v5181, %v14649
  %v14691 = vmul.f32 %v5182, %v14653
  %v14692 = vmul.f32 %v5183, %v14657
  %v14693 = vmul.f32 %v5184, %v14661
  %v14694 = vmul.f32 %v10854, %v14649
  %v14695 = vmul.f32 %v10855, %v14653
  %v14696 = vmul.f32 %v10856, %v14657
  %v14697 = vmul.f32 %v10857, %v14661
  %v14698 = vmul.f32 %v14639, %v14649
  %v14699 = vmul.f32 %v14640, %v14653
  %v14700 = vmul.f32 %v14641, %v14657
  %v14701 = vmul.f32 %v14642, %v14661
  %v14738 = vrot.slane %v14666, 4
  %v14739 = vrot.slane %v14670, 4
  %v14740 = vsel %vm14267, %v14738, %v14739
  %v14741 = vrot.slane %v14667, 4
  %v14742 = vrot.slane %v14671, 4
  %v14743 = vsel %vm14267, %v14741, %v14742
  %v14744 = vrot.slane %v14668, 4
  %v14745 = vrot.slane %v14672, 4
  %v14746 = vsel %vm14267, %v14744, %v14745
  %v14747 = vrot.slane %v14669, 4
  %v14748 = vrot.slane %v14673, 4
  %v14749 = vsel %vm14267, %v14747, %v14748
  %v14750 = vrot.slane %v14674, 4
  %v14751 = vsel %vm14267, %v14739, %v14750
  %v14752 = vrot.slane %v14675, 4
  %v14753 = vsel %vm14267, %v14742, %v14752
  %v14754 = vrot.slane %v14676, 4
  %v14755 = vsel %vm14267, %v14745, %v14754
  %v14756 = vrot.slane %v14677, 4
  %v14757 = vsel %vm14267, %v14748, %v14756
  %v14758 = vrot.slane %v14678, 4
  %v14759 = vsel %vm14267, %v14750, %v14758
  %v14760 = vrot.slane %v14679, 4
  %v14761 = vsel %vm14267, %v14752, %v14760
  %v14762 = vrot.slane %v14680, 4
  %v14763 = vsel %vm14267, %v14754, %v14762
  %v14764 = vrot.slane %v14681, 4
  %v14765 = vsel %vm14267, %v14756, %v14764
  %v14766 = vrot.slane %v14682, 4
  %v14767 = vsel %vm14267, %v14758, %v14766
  %v14768 = vrot.slane %v14683, 4
  %v14769 = vsel %vm14267, %v14760, %v14768
  %v14770 = vrot.slane %v14684, 4
  %v14771 = vsel %vm14267, %v14762, %v14770
  %v14772 = vrot.slane %v14685, 4
  %v14773 = vsel %vm14267, %v14764, %v14772
  %v14774 = vrot.slane %v14686, 4
  %v14775 = vsel %vm14267, %v14766, %v14774
  %v14776 = vrot.slane %v14687, 4
  %v14777 = vsel %vm14267, %v14768, %v14776
  %v14778 = vrot.slane %v14688, 4
  %v14779 = vsel %vm14267, %v14770, %v14778
  %v14780 = vrot.slane %v14689, 4
  %v14781 = vsel %vm14267, %v14772, %v14780
  %v14782 = vrot.slane %v14690, 4
  %v14783 = vsel %vm14267, %v14774, %v14782
  %v14784 = vrot.slane %v14691, 4
  %v14785 = vsel %vm14267, %v14776, %v14784
  %v14786 = vrot.slane %v14692, 4
  %v14787 = vsel %vm14267, %v14778, %v14786
  %v14788 = vrot.slane %v14693, 4
  %v14789 = vsel %vm14267, %v14780, %v14788
  %v14790 = vrot.slane %v14694, 4
  %v14791 = vsel %vm14267, %v14782, %v14790
  %v14792 = vrot.slane %v14695, 4
  %v14793 = vsel %vm14267, %v14784, %v14792
  %v14794 = vrot.slane %v14696, 4
  %v14795 = vsel %vm14267, %v14786, %v14794
  %v14796 = vrot.slane %v14697, 4
  %v14797 = vsel %vm14267, %v14788, %v14796
  %v14798 = vrot.slane %v14698, 4
  %v14799 = vsel %vm14267, %v14790, %v14798
  %v14800 = vrot.slane %v14699, 4
  %v14801 = vsel %vm14267, %v14792, %v14800
  %v14802 = vrot.slane %v14700, 4
  %v14803 = vsel %vm14267, %v14794, %v14802
  %v14804 = vrot.slane %v14701, 4
  %v14805 = vsel %vm14267, %v14796, %v14804
  %v14838 = vadd.f32 %v14603, %v14740
  %v14839 = vadd.f32 %v14604, %v14743
  %v14840 = vadd.f32 %v14605, %v14746
  %v14841 = vadd.f32 %v14606, %v14749
  %v14842 = vadd.f32 %v14607, %v14751
  %v14843 = vadd.f32 %v14608, %v14753
  %v14844 = vadd.f32 %v14609, %v14755
  %v14845 = vadd.f32 %v14610, %v14757
  %v14846 = vadd.f32 %v14611, %v14759
  %v14847 = vadd.f32 %v14612, %v14761
  %v14848 = vadd.f32 %v14613, %v14763
  %v14849 = vadd.f32 %v14614, %v14765
  %v14850 = vadd.f32 %v14615, %v14767
  %v14851 = vadd.f32 %v14616, %v14769
  %v14852 = vadd.f32 %v14617, %v14771
  %v14853 = vadd.f32 %v14618, %v14773
  %v14854 = vadd.f32 %v14619, %v14775
  %v14855 = vadd.f32 %v14620, %v14777
  %v14856 = vadd.f32 %v14621, %v14779
  %v14857 = vadd.f32 %v14622, %v14781
  %v14858 = vadd.f32 %v14623, %v14783
  %v14859 = vadd.f32 %v14624, %v14785
  %v14860 = vadd.f32 %v14625, %v14787
  %v14861 = vadd.f32 %v14626, %v14789
  %v14862 = vadd.f32 %v14627, %v14791
  %v14863 = vadd.f32 %v14628, %v14793
  %v14864 = vadd.f32 %v14629, %v14795
  %v14865 = vadd.f32 %v14630, %v14797
  %v14866 = vadd.f32 %v14631, %v14799
  %v14867 = vadd.f32 %v14632, %v14801
  %v14868 = vadd.f32 %v14633, %v14803
  %v14869 = vadd.f32 %v14634, %v14805
  %v14870 = vld [vmem:[%s337 + $0x40] sm:$0xf0]
  %v14871 = vld [vmem:[%s337 + $0x48] sm:$0xf0]
  %v14872 = vld [vmem:[%s337 + $0x50] sm:$0xf0]
  %v14873 = vld [vmem:[%s337 + $0x58] sm:$0xf0]
  %v14874 = vld [vmem:[%s337 + $0x140] sm:$0xf]
  %v14875 = vld [vmem:[%s337 + $0x148] sm:$0xf]
  %v14876 = vld [vmem:[%s337 + $0x150] sm:$0xf]
  %v14877 = vld [vmem:[%s337 + $0x158] sm:$0xf]
  %s14878 = scalar_lea.vmem %s1, 259
  %v14879 = vld [vmem:[%s14878] ss:$8 sm:$0xf]
  %v14881 = vlaneseq
  %v14882 = vshrl.u32 %v14881, 7
  %v14883 = vsub.s32 0, %v14882
  %v14884 = vrot.slane %v14879, %v14883
  %v14885 = vlaneseq
  %v14886 = vshrl.u32 %v14885, 7
  %v14887 = vsub.s32 1, %v14886
  %v14888 = vrot.slane %v14879, %v14887
  %v14889 = vlaneseq
  %v14890 = vshrl.u32 %v14889, 7
  %v14891 = vsub.s32 2, %v14890
  %v14892 = vrot.slane %v14879, %v14891
  %v14893 = vlaneseq
  %v14894 = vshrl.u32 %v14893, 7
  %v14895 = vsub.s32 3, %v14894
  %v14896 = vrot.slane %v14879, %v14895
  %v14901 = vmul.f32 %v14870, %v14884
  %v14902 = vmul.f32 %v14871, %v14888
  %v14903 = vmul.f32 %v14872, %v14892
  %v14904 = vmul.f32 %v14873, %v14896
  %v14905 = vmul.f32 %v350, %v14884
  %v14906 = vmul.f32 %v351, %v14888
  %v14907 = vmul.f32 %v352, %v14892
  %v14908 = vmul.f32 %v353, %v14896
  %v14909 = vmul.f32 %v354, %v14884
  %v14910 = vmul.f32 %v355, %v14888
  %v14911 = vmul.f32 %v356, %v14892
  %v14912 = vmul.f32 %v357, %v14896
  %v14913 = vmul.f32 %v358, %v14884
  %v14914 = vmul.f32 %v359, %v14888
  %v14915 = vmul.f32 %v360, %v14892
  %v14916 = vmul.f32 %v361, %v14896
  %v14917 = vmul.f32 %v362, %v14884
  %v14918 = vmul.f32 %v363, %v14888
  %v14919 = vmul.f32 %v364, %v14892
  %v14920 = vmul.f32 %v365, %v14896
  %v14921 = vmul.f32 %v366, %v14884
  %v14922 = vmul.f32 %v367, %v14888
  %v14923 = vmul.f32 %v368, %v14892
  %v14924 = vmul.f32 %v369, %v14896
  %v14925 = vmul.f32 %v5420, %v14884
  %v14926 = vmul.f32 %v5421, %v14888
  %v14927 = vmul.f32 %v5422, %v14892
  %v14928 = vmul.f32 %v5423, %v14896
  %v14929 = vmul.f32 %v11093, %v14884
  %v14930 = vmul.f32 %v11094, %v14888
  %v14931 = vmul.f32 %v11095, %v14892
  %v14932 = vmul.f32 %v11096, %v14896
  %v14933 = vmul.f32 %v14874, %v14884
  %v14934 = vmul.f32 %v14875, %v14888
  %v14935 = vmul.f32 %v14876, %v14892
  %v14936 = vmul.f32 %v14877, %v14896
  %v14973 = vrot.slane %v14901, 4
  %v14974 = vrot.slane %v14905, 4
  %v14975 = vsel %vm14267, %v14973, %v14974
  %v14976 = vrot.slane %v14902, 4
  %v14977 = vrot.slane %v14906, 4
  %v14978 = vsel %vm14267, %v14976, %v14977
  %v14979 = vrot.slane %v14903, 4
  %v14980 = vrot.slane %v14907, 4
  %v14981 = vsel %vm14267, %v14979, %v14980
  %v14982 = vrot.slane %v14904, 4
  %v14983 = vrot.slane %v14908, 4
  %v14984 = vsel %vm14267, %v14982, %v14983
  %v14985 = vrot.slane %v14909, 4
  %v14986 = vsel %vm14267, %v14974, %v14985
  %v14987 = vrot.slane %v14910, 4
  %v14988 = vsel %vm14267, %v14977, %v14987
  %v14989 = vrot.slane %v14911, 4
  %v14990 = vsel %vm14267, %v14980, %v14989
  %v14991 = vrot.slane %v14912, 4
  %v14992 = vsel %vm14267, %v14983, %v14991
  %v14993 = vrot.slane %v14913, 4
  %v14994 = vsel %vm14267, %v14985, %v14993
  %v14995 = vrot.slane %v14914, 4
  %v14996 = vsel %vm14267, %v14987, %v14995
  %v14997 = vrot.slane %v14915, 4
  %v14998 = vsel %vm14267, %v14989, %v14997
  %v14999 = vrot.slane %v14916, 4
  %v15000 = vsel %vm14267, %v14991, %v14999
  %v15001 = vrot.slane %v14917, 4
  %v15002 = vsel %vm14267, %v14993, %v15001
  %v15003 = vrot.slane %v14918, 4
  %v15004 = vsel %vm14267, %v14995, %v15003
  %v15005 = vrot.slane %v14919, 4
  %v15006 = vsel %vm14267, %v14997, %v15005
  %v15007 = vrot.slane %v14920, 4
  %v15008 = vsel %vm14267, %v14999, %v15007
  %v15009 = vrot.slane %v14921, 4
  %v15010 = vsel %vm14267, %v15001, %v15009
  %v15011 = vrot.slane %v14922, 4
  %v15012 = vsel %vm14267, %v15003, %v15011
  %v15013 = vrot.slane %v14923, 4
  %v15014 = vsel %vm14267, %v15005, %v15013
  %v15015 = vrot.slane %v14924, 4
  %v15016 = vsel %vm14267, %v15007, %v15015
  %v15017 = vrot.slane %v14925, 4
  %v15018 = vsel %vm14267, %v15009, %v15017
  %v15019 = vrot.slane %v14926, 4
  %v15020 = vsel %vm14267, %v15011, %v15019
  %v15021 = vrot.slane %v14927, 4
  %v15022 = vsel %vm14267, %v15013, %v15021
  %v15023 = vrot.slane %v14928, 4
  %v15024 = vsel %vm14267, %v15015, %v15023
  %v15025 = vrot.slane %v14929, 4
  %v15026 = vsel %vm14267, %v15017, %v15025
  %v15027 = vrot.slane %v14930, 4
  %v15028 = vsel %vm14267, %v15019, %v15027
  %v15029 = vrot.slane %v14931, 4
  %v15030 = vsel %vm14267, %v15021, %v15029
  %v15031 = vrot.slane %v14932, 4
  %v15032 = vsel %vm14267, %v15023, %v15031
  %v15033 = vrot.slane %v14933, 4
  %v15034 = vsel %vm14267, %v15025, %v15033
  %v15035 = vrot.slane %v14934, 4
  %v15036 = vsel %vm14267, %v15027, %v15035
  %v15037 = vrot.slane %v14935, 4
  %v15038 = vsel %vm14267, %v15029, %v15037
  %v15039 = vrot.slane %v14936, 4
  %v15040 = vsel %vm14267, %v15031, %v15039
  %v15073 = vadd.f32 %v14838, %v14975
  %v15074 = vadd.f32 %v14839, %v14978
  %v15075 = vadd.f32 %v14840, %v14981
  %v15076 = vadd.f32 %v14841, %v14984
  %v15077 = vadd.f32 %v14842, %v14986
  %v15078 = vadd.f32 %v14843, %v14988
  %v15079 = vadd.f32 %v14844, %v14990
  %v15080 = vadd.f32 %v14845, %v14992
  %v15081 = vadd.f32 %v14846, %v14994
  %v15082 = vadd.f32 %v14847, %v14996
  %v15083 = vadd.f32 %v14848, %v14998
  %v15084 = vadd.f32 %v14849, %v15000
  %v15085 = vadd.f32 %v14850, %v15002
  %v15086 = vadd.f32 %v14851, %v15004
  %v15087 = vadd.f32 %v14852, %v15006
  %v15088 = vadd.f32 %v14853, %v15008
  %v15089 = vadd.f32 %v14854, %v15010
  %v15090 = vadd.f32 %v14855, %v15012
  %v15091 = vadd.f32 %v14856, %v15014
  %v15092 = vadd.f32 %v14857, %v15016
  %v15093 = vadd.f32 %v14858, %v15018
  %v15094 = vadd.f32 %v14859, %v15020
  %v15095 = vadd.f32 %v14860, %v15022
  %v15096 = vadd.f32 %v14861, %v15024
  %v15097 = vadd.f32 %v14862, %v15026
  %v15098 = vadd.f32 %v14863, %v15028
  %v15099 = vadd.f32 %v14864, %v15030
  %v15100 = vadd.f32 %v14865, %v15032
  %v15101 = vadd.f32 %v14866, %v15034
  %v15102 = vadd.f32 %v14867, %v15036
  %v15103 = vadd.f32 %v14868, %v15038
  %v15104 = vadd.f32 %v14869, %v15040
  %v15105 = vld [vmem:[%s457 + $0x40] sm:$0xf0]
  %v15106 = vld [vmem:[%s457 + $0x48] sm:$0xf0]
  %v15107 = vld [vmem:[%s457 + $0x50] sm:$0xf0]
  %v15108 = vld [vmem:[%s457 + $0x58] sm:$0xf0]
  %v15109 = vld [vmem:[%s457 + $0x140] sm:$0xf]
  %v15110 = vld [vmem:[%s457 + $0x148] sm:$0xf]
  %v15111 = vld [vmem:[%s457 + $0x150] sm:$0xf]
  %v15112 = vld [vmem:[%s457 + $0x158] sm:$0xf]
  %s15113 = scalar_lea.vmem %s1, 260
  %v15114 = vld [vmem:[%s15113] ss:$8 sm:$0xf]
  %v15116 = vlaneseq
  %v15117 = vshrl.u32 %v15116, 7
  %v15118 = vsub.s32 0, %v15117
  %v15119 = vrot.slane %v15114, %v15118
  %v15120 = vlaneseq
  %v15121 = vshrl.u32 %v15120, 7
  %v15122 = vsub.s32 1, %v15121
  %v15123 = vrot.slane %v15114, %v15122
  %v15124 = vlaneseq
  %v15125 = vshrl.u32 %v15124, 7
  %v15126 = vsub.s32 2, %v15125
  %v15127 = vrot.slane %v15114, %v15126
  %v15128 = vlaneseq
  %v15129 = vshrl.u32 %v15128, 7
  %v15130 = vsub.s32 3, %v15129
  %v15131 = vrot.slane %v15114, %v15130
  %v15136 = vmul.f32 %v15105, %v15119
  %v15137 = vmul.f32 %v15106, %v15123
  %v15138 = vmul.f32 %v15107, %v15127
  %v15139 = vmul.f32 %v15108, %v15131
  %v15140 = vmul.f32 %v470, %v15119
  %v15141 = vmul.f32 %v471, %v15123
  %v15142 = vmul.f32 %v472, %v15127
  %v15143 = vmul.f32 %v473, %v15131
  %v15144 = vmul.f32 %v474, %v15119
  %v15145 = vmul.f32 %v475, %v15123
  %v15146 = vmul.f32 %v476, %v15127
  %v15147 = vmul.f32 %v477, %v15131
  %v15148 = vmul.f32 %v478, %v15119
  %v15149 = vmul.f32 %v479, %v15123
  %v15150 = vmul.f32 %v480, %v15127
  %v15151 = vmul.f32 %v481, %v15131
  %v15152 = vmul.f32 %v482, %v15119
  %v15153 = vmul.f32 %v483, %v15123
  %v15154 = vmul.f32 %v484, %v15127
  %v15155 = vmul.f32 %v485, %v15131
  %v15156 = vmul.f32 %v486, %v15119
  %v15157 = vmul.f32 %v487, %v15123
  %v15158 = vmul.f32 %v488, %v15127
  %v15159 = vmul.f32 %v489, %v15131
  %v15160 = vmul.f32 %v5659, %v15119
  %v15161 = vmul.f32 %v5660, %v15123
  %v15162 = vmul.f32 %v5661, %v15127
  %v15163 = vmul.f32 %v5662, %v15131
  %v15164 = vmul.f32 %v11332, %v15119
  %v15165 = vmul.f32 %v11333, %v15123
  %v15166 = vmul.f32 %v11334, %v15127
  %v15167 = vmul.f32 %v11335, %v15131
  %v15168 = vmul.f32 %v15109, %v15119
  %v15169 = vmul.f32 %v15110, %v15123
  %v15170 = vmul.f32 %v15111, %v15127
  %v15171 = vmul.f32 %v15112, %v15131
  %v15208 = vrot.slane %v15136, 4
  %v15209 = vrot.slane %v15140, 4
  %v15210 = vsel %vm14267, %v15208, %v15209
  %v15211 = vrot.slane %v15137, 4
  %v15212 = vrot.slane %v15141, 4
  %v15213 = vsel %vm14267, %v15211, %v15212
  %v15214 = vrot.slane %v15138, 4
  %v15215 = vrot.slane %v15142, 4
  %v15216 = vsel %vm14267, %v15214, %v15215
  %v15217 = vrot.slane %v15139, 4
  %v15218 = vrot.slane %v15143, 4
  %v15219 = vsel %vm14267, %v15217, %v15218
  %v15220 = vrot.slane %v15144, 4
  %v15221 = vsel %vm14267, %v15209, %v15220
  %v15222 = vrot.slane %v15145, 4
  %v15223 = vsel %vm14267, %v15212, %v15222
  %v15224 = vrot.slane %v15146, 4
  %v15225 = vsel %vm14267, %v15215, %v15224
  %v15226 = vrot.slane %v15147, 4
  %v15227 = vsel %vm14267, %v15218, %v15226
  %v15228 = vrot.slane %v15148, 4
  %v15229 = vsel %vm14267, %v15220, %v15228
  %v15230 = vrot.slane %v15149, 4
  %v15231 = vsel %vm14267, %v15222, %v15230
  %v15232 = vrot.slane %v15150, 4
  %v15233 = vsel %vm14267, %v15224, %v15232
  %v15234 = vrot.slane %v15151, 4
  %v15235 = vsel %vm14267, %v15226, %v15234
  %v15236 = vrot.slane %v15152, 4
  %v15237 = vsel %vm14267, %v15228, %v15236
  %v15238 = vrot.slane %v15153, 4
  %v15239 = vsel %vm14267, %v15230, %v15238
  %v15240 = vrot.slane %v15154, 4
  %v15241 = vsel %vm14267, %v15232, %v15240
  %v15242 = vrot.slane %v15155, 4
  %v15243 = vsel %vm14267, %v15234, %v15242
  %v15244 = vrot.slane %v15156, 4
  %v15245 = vsel %vm14267, %v15236, %v15244
  %v15246 = vrot.slane %v15157, 4
  %v15247 = vsel %vm14267, %v15238, %v15246
  %v15248 = vrot.slane %v15158, 4
  %v15249 = vsel %vm14267, %v15240, %v15248
  %v15250 = vrot.slane %v15159, 4
  %v15251 = vsel %vm14267, %v15242, %v15250
  %v15252 = vrot.slane %v15160, 4
  %v15253 = vsel %vm14267, %v15244, %v15252
  %v15254 = vrot.slane %v15161, 4
  %v15255 = vsel %vm14267, %v15246, %v15254
  %v15256 = vrot.slane %v15162, 4
  %v15257 = vsel %vm14267, %v15248, %v15256
  %v15258 = vrot.slane %v15163, 4
  %v15259 = vsel %vm14267, %v15250, %v15258
  %v15260 = vrot.slane %v15164, 4
  %v15261 = vsel %vm14267, %v15252, %v15260
  %v15262 = vrot.slane %v15165, 4
  %v15263 = vsel %vm14267, %v15254, %v15262
  %v15264 = vrot.slane %v15166, 4
  %v15265 = vsel %vm14267, %v15256, %v15264
  %v15266 = vrot.slane %v15167, 4
  %v15267 = vsel %vm14267, %v15258, %v15266
  %v15268 = vrot.slane %v15168, 4
  %v15269 = vsel %vm14267, %v15260, %v15268
  %v15270 = vrot.slane %v15169, 4
  %v15271 = vsel %vm14267, %v15262, %v15270
  %v15272 = vrot.slane %v15170, 4
  %v15273 = vsel %vm14267, %v15264, %v15272
  %v15274 = vrot.slane %v15171, 4
  %v15275 = vsel %vm14267, %v15266, %v15274
  %v15308 = vadd.f32 %v15073, %v15210
  %v15309 = vadd.f32 %v15074, %v15213
  %v15310 = vadd.f32 %v15075, %v15216
  %v15311 = vadd.f32 %v15076, %v15219
  %v15312 = vadd.f32 %v15077, %v15221
  %v15313 = vadd.f32 %v15078, %v15223
  %v15314 = vadd.f32 %v15079, %v15225
  %v15315 = vadd.f32 %v15080, %v15227
  %v15316 = vadd.f32 %v15081, %v15229
  %v15317 = vadd.f32 %v15082, %v15231
  %v15318 = vadd.f32 %v15083, %v15233
  %v15319 = vadd.f32 %v15084, %v15235
  %v15320 = vadd.f32 %v15085, %v15237
  %v15321 = vadd.f32 %v15086, %v15239
  %v15322 = vadd.f32 %v15087, %v15241
  %v15323 = vadd.f32 %v15088, %v15243
  %v15324 = vadd.f32 %v15089, %v15245
  %v15325 = vadd.f32 %v15090, %v15247
  %v15326 = vadd.f32 %v15091, %v15249
  %v15327 = vadd.f32 %v15092, %v15251
  %v15328 = vadd.f32 %v15093, %v15253
  %v15329 = vadd.f32 %v15094, %v15255
  %v15330 = vadd.f32 %v15095, %v15257
  %v15331 = vadd.f32 %v15096, %v15259
  %v15332 = vadd.f32 %v15097, %v15261
  %v15333 = vadd.f32 %v15098, %v15263
  %v15334 = vadd.f32 %v15099, %v15265
  %v15335 = vadd.f32 %v15100, %v15267
  %v15336 = vadd.f32 %v15101, %v15269
  %v15337 = vadd.f32 %v15102, %v15271
  %v15338 = vadd.f32 %v15103, %v15273
  %v15339 = vadd.f32 %v15104, %v15275
  %v15340 = vld [vmem:[%s577 + $0x40] sm:$0xf0]
  %v15341 = vld [vmem:[%s577 + $0x48] sm:$0xf0]
  %v15342 = vld [vmem:[%s577 + $0x50] sm:$0xf0]
  %v15343 = vld [vmem:[%s577 + $0x58] sm:$0xf0]
  %v15344 = vld [vmem:[%s577 + $0x140] sm:$0xf]
  %v15345 = vld [vmem:[%s577 + $0x148] sm:$0xf]
  %v15346 = vld [vmem:[%s577 + $0x150] sm:$0xf]
  %v15347 = vld [vmem:[%s577 + $0x158] sm:$0xf]
  %s15348 = scalar_lea.vmem %s1, 261
  %v15349 = vld [vmem:[%s15348] ss:$8 sm:$0xf]
  %v15351 = vlaneseq
  %v15352 = vshrl.u32 %v15351, 7
  %v15353 = vsub.s32 0, %v15352
  %v15354 = vrot.slane %v15349, %v15353
  %v15355 = vlaneseq
  %v15356 = vshrl.u32 %v15355, 7
  %v15357 = vsub.s32 1, %v15356
  %v15358 = vrot.slane %v15349, %v15357
  %v15359 = vlaneseq
  %v15360 = vshrl.u32 %v15359, 7
  %v15361 = vsub.s32 2, %v15360
  %v15362 = vrot.slane %v15349, %v15361
  %v15363 = vlaneseq
  %v15364 = vshrl.u32 %v15363, 7
  %v15365 = vsub.s32 3, %v15364
  %v15366 = vrot.slane %v15349, %v15365
  %v15371 = vmul.f32 %v15340, %v15354
  %v15372 = vmul.f32 %v15341, %v15358
  %v15373 = vmul.f32 %v15342, %v15362
  %v15374 = vmul.f32 %v15343, %v15366
  %v15375 = vmul.f32 %v590, %v15354
  %v15376 = vmul.f32 %v591, %v15358
  %v15377 = vmul.f32 %v592, %v15362
  %v15378 = vmul.f32 %v593, %v15366
  %v15379 = vmul.f32 %v594, %v15354
  %v15380 = vmul.f32 %v595, %v15358
  %v15381 = vmul.f32 %v596, %v15362
  %v15382 = vmul.f32 %v597, %v15366
  %v15383 = vmul.f32 %v598, %v15354
  %v15384 = vmul.f32 %v599, %v15358
  %v15385 = vmul.f32 %v600, %v15362
  %v15386 = vmul.f32 %v601, %v15366
  %v15387 = vmul.f32 %v602, %v15354
  %v15388 = vmul.f32 %v603, %v15358
  %v15389 = vmul.f32 %v604, %v15362
  %v15390 = vmul.f32 %v605, %v15366
  %v15391 = vmul.f32 %v606, %v15354
  %v15392 = vmul.f32 %v607, %v15358
  %v15393 = vmul.f32 %v608, %v15362
  %v15394 = vmul.f32 %v609, %v15366
  %v15395 = vmul.f32 %v5898, %v15354
  %v15396 = vmul.f32 %v5899, %v15358
  %v15397 = vmul.f32 %v5900, %v15362
  %v15398 = vmul.f32 %v5901, %v15366
  %v15399 = vmul.f32 %v11571, %v15354
  %v15400 = vmul.f32 %v11572, %v15358
  %v15401 = vmul.f32 %v11573, %v15362
  %v15402 = vmul.f32 %v11574, %v15366
  %v15403 = vmul.f32 %v15344, %v15354
  %v15404 = vmul.f32 %v15345, %v15358
  %v15405 = vmul.f32 %v15346, %v15362
  %v15406 = vmul.f32 %v15347, %v15366
  %v15443 = vrot.slane %v15371, 4
  %v15444 = vrot.slane %v15375, 4
  %v15445 = vsel %vm14267, %v15443, %v15444
  %v15446 = vrot.slane %v15372, 4
  %v15447 = vrot.slane %v15376, 4
  %v15448 = vsel %vm14267, %v15446, %v15447
  %v15449 = vrot.slane %v15373, 4
  %v15450 = vrot.slane %v15377, 4
  %v15451 = vsel %vm14267, %v15449, %v15450
  %v15452 = vrot.slane %v15374, 4
  %v15453 = vrot.slane %v15378, 4
  %v15454 = vsel %vm14267, %v15452, %v15453
  %v15455 = vrot.slane %v15379, 4
  %v15456 = vsel %vm14267, %v15444, %v15455
  %v15457 = vrot.slane %v15380, 4
  %v15458 = vsel %vm14267, %v15447, %v15457
  %v15459 = vrot.slane %v15381, 4
  %v15460 = vsel %vm14267, %v15450, %v15459
  %v15461 = vrot.slane %v15382, 4
  %v15462 = vsel %vm14267, %v15453, %v15461
  %v15463 = vrot.slane %v15383, 4
  %v15464 = vsel %vm14267, %v15455, %v15463
  %v15465 = vrot.slane %v15384, 4
  %v15466 = vsel %vm14267, %v15457, %v15465
  %v15467 = vrot.slane %v15385, 4
  %v15468 = vsel %vm14267, %v15459, %v15467
  %v15469 = vrot.slane %v15386, 4
  %v15470 = vsel %vm14267, %v15461, %v15469
  %v15471 = vrot.slane %v15387, 4
  %v15472 = vsel %vm14267, %v15463, %v15471
  %v15473 = vrot.slane %v15388, 4
  %v15474 = vsel %vm14267, %v15465, %v15473
  %v15475 = vrot.slane %v15389, 4
  %v15476 = vsel %vm14267, %v15467, %v15475
  %v15477 = vrot.slane %v15390, 4
  %v15478 = vsel %vm14267, %v15469, %v15477
  %v15479 = vrot.slane %v15391, 4
  %v15480 = vsel %vm14267, %v15471, %v15479
  %v15481 = vrot.slane %v15392, 4
  %v15482 = vsel %vm14267, %v15473, %v15481
  %v15483 = vrot.slane %v15393, 4
  %v15484 = vsel %vm14267, %v15475, %v15483
  %v15485 = vrot.slane %v15394, 4
  %v15486 = vsel %vm14267, %v15477, %v15485
  %v15487 = vrot.slane %v15395, 4
  %v15488 = vsel %vm14267, %v15479, %v15487
  %v15489 = vrot.slane %v15396, 4
  %v15490 = vsel %vm14267, %v15481, %v15489
  %v15491 = vrot.slane %v15397, 4
  %v15492 = vsel %vm14267, %v15483, %v15491
  %v15493 = vrot.slane %v15398, 4
  %v15494 = vsel %vm14267, %v15485, %v15493
  %v15495 = vrot.slane %v15399, 4
  %v15496 = vsel %vm14267, %v15487, %v15495
  %v15497 = vrot.slane %v15400, 4
  %v15498 = vsel %vm14267, %v15489, %v15497
  %v15499 = vrot.slane %v15401, 4
  %v15500 = vsel %vm14267, %v15491, %v15499
  %v15501 = vrot.slane %v15402, 4
  %v15502 = vsel %vm14267, %v15493, %v15501
  %v15503 = vrot.slane %v15403, 4
  %v15504 = vsel %vm14267, %v15495, %v15503
  %v15505 = vrot.slane %v15404, 4
  %v15506 = vsel %vm14267, %v15497, %v15505
  %v15507 = vrot.slane %v15405, 4
  %v15508 = vsel %vm14267, %v15499, %v15507
  %v15509 = vrot.slane %v15406, 4
  %v15510 = vsel %vm14267, %v15501, %v15509
  %v15543 = vadd.f32 %v15308, %v15445
  %v15544 = vadd.f32 %v15309, %v15448
  %v15545 = vadd.f32 %v15310, %v15451
  %v15546 = vadd.f32 %v15311, %v15454
  %v15547 = vadd.f32 %v15312, %v15456
  %v15548 = vadd.f32 %v15313, %v15458
  %v15549 = vadd.f32 %v15314, %v15460
  %v15550 = vadd.f32 %v15315, %v15462
  %v15551 = vadd.f32 %v15316, %v15464
  %v15552 = vadd.f32 %v15317, %v15466
  %v15553 = vadd.f32 %v15318, %v15468
  %v15554 = vadd.f32 %v15319, %v15470
  %v15555 = vadd.f32 %v15320, %v15472
  %v15556 = vadd.f32 %v15321, %v15474
  %v15557 = vadd.f32 %v15322, %v15476
  %v15558 = vadd.f32 %v15323, %v15478
  %v15559 = vadd.f32 %v15324, %v15480
  %v15560 = vadd.f32 %v15325, %v15482
  %v15561 = vadd.f32 %v15326, %v15484
  %v15562 = vadd.f32 %v15327, %v15486
  %v15563 = vadd.f32 %v15328, %v15488
  %v15564 = vadd.f32 %v15329, %v15490
  %v15565 = vadd.f32 %v15330, %v15492
  %v15566 = vadd.f32 %v15331, %v15494
  %v15567 = vadd.f32 %v15332, %v15496
  %v15568 = vadd.f32 %v15333, %v15498
  %v15569 = vadd.f32 %v15334, %v15500
  %v15570 = vadd.f32 %v15335, %v15502
  %v15571 = vadd.f32 %v15336, %v15504
  %v15572 = vadd.f32 %v15337, %v15506
  %v15573 = vadd.f32 %v15338, %v15508
  %v15574 = vadd.f32 %v15339, %v15510
  %v15575 = vld [vmem:[%s697 + $0x40] sm:$0xf0]
  %v15576 = vld [vmem:[%s697 + $0x48] sm:$0xf0]
  %v15577 = vld [vmem:[%s697 + $0x50] sm:$0xf0]
  %v15578 = vld [vmem:[%s697 + $0x58] sm:$0xf0]
  %v15579 = vld [vmem:[%s697 + $0x140] sm:$0xf]
  %v15580 = vld [vmem:[%s697 + $0x148] sm:$0xf]
  %v15581 = vld [vmem:[%s697 + $0x150] sm:$0xf]
  %v15582 = vld [vmem:[%s697 + $0x158] sm:$0xf]
  %s15583 = scalar_lea.vmem %s1, 262
  %v15584 = vld [vmem:[%s15583] ss:$8 sm:$0xf]
  %v15586 = vlaneseq
  %v15587 = vshrl.u32 %v15586, 7
  %v15588 = vsub.s32 0, %v15587
  %v15589 = vrot.slane %v15584, %v15588
  %v15590 = vlaneseq
  %v15591 = vshrl.u32 %v15590, 7
  %v15592 = vsub.s32 1, %v15591
  %v15593 = vrot.slane %v15584, %v15592
  %v15594 = vlaneseq
  %v15595 = vshrl.u32 %v15594, 7
  %v15596 = vsub.s32 2, %v15595
  %v15597 = vrot.slane %v15584, %v15596
  %v15598 = vlaneseq
  %v15599 = vshrl.u32 %v15598, 7
  %v15600 = vsub.s32 3, %v15599
  %v15601 = vrot.slane %v15584, %v15600
  %v15606 = vmul.f32 %v15575, %v15589
  %v15607 = vmul.f32 %v15576, %v15593
  %v15608 = vmul.f32 %v15577, %v15597
  %v15609 = vmul.f32 %v15578, %v15601
  %v15610 = vmul.f32 %v710, %v15589
  %v15611 = vmul.f32 %v711, %v15593
  %v15612 = vmul.f32 %v712, %v15597
  %v15613 = vmul.f32 %v713, %v15601
  %v15614 = vmul.f32 %v714, %v15589
  %v15615 = vmul.f32 %v715, %v15593
  %v15616 = vmul.f32 %v716, %v15597
  %v15617 = vmul.f32 %v717, %v15601
  %v15618 = vmul.f32 %v718, %v15589
  %v15619 = vmul.f32 %v719, %v15593
  %v15620 = vmul.f32 %v720, %v15597
  %v15621 = vmul.f32 %v721, %v15601
  %v15622 = vmul.f32 %v722, %v15589
  %v15623 = vmul.f32 %v723, %v15593
  %v15624 = vmul.f32 %v724, %v15597
  %v15625 = vmul.f32 %v725, %v15601
  %v15626 = vmul.f32 %v726, %v15589
  %v15627 = vmul.f32 %v727, %v15593
  %v15628 = vmul.f32 %v728, %v15597
  %v15629 = vmul.f32 %v729, %v15601
  %v15630 = vmul.f32 %v6137, %v15589
  %v15631 = vmul.f32 %v6138, %v15593
  %v15632 = vmul.f32 %v6139, %v15597
  %v15633 = vmul.f32 %v6140, %v15601
  %v15634 = vmul.f32 %v11810, %v15589
  %v15635 = vmul.f32 %v11811, %v15593
  %v15636 = vmul.f32 %v11812, %v15597
  %v15637 = vmul.f32 %v11813, %v15601
  %v15638 = vmul.f32 %v15579, %v15589
  %v15639 = vmul.f32 %v15580, %v15593
  %v15640 = vmul.f32 %v15581, %v15597
  %v15641 = vmul.f32 %v15582, %v15601
  %v15678 = vrot.slane %v15606, 4
  %v15679 = vrot.slane %v15610, 4
  %v15680 = vsel %vm14267, %v15678, %v15679
  %v15681 = vrot.slane %v15607, 4
  %v15682 = vrot.slane %v15611, 4
  %v15683 = vsel %vm14267, %v15681, %v15682
  %v15684 = vrot.slane %v15608, 4
  %v15685 = vrot.slane %v15612, 4
  %v15686 = vsel %vm14267, %v15684, %v15685
  %v15687 = vrot.slane %v15609, 4
  %v15688 = vrot.slane %v15613, 4
  %v15689 = vsel %vm14267, %v15687, %v15688
  %v15690 = vrot.slane %v15614, 4
  %v15691 = vsel %vm14267, %v15679, %v15690
  %v15692 = vrot.slane %v15615, 4
  %v15693 = vsel %vm14267, %v15682, %v15692
  %v15694 = vrot.slane %v15616, 4
  %v15695 = vsel %vm14267, %v15685, %v15694
  %v15696 = vrot.slane %v15617, 4
  %v15697 = vsel %vm14267, %v15688, %v15696
  %v15698 = vrot.slane %v15618, 4
  %v15699 = vsel %vm14267, %v15690, %v15698
  %v15700 = vrot.slane %v15619, 4
  %v15701 = vsel %vm14267, %v15692, %v15700
  %v15702 = vrot.slane %v15620, 4
  %v15703 = vsel %vm14267, %v15694, %v15702
  %v15704 = vrot.slane %v15621, 4
  %v15705 = vsel %vm14267, %v15696, %v15704
  %v15706 = vrot.slane %v15622, 4
  %v15707 = vsel %vm14267, %v15698, %v15706
  %v15708 = vrot.slane %v15623, 4
  %v15709 = vsel %vm14267, %v15700, %v15708
  %v15710 = vrot.slane %v15624, 4
  %v15711 = vsel %vm14267, %v15702, %v15710
  %v15712 = vrot.slane %v15625, 4
  %v15713 = vsel %vm14267, %v15704, %v15712
  %v15714 = vrot.slane %v15626, 4
  %v15715 = vsel %vm14267, %v15706, %v15714
  %v15716 = vrot.slane %v15627, 4
  %v15717 = vsel %vm14267, %v15708, %v15716
  %v15718 = vrot.slane %v15628, 4
  %v15719 = vsel %vm14267, %v15710, %v15718
  %v15720 = vrot.slane %v15629, 4
  %v15721 = vsel %vm14267, %v15712, %v15720
  %v15722 = vrot.slane %v15630, 4
  %v15723 = vsel %vm14267, %v15714, %v15722
  %v15724 = vrot.slane %v15631, 4
  %v15725 = vsel %vm14267, %v15716, %v15724
  %v15726 = vrot.slane %v15632, 4
  %v15727 = vsel %vm14267, %v15718, %v15726
  %v15728 = vrot.slane %v15633, 4
  %v15729 = vsel %vm14267, %v15720, %v15728
  %v15730 = vrot.slane %v15634, 4
  %v15731 = vsel %vm14267, %v15722, %v15730
  %v15732 = vrot.slane %v15635, 4
  %v15733 = vsel %vm14267, %v15724, %v15732
  %v15734 = vrot.slane %v15636, 4
  %v15735 = vsel %vm14267, %v15726, %v15734
  %v15736 = vrot.slane %v15637, 4
  %v15737 = vsel %vm14267, %v15728, %v15736
  %v15738 = vrot.slane %v15638, 4
  %v15739 = vsel %vm14267, %v15730, %v15738
  %v15740 = vrot.slane %v15639, 4
  %v15741 = vsel %vm14267, %v15732, %v15740
  %v15742 = vrot.slane %v15640, 4
  %v15743 = vsel %vm14267, %v15734, %v15742
  %v15744 = vrot.slane %v15641, 4
  %v15745 = vsel %vm14267, %v15736, %v15744
  %v15778 = vadd.f32 %v15543, %v15680
  %v15779 = vadd.f32 %v15544, %v15683
  %v15780 = vadd.f32 %v15545, %v15686
  %v15781 = vadd.f32 %v15546, %v15689
  %v15782 = vadd.f32 %v15547, %v15691
  %v15783 = vadd.f32 %v15548, %v15693
  %v15784 = vadd.f32 %v15549, %v15695
  %v15785 = vadd.f32 %v15550, %v15697
  %v15786 = vadd.f32 %v15551, %v15699
  %v15787 = vadd.f32 %v15552, %v15701
  %v15788 = vadd.f32 %v15553, %v15703
  %v15789 = vadd.f32 %v15554, %v15705
  %v15790 = vadd.f32 %v15555, %v15707
  %v15791 = vadd.f32 %v15556, %v15709
  %v15792 = vadd.f32 %v15557, %v15711
  %v15793 = vadd.f32 %v15558, %v15713
  %v15794 = vadd.f32 %v15559, %v15715
  %v15795 = vadd.f32 %v15560, %v15717
  %v15796 = vadd.f32 %v15561, %v15719
  %v15797 = vadd.f32 %v15562, %v15721
  %v15798 = vadd.f32 %v15563, %v15723
  %v15799 = vadd.f32 %v15564, %v15725
  %v15800 = vadd.f32 %v15565, %v15727
  %v15801 = vadd.f32 %v15566, %v15729
  %v15802 = vadd.f32 %v15567, %v15731
  %v15803 = vadd.f32 %v15568, %v15733
  %v15804 = vadd.f32 %v15569, %v15735
  %v15805 = vadd.f32 %v15570, %v15737
  %v15806 = vadd.f32 %v15571, %v15739
  %v15807 = vadd.f32 %v15572, %v15741
  %v15808 = vadd.f32 %v15573, %v15743
  %v15809 = vadd.f32 %v15574, %v15745
  %v15810 = vld [vmem:[%s817 + $0x40] sm:$0xf0]
  %v15811 = vld [vmem:[%s817 + $0x48] sm:$0xf0]
  %v15812 = vld [vmem:[%s817 + $0x50] sm:$0xf0]
  %v15813 = vld [vmem:[%s817 + $0x58] sm:$0xf0]
  %v15814 = vld [vmem:[%s817 + $0x140] sm:$0xf]
  %v15815 = vld [vmem:[%s817 + $0x148] sm:$0xf]
  %v15816 = vld [vmem:[%s817 + $0x150] sm:$0xf]
  %v15817 = vld [vmem:[%s817 + $0x158] sm:$0xf]
  %s15818 = scalar_lea.vmem %s1, 263
  %v15819 = vld [vmem:[%s15818] ss:$8 sm:$0xf]
  %v15821 = vlaneseq
  %v15822 = vshrl.u32 %v15821, 7
  %v15823 = vsub.s32 0, %v15822
  %v15824 = vrot.slane %v15819, %v15823
  %v15825 = vlaneseq
  %v15826 = vshrl.u32 %v15825, 7
  %v15827 = vsub.s32 1, %v15826
  %v15828 = vrot.slane %v15819, %v15827
  %v15829 = vlaneseq
  %v15830 = vshrl.u32 %v15829, 7
  %v15831 = vsub.s32 2, %v15830
  %v15832 = vrot.slane %v15819, %v15831
  %v15833 = vlaneseq
  %v15834 = vshrl.u32 %v15833, 7
  %v15835 = vsub.s32 3, %v15834
  %v15836 = vrot.slane %v15819, %v15835
  %v15841 = vmul.f32 %v15810, %v15824
  %v15842 = vmul.f32 %v15811, %v15828
  %v15843 = vmul.f32 %v15812, %v15832
  %v15844 = vmul.f32 %v15813, %v15836
  %v15845 = vmul.f32 %v830, %v15824
  %v15846 = vmul.f32 %v831, %v15828
  %v15847 = vmul.f32 %v832, %v15832
  %v15848 = vmul.f32 %v833, %v15836
  %v15849 = vmul.f32 %v834, %v15824
  %v15850 = vmul.f32 %v835, %v15828
  %v15851 = vmul.f32 %v836, %v15832
  %v15852 = vmul.f32 %v837, %v15836
  %v15853 = vmul.f32 %v838, %v15824
  %v15854 = vmul.f32 %v839, %v15828
  %v15855 = vmul.f32 %v840, %v15832
  %v15856 = vmul.f32 %v841, %v15836
  %v15857 = vmul.f32 %v842, %v15824
  %v15858 = vmul.f32 %v843, %v15828
  %v15859 = vmul.f32 %v844, %v15832
  %v15860 = vmul.f32 %v845, %v15836
  %v15861 = vmul.f32 %v846, %v15824
  %v15862 = vmul.f32 %v847, %v15828
  %v15863 = vmul.f32 %v848, %v15832
  %v15864 = vmul.f32 %v849, %v15836
  %v15865 = vmul.f32 %v6376, %v15824
  %v15866 = vmul.f32 %v6377, %v15828
  %v15867 = vmul.f32 %v6378, %v15832
  %v15868 = vmul.f32 %v6379, %v15836
  %v15869 = vmul.f32 %v12049, %v15824
  %v15870 = vmul.f32 %v12050, %v15828
  %v15871 = vmul.f32 %v12051, %v15832
  %v15872 = vmul.f32 %v12052, %v15836
  %v15873 = vmul.f32 %v15814, %v15824
  %v15874 = vmul.f32 %v15815, %v15828
  %v15875 = vmul.f32 %v15816, %v15832
  %v15876 = vmul.f32 %v15817, %v15836
  %v15913 = vrot.slane %v15841, 4
  %v15914 = vrot.slane %v15845, 4
  %v15915 = vsel %vm14267, %v15913, %v15914
  %v15916 = vrot.slane %v15842, 4
  %v15917 = vrot.slane %v15846, 4
  %v15918 = vsel %vm14267, %v15916, %v15917
  %v15919 = vrot.slane %v15843, 4
  %v15920 = vrot.slane %v15847, 4
  %v15921 = vsel %vm14267, %v15919, %v15920
  %v15922 = vrot.slane %v15844, 4
  %v15923 = vrot.slane %v15848, 4
  %v15924 = vsel %vm14267, %v15922, %v15923
  %v15925 = vrot.slane %v15849, 4
  %v15926 = vsel %vm14267, %v15914, %v15925
  %v15927 = vrot.slane %v15850, 4
  %v15928 = vsel %vm14267, %v15917, %v15927
  %v15929 = vrot.slane %v15851, 4
  %v15930 = vsel %vm14267, %v15920, %v15929
  %v15931 = vrot.slane %v15852, 4
  %v15932 = vsel %vm14267, %v15923, %v15931
  %v15933 = vrot.slane %v15853, 4
  %v15934 = vsel %vm14267, %v15925, %v15933
  %v15935 = vrot.slane %v15854, 4
  %v15936 = vsel %vm14267, %v15927, %v15935
  %v15937 = vrot.slane %v15855, 4
  %v15938 = vsel %vm14267, %v15929, %v15937
  %v15939 = vrot.slane %v15856, 4
  %v15940 = vsel %vm14267, %v15931, %v15939
  %v15941 = vrot.slane %v15857, 4
  %v15942 = vsel %vm14267, %v15933, %v15941
  %v15943 = vrot.slane %v15858, 4
  %v15944 = vsel %vm14267, %v15935, %v15943
  %v15945 = vrot.slane %v15859, 4
  %v15946 = vsel %vm14267, %v15937, %v15945
  %v15947 = vrot.slane %v15860, 4
  %v15948 = vsel %vm14267, %v15939, %v15947
  %v15949 = vrot.slane %v15861, 4
  %v15950 = vsel %vm14267, %v15941, %v15949
  %v15951 = vrot.slane %v15862, 4
  %v15952 = vsel %vm14267, %v15943, %v15951
  %v15953 = vrot.slane %v15863, 4
  %v15954 = vsel %vm14267, %v15945, %v15953
  %v15955 = vrot.slane %v15864, 4
  %v15956 = vsel %vm14267, %v15947, %v15955
  %v15957 = vrot.slane %v15865, 4
  %v15958 = vsel %vm14267, %v15949, %v15957
  %v15959 = vrot.slane %v15866, 4
  %v15960 = vsel %vm14267, %v15951, %v15959
  %v15961 = vrot.slane %v15867, 4
  %v15962 = vsel %vm14267, %v15953, %v15961
  %v15963 = vrot.slane %v15868, 4
  %v15964 = vsel %vm14267, %v15955, %v15963
  %v15965 = vrot.slane %v15869, 4
  %v15966 = vsel %vm14267, %v15957, %v15965
  %v15967 = vrot.slane %v15870, 4
  %v15968 = vsel %vm14267, %v15959, %v15967
  %v15969 = vrot.slane %v15871, 4
  %v15970 = vsel %vm14267, %v15961, %v15969
  %v15971 = vrot.slane %v15872, 4
  %v15972 = vsel %vm14267, %v15963, %v15971
  %v15973 = vrot.slane %v15873, 4
  %v15974 = vsel %vm14267, %v15965, %v15973
  %v15975 = vrot.slane %v15874, 4
  %v15976 = vsel %vm14267, %v15967, %v15975
  %v15977 = vrot.slane %v15875, 4
  %v15978 = vsel %vm14267, %v15969, %v15977
  %v15979 = vrot.slane %v15876, 4
  %v15980 = vsel %vm14267, %v15971, %v15979
  %v16013 = vadd.f32 %v15778, %v15915
  %v16014 = vadd.f32 %v15779, %v15918
  %v16015 = vadd.f32 %v15780, %v15921
  %v16016 = vadd.f32 %v15781, %v15924
  %v16017 = vadd.f32 %v15782, %v15926
  %v16018 = vadd.f32 %v15783, %v15928
  %v16019 = vadd.f32 %v15784, %v15930
  %v16020 = vadd.f32 %v15785, %v15932
  %v16021 = vadd.f32 %v15786, %v15934
  %v16022 = vadd.f32 %v15787, %v15936
  %v16023 = vadd.f32 %v15788, %v15938
  %v16024 = vadd.f32 %v15789, %v15940
  %v16025 = vadd.f32 %v15790, %v15942
  %v16026 = vadd.f32 %v15791, %v15944
  %v16027 = vadd.f32 %v15792, %v15946
  %v16028 = vadd.f32 %v15793, %v15948
  %v16029 = vadd.f32 %v15794, %v15950
  %v16030 = vadd.f32 %v15795, %v15952
  %v16031 = vadd.f32 %v15796, %v15954
  %v16032 = vadd.f32 %v15797, %v15956
  %v16033 = vadd.f32 %v15798, %v15958
  %v16034 = vadd.f32 %v15799, %v15960
  %v16035 = vadd.f32 %v15800, %v15962
  %v16036 = vadd.f32 %v15801, %v15964
  %v16037 = vadd.f32 %v15802, %v15966
  %v16038 = vadd.f32 %v15803, %v15968
  %v16039 = vadd.f32 %v15804, %v15970
  %v16040 = vadd.f32 %v15805, %v15972
  %v16041 = vadd.f32 %v15806, %v15974
  %v16042 = vadd.f32 %v15807, %v15976
  %v16043 = vadd.f32 %v15808, %v15978
  %v16044 = vadd.f32 %v15809, %v15980
  %16045 = vst [vmem:[%s2] sm:$0xff] %v16013
  %16046 = vst [vmem:[%s2 + $0x8] sm:$0xff] %v16014
  %16047 = vst [vmem:[%s2 + $0x10] sm:$0xff] %v16015
  %vm16048 = vcmask 457728
  %16049 = vst.msk [vmem:[%s2 + $0x18] sm:$0xff] %vm16048, %v16016
  %16050 = vst [vmem:[%s2 + $0x20] sm:$0xff] %v16017
  %16051 = vst [vmem:[%s2 + $0x28] sm:$0xff] %v16018
  %16052 = vst [vmem:[%s2 + $0x30] sm:$0xff] %v16019
  %16053 = vst.msk [vmem:[%s2 + $0x38] sm:$0xff] %vm16048, %v16020
  %16054 = vst [vmem:[%s2 + $0x40] sm:$0xff] %v16021
  %16055 = vst [vmem:[%s2 + $0x48] sm:$0xff] %v16022
  %16056 = vst [vmem:[%s2 + $0x50] sm:$0xff] %v16023
  %16057 = vst.msk [vmem:[%s2 + $0x58] sm:$0xff] %vm16048, %v16024
  %16058 = vst [vmem:[%s2 + $0x60] sm:$0xff] %v16025
  %16059 = vst [vmem:[%s2 + $0x68] sm:$0xff] %v16026
  %16060 = vst [vmem:[%s2 + $0x70] sm:$0xff] %v16027
  %16061 = vst.msk [vmem:[%s2 + $0x78] sm:$0xff] %vm16048, %v16028
  %16062 = vst [vmem:[%s2 + $0x80] sm:$0xff] %v16029
  %16063 = vst [vmem:[%s2 + $0x88] sm:$0xff] %v16030
  %16064 = vst [vmem:[%s2 + $0x90] sm:$0xff] %v16031
  %16065 = vst.msk [vmem:[%s2 + $0x98] sm:$0xff] %vm16048, %v16032
  %16066 = vst [vmem:[%s2 + $0xa0] sm:$0xff] %v16033
  %16067 = vst [vmem:[%s2 + $0xa8] sm:$0xff] %v16034
  %16068 = vst [vmem:[%s2 + $0xb0] sm:$0xff] %v16035
  %16069 = vst.msk [vmem:[%s2 + $0xb8] sm:$0xff] %vm16048, %v16036
  %16070 = vst [vmem:[%s2 + $0xc0] sm:$0xff] %v16037
  %16071 = vst [vmem:[%s2 + $0xc8] sm:$0xff] %v16038
  %16072 = vst [vmem:[%s2 + $0xd0] sm:$0xff] %v16039
  %16073 = vst.msk [vmem:[%s2 + $0xd8] sm:$0xff] %vm16048, %v16040
  %16074 = vst [vmem:[%s2 + $0xe0] sm:$0xff] %v16041
  %16075 = vst [vmem:[%s2 + $0xe8] sm:$0xff] %v16042
  %16076 = vst [vmem:[%s2 + $0xf0] sm:$0xff] %v16043
  %16077 = vst.msk [vmem:[%s2 + $0xf8] sm:$0xff] %vm16048, %v16044
  // Predicated region
  $region10: #{relu_grouped_conv.1} parent=0 // pred_check
    _
  $region11: #{relu_grouped_conv.1} parent=0 // pred_check_branch
    %16079 = sbr.rel (0) target = $region13
  $region12: #{relu_grouped_conv.1} parent=0 // pred_region
    _
  $region13: #{relu_grouped_conv.1} parent=0 // pred_fallthru
    _
  // Predicated region
  $region14: #{relu_grouped_conv.1} parent=0 // pred_check
    _
  $region15: #{relu_grouped_conv.1} parent=0 // pred_check_branch
    %16081 = sbr.rel (0) target = $region17
  $region16: #{relu_grouped_conv.1} parent=0 // pred_region
    _
  $region17: #{relu_grouped_conv.1} parent=0 // pred_fallthru
    _

</llo_original>
